<compile_context>
chip_gen: v6e
topology: v6e:2x2x1
jax: 0.10.0
libtpu: 0.0.40
codegen_flags: <defaults>
</compile_context>

<pallas_src>
import functools

import jax
import jax.numpy as jnp
from jax import lax
from jax.experimental import pallas as pl
from jax.experimental.pallas import tpu as pltpu


# Off-center taps of the 3x3 kernel, in a fixed order shared by wrapper+kernel.
_TAPS = tuple((ky, kx) for ky in range(3) for kx in range(3) if (ky, kx) != (1, 1))


# -----------------------------------------------------------------------------
# Pallas kernel: the whole BasicStage for one batch element (flat (H*W, dim)).
# -----------------------------------------------------------------------------
def _stage_kernel(x_ref, w1c_ref, wtap_ref, shift_ref, w2_ref, o_ref, xpf_ref,
                  *, H, W, c3, depth):
    HW = H * W
    OFF = W + 16                      # top zero-pad rows of the flat conv scratch

    # Zero the pad regions once; only the interior is rewritten per block.
    xpf_ref[0:OFF, :] = jnp.zeros((OFF, c3), jnp.bfloat16)
    xpf_ref[OFF + HW:OFF + HW + OFF, :] = jnp.zeros((OFF, c3), jnp.bfloat16)

    # Column index of every output pixel (flat row-major) for the +-1 x-shift
    # boundary masks. Vertical boundaries are covered by the zero pad rows.
    col = lax.broadcasted_iota(jnp.int32, (HW, c3), 0) % W
    not_left = col != 0               # valid rows when dx == -1
    not_right = col != (W - 1)        # valid rows when dx == +1

    x_bf = x_ref[...]                 # (HW, dim) bf16 input / running activation
    x_f32 = x_bf.astype(jnp.float32)  # residual carried in f32 (VMEM only)

    for d in range(depth):            # static unroll over the stage's blocks
        # Refresh conv-channel scratch interior with this block's activation.
        xpf_ref[OFF:OFF + HW, :] = x_bf[:, :c3]

        # Dense part: untouched channels + center conv tap (both folded in w1c,
        # BN scale already folded into the weights).
        h = jnp.dot(x_bf, w1c_ref[d], preferred_element_type=jnp.float32)

        # 8 off-center taps: shifted flat slab @ folded (c3, hidden) weight.
        for t, (ky, kx) in enumerate(_TAPS):
            dy, dx = ky - 1, kx - 1
            start = OFF + dy * W + dx
            patch = xpf_ref[start:start + HW, :]          # (HW, c3) bf16
            if dx == -1:
                patch = jnp.where(not_left, patch, jnp.zeros_like(patch))
            elif dx == 1:
                patch = jnp.where(not_right, patch, jnp.zeros_like(patch))
            h = h + jnp.dot(patch, wtap_ref[d, t],
                            preferred_element_type=jnp.float32)

        # Folded-BN shift + ReLU (f32), second 1x1 conv, residual add.
        h = jnp.maximum(h + shift_ref[d], 0.0)
        out = jnp.dot(h.astype(jnp.bfloat16), w2_ref[d],
                      preferred_element_type=jnp.float32)
        x_f32 = x_f32 + out
        x_bf = x_f32.astype(jnp.bfloat16)

    o_ref[...] = x_bf


# -----------------------------------------------------------------------------
# Wrapper: fold weights, tile, call the kernel.  Input/output are NCHW.
# -----------------------------------------------------------------------------
def _fold_block_weights(p, dim, c3, hidden, bn_eps):
    scale = p["bn_gamma"] / jnp.sqrt(p["bn_var"] + bn_eps)       # (hidden,)
    shift = p["bn_beta"] - p["bn_mean"] * scale                  # (hidden,)
    w1 = p["w1"]                                                 # (dim, hidden)
    wconv = p["wconv"]                                           # (3,3,c3,c3) HWIO
    w1a = w1[:c3]                                                # conv-out -> hidden
    wfold = jnp.einsum("abio,oh->abih", wconv, w1a)              # (3,3,c3,hidden)
    # Center tap merged with the untouched-channel rows of W1; BN scale folded.
    w1c = jnp.concatenate([wfold[1, 1], w1[c3:]], axis=0) * scale[None, :]
    wtap = jnp.stack([wfold[ky, kx] for (ky, kx) in _TAPS], axis=0)
    wtap = wtap * scale[None, None, :]
    return (w1c.astype(jnp.bfloat16),
            wtap.astype(jnp.bfloat16),
            shift.reshape(1, hidden).astype(jnp.float32),
            p["w2"].astype(jnp.bfloat16))


def basic_stage_forward(x_nchw, blocks_params, *, n_div, bn_eps=1e-5):
    """BasicStage.forward (inference): all MLPBlocks fused in one Pallas call."""
    B, dim, H, W = x_nchw.shape
    c3 = dim // n_div
    depth = len(blocks_params)
    hidden = blocks_params[0]["w1"].shape[1]
    HW = H * W

    folded = [_fold_block_weights(p, dim, c3, hidden, bn_eps)
              for p in blocks_params]
    w1c_all = jnp.stack([f[0] for f in folded], axis=0)     # (depth, dim, hidden)
    wtap_all = jnp.stack([f[1] for f in folded], axis=0)    # (depth, 8, c3, hidden)
    shift_all = jnp.stack([f[2] for f in folded], axis=0)   # (depth, 1, hidden)
    w2_all = jnp.stack([f[3] for f in folded], axis=0)      # (depth, hidden, dim)

    # NCHW -> NHWC -> lane-dense (B*H*W, dim) bf16 slab.
    x2d = jnp.transpose(x_nchw, (0, 2, 3, 1)).reshape(B * HW, dim)
    x2d = x2d.astype(jnp.bfloat16)

    # Explicit VMEM budget from the actual block / weight / scratch sizes.
    act_blk = HW * dim * 2
    weight_bytes = (int(w1c_all.size + wtap_all.size + w2_all.size) * 2
                    + int(shift_all.size) * 4)
    scratch_bytes = (HW + 2 * (W + 16)) * c3 * 2
    live_bytes = HW * (dim * 10 + hidden * 6)
    est = 2 * 2 * act_blk + 2 * weight_bytes + scratch_bytes + 2 * live_bytes
    vmem_limit = int(min(max(2 * est, 32 * 1024 * 1024), 64 * 1024 * 1024))

    kernel = functools.partial(_stage_kernel, H=H, W=W, c3=c3, depth=depth)

    out2d = pl.pallas_call(
        kernel,
        out_shape=jax.ShapeDtypeStruct((B * HW, dim), jnp.bfloat16),
        grid_spec=pltpu.PrefetchScalarGridSpec(
            num_scalar_prefetch=0,
            grid=(B,),
            in_specs=[
                pl.BlockSpec((HW, dim), lambda b: (b, 0)),
                pl.BlockSpec((depth, dim, hidden), lambda b: (0, 0, 0)),
                pl.BlockSpec((depth, 8, c3, hidden), lambda b: (0, 0, 0, 0)),
                pl.BlockSpec((depth, 1, hidden), lambda b: (0, 0, 0)),
                pl.BlockSpec((depth, hidden, dim), lambda b: (0, 0, 0)),
            ],
            out_specs=pl.BlockSpec((HW, dim), lambda b: (b, 0)),
            scratch_shapes=[
                pltpu.VMEM((HW + 2 * (W + 16), c3), jnp.bfloat16),
            ],
        ),
        compiler_params=pltpu.CompilerParams(
            dimension_semantics=("parallel",),
            vmem_limit_bytes=vmem_limit,
        ),
    )(x2d, w1c_all, wtap_all, shift_all, w2_all)

    out = out2d.reshape(B, H, W, dim).astype(x_nchw.dtype)
    return jnp.transpose(out, (0, 3, 1, 2))                 # NHWC -> NCHW


# -----------------------------------------------------------------------------
# Deterministic parameter init (shapes as implied by the PyTorch module).
# -----------------------------------------------------------------------------
def init_params(key, *, dim, depth, n_div, mlp_ratio):
    c3 = dim // n_div
    hidden = int(dim * mlp_ratio)
    blocks = []
    for i in range(depth):
        k = jax.random.fold_in(key, i)
        k1, k2, k3, k4, k5, k6 = jax.random.split(k, 6)
        blocks.append(dict(
            wconv=jax.random.normal(k1, (3, 3, c3, c3), jnp.float32) * 0.1,
            w1=jax.random.normal(k2, (dim, hidden), jnp.float32) * 0.1,
            w2=jax.random.normal(k3, (hidden, dim), jnp.float32) * 0.1,
            bn_gamma=1.0 + 0.1 * jax.random.normal(k4, (hidden,), jnp.float32),
            bn_beta=0.1 * jax.random.normal(k5, (hidden,), jnp.float32),
            bn_mean=0.1 * jax.random.normal(k6, (hidden,), jnp.float32),
            bn_var=jnp.ones((hidden,), jnp.float32),
        ))
    return blocks


# -----------------------------------------------------------------------------
# Pure-JAX f32 reference (for correctness check).
# -----------------------------------------------------------------------------
def reference_forward(x_nchw, blocks_params, *, n_div, bn_eps=1e-5):
    x = jnp.transpose(x_nchw, (0, 2, 3, 1))
    dim = x.shape[-1]
    c3 = dim // n_div
    for p in blocks_params:
        shortcut = x
        conv = lax.conv_general_dilated(
            x[..., :c3], p["wconv"], window_strides=(1, 1), padding="SAME",
            dimension_numbers=("NHWC", "HWIO", "NHWC"))
        mixed = jnp.concatenate([conv, x[..., c3:]], axis=-1)
        h = jnp.einsum("bhwc,cd->bhwd", mixed, p["w1"])
        scale = p["bn_gamma"] / jnp.sqrt(p["bn_var"] + bn_eps)
        shift = p["bn_beta"] - p["bn_mean"] * scale
        h = h * scale + shift
        h = jnp.maximum(h, 0.0)
        out = jnp.einsum("bhwc,cd->bhwd", h, p["w2"])
        x = shortcut + out
    return jnp.transpose(x, (0, 3, 1, 2))


if __name__ == "__main__":
    # Small, module-consistent shapes (NCHW input, like the PyTorch module).
    B, dim, H, W = 2, 64, 16, 16
    depth, n_div, mlp_ratio = 2, 4, 2.0

    key = jax.random.PRNGKey(0)
    kx_, kp = jax.random.split(key)
    x = jax.random.normal(kx_, (B, dim, H, W), jnp.float32)
    params = init_params(kp, dim=dim, depth=depth, n_div=n_div,
                         mlp_ratio=mlp_ratio)

    out = jax.block_until_ready(basic_stage_forward(x, params, n_div=n_div))
    ref = jax.block_until_ready(reference_forward(x, params, n_div=n_div))

    assert out.shape == (B, dim, H, W) and out.dtype == x.dtype
    err = float(jnp.max(jnp.abs(out - ref)))
    tol = 3e-2 + 3e-2 * float(jnp.max(jnp.abs(ref)))   # bf16 activations vs f32 ref
    assert err < tol, f"mismatch vs reference: {err} >= {tol}"

    print("KERNEL_OK")
</pallas_src>

<mosaic_0001>
module attributes {stable_mosaic.version = 11 : i64} {
  func.func @_stage_kernel(%arg0: i32, %arg1: memref<256x64xbf16, #tpu.memory_space<vmem>>, %arg2: memref<2x64x128xbf16, #tpu.memory_space<vmem>>, %arg3: memref<2x8x16x128xbf16, #tpu.memory_space<vmem>>, %arg4: memref<2x1x128xf32, #tpu.memory_space<vmem>>, %arg5: memref<2x128x64xbf16, #tpu.memory_space<vmem>>, %arg6: memref<256x64xbf16, #tpu.memory_space<vmem>>, %arg7: memref<320x16xbf16, #tpu.memory_space<vmem>>) attributes {dimension_semantics = [#tpu.dimension_semantics<parallel>], iteration_bounds = array<i64: 2>, scalar_prefetch = 0 : i64, scratch_operands = 1 : i64, tpu.core_type = #tpu.core_type<tc>, window_params = [{transform_indices = @transform_0, window_bounds = array<i64: 256, 64>}, {pipeline_mode = #tpu.pipeline_mode<synchronous>, transform_indices = @transform_1, window_bounds = array<i64: 2, 64, 128>}, {pipeline_mode = #tpu.pipeline_mode<synchronous>, transform_indices = @transform_2, window_bounds = array<i64: 2, 8, 16, 128>}, {pipeline_mode = #tpu.pipeline_mode<synchronous>, transform_indices = @transform_3, window_bounds = array<i64: 2, 1, 128>}, {pipeline_mode = #tpu.pipeline_mode<synchronous>, transform_indices = @transform_4, window_bounds = array<i64: 2, 128, 64>}, {transform_indices = @transform_5, window_bounds = array<i64: 256, 64>}]} {
    %cst = arith.constant 0.000000e+00 : bf16
    %0 = vector.broadcast %cst : bf16 to vector<32x16xbf16>
    %c0 = arith.constant 0 : index
    %c0_0 = arith.constant 0 : index
    %1 = vector.load %arg7[%c0, %c0_0] : memref<320x16xbf16, #tpu.memory_space<vmem>>, vector<32x16xbf16>
    tpu.vector_store %arg7[%c0, %c0_0], %0 {strides = array<i32>} : memref<320x16xbf16, #tpu.memory_space<vmem>>, vector<32x16xbf16>,
    %cst_1 = arith.constant 0.000000e+00 : bf16
    %2 = vector.broadcast %cst_1 : bf16 to vector<32x16xbf16>
    %c288 = arith.constant 288 : index
    %c0_2 = arith.constant 0 : index
    %3 = vector.load %arg7[%c288, %c0_2] : memref<320x16xbf16, #tpu.memory_space<vmem>>, vector<32x16xbf16>
    tpu.vector_store %arg7[%c288, %c0_2], %2 {strides = array<i32>} : memref<320x16xbf16, #tpu.memory_space<vmem>>, vector<32x16xbf16>,
    %4 = tpu.iota {dimensions = array<i32: 0>} : vector<256x16xi32>
    %c16_i32 = arith.constant 16 : i32
    %c0_i32 = arith.constant 0 : i32
    %5 = arith.cmpi eq, %c16_i32, %c0_i32 : i32
    %c1_i32 = arith.constant 1 : i32
    %6 = arith.select %5, %c1_i32, %c16_i32 : i32
    %7 = vector.broadcast %6 : i32 to vector<256x16xi32>
    %8 = arith.remsi %4, %7 : vector<256x16xi32>
    %c0_i32_3 = arith.constant 0 : i32
    %9 = vector.broadcast %c0_i32_3 : i32 to vector<256x16xi32>
    %10 = arith.cmpi ne, %8, %9 : vector<256x16xi32>
    %c0_i32_4 = arith.constant 0 : i32
    %11 = vector.broadcast %c0_i32_4 : i32 to vector<256x16xi32>
    %12 = arith.cmpi slt, %8, %11 : vector<256x16xi32>
    %c0_i32_5 = arith.constant 0 : i32
    %13 = arith.cmpi slt, %6, %c0_i32_5 : i32
    %14 = vector.broadcast %13 : i1 to vector<256x16xi1>
    %15 = vector.broadcast %14 : vector<256x16xi1> to vector<256x16xi1>
    %16 = arith.xori %12, %15 : vector<256x16xi1>
    %17 = arith.andi %16, %10 : vector<256x16xi1>
    %18 = vector.broadcast %6 : i32 to vector<256x16xi32>
    %19 = arith.addi %8, %18 : vector<256x16xi32>
    %20 = arith.select %17, %19, %8 : vector<256x16xi1>, vector<256x16xi32>
    %c0_i32_6 = arith.constant 0 : i32
    %21 = vector.broadcast %c0_i32_6 : i32 to vector<256x16xi32>
    %22 = arith.cmpi ne, %20, %21 : vector<256x16xi32>
    %c15_i32 = arith.constant 15 : i32
    %23 = vector.broadcast %c15_i32 : i32 to vector<256x16xi32>
    %24 = arith.cmpi ne, %20, %23 : vector<256x16xi32>
    %c0_7 = arith.constant 0 : index
    %c0_8 = arith.constant 0 : index
    %25 = vector.load %arg1[%c0_7, %c0_8] : memref<256x64xbf16, #tpu.memory_space<vmem>>, vector<256x64xbf16>
    %26 = arith.extf %25 : vector<256x64xbf16> to vector<256x64xf32>
    %27 = vector.extract_strided_slice %25 {offsets = [0, 0], sizes = [256, 16], strides = [1, 1]} : vector<256x64xbf16> to vector<256x16xbf16>
    %c32 = arith.constant 32 : index
    %c0_9 = arith.constant 0 : index
    %28 = vector.load %arg7[%c32, %c0_9] : memref<320x16xbf16, #tpu.memory_space<vmem>>, vector<256x16xbf16>
    tpu.vector_store %arg7[%c32, %c0_9], %27 {strides = array<i32>} : memref<320x16xbf16, #tpu.memory_space<vmem>>, vector<256x16xbf16>,
    %c0_10 = arith.constant 0 : index
    %c0_11 = arith.constant 0 : index
    %c0_12 = arith.constant 0 : index
    %29 = vector.load %arg2[%c0_10, %c0_11, %c0_12] : memref<2x64x128xbf16, #tpu.memory_space<vmem>>, vector<1x64x128xbf16>
    %30 = vector.shape_cast %29 : vector<1x64x128xbf16> to vector<64x128xbf16>
    %cst_13 = arith.constant dense<0.000000e+00> : vector<256x128xf32>
    %31 = tpu.matmul %25, %30, %cst_13 {dimension_numbers = #tpu.dot_dimension_numbers<[1], [0], [0], [1], [0, 0, 1, 1], [], []>} : vector<256x64xbf16>, vector<64x128xbf16>, vector<256x128xf32> -> vector<256x128xf32>
    %c15 = arith.constant 15 : index
    %c0_14 = arith.constant 0 : index
    %32 = vector.load %arg7[%c15, %c0_14] : memref<320x16xbf16, #tpu.memory_space<vmem>>, vector<256x16xbf16>
    %cst_15 = arith.constant 0.000000e+00 : bf16
    %33 = vector.broadcast %cst_15 : bf16 to vector<256x16xbf16>
    %34 = arith.select %22, %32, %33 : vector<256x16xi1>, vector<256x16xbf16>
    %c0_16 = arith.constant 0 : index
    %c0_17 = arith.constant 0 : index
    %c0_18 = arith.constant 0 : index
    %c0_19 = arith.constant 0 : index
    %35 = vector.load %arg3[%c0_16, %c0_17, %c0_18, %c0_19] : memref<2x8x16x128xbf16, #tpu.memory_space<vmem>>, vector<1x1x16x128xbf16>
    %36 = vector.shape_cast %35 : vector<1x1x16x128xbf16> to vector<16x128xbf16>
    %cst_20 = arith.constant dense<0.000000e+00> : vector<256x128xf32>
    %37 = tpu.matmul %34, %36, %cst_20 {dimension_numbers = #tpu.dot_dimension_numbers<[1], [0], [0], [1], [0, 0, 1, 1], [], []>} : vector<256x16xbf16>, vector<16x128xbf16>, vector<256x128xf32> -> vector<256x128xf32>
    %38 = arith.addf %31, %37 : vector<256x128xf32>
    %c16 = arith.constant 16 : index
    %c0_21 = arith.constant 0 : index
    %39 = vector.load %arg7[%c16, %c0_21] : memref<320x16xbf16, #tpu.memory_space<vmem>>, vector<256x16xbf16>
    %c0_22 = arith.constant 0 : index
    %c1 = arith.constant 1 : index
    %c0_23 = arith.constant 0 : index
    %c0_24 = arith.constant 0 : index
    %40 = vector.load %arg3[%c0_22, %c1, %c0_23, %c0_24] : memref<2x8x16x128xbf16, #tpu.memory_space<vmem>>, vector<1x1x16x128xbf16>
    %41 = vector.shape_cast %40 : vector<1x1x16x128xbf16> to vector<16x128xbf16>
    %cst_25 = arith.constant dense<0.000000e+00> : vector<256x128xf32>
    %42 = tpu.matmul %39, %41, %cst_25 {dimension_numbers = #tpu.dot_dimension_numbers<[1], [0], [0], [1], [0, 0, 1, 1], [], []>} : vector<256x16xbf16>, vector<16x128xbf16>, vector<256x128xf32> -> vector<256x128xf32>
    %43 = arith.addf %38, %42 : vector<256x128xf32>
    %c17 = arith.constant 17 : index
    %c0_26 = arith.constant 0 : index
    %44 = vector.load %arg7[%c17, %c0_26] : memref<320x16xbf16, #tpu.memory_space<vmem>>, vector<256x16xbf16>
    %cst_27 = arith.constant 0.000000e+00 : bf16
    %45 = vector.broadcast %cst_27 : bf16 to vector<256x16xbf16>
    %46 = arith.select %24, %44, %45 : vector<256x16xi1>, vector<256x16xbf16>
    %c0_28 = arith.constant 0 : index
    %c2 = arith.constant 2 : index
    %c0_29 = arith.constant 0 : index
    %c0_30 = arith.constant 0 : index
    %47 = vector.load %arg3[%c0_28, %c2, %c0_29, %c0_30] : memref<2x8x16x128xbf16, #tpu.memory_space<vmem>>, vector<1x1x16x128xbf16>
    %48 = vector.shape_cast %47 : vector<1x1x16x128xbf16> to vector<16x128xbf16>
    %cst_31 = arith.constant dense<0.000000e+00> : vector<256x128xf32>
    %49 = tpu.matmul %46, %48, %cst_31 {dimension_numbers = #tpu.dot_dimension_numbers<[1], [0], [0], [1], [0, 0, 1, 1], [], []>} : vector<256x16xbf16>, vector<16x128xbf16>, vector<256x128xf32> -> vector<256x128xf32>
    %50 = arith.addf %43, %49 : vector<256x128xf32>
    %c31 = arith.constant 31 : index
    %c0_32 = arith.constant 0 : index
    %51 = vector.load %arg7[%c31, %c0_32] : memref<320x16xbf16, #tpu.memory_space<vmem>>, vector<256x16xbf16>
    %cst_33 = arith.constant 0.000000e+00 : bf16
    %52 = vector.broadcast %cst_33 : bf16 to vector<256x16xbf16>
    %53 = arith.select %22, %51, %52 : vector<256x16xi1>, vector<256x16xbf16>
    %c0_34 = arith.constant 0 : index
    %c3 = arith.constant 3 : index
    %c0_35 = arith.constant 0 : index
    %c0_36 = arith.constant 0 : index
    %54 = vector.load %arg3[%c0_34, %c3, %c0_35, %c0_36] : memref<2x8x16x128xbf16, #tpu.memory_space<vmem>>, vector<1x1x16x128xbf16>
    %55 = vector.shape_cast %54 : vector<1x1x16x128xbf16> to vector<16x128xbf16>
    %cst_37 = arith.constant dense<0.000000e+00> : vector<256x128xf32>
    %56 = tpu.matmul %53, %55, %cst_37 {dimension_numbers = #tpu.dot_dimension_numbers<[1], [0], [0], [1], [0, 0, 1, 1], [], []>} : vector<256x16xbf16>, vector<16x128xbf16>, vector<256x128xf32> -> vector<256x128xf32>
    %57 = arith.addf %50, %56 : vector<256x128xf32>
    %c33 = arith.constant 33 : index
    %c0_38 = arith.constant 0 : index
    %58 = vector.load %arg7[%c33, %c0_38] : memref<320x16xbf16, #tpu.memory_space<vmem>>, vector<256x16xbf16>
    %cst_39 = arith.constant 0.000000e+00 : bf16
    %59 = vector.broadcast %cst_39 : bf16 to vector<256x16xbf16>
    %60 = arith.select %24, %58, %59 : vector<256x16xi1>, vector<256x16xbf16>
    %c0_40 = arith.constant 0 : index
    %c4 = arith.constant 4 : index
    %c0_41 = arith.constant 0 : index
    %c0_42 = arith.constant 0 : index
    %61 = vector.load %arg3[%c0_40, %c4, %c0_41, %c0_42] : memref<2x8x16x128xbf16, #tpu.memory_space<vmem>>, vector<1x1x16x128xbf16>
    %62 = vector.shape_cast %61 : vector<1x1x16x128xbf16> to vector<16x128xbf16>
    %cst_43 = arith.constant dense<0.000000e+00> : vector<256x128xf32>
    %63 = tpu.matmul %60, %62, %cst_43 {dimension_numbers = #tpu.dot_dimension_numbers<[1], [0], [0], [1], [0, 0, 1, 1], [], []>} : vector<256x16xbf16>, vector<16x128xbf16>, vector<256x128xf32> -> vector<256x128xf32>
    %64 = arith.addf %57, %63 : vector<256x128xf32>
    %c47 = arith.constant 47 : index
    %c0_44 = arith.constant 0 : index
    %65 = vector.load %arg7[%c47, %c0_44] : memref<320x16xbf16, #tpu.memory_space<vmem>>, vector<256x16xbf16>
    %cst_45 = arith.constant 0.000000e+00 : bf16
    %66 = vector.broadcast %cst_45 : bf16 to vector<256x16xbf16>
    %67 = arith.select %22, %65, %66 : vector<256x16xi1>, vector<256x16xbf16>
    %c0_46 = arith.constant 0 : index
    %c5 = arith.constant 5 : index
    %c0_47 = arith.constant 0 : index
    %c0_48 = arith.constant 0 : index
    %68 = vector.load %arg3[%c0_46, %c5, %c0_47, %c0_48] : memref<2x8x16x128xbf16, #tpu.memory_space<vmem>>, vector<1x1x16x128xbf16>
    %69 = vector.shape_cast %68 : vector<1x1x16x128xbf16> to vector<16x128xbf16>
    %cst_49 = arith.constant dense<0.000000e+00> : vector<256x128xf32>
    %70 = tpu.matmul %67, %69, %cst_49 {dimension_numbers = #tpu.dot_dimension_numbers<[1], [0], [0], [1], [0, 0, 1, 1], [], []>} : vector<256x16xbf16>, vector<16x128xbf16>, vector<256x128xf32> -> vector<256x128xf32>
    %71 = arith.addf %64, %70 : vector<256x128xf32>
    %c48 = arith.constant 48 : index
    %c0_50 = arith.constant 0 : index
    %72 = vector.load %arg7[%c48, %c0_50] : memref<320x16xbf16, #tpu.memory_space<vmem>>, vector<256x16xbf16>
    %c0_51 = arith.constant 0 : index
    %c6 = arith.constant 6 : index
    %c0_52 = arith.constant 0 : index
    %c0_53 = arith.constant 0 : index
    %73 = vector.load %arg3[%c0_51, %c6, %c0_52, %c0_53] : memref<2x8x16x128xbf16, #tpu.memory_space<vmem>>, vector<1x1x16x128xbf16>
    %74 = vector.shape_cast %73 : vector<1x1x16x128xbf16> to vector<16x128xbf16>
    %cst_54 = arith.constant dense<0.000000e+00> : vector<256x128xf32>
    %75 = tpu.matmul %72, %74, %cst_54 {dimension_numbers = #tpu.dot_dimension_numbers<[1], [0], [0], [1], [0, 0, 1, 1], [], []>} : vector<256x16xbf16>, vector<16x128xbf16>, vector<256x128xf32> -> vector<256x128xf32>
    %76 = arith.addf %71, %75 : vector<256x128xf32>
    %c49 = arith.constant 49 : index
    %c0_55 = arith.constant 0 : index
    %77 = vector.load %arg7[%c49, %c0_55] : memref<320x16xbf16, #tpu.memory_space<vmem>>, vector<256x16xbf16>
    %cst_56 = arith.constant 0.000000e+00 : bf16
    %78 = vector.broadcast %cst_56 : bf16 to vector<256x16xbf16>
    %79 = arith.select %24, %77, %78 : vector<256x16xi1>, vector<256x16xbf16>
    %c0_57 = arith.constant 0 : index
    %c7 = arith.constant 7 : index
    %c0_58 = arith.constant 0 : index
    %c0_59 = arith.constant 0 : index
    %80 = vector.load %arg3[%c0_57, %c7, %c0_58, %c0_59] : memref<2x8x16x128xbf16, #tpu.memory_space<vmem>>, vector<1x1x16x128xbf16>
    %81 = vector.shape_cast %80 : vector<1x1x16x128xbf16> to vector<16x128xbf16>
    %cst_60 = arith.constant dense<0.000000e+00> : vector<256x128xf32>
    %82 = tpu.matmul %79, %81, %cst_60 {dimension_numbers = #tpu.dot_dimension_numbers<[1], [0], [0], [1], [0, 0, 1, 1], [], []>} : vector<256x16xbf16>, vector<16x128xbf16>, vector<256x128xf32> -> vector<256x128xf32>
    %83 = arith.addf %76, %82 : vector<256x128xf32>
    %c0_61 = arith.constant 0 : index
    %c0_62 = arith.constant 0 : index
    %c0_63 = arith.constant 0 : index
    %84 = vector.load %arg4[%c0_61, %c0_62, %c0_63] : memref<2x1x128xf32, #tpu.memory_space<vmem>>, vector<1x1x128xf32>
    %85 = vector.shape_cast %84 : vector<1x1x128xf32> to vector<1x128xf32>
    %86 = vector.broadcast %85 : vector<1x128xf32> to vector<256x128xf32>
    %87 = arith.addf %83, %86 : vector<256x128xf32>
    %cst_64 = arith.constant 0.000000e+00 : f32
    %88 = vector.broadcast %cst_64 : f32 to vector<256x128xf32>
    %89 = arith.maximumf %87, %88 : vector<256x128xf32>
    %90 = arith.truncf %89 : vector<256x128xf32> to vector<256x128xbf16>
    %c0_65 = arith.constant 0 : index
    %c0_66 = arith.constant 0 : index
    %c0_67 = arith.constant 0 : index
    %91 = vector.load %arg5[%c0_65, %c0_66, %c0_67] : memref<2x128x64xbf16, #tpu.memory_space<vmem>>, vector<1x128x64xbf16>
    %92 = vector.shape_cast %91 : vector<1x128x64xbf16> to vector<128x64xbf16>
    %cst_68 = arith.constant dense<0.000000e+00> : vector<256x64xf32>
    %93 = tpu.matmul %90, %92, %cst_68 {dimension_numbers = #tpu.dot_dimension_numbers<[1], [0], [0], [1], [0, 0, 1, 1], [], []>} : vector<256x128xbf16>, vector<128x64xbf16>, vector<256x64xf32> -> vector<256x64xf32>
    %94 = arith.addf %26, %93 : vector<256x64xf32>
    %95 = arith.truncf %94 : vector<256x64xf32> to vector<256x64xbf16>
    %96 = vector.extract_strided_slice %95 {offsets = [0, 0], sizes = [256, 16], strides = [1, 1]} : vector<256x64xbf16> to vector<256x16xbf16>
    %c32_69 = arith.constant 32 : index
    %c0_70 = arith.constant 0 : index
    %97 = vector.load %arg7[%c32_69, %c0_70] : memref<320x16xbf16, #tpu.memory_space<vmem>>, vector<256x16xbf16>
    tpu.vector_store %arg7[%c32_69, %c0_70], %96 {strides = array<i32>} : memref<320x16xbf16, #tpu.memory_space<vmem>>, vector<256x16xbf16>,
    %c1_71 = arith.constant 1 : index
    %c0_72 = arith.constant 0 : index
    %c0_73 = arith.constant 0 : index
    %98 = vector.load %arg2[%c1_71, %c0_72, %c0_73] : memref<2x64x128xbf16, #tpu.memory_space<vmem>>, vector<1x64x128xbf16>
    %99 = vector.shape_cast %98 : vector<1x64x128xbf16> to vector<64x128xbf16>
    %cst_74 = arith.constant dense<0.000000e+00> : vector<256x128xf32>
    %100 = tpu.matmul %95, %99, %cst_74 {dimension_numbers = #tpu.dot_dimension_numbers<[1], [0], [0], [1], [0, 0, 1, 1], [], []>} : vector<256x64xbf16>, vector<64x128xbf16>, vector<256x128xf32> -> vector<256x128xf32>
    %c15_75 = arith.constant 15 : index
    %c0_76 = arith.constant 0 : index
    %101 = vector.load %arg7[%c15_75, %c0_76] : memref<320x16xbf16, #tpu.memory_space<vmem>>, vector<256x16xbf16>
    %cst_77 = arith.constant 0.000000e+00 : bf16
    %102 = vector.broadcast %cst_77 : bf16 to vector<256x16xbf16>
    %103 = arith.select %22, %101, %102 : vector<256x16xi1>, vector<256x16xbf16>
    %c1_78 = arith.constant 1 : index
    %c0_79 = arith.constant 0 : index
    %c0_80 = arith.constant 0 : index
    %c0_81 = arith.constant 0 : index
    %104 = vector.load %arg3[%c1_78, %c0_79, %c0_80, %c0_81] : memref<2x8x16x128xbf16, #tpu.memory_space<vmem>>, vector<1x1x16x128xbf16>
    %105 = vector.shape_cast %104 : vector<1x1x16x128xbf16> to vector<16x128xbf16>
    %cst_82 = arith.constant dense<0.000000e+00> : vector<256x128xf32>
    %106 = tpu.matmul %103, %105, %cst_82 {dimension_numbers = #tpu.dot_dimension_numbers<[1], [0], [0], [1], [0, 0, 1, 1], [], []>} : vector<256x16xbf16>, vector<16x128xbf16>, vector<256x128xf32> -> vector<256x128xf32>
    %107 = arith.addf %100, %106 : vector<256x128xf32>
    %c16_83 = arith.constant 16 : index
    %c0_84 = arith.constant 0 : index
    %108 = vector.load %arg7[%c16_83, %c0_84] : memref<320x16xbf16, #tpu.memory_space<vmem>>, vector<256x16xbf16>
    %c1_85 = arith.constant 1 : index
    %c1_86 = arith.constant 1 : index
    %c0_87 = arith.constant 0 : index
    %c0_88 = arith.constant 0 : index
    %109 = vector.load %arg3[%c1_85, %c1_86, %c0_87, %c0_88] : memref<2x8x16x128xbf16, #tpu.memory_space<vmem>>, vector<1x1x16x128xbf16>
    %110 = vector.shape_cast %109 : vector<1x1x16x128xbf16> to vector<16x128xbf16>
    %cst_89 = arith.constant dense<0.000000e+00> : vector<256x128xf32>
    %111 = tpu.matmul %108, %110, %cst_89 {dimension_numbers = #tpu.dot_dimension_numbers<[1], [0], [0], [1], [0, 0, 1, 1], [], []>} : vector<256x16xbf16>, vector<16x128xbf16>, vector<256x128xf32> -> vector<256x128xf32>
    %112 = arith.addf %107, %111 : vector<256x128xf32>
    %c17_90 = arith.constant 17 : index
    %c0_91 = arith.constant 0 : index
    %113 = vector.load %arg7[%c17_90, %c0_91] : memref<320x16xbf16, #tpu.memory_space<vmem>>, vector<256x16xbf16>
    %cst_92 = arith.constant 0.000000e+00 : bf16
    %114 = vector.broadcast %cst_92 : bf16 to vector<256x16xbf16>
    %115 = arith.select %24, %113, %114 : vector<256x16xi1>, vector<256x16xbf16>
    %c1_93 = arith.constant 1 : index
    %c2_94 = arith.constant 2 : index
    %c0_95 = arith.constant 0 : index
    %c0_96 = arith.constant 0 : index
    %116 = vector.load %arg3[%c1_93, %c2_94, %c0_95, %c0_96] : memref<2x8x16x128xbf16, #tpu.memory_space<vmem>>, vector<1x1x16x128xbf16>
    %117 = vector.shape_cast %116 : vector<1x1x16x128xbf16> to vector<16x128xbf16>
    %cst_97 = arith.constant dense<0.000000e+00> : vector<256x128xf32>
    %118 = tpu.matmul %115, %117, %cst_97 {dimension_numbers = #tpu.dot_dimension_numbers<[1], [0], [0], [1], [0, 0, 1, 1], [], []>} : vector<256x16xbf16>, vector<16x128xbf16>, vector<256x128xf32> -> vector<256x128xf32>
    %119 = arith.addf %112, %118 : vector<256x128xf32>
    %c31_98 = arith.constant 31 : index
    %c0_99 = arith.constant 0 : index
    %120 = vector.load %arg7[%c31_98, %c0_99] : memref<320x16xbf16, #tpu.memory_space<vmem>>, vector<256x16xbf16>
    %cst_100 = arith.constant 0.000000e+00 : bf16
    %121 = vector.broadcast %cst_100 : bf16 to vector<256x16xbf16>
    %122 = arith.select %22, %120, %121 : vector<256x16xi1>, vector<256x16xbf16>
    %c1_101 = arith.constant 1 : index
    %c3_102 = arith.constant 3 : index
    %c0_103 = arith.constant 0 : index
    %c0_104 = arith.constant 0 : index
    %123 = vector.load %arg3[%c1_101, %c3_102, %c0_103, %c0_104] : memref<2x8x16x128xbf16, #tpu.memory_space<vmem>>, vector<1x1x16x128xbf16>
    %124 = vector.shape_cast %123 : vector<1x1x16x128xbf16> to vector<16x128xbf16>
    %cst_105 = arith.constant dense<0.000000e+00> : vector<256x128xf32>
    %125 = tpu.matmul %122, %124, %cst_105 {dimension_numbers = #tpu.dot_dimension_numbers<[1], [0], [0], [1], [0, 0, 1, 1], [], []>} : vector<256x16xbf16>, vector<16x128xbf16>, vector<256x128xf32> -> vector<256x128xf32>
    %126 = arith.addf %119, %125 : vector<256x128xf32>
    %c33_106 = arith.constant 33 : index
    %c0_107 = arith.constant 0 : index
    %127 = vector.load %arg7[%c33_106, %c0_107] : memref<320x16xbf16, #tpu.memory_space<vmem>>, vector<256x16xbf16>
    %cst_108 = arith.constant 0.000000e+00 : bf16
    %128 = vector.broadcast %cst_108 : bf16 to vector<256x16xbf16>
    %129 = arith.select %24, %127, %128 : vector<256x16xi1>, vector<256x16xbf16>
    %c1_109 = arith.constant 1 : index
    %c4_110 = arith.constant 4 : index
    %c0_111 = arith.constant 0 : index
    %c0_112 = arith.constant 0 : index
    %130 = vector.load %arg3[%c1_109, %c4_110, %c0_111, %c0_112] : memref<2x8x16x128xbf16, #tpu.memory_space<vmem>>, vector<1x1x16x128xbf16>
    %131 = vector.shape_cast %130 : vector<1x1x16x128xbf16> to vector<16x128xbf16>
    %cst_113 = arith.constant dense<0.000000e+00> : vector<256x128xf32>
    %132 = tpu.matmul %129, %131, %cst_113 {dimension_numbers = #tpu.dot_dimension_numbers<[1], [0], [0], [1], [0, 0, 1, 1], [], []>} : vector<256x16xbf16>, vector<16x128xbf16>, vector<256x128xf32> -> vector<256x128xf32>
    %133 = arith.addf %126, %132 : vector<256x128xf32>
    %c47_114 = arith.constant 47 : index
    %c0_115 = arith.constant 0 : index
    %134 = vector.load %arg7[%c47_114, %c0_115] : memref<320x16xbf16, #tpu.memory_space<vmem>>, vector<256x16xbf16>
    %cst_116 = arith.constant 0.000000e+00 : bf16
    %135 = vector.broadcast %cst_116 : bf16 to vector<256x16xbf16>
    %136 = arith.select %22, %134, %135 : vector<256x16xi1>, vector<256x16xbf16>
    %c1_117 = arith.constant 1 : index
    %c5_118 = arith.constant 5 : index
    %c0_119 = arith.constant 0 : index
    %c0_120 = arith.constant 0 : index
    %137 = vector.load %arg3[%c1_117, %c5_118, %c0_119, %c0_120] : memref<2x8x16x128xbf16, #tpu.memory_space<vmem>>, vector<1x1x16x128xbf16>
    %138 = vector.shape_cast %137 : vector<1x1x16x128xbf16> to vector<16x128xbf16>
    %cst_121 = arith.constant dense<0.000000e+00> : vector<256x128xf32>
    %139 = tpu.matmul %136, %138, %cst_121 {dimension_numbers = #tpu.dot_dimension_numbers<[1], [0], [0], [1], [0, 0, 1, 1], [], []>} : vector<256x16xbf16>, vector<16x128xbf16>, vector<256x128xf32> -> vector<256x128xf32>
    %140 = arith.addf %133, %139 : vector<256x128xf32>
    %c48_122 = arith.constant 48 : index
    %c0_123 = arith.constant 0 : index
    %141 = vector.load %arg7[%c48_122, %c0_123] : memref<320x16xbf16, #tpu.memory_space<vmem>>, vector<256x16xbf16>
    %c1_124 = arith.constant 1 : index
    %c6_125 = arith.constant 6 : index
    %c0_126 = arith.constant 0 : index
    %c0_127 = arith.constant 0 : index
    %142 = vector.load %arg3[%c1_124, %c6_125, %c0_126, %c0_127] : memref<2x8x16x128xbf16, #tpu.memory_space<vmem>>, vector<1x1x16x128xbf16>
    %143 = vector.shape_cast %142 : vector<1x1x16x128xbf16> to vector<16x128xbf16>
    %cst_128 = arith.constant dense<0.000000e+00> : vector<256x128xf32>
    %144 = tpu.matmul %141, %143, %cst_128 {dimension_numbers = #tpu.dot_dimension_numbers<[1], [0], [0], [1], [0, 0, 1, 1], [], []>} : vector<256x16xbf16>, vector<16x128xbf16>, vector<256x128xf32> -> vector<256x128xf32>
    %145 = arith.addf %140, %144 : vector<256x128xf32>
    %c49_129 = arith.constant 49 : index
    %c0_130 = arith.constant 0 : index
    %146 = vector.load %arg7[%c49_129, %c0_130] : memref<320x16xbf16, #tpu.memory_space<vmem>>, vector<256x16xbf16>
    %cst_131 = arith.constant 0.000000e+00 : bf16
    %147 = vector.broadcast %cst_131 : bf16 to vector<256x16xbf16>
    %148 = arith.select %24, %146, %147 : vector<256x16xi1>, vector<256x16xbf16>
    %c1_132 = arith.constant 1 : index
    %c7_133 = arith.constant 7 : index
    %c0_134 = arith.constant 0 : index
    %c0_135 = arith.constant 0 : index
    %149 = vector.load %arg3[%c1_132, %c7_133, %c0_134, %c0_135] : memref<2x8x16x128xbf16, #tpu.memory_space<vmem>>, vector<1x1x16x128xbf16>
    %150 = vector.shape_cast %149 : vector<1x1x16x128xbf16> to vector<16x128xbf16>
    %cst_136 = arith.constant dense<0.000000e+00> : vector<256x128xf32>
    %151 = tpu.matmul %148, %150, %cst_136 {dimension_numbers = #tpu.dot_dimension_numbers<[1], [0], [0], [1], [0, 0, 1, 1], [], []>} : vector<256x16xbf16>, vector<16x128xbf16>, vector<256x128xf32> -> vector<256x128xf32>
    %152 = arith.addf %145, %151 : vector<256x128xf32>
    %c1_137 = arith.constant 1 : index
    %c0_138 = arith.constant 0 : index
    %c0_139 = arith.constant 0 : index
    %153 = vector.load %arg4[%c1_137, %c0_138, %c0_139] : memref<2x1x128xf32, #tpu.memory_space<vmem>>, vector<1x1x128xf32>
    %154 = vector.shape_cast %153 : vector<1x1x128xf32> to vector<1x128xf32>
    %155 = vector.broadcast %154 : vector<1x128xf32> to vector<256x128xf32>
    %156 = arith.addf %152, %155 : vector<256x128xf32>
    %cst_140 = arith.constant 0.000000e+00 : f32
    %157 = vector.broadcast %cst_140 : f32 to vector<256x128xf32>
    %158 = arith.maximumf %156, %157 : vector<256x128xf32>
    %159 = arith.truncf %158 : vector<256x128xf32> to vector<256x128xbf16>
    %c1_141 = arith.constant 1 : index
    %c0_142 = arith.constant 0 : index
    %c0_143 = arith.constant 0 : index
    %160 = vector.load %arg5[%c1_141, %c0_142, %c0_143] : memref<2x128x64xbf16, #tpu.memory_space<vmem>>, vector<1x128x64xbf16>
    %161 = vector.shape_cast %160 : vector<1x128x64xbf16> to vector<128x64xbf16>
    %cst_144 = arith.constant dense<0.000000e+00> : vector<256x64xf32>
    %162 = tpu.matmul %159, %161, %cst_144 {dimension_numbers = #tpu.dot_dimension_numbers<[1], [0], [0], [1], [0, 0, 1, 1], [], []>} : vector<256x128xbf16>, vector<128x64xbf16>, vector<256x64xf32> -> vector<256x64xf32>
    %163 = arith.addf %94, %162 : vector<256x64xf32>
    %164 = arith.truncf %163 : vector<256x64xf32> to vector<256x64xbf16>
    %c0_145 = arith.constant 0 : index
    %c0_146 = arith.constant 0 : index
    %165 = vector.load %arg6[%c0_145, %c0_146] : memref<256x64xbf16, #tpu.memory_space<vmem>>, vector<256x64xbf16>
    tpu.vector_store %arg6[%c0_145, %c0_146], %164 {strides = array<i32>} : memref<256x64xbf16, #tpu.memory_space<vmem>>, vector<256x64xbf16>,
    return
  }
  func.func @transform_0(%arg0: i32) -> (i32, i32) {
    %c0_i32 = arith.constant 0 : i32
    %c0_i32_0 = arith.constant 0 : i32
    return %arg0, %c0_i32 : i32, i32
  }
  func.func @transform_1(%arg0: i32) -> (i32, i32, i32) {
    %c0_i32 = arith.constant 0 : i32
    %c0_i32_0 = arith.constant 0 : i32
    %c0_i32_1 = arith.constant 0 : i32
    %c0_i32_2 = arith.constant 0 : i32
    return %c0_i32, %c0_i32_0, %c0_i32_1 : i32, i32, i32
  }
  func.func @transform_2(%arg0: i32) -> (i32, i32, i32, i32) {
    %c0_i32 = arith.constant 0 : i32
    %c0_i32_0 = arith.constant 0 : i32
    %c0_i32_1 = arith.constant 0 : i32
    %c0_i32_2 = arith.constant 0 : i32
    %c0_i32_3 = arith.constant 0 : i32
    return %c0_i32, %c0_i32_0, %c0_i32_1, %c0_i32_2 : i32, i32, i32, i32
  }
  func.func @transform_3(%arg0: i32) -> (i32, i32, i32) {
    %c0_i32 = arith.constant 0 : i32
    %c0_i32_0 = arith.constant 0 : i32
    %c0_i32_1 = arith.constant 0 : i32
    %c0_i32_2 = arith.constant 0 : i32
    return %c0_i32, %c0_i32_0, %c0_i32_1 : i32, i32, i32
  }
  func.func @transform_4(%arg0: i32) -> (i32, i32, i32) {
    %c0_i32 = arith.constant 0 : i32
    %c0_i32_0 = arith.constant 0 : i32
    %c0_i32_1 = arith.constant 0 : i32
    %c0_i32_2 = arith.constant 0 : i32
    return %c0_i32, %c0_i32_0, %c0_i32_1 : i32, i32, i32
  }
  func.func @transform_5(%arg0: i32) -> (i32, i32) {
    %c0_i32 = arith.constant 0 : i32
    %c0_i32_0 = arith.constant 0 : i32
    return %arg0, %c0_i32 : i32, i32
  }
}

</mosaic_0001>

<llo_original>
// kernel: tpu_custom_call.1
$region0: #{tpu_custom_call.1}
  #allocation0 [shape = 'u32[]', space=smem, size = 0x4, offset = 0x4, fixed_abs, tag = 'smem constant byte address 0x4 - core index']
  #allocation1 [shape = 'u32[144,128]{1,0:T(1,128)}', space=vmem, size = 0x12000, scoped, tag = 'internal scratch']
  #allocation2 [shape = 'bf16[320,16]{1,0:T(8,128)(2,1)}', space=vmem, size = 0x14000, scoped, tag = 'scratch operand']
  %s0 = inlined_call_operand.vmem [shape: bf16[512,64], index: 0, kind: input, shape index: {}]
  %s1 = inlined_call_operand.vmem [shape: bf16[2,64,128], index: 1, kind: input, shape index: {}]
  %s2 = inlined_call_operand.vmem [shape: bf16[2,8,16,128], index: 2, kind: input, shape index: {}]
  %s3 = inlined_call_operand.vmem [shape: f32[2,1,128], index: 3, kind: input, shape index: {}]
  %s4 = inlined_call_operand.vmem [shape: bf16[2,128,64], index: 4, kind: input, shape index: {}]
  %s5 = inlined_call_operand.vmem [shape: bf16[512,64], index: 5, kind: output, shape index: {}]
  %s6 = sld [smem:[#allocation0]]
  $region53: #{tpu_custom_call.1} parent=0
    _
  %s8 = ssub.s32 1, %s6
  %s9 = scalar_select 0, %s8, %s6
  loop: start=0, step=1, limit=4
  $region2: #{tpu_custom_call.1} parent=0 // loop_pre_header
    _
  $region3: #{tpu_custom_call.1} parent=0 // loop_header
    %s11 = sphi 0, %s15
    %p12 = scmp.ge.s32.totalorder %s11, 4
    %s21 = sphi 0, %s23
    %s24 = sphi 0, %s21
    %s25 = sphi 0, %s24
    %s41 = sphi 0, %s25
    %s45 = sphi 0, %s45
    %s47 = sphi 0, %s45
    %s48 = sphi 0, %s47
    %s62 = sphi 0, %s48
    %s66 = sphi 0, %s66
    %s68 = sphi 0, %s66
    %s69 = sphi 0, %s68
    %s83 = sphi 0, %s69
    %s87 = sphi 0, %s87
    %s89 = sphi 0, %s87
    %s90 = sphi 0, %s89
    %s104 = sphi 0, %s90
    %s108 = sphi 0, %s108
    %s110 = sphi 0, %s108
    %s111 = sphi 0, %s110
    %s125 = sphi 0, %s111
    %s131 = sphi 0, %s133
    %s134 = sphi 0, %s131
    %s135 = sphi 0, %s134
    %s151 = sphi 0, %s135
  $region4: #{tpu_custom_call.1} parent=0 // loop_header_branch
    %14 = sbr.rel (%p12) target = $region8
  $region5: #{tpu_custom_call.1} parent=0 // loop_body
    %s16 = ssub.s32 %s11, 1
    %s17 = ssub.s32 %s11, 2
    %s18 = sadd.s32 %s11, 1
    %s19 = ssub.s32 %s11, %s18
    %p20 = scmp.eq.s32.totalorder %s19, 0
    %s22 = sadd.s32 %s21, 1
    %s23 = scalar_select %p20, %s21, %s22
    %p26 = pneg %p20
    %p27 = scmp.eq.s32.totalorder %s11, 1
    %p28 = por %p26, %p27
    %p29 = scmp.ne.s32.totalorder %s21, %s24
    %p30 = scmp.eq.s32.totalorder %s11, 0
    %p31 = por %p29, %p30
    %p32 = scmp.ne.s32.totalorder %s21, %s24
    %p33 = scmp.eq.s32.totalorder %s16, 1
    %p34 = por %p32, %p33
    %p35 = scmp.ne.s32.totalorder %s24, %s25
    %p36 = scmp.eq.s32.totalorder %s16, 0
    %p37 = por %p35, %p36
    %p38 = scmp.ne.s32.totalorder %s24, %s25
    %p39 = scmp.eq.s32.totalorder %s17, 1
    %p40 = por %p38, %p39
    %p42 = scmp.ne.s32.totalorder %s25, %s41
    %p43 = scmp.eq.s32.totalorder %s17, 0
    %p44 = por %p42, %p43
    %s46 = sadd.s32 %s45, 1
    %p49 = scmp.eq.s32.totalorder %s11, 1
    %p50 = scmp.ne.s32.totalorder %s45, %s47
    %p51 = scmp.eq.s32.totalorder %s11, 0
    %p52 = por %p50, %p51
    %p53 = scmp.ne.s32.totalorder %s45, %s47
    %p54 = scmp.eq.s32.totalorder %s16, 1
    %p55 = por %p53, %p54
    %p56 = scmp.ne.s32.totalorder %s47, %s48
    %p57 = scmp.eq.s32.totalorder %s16, 0
    %p58 = por %p56, %p57
    %p59 = scmp.ne.s32.totalorder %s47, %s48
    %p60 = scmp.eq.s32.totalorder %s17, 1
    %p61 = por %p59, %p60
    %p63 = scmp.ne.s32.totalorder %s48, %s62
    %p64 = scmp.eq.s32.totalorder %s17, 0
    %p65 = por %p63, %p64
    %s67 = sadd.s32 %s66, 1
    %p70 = scmp.eq.s32.totalorder %s11, 1
    %p71 = scmp.ne.s32.totalorder %s66, %s68
    %p72 = scmp.eq.s32.totalorder %s11, 0
    %p73 = por %p71, %p72
    %p74 = scmp.ne.s32.totalorder %s66, %s68
    %p75 = scmp.eq.s32.totalorder %s16, 1
    %p76 = por %p74, %p75
    %p77 = scmp.ne.s32.totalorder %s68, %s69
    %p78 = scmp.eq.s32.totalorder %s16, 0
    %p79 = por %p77, %p78
    %p80 = scmp.ne.s32.totalorder %s68, %s69
    %p81 = scmp.eq.s32.totalorder %s17, 1
    %p82 = por %p80, %p81
    %p84 = scmp.ne.s32.totalorder %s69, %s83
    %p85 = scmp.eq.s32.totalorder %s17, 0
    %p86 = por %p84, %p85
    %s88 = sadd.s32 %s87, 1
    %p91 = scmp.eq.s32.totalorder %s11, 1
    %p92 = scmp.ne.s32.totalorder %s87, %s89
    %p93 = scmp.eq.s32.totalorder %s11, 0
    %p94 = por %p92, %p93
    %p95 = scmp.ne.s32.totalorder %s87, %s89
    %p96 = scmp.eq.s32.totalorder %s16, 1
    %p97 = por %p95, %p96
    %p98 = scmp.ne.s32.totalorder %s89, %s90
    %p99 = scmp.eq.s32.totalorder %s16, 0
    %p100 = por %p98, %p99
    %p101 = scmp.ne.s32.totalorder %s89, %s90
    %p102 = scmp.eq.s32.totalorder %s17, 1
    %p103 = por %p101, %p102
    %p105 = scmp.ne.s32.totalorder %s90, %s104
    %p106 = scmp.eq.s32.totalorder %s17, 0
    %p107 = por %p105, %p106
    %s109 = sadd.s32 %s108, 1
    %p112 = scmp.eq.s32.totalorder %s11, 1
    %p113 = scmp.ne.s32.totalorder %s108, %s110
    %p114 = scmp.eq.s32.totalorder %s11, 0
    %p115 = por %p113, %p114
    %p116 = scmp.ne.s32.totalorder %s108, %s110
    %p117 = scmp.eq.s32.totalorder %s16, 1
    %p118 = por %p116, %p117
    %p119 = scmp.ne.s32.totalorder %s110, %s111
    %p120 = scmp.eq.s32.totalorder %s16, 0
    %p121 = por %p119, %p120
    %p122 = scmp.ne.s32.totalorder %s110, %s111
    %p123 = scmp.eq.s32.totalorder %s17, 1
    %p124 = por %p122, %p123
    %p126 = scmp.ne.s32.totalorder %s111, %s125
    %p127 = scmp.eq.s32.totalorder %s17, 0
    %p128 = por %p126, %p127
    %s129 = ssub.s32 %s11, %s18
    %p130 = scmp.eq.s32.totalorder %s129, 0
    %s132 = sadd.s32 %s131, 1
    %s133 = scalar_select %p130, %s131, %s132
    %p136 = pneg %p130
    %p137 = scmp.eq.s32.totalorder %s11, 1
    %p138 = por %p136, %p137
    %p139 = scmp.ne.s32.totalorder %s131, %s134
    %p140 = scmp.eq.s32.totalorder %s11, 0
    %p141 = por %p139, %p140
    %p142 = scmp.ne.s32.totalorder %s131, %s134
    %p143 = scmp.eq.s32.totalorder %s16, 1
    %p144 = por %p142, %p143
    %p145 = scmp.ne.s32.totalorder %s134, %s135
    %p146 = scmp.eq.s32.totalorder %s16, 0
    %p147 = por %p145, %p146
    %p148 = scmp.ne.s32.totalorder %s134, %s135
    %p149 = scmp.eq.s32.totalorder %s17, 1
    %p150 = por %p148, %p149
    %p152 = scmp.ne.s32.totalorder %s135, %s151
    %p153 = scmp.eq.s32.totalorder %s17, 0
    %p154 = por %p152, %p153
    %p155 = scmp.le.s32.totalorder 1, %s11
    %p156 = scmp.lt.s32.totalorder %s11, 3
    %p157 = pnand %p155, %p156
    %p158 = pneg %p157
    // Predicated region
    $region9: #{tpu_custom_call.1} parent=5 // pred_check
      _
    $region10: #{tpu_custom_call.1} parent=5 // pred_check_branch
      %160 = sbr.rel (%p157) target = $region12
    $region11: #{tpu_custom_call.1} parent=5 // pred_region
      %s161 = ssub.s32 %s11, 1
      // Predicated region
      $region13: #{tpu_custom_call.1} parent=11 // pred_check
        %p162 = pneg %p58
      $region14: #{tpu_custom_call.1} parent=11 // pred_check_branch
        %164 = sbr.rel (%p162) target = $region16
      $region15: #{tpu_custom_call.1} parent=11 // pred_region
        _
      $region16: #{tpu_custom_call.1} parent=11 // pred_fallthru
        _
      // Predicated region
      $region17: #{tpu_custom_call.1} parent=11 // pred_check
        %p165 = pneg %p79
      $region18: #{tpu_custom_call.1} parent=11 // pred_check_branch
        %167 = sbr.rel (%p165) target = $region20
      $region19: #{tpu_custom_call.1} parent=11 // pred_region
        _
      $region20: #{tpu_custom_call.1} parent=11 // pred_fallthru
        _
      // Predicated region
      $region21: #{tpu_custom_call.1} parent=11 // pred_check
        %p168 = pneg %p100
      $region22: #{tpu_custom_call.1} parent=11 // pred_check_branch
        %170 = sbr.rel (%p168) target = $region24
      $region23: #{tpu_custom_call.1} parent=11 // pred_region
        _
      $region24: #{tpu_custom_call.1} parent=11 // pred_fallthru
        _
      // Predicated region
      $region25: #{tpu_custom_call.1} parent=11 // pred_check
        %p171 = pneg %p121
      $region26: #{tpu_custom_call.1} parent=11 // pred_check_branch
        %173 = sbr.rel (%p171) target = $region28
      $region27: #{tpu_custom_call.1} parent=11 // pred_region
        _
      $region28: #{tpu_custom_call.1} parent=11 // pred_fallthru
        _
    $region12: #{tpu_custom_call.1} parent=5 // pred_fallthru
      _
    %p174 = scmp.lt.s32.totalorder %s11, 2
    // Predicated region
    $region29: #{tpu_custom_call.1} parent=5 // pred_check
      %p175 = pneg %p174
    $region30: #{tpu_custom_call.1} parent=5 // pred_check_branch
      %177 = sbr.rel (%p175) target = $region32
    $region31: #{tpu_custom_call.1} parent=5 // pred_region
      // Predicated region
      $region33: #{tpu_custom_call.1} parent=31 // pred_check
        %p178 = pneg %p31
      $region34: #{tpu_custom_call.1} parent=31 // pred_check_branch
        %180 = sbr.rel (%p178) target = $region36
      $region35: #{tpu_custom_call.1} parent=31 // pred_region
        %s181 = smul.u32 32, %s11
        %p182 = scmp.lt.s32.totalorder %s181, 63
        %s183 = scalar_select %p182, %s181, 63
        %s184 = smul.addr %s183, 4
        %s185 = scalar_lea.vmem %s0, %s184
        %s186 = smul.u32 32, %s11
      $region36: #{tpu_custom_call.1} parent=31 // pred_fallthru
        _
    $region32: #{tpu_custom_call.1} parent=5 // pred_fallthru
      _
    %p187 = scmp.le.s32.totalorder 1, %s11
    %p188 = scmp.lt.s32.totalorder %s11, 3
    %p189 = pnand %p187, %p188
    %p190 = pneg %p189
    // Predicated region
    $region37: #{tpu_custom_call.1} parent=5 // pred_check
      _
    $region38: #{tpu_custom_call.1} parent=5 // pred_check_branch
      %192 = sbr.rel (%p189) target = $region40
    $region39: #{tpu_custom_call.1} parent=5 // pred_region
      %s193 = ssub.s32 %s11, 1
      %s194 = smul.u32 32, %s16
      %p195 = scmp.lt.s32.totalorder %s194, 63
      %s196 = scalar_select %p195, %s194, 63
      %s197 = smul.addr %s196, 4
      %s198 = scalar_lea.vmem %s0, %s197
      %p199 = pneg %p37
      %p200 = pneg %p34
      %p201 = pneg %p58
      %p202 = pneg %p55
      %p203 = pneg %p79
      %p204 = pneg %p76
      %p205 = pneg %p100
      %p206 = pneg %p97
      %p207 = pneg %p121
      %p208 = pneg %p118
      %p209 = pneg %p147
      %p210 = pneg %p144
      %s211 = smul.u32 32, %s16
      %p212 = scmp.lt.s32.totalorder %s211, 63
      %s213 = scalar_select %p212, %s211, 63
      %s214 = smul.addr %s213, 4
      %s215 = scalar_lea.vmem %s5, %s214
      %s216 = smul.u32 32, %s16
      %p217 = scmp.lt.s32.totalorder %s216, 63
      %s218 = scalar_select %p217, %s216, 63
      %s219 = smul.addr %s218, 4
      %s220 = scalar_lea.vmem %s0, %s219
      %s221 = smul.u32 32, %s16
      %s222 = smul.u32 32, %s16
      %p223 = scmp.lt.s32.totalorder %s222, 63
      %s224 = scalar_select %p223, %s222, 63
      %s225 = smul.addr %s224, 4
      %s226 = scalar_lea.vmem %s5, %s225
      %s227 = smul.u32 32, %s16
      %vm231 = vcmask 125952
      %232 = vst.msk [vmem:[#allocation2] sm:$0xf] %vm231, 0
      %233 = vst.msk [vmem:[#allocation2 + $0x4] sm:$0xf] %vm231, 0
      %234 = vst.msk [vmem:[#allocation2 + $0x8] sm:$0xf] %vm231, 0
      %235 = vst.msk [vmem:[#allocation2 + $0xc] sm:$0xf] %vm231, 0
      %236 = vst.msk [vmem:[#allocation2 + $0x90] sm:$0xf] %vm231, 0
      %237 = vst.msk [vmem:[#allocation2 + $0x94] sm:$0xf] %vm231, 0
      %238 = vst.msk [vmem:[#allocation2 + $0x98] sm:$0xf] %vm231, 0
      %239 = vst.msk [vmem:[#allocation2 + $0x9c] sm:$0xf] %vm231, 0
      %v240 = vlaneseq
      %v241 = vshrl.u32 %v240, 7
      %v242 = vadd.s32 %v241, 8
      %v243 = vadd.s32 %v241, 16
      %v244 = vadd.s32 %v241, 24
      %v245 = vadd.s32 %v241, 32
      %v246 = vadd.s32 %v241, 40
      %v247 = vadd.s32 %v241, 48
      %v248 = vadd.s32 %v241, 56
      %v249 = vadd.s32 %v241, 64
      %v250 = vadd.s32 %v241, 72
      %v251 = vadd.s32 %v241, 80
      %v252 = vadd.s32 %v241, 88
      %v253 = vadd.s32 %v241, 96
      %v254 = vadd.s32 %v241, 104
      %v255 = vadd.s32 %v241, 112
      %v256 = vadd.s32 %v241, 120
      %v257 = vadd.s32 %v241, 128
      %v258 = vadd.s32 %v241, 136
      %v259 = vadd.s32 %v241, 144
      %v260 = vadd.s32 %v241, 152
      %v261 = vadd.s32 %v241, 160
      %v262 = vadd.s32 %v241, 168
      %v263 = vadd.s32 %v241, 176
      %v264 = vadd.s32 %v241, 184
      %v265 = vadd.s32 %v241, 192
      %v266 = vadd.s32 %v241, 200
      %v267 = vadd.s32 %v241, 208
      %v268 = vadd.s32 %v241, 216
      %v269 = vadd.s32 %v241, 224
      %v270 = vadd.s32 %v241, 232
      %v271 = vadd.s32 %v241, 240
      %v272 = vadd.s32 %v241, 248
      %vm273 = vcmp.lt.s32.totalorder %v241, 0
      %v274 = vsub.s32 0, %v241
      %v275 = vsel %vm273, %v274, %v241
      %v276 = vshrl.u32 %v275, 4
      %v277 = vand.u32 %v275, 15
      %v278 = vsub.s32 0, %v277
      %v279 = vsel %vm273, %v278, %v277
      %vm280 = vcmp.lt.s32.totalorder %v242, 0
      %v281 = vsub.s32 0, %v242
      %v282 = vsel %vm280, %v281, %v242
      %v283 = vshrl.u32 %v282, 4
      %v284 = vand.u32 %v282, 15
      %v285 = vsub.s32 0, %v284
      %v286 = vsel %vm280, %v285, %v284
      %vm287 = vcmp.lt.s32.totalorder %v243, 0
      %v288 = vsub.s32 0, %v243
      %v289 = vsel %vm287, %v288, %v243
      %v290 = vshrl.u32 %v289, 4
      %v291 = vand.u32 %v289, 15
      %v292 = vsub.s32 0, %v291
      %v293 = vsel %vm287, %v292, %v291
      %vm294 = vcmp.lt.s32.totalorder %v244, 0
      %v295 = vsub.s32 0, %v244
      %v296 = vsel %vm294, %v295, %v244
      %v297 = vshrl.u32 %v296, 4
      %v298 = vand.u32 %v296, 15
      %v299 = vsub.s32 0, %v298
      %v300 = vsel %vm294, %v299, %v298
      %vm301 = vcmp.lt.s32.totalorder %v245, 0
      %v302 = vsub.s32 0, %v245
      %v303 = vsel %vm301, %v302, %v245
      %v304 = vshrl.u32 %v303, 4
      %v305 = vand.u32 %v303, 15
      %v306 = vsub.s32 0, %v305
      %v307 = vsel %vm301, %v306, %v305
      %vm308 = vcmp.lt.s32.totalorder %v246, 0
      %v309 = vsub.s32 0, %v246
      %v310 = vsel %vm308, %v309, %v246
      %v311 = vshrl.u32 %v310, 4
      %v312 = vand.u32 %v310, 15
      %v313 = vsub.s32 0, %v312
      %v314 = vsel %vm308, %v313, %v312
      %vm315 = vcmp.lt.s32.totalorder %v247, 0
      %v316 = vsub.s32 0, %v247
      %v317 = vsel %vm315, %v316, %v247
      %v318 = vshrl.u32 %v317, 4
      %v319 = vand.u32 %v317, 15
      %v320 = vsub.s32 0, %v319
      %v321 = vsel %vm315, %v320, %v319
      %vm322 = vcmp.lt.s32.totalorder %v248, 0
      %v323 = vsub.s32 0, %v248
      %v324 = vsel %vm322, %v323, %v248
      %v325 = vshrl.u32 %v324, 4
      %v326 = vand.u32 %v324, 15
      %v327 = vsub.s32 0, %v326
      %v328 = vsel %vm322, %v327, %v326
      %vm329 = vcmp.lt.s32.totalorder %v249, 0
      %v330 = vsub.s32 0, %v249
      %v331 = vsel %vm329, %v330, %v249
      %v332 = vshrl.u32 %v331, 4
      %v333 = vand.u32 %v331, 15
      %v334 = vsub.s32 0, %v333
      %v335 = vsel %vm329, %v334, %v333
      %vm336 = vcmp.lt.s32.totalorder %v250, 0
      %v337 = vsub.s32 0, %v250
      %v338 = vsel %vm336, %v337, %v250
      %v339 = vshrl.u32 %v338, 4
      %v340 = vand.u32 %v338, 15
      %v341 = vsub.s32 0, %v340
      %v342 = vsel %vm336, %v341, %v340
      %vm343 = vcmp.lt.s32.totalorder %v251, 0
      %v344 = vsub.s32 0, %v251
      %v345 = vsel %vm343, %v344, %v251
      %v346 = vshrl.u32 %v345, 4
      %v347 = vand.u32 %v345, 15
      %v348 = vsub.s32 0, %v347
      %v349 = vsel %vm343, %v348, %v347
      %vm350 = vcmp.lt.s32.totalorder %v252, 0
      %v351 = vsub.s32 0, %v252
      %v352 = vsel %vm350, %v351, %v252
      %v353 = vshrl.u32 %v352, 4
      %v354 = vand.u32 %v352, 15
      %v355 = vsub.s32 0, %v354
      %v356 = vsel %vm350, %v355, %v354
      %vm357 = vcmp.lt.s32.totalorder %v253, 0
      %v358 = vsub.s32 0, %v253
      %v359 = vsel %vm357, %v358, %v253
      %v360 = vshrl.u32 %v359, 4
      %v361 = vand.u32 %v359, 15
      %v362 = vsub.s32 0, %v361
      %v363 = vsel %vm357, %v362, %v361
      %vm364 = vcmp.lt.s32.totalorder %v254, 0
      %v365 = vsub.s32 0, %v254
      %v366 = vsel %vm364, %v365, %v254
      %v367 = vshrl.u32 %v366, 4
      %v368 = vand.u32 %v366, 15
      %v369 = vsub.s32 0, %v368
      %v370 = vsel %vm364, %v369, %v368
      %vm371 = vcmp.lt.s32.totalorder %v255, 0
      %v372 = vsub.s32 0, %v255
      %v373 = vsel %vm371, %v372, %v255
      %v374 = vshrl.u32 %v373, 4
      %v375 = vand.u32 %v373, 15
      %v376 = vsub.s32 0, %v375
      %v377 = vsel %vm371, %v376, %v375
      %vm378 = vcmp.lt.s32.totalorder %v256, 0
      %v379 = vsub.s32 0, %v256
      %v380 = vsel %vm378, %v379, %v256
      %v381 = vshrl.u32 %v380, 4
      %v382 = vand.u32 %v380, 15
      %v383 = vsub.s32 0, %v382
      %v384 = vsel %vm378, %v383, %v382
      %vm385 = vcmp.lt.s32.totalorder %v257, 0
      %v386 = vsub.s32 0, %v257
      %v387 = vsel %vm385, %v386, %v257
      %v388 = vshrl.u32 %v387, 4
      %v389 = vand.u32 %v387, 15
      %v390 = vsub.s32 0, %v389
      %v391 = vsel %vm385, %v390, %v389
      %vm392 = vcmp.lt.s32.totalorder %v258, 0
      %v393 = vsub.s32 0, %v258
      %v394 = vsel %vm392, %v393, %v258
      %v395 = vshrl.u32 %v394, 4
      %v396 = vand.u32 %v394, 15
      %v397 = vsub.s32 0, %v396
      %v398 = vsel %vm392, %v397, %v396
      %vm399 = vcmp.lt.s32.totalorder %v259, 0
      %v400 = vsub.s32 0, %v259
      %v401 = vsel %vm399, %v400, %v259
      %v402 = vshrl.u32 %v401, 4
      %v403 = vand.u32 %v401, 15
      %v404 = vsub.s32 0, %v403
      %v405 = vsel %vm399, %v404, %v403
      %vm406 = vcmp.lt.s32.totalorder %v260, 0
      %v407 = vsub.s32 0, %v260
      %v408 = vsel %vm406, %v407, %v260
      %v409 = vshrl.u32 %v408, 4
      %v410 = vand.u32 %v408, 15
      %v411 = vsub.s32 0, %v410
      %v412 = vsel %vm406, %v411, %v410
      %vm413 = vcmp.lt.s32.totalorder %v261, 0
      %v414 = vsub.s32 0, %v261
      %v415 = vsel %vm413, %v414, %v261
      %v416 = vshrl.u32 %v415, 4
      %v417 = vand.u32 %v415, 15
      %v418 = vsub.s32 0, %v417
      %v419 = vsel %vm413, %v418, %v417
      %vm420 = vcmp.lt.s32.totalorder %v262, 0
      %v421 = vsub.s32 0, %v262
      %v422 = vsel %vm420, %v421, %v262
      %v423 = vshrl.u32 %v422, 4
      %v424 = vand.u32 %v422, 15
      %v425 = vsub.s32 0, %v424
      %v426 = vsel %vm420, %v425, %v424
      %vm427 = vcmp.lt.s32.totalorder %v263, 0
      %v428 = vsub.s32 0, %v263
      %v429 = vsel %vm427, %v428, %v263
      %v430 = vshrl.u32 %v429, 4
      %v431 = vand.u32 %v429, 15
      %v432 = vsub.s32 0, %v431
      %v433 = vsel %vm427, %v432, %v431
      %vm434 = vcmp.lt.s32.totalorder %v264, 0
      %v435 = vsub.s32 0, %v264
      %v436 = vsel %vm434, %v435, %v264
      %v437 = vshrl.u32 %v436, 4
      %v438 = vand.u32 %v436, 15
      %v439 = vsub.s32 0, %v438
      %v440 = vsel %vm434, %v439, %v438
      %vm441 = vcmp.lt.s32.totalorder %v265, 0
      %v442 = vsub.s32 0, %v265
      %v443 = vsel %vm441, %v442, %v265
      %v444 = vshrl.u32 %v443, 4
      %v445 = vand.u32 %v443, 15
      %v446 = vsub.s32 0, %v445
      %v447 = vsel %vm441, %v446, %v445
      %vm448 = vcmp.lt.s32.totalorder %v266, 0
      %v449 = vsub.s32 0, %v266
      %v450 = vsel %vm448, %v449, %v266
      %v451 = vshrl.u32 %v450, 4
      %v452 = vand.u32 %v450, 15
      %v453 = vsub.s32 0, %v452
      %v454 = vsel %vm448, %v453, %v452
      %vm455 = vcmp.lt.s32.totalorder %v267, 0
      %v456 = vsub.s32 0, %v267
      %v457 = vsel %vm455, %v456, %v267
      %v458 = vshrl.u32 %v457, 4
      %v459 = vand.u32 %v457, 15
      %v460 = vsub.s32 0, %v459
      %v461 = vsel %vm455, %v460, %v459
      %vm462 = vcmp.lt.s32.totalorder %v268, 0
      %v463 = vsub.s32 0, %v268
      %v464 = vsel %vm462, %v463, %v268
      %v465 = vshrl.u32 %v464, 4
      %v466 = vand.u32 %v464, 15
      %v467 = vsub.s32 0, %v466
      %v468 = vsel %vm462, %v467, %v466
      %vm469 = vcmp.lt.s32.totalorder %v269, 0
      %v470 = vsub.s32 0, %v269
      %v471 = vsel %vm469, %v470, %v269
      %v472 = vshrl.u32 %v471, 4
      %v473 = vand.u32 %v471, 15
      %v474 = vsub.s32 0, %v473
      %v475 = vsel %vm469, %v474, %v473
      %vm476 = vcmp.lt.s32.totalorder %v270, 0
      %v477 = vsub.s32 0, %v270
      %v478 = vsel %vm476, %v477, %v270
      %v479 = vshrl.u32 %v478, 4
      %v480 = vand.u32 %v478, 15
      %v481 = vsub.s32 0, %v480
      %v482 = vsel %vm476, %v481, %v480
      %vm483 = vcmp.lt.s32.totalorder %v271, 0
      %v484 = vsub.s32 0, %v271
      %v485 = vsel %vm483, %v484, %v271
      %v486 = vshrl.u32 %v485, 4
      %v487 = vand.u32 %v485, 15
      %v488 = vsub.s32 0, %v487
      %v489 = vsel %vm483, %v488, %v487
      %vm490 = vcmp.lt.s32.totalorder %v272, 0
      %v491 = vsub.s32 0, %v272
      %v492 = vsel %vm490, %v491, %v272
      %v493 = vshrl.u32 %v492, 4
      %v494 = vand.u32 %v492, 15
      %v495 = vsub.s32 0, %v494
      %v496 = vsel %vm490, %v495, %v494
      %vm497 = vcmp.ne.s32.totalorder %v279, 0
      %vm498 = vcmp.ne.s32.totalorder %v286, 0
      %vm499 = vcmp.ne.s32.totalorder %v293, 0
      %vm500 = vcmp.ne.s32.totalorder %v300, 0
      %vm501 = vcmp.ne.s32.totalorder %v307, 0
      %vm502 = vcmp.ne.s32.totalorder %v314, 0
      %vm503 = vcmp.ne.s32.totalorder %v321, 0
      %vm504 = vcmp.ne.s32.totalorder %v328, 0
      %vm505 = vcmp.ne.s32.totalorder %v335, 0
      %vm506 = vcmp.ne.s32.totalorder %v342, 0
      %vm507 = vcmp.ne.s32.totalorder %v349, 0
      %vm508 = vcmp.ne.s32.totalorder %v356, 0
      %vm509 = vcmp.ne.s32.totalorder %v363, 0
      %vm510 = vcmp.ne.s32.totalorder %v370, 0
      %vm511 = vcmp.ne.s32.totalorder %v377, 0
      %vm512 = vcmp.ne.s32.totalorder %v384, 0
      %vm513 = vcmp.ne.s32.totalorder %v391, 0
      %vm514 = vcmp.ne.s32.totalorder %v398, 0
      %vm515 = vcmp.ne.s32.totalorder %v405, 0
      %vm516 = vcmp.ne.s32.totalorder %v412, 0
      %vm517 = vcmp.ne.s32.totalorder %v419, 0
      %vm518 = vcmp.ne.s32.totalorder %v426, 0
      %vm519 = vcmp.ne.s32.totalorder %v433, 0
      %vm520 = vcmp.ne.s32.totalorder %v440, 0
      %vm521 = vcmp.ne.s32.totalorder %v447, 0
      %vm522 = vcmp.ne.s32.totalorder %v454, 0
      %vm523 = vcmp.ne.s32.totalorder %v461, 0
      %vm524 = vcmp.ne.s32.totalorder %v468, 0
      %vm525 = vcmp.ne.s32.totalorder %v475, 0
      %vm526 = vcmp.ne.s32.totalorder %v482, 0
      %vm527 = vcmp.ne.s32.totalorder %v489, 0
      %vm528 = vcmp.ne.s32.totalorder %v496, 0
      %vm529 = vcmp.lt.s32.totalorder %v279, 0
      %vm530 = vcmp.lt.s32.totalorder %v286, 0
      %vm531 = vcmp.lt.s32.totalorder %v293, 0
      %vm532 = vcmp.lt.s32.totalorder %v300, 0
      %vm533 = vcmp.lt.s32.totalorder %v307, 0
      %vm534 = vcmp.lt.s32.totalorder %v314, 0
      %vm535 = vcmp.lt.s32.totalorder %v321, 0
      %vm536 = vcmp.lt.s32.totalorder %v328, 0
      %vm537 = vcmp.lt.s32.totalorder %v335, 0
      %vm538 = vcmp.lt.s32.totalorder %v342, 0
      %vm539 = vcmp.lt.s32.totalorder %v349, 0
      %vm540 = vcmp.lt.s32.totalorder %v356, 0
      %vm541 = vcmp.lt.s32.totalorder %v363, 0
      %vm542 = vcmp.lt.s32.totalorder %v370, 0
      %vm543 = vcmp.lt.s32.totalorder %v377, 0
      %vm544 = vcmp.lt.s32.totalorder %v384, 0
      %vm545 = vcmp.lt.s32.totalorder %v391, 0
      %vm546 = vcmp.lt.s32.totalorder %v398, 0
      %vm547 = vcmp.lt.s32.totalorder %v405, 0
      %vm548 = vcmp.lt.s32.totalorder %v412, 0
      %vm549 = vcmp.lt.s32.totalorder %v419, 0
      %vm550 = vcmp.lt.s32.totalorder %v426, 0
      %vm551 = vcmp.lt.s32.totalorder %v433, 0
      %vm552 = vcmp.lt.s32.totalorder %v440, 0
      %vm553 = vcmp.lt.s32.totalorder %v447, 0
      %vm554 = vcmp.lt.s32.totalorder %v454, 0
      %vm555 = vcmp.lt.s32.totalorder %v461, 0
      %vm556 = vcmp.lt.s32.totalorder %v468, 0
      %vm557 = vcmp.lt.s32.totalorder %v475, 0
      %vm558 = vcmp.lt.s32.totalorder %v482, 0
      %vm559 = vcmp.lt.s32.totalorder %v489, 0
      %vm560 = vcmp.lt.s32.totalorder %v496, 0
      %vm561 = vmand %vm529, %vm497
      %vm562 = vmand %vm530, %vm498
      %vm563 = vmand %vm531, %vm499
      %vm564 = vmand %vm532, %vm500
      %vm565 = vmand %vm533, %vm501
      %vm566 = vmand %vm534, %vm502
      %vm567 = vmand %vm535, %vm503
      %vm568 = vmand %vm536, %vm504
      %vm569 = vmand %vm537, %vm505
      %vm570 = vmand %vm538, %vm506
      %vm571 = vmand %vm539, %vm507
      %vm572 = vmand %vm540, %vm508
      %vm573 = vmand %vm541, %vm509
      %vm574 = vmand %vm542, %vm510
      %vm575 = vmand %vm543, %vm511
      %vm576 = vmand %vm544, %vm512
      %vm577 = vmand %vm545, %vm513
      %vm578 = vmand %vm546, %vm514
      %vm579 = vmand %vm547, %vm515
      %vm580 = vmand %vm548, %vm516
      %vm581 = vmand %vm549, %vm517
      %vm582 = vmand %vm550, %vm518
      %vm583 = vmand %vm551, %vm519
      %vm584 = vmand %vm552, %vm520
      %vm585 = vmand %vm553, %vm521
      %vm586 = vmand %vm554, %vm522
      %vm587 = vmand %vm555, %vm523
      %vm588 = vmand %vm556, %vm524
      %vm589 = vmand %vm557, %vm525
      %vm590 = vmand %vm558, %vm526
      %vm591 = vmand %vm559, %vm527
      %vm592 = vmand %vm560, %vm528
      %v593 = vadd.s32 %v279, 16
      %v594 = vadd.s32 %v286, 16
      %v595 = vadd.s32 %v293, 16
      %v596 = vadd.s32 %v300, 16
      %v597 = vadd.s32 %v307, 16
      %v598 = vadd.s32 %v314, 16
      %v599 = vadd.s32 %v321, 16
      %v600 = vadd.s32 %v328, 16
      %v601 = vadd.s32 %v335, 16
      %v602 = vadd.s32 %v342, 16
      %v603 = vadd.s32 %v349, 16
      %v604 = vadd.s32 %v356, 16
      %v605 = vadd.s32 %v363, 16
      %v606 = vadd.s32 %v370, 16
      %v607 = vadd.s32 %v377, 16
      %v608 = vadd.s32 %v384, 16
      %v609 = vadd.s32 %v391, 16
      %v610 = vadd.s32 %v398, 16
      %v611 = vadd.s32 %v405, 16
      %v612 = vadd.s32 %v412, 16
      %v613 = vadd.s32 %v419, 16
      %v614 = vadd.s32 %v426, 16
      %v615 = vadd.s32 %v433, 16
      %v616 = vadd.s32 %v440, 16
      %v617 = vadd.s32 %v447, 16
      %v618 = vadd.s32 %v454, 16
      %v619 = vadd.s32 %v461, 16
      %v620 = vadd.s32 %v468, 16
      %v621 = vadd.s32 %v475, 16
      %v622 = vadd.s32 %v482, 16
      %v623 = vadd.s32 %v489, 16
      %v624 = vadd.s32 %v496, 16
      %v625 = vsel %vm561, %v593, %v279
      %v626 = vsel %vm562, %v594, %v286
      %v627 = vsel %vm563, %v595, %v293
      %v628 = vsel %vm564, %v596, %v300
      %v629 = vsel %vm565, %v597, %v307
      %v630 = vsel %vm566, %v598, %v314
      %v631 = vsel %vm567, %v599, %v321
      %v632 = vsel %vm568, %v600, %v328
      %v633 = vsel %vm569, %v601, %v335
      %v634 = vsel %vm570, %v602, %v342
      %v635 = vsel %vm571, %v603, %v349
      %v636 = vsel %vm572, %v604, %v356
      %v637 = vsel %vm573, %v605, %v363
      %v638 = vsel %vm574, %v606, %v370
      %v639 = vsel %vm575, %v607, %v377
      %v640 = vsel %vm576, %v608, %v384
      %v641 = vsel %vm577, %v609, %v391
      %v642 = vsel %vm578, %v610, %v398
      %v643 = vsel %vm579, %v611, %v405
      %v644 = vsel %vm580, %v612, %v412
      %v645 = vsel %vm581, %v613, %v419
      %v646 = vsel %vm582, %v614, %v426
      %v647 = vsel %vm583, %v615, %v433
      %v648 = vsel %vm584, %v616, %v440
      %v649 = vsel %vm585, %v617, %v447
      %v650 = vsel %vm586, %v618, %v454
      %v651 = vsel %vm587, %v619, %v461
      %v652 = vsel %vm588, %v620, %v468
      %v653 = vsel %vm589, %v621, %v475
      %v654 = vsel %vm590, %v622, %v482
      %v655 = vsel %vm591, %v623, %v489
      %v656 = vsel %vm592, %v624, %v496
      %vm657 = vcmp.ne.s32.totalorder %v625, 0
      %vm658 = vcmp.ne.s32.totalorder %v626, 0
      %vm659 = vcmp.ne.s32.totalorder %v627, 0
      %vm660 = vcmp.ne.s32.totalorder %v628, 0
      %vm661 = vcmp.ne.s32.totalorder %v629, 0
      %vm662 = vcmp.ne.s32.totalorder %v630, 0
      %vm663 = vcmp.ne.s32.totalorder %v631, 0
      %vm664 = vcmp.ne.s32.totalorder %v632, 0
      %vm665 = vcmp.ne.s32.totalorder %v633, 0
      %vm666 = vcmp.ne.s32.totalorder %v634, 0
      %vm667 = vcmp.ne.s32.totalorder %v635, 0
      %vm668 = vcmp.ne.s32.totalorder %v636, 0
      %vm669 = vcmp.ne.s32.totalorder %v637, 0
      %vm670 = vcmp.ne.s32.totalorder %v638, 0
      %vm671 = vcmp.ne.s32.totalorder %v639, 0
      %vm672 = vcmp.ne.s32.totalorder %v640, 0
      %vm673 = vcmp.ne.s32.totalorder %v641, 0
      %vm674 = vcmp.ne.s32.totalorder %v642, 0
      %vm675 = vcmp.ne.s32.totalorder %v643, 0
      %vm676 = vcmp.ne.s32.totalorder %v644, 0
      %vm677 = vcmp.ne.s32.totalorder %v645, 0
      %vm678 = vcmp.ne.s32.totalorder %v646, 0
      %vm679 = vcmp.ne.s32.totalorder %v647, 0
      %vm680 = vcmp.ne.s32.totalorder %v648, 0
      %vm681 = vcmp.ne.s32.totalorder %v649, 0
      %vm682 = vcmp.ne.s32.totalorder %v650, 0
      %vm683 = vcmp.ne.s32.totalorder %v651, 0
      %vm684 = vcmp.ne.s32.totalorder %v652, 0
      %vm685 = vcmp.ne.s32.totalorder %v653, 0
      %vm686 = vcmp.ne.s32.totalorder %v654, 0
      %vm687 = vcmp.ne.s32.totalorder %v655, 0
      %vm688 = vcmp.ne.s32.totalorder %v656, 0
      %vm689 = vcmp.ne.s32.totalorder %v625, 15
      %vm690 = vcmp.ne.s32.totalorder %v626, 15
      %vm691 = vcmp.ne.s32.totalorder %v627, 15
      %vm692 = vcmp.ne.s32.totalorder %v628, 15
      %vm693 = vcmp.ne.s32.totalorder %v629, 15
      %vm694 = vcmp.ne.s32.totalorder %v630, 15
      %vm695 = vcmp.ne.s32.totalorder %v631, 15
      %vm696 = vcmp.ne.s32.totalorder %v632, 15
      %vm697 = vcmp.ne.s32.totalorder %v633, 15
      %vm698 = vcmp.ne.s32.totalorder %v634, 15
      %vm699 = vcmp.ne.s32.totalorder %v635, 15
      %vm700 = vcmp.ne.s32.totalorder %v636, 15
      %vm701 = vcmp.ne.s32.totalorder %v637, 15
      %vm702 = vcmp.ne.s32.totalorder %v638, 15
      %vm703 = vcmp.ne.s32.totalorder %v639, 15
      %vm704 = vcmp.ne.s32.totalorder %v640, 15
      %vm705 = vcmp.ne.s32.totalorder %v641, 15
      %vm706 = vcmp.ne.s32.totalorder %v642, 15
      %vm707 = vcmp.ne.s32.totalorder %v643, 15
      %vm708 = vcmp.ne.s32.totalorder %v644, 15
      %vm709 = vcmp.ne.s32.totalorder %v645, 15
      %vm710 = vcmp.ne.s32.totalorder %v646, 15
      %vm711 = vcmp.ne.s32.totalorder %v647, 15
      %vm712 = vcmp.ne.s32.totalorder %v648, 15
      %vm713 = vcmp.ne.s32.totalorder %v649, 15
      %vm714 = vcmp.ne.s32.totalorder %v650, 15
      %vm715 = vcmp.ne.s32.totalorder %v651, 15
      %vm716 = vcmp.ne.s32.totalorder %v652, 15
      %vm717 = vcmp.ne.s32.totalorder %v653, 15
      %vm718 = vcmp.ne.s32.totalorder %v654, 15
      %vm719 = vcmp.ne.s32.totalorder %v655, 15
      %vm720 = vcmp.ne.s32.totalorder %v656, 15
      %v721 = vld [vmem:[%s220] sm:$0xf]
      %v722 = vld [vmem:[%s220 + $0x4] sm:$0xf]
      %v723 = vld [vmem:[%s220 + $0x8] sm:$0xf]
      %v724 = vld [vmem:[%s220 + $0xc] sm:$0xf]
      %v725 = vld [vmem:[%s220 + $0x10] sm:$0xf]
      %v726 = vld [vmem:[%s220 + $0x14] sm:$0xf]
      %v727 = vld [vmem:[%s220 + $0x18] sm:$0xf]
      %v728 = vld [vmem:[%s220 + $0x1c] sm:$0xf]
      %v729 = vld [vmem:[%s220 + $0x20] sm:$0xf]
      %v730 = vld [vmem:[%s220 + $0x24] sm:$0xf]
      %v731 = vld [vmem:[%s220 + $0x28] sm:$0xf]
      %v732 = vld [vmem:[%s220 + $0x2c] sm:$0xf]
      %v733 = vld [vmem:[%s220 + $0x30] sm:$0xf]
      %v734 = vld [vmem:[%s220 + $0x34] sm:$0xf]
      %v735 = vld [vmem:[%s220 + $0x38] sm:$0xf]
      %v736 = vld [vmem:[%s220 + $0x3c] sm:$0xf]
      %v737 = vld [vmem:[%s220 + $0x40] sm:$0xf]
      %v738 = vld [vmem:[%s220 + $0x44] sm:$0xf]
      %v739 = vld [vmem:[%s220 + $0x48] sm:$0xf]
      %v740 = vld [vmem:[%s220 + $0x4c] sm:$0xf]
      %v741 = vld [vmem:[%s220 + $0x50] sm:$0xf]
      %v742 = vld [vmem:[%s220 + $0x54] sm:$0xf]
      %v743 = vld [vmem:[%s220 + $0x58] sm:$0xf]
      %v744 = vld [vmem:[%s220 + $0x5c] sm:$0xf]
      %v745 = vld [vmem:[%s220 + $0x60] sm:$0xf]
      %v746 = vld [vmem:[%s220 + $0x64] sm:$0xf]
      %v747 = vld [vmem:[%s220 + $0x68] sm:$0xf]
      %v748 = vld [vmem:[%s220 + $0x6c] sm:$0xf]
      %v749 = vld [vmem:[%s220 + $0x70] sm:$0xf]
      %v750 = vld [vmem:[%s220 + $0x74] sm:$0xf]
      %v751 = vld [vmem:[%s220 + $0x78] sm:$0xf]
      %v752 = vld [vmem:[%s220 + $0x7c] sm:$0xf]
      %v753 = vunpack.c.l.bf16 %v721
      %v754 = vunpack.c.l.bf16 %v722
      %v755 = vunpack.c.l.bf16 %v723
      %v756 = vunpack.c.l.bf16 %v724
      %v757 = vunpack.c.l.bf16 %v725
      %v758 = vunpack.c.l.bf16 %v726
      %v759 = vunpack.c.l.bf16 %v727
      %v760 = vunpack.c.l.bf16 %v728
      %v761 = vunpack.c.l.bf16 %v729
      %v762 = vunpack.c.l.bf16 %v730
      %v763 = vunpack.c.l.bf16 %v731
      %v764 = vunpack.c.l.bf16 %v732
      %v765 = vunpack.c.l.bf16 %v733
      %v766 = vunpack.c.l.bf16 %v734
      %v767 = vunpack.c.l.bf16 %v735
      %v768 = vunpack.c.l.bf16 %v736
      %v769 = vunpack.c.l.bf16 %v737
      %v770 = vunpack.c.l.bf16 %v738
      %v771 = vunpack.c.l.bf16 %v739
      %v772 = vunpack.c.l.bf16 %v740
      %v773 = vunpack.c.l.bf16 %v741
      %v774 = vunpack.c.l.bf16 %v742
      %v775 = vunpack.c.l.bf16 %v743
      %v776 = vunpack.c.l.bf16 %v744
      %v777 = vunpack.c.l.bf16 %v745
      %v778 = vunpack.c.l.bf16 %v746
      %v779 = vunpack.c.l.bf16 %v747
      %v780 = vunpack.c.l.bf16 %v748
      %v781 = vunpack.c.l.bf16 %v749
      %v782 = vunpack.c.l.bf16 %v750
      %v783 = vunpack.c.l.bf16 %v751
      %v784 = vunpack.c.l.bf16 %v752
      %785 = vst.msk [vmem:[#allocation2 + $0x10] sm:$0xf] %vm231, %v721
      %786 = vst.msk [vmem:[#allocation2 + $0x14] sm:$0xf] %vm231, %v722
      %787 = vst.msk [vmem:[#allocation2 + $0x18] sm:$0xf] %vm231, %v723
      %788 = vst.msk [vmem:[#allocation2 + $0x1c] sm:$0xf] %vm231, %v724
      %789 = vst.msk [vmem:[#allocation2 + $0x20] sm:$0xf] %vm231, %v725
      %790 = vst.msk [vmem:[#allocation2 + $0x24] sm:$0xf] %vm231, %v726
      %791 = vst.msk [vmem:[#allocation2 + $0x28] sm:$0xf] %vm231, %v727
      %792 = vst.msk [vmem:[#allocation2 + $0x2c] sm:$0xf] %vm231, %v728
      %793 = vst.msk [vmem:[#allocation2 + $0x30] sm:$0xf] %vm231, %v729
      %794 = vst.msk [vmem:[#allocation2 + $0x34] sm:$0xf] %vm231, %v730
      %795 = vst.msk [vmem:[#allocation2 + $0x38] sm:$0xf] %vm231, %v731
      %796 = vst.msk [vmem:[#allocation2 + $0x3c] sm:$0xf] %vm231, %v732
      %797 = vst.msk [vmem:[#allocation2 + $0x40] sm:$0xf] %vm231, %v733
      %798 = vst.msk [vmem:[#allocation2 + $0x44] sm:$0xf] %vm231, %v734
      %799 = vst.msk [vmem:[#allocation2 + $0x48] sm:$0xf] %vm231, %v735
      %800 = vst.msk [vmem:[#allocation2 + $0x4c] sm:$0xf] %vm231, %v736
      %801 = vst.msk [vmem:[#allocation2 + $0x50] sm:$0xf] %vm231, %v737
      %802 = vst.msk [vmem:[#allocation2 + $0x54] sm:$0xf] %vm231, %v738
      %803 = vst.msk [vmem:[#allocation2 + $0x58] sm:$0xf] %vm231, %v739
      %804 = vst.msk [vmem:[#allocation2 + $0x5c] sm:$0xf] %vm231, %v740
      %805 = vst.msk [vmem:[#allocation2 + $0x60] sm:$0xf] %vm231, %v741
      %806 = vst.msk [vmem:[#allocation2 + $0x64] sm:$0xf] %vm231, %v742
      %807 = vst.msk [vmem:[#allocation2 + $0x68] sm:$0xf] %vm231, %v743
      %808 = vst.msk [vmem:[#allocation2 + $0x6c] sm:$0xf] %vm231, %v744
      %809 = vst.msk [vmem:[#allocation2 + $0x70] sm:$0xf] %vm231, %v745
      %810 = vst.msk [vmem:[#allocation2 + $0x74] sm:$0xf] %vm231, %v746
      %811 = vst.msk [vmem:[#allocation2 + $0x78] sm:$0xf] %vm231, %v747
      %812 = vst.msk [vmem:[#allocation2 + $0x7c] sm:$0xf] %vm231, %v748
      %813 = vst.msk [vmem:[#allocation2 + $0x80] sm:$0xf] %vm231, %v749
      %814 = vst.msk [vmem:[#allocation2 + $0x84] sm:$0xf] %vm231, %v750
      %815 = vst.msk [vmem:[#allocation2 + $0x88] sm:$0xf] %vm231, %v751
      %816 = vst.msk [vmem:[#allocation2 + $0x8c] sm:$0xf] %vm231, %v752
      %v817 = vld [vmem:[%s1] sm:$0xf]
      %v818 = vld [vmem:[%s1 + $0x4] sm:$0xf]
      %v819 = vld [vmem:[%s1 + $0x8] sm:$0xf]
      %v820 = vld [vmem:[%s1 + $0xc] sm:$0xf]
      %v821 = vld [vmem:[%s1 + $0x10] sm:$0xf]
      %v822 = vld [vmem:[%s1 + $0x14] sm:$0xf]
      %v823 = vld [vmem:[%s1 + $0x18] sm:$0xf]
      %v824 = vld [vmem:[%s1 + $0x1c] sm:$0xf]
      %v825 = vld [vmem:[#allocation2 + $0x4] sm:$0x8]
      %v826 = vld [vmem:[#allocation2 + $0x8] sm:$0xf]
      %v827 = vld [vmem:[#allocation2 + $0xc] sm:$0xf]
      %v828 = vld [vmem:[#allocation2 + $0x10] sm:$0xf]
      %v829 = vld [vmem:[#allocation2 + $0x14] sm:$0xf]
      %v830 = vld [vmem:[#allocation2 + $0x18] sm:$0xf]
      %v831 = vld [vmem:[#allocation2 + $0x1c] sm:$0xf]
      %v832 = vld [vmem:[#allocation2 + $0x20] sm:$0xf]
      %v833 = vld [vmem:[#allocation2 + $0x24] sm:$0xf]
      %v834 = vld [vmem:[#allocation2 + $0x28] sm:$0xf]
      %v835 = vld [vmem:[#allocation2 + $0x2c] sm:$0xf]
      %v836 = vld [vmem:[#allocation2 + $0x30] sm:$0xf]
      %v837 = vld [vmem:[#allocation2 + $0x34] sm:$0xf]
      %v838 = vld [vmem:[#allocation2 + $0x38] sm:$0xf]
      %v839 = vld [vmem:[#allocation2 + $0x3c] sm:$0xf]
      %v840 = vld [vmem:[#allocation2 + $0x40] sm:$0xf]
      %v841 = vld [vmem:[#allocation2 + $0x44] sm:$0xf]
      %v842 = vld [vmem:[#allocation2 + $0x48] sm:$0xf]
      %v843 = vld [vmem:[#allocation2 + $0x4c] sm:$0xf]
      %v844 = vld [vmem:[#allocation2 + $0x50] sm:$0xf]
      %v845 = vld [vmem:[#allocation2 + $0x54] sm:$0xf]
      %v846 = vld [vmem:[#allocation2 + $0x58] sm:$0xf]
      %v847 = vld [vmem:[#allocation2 + $0x5c] sm:$0xf]
      %v848 = vld [vmem:[#allocation2 + $0x60] sm:$0xf]
      %v849 = vld [vmem:[#allocation2 + $0x64] sm:$0xf]
      %v850 = vld [vmem:[#allocation2 + $0x68] sm:$0xf]
      %v851 = vld [vmem:[#allocation2 + $0x6c] sm:$0xf]
      %v852 = vld [vmem:[#allocation2 + $0x70] sm:$0xf]
      %v853 = vld [vmem:[#allocation2 + $0x74] sm:$0xf]
      %v854 = vld [vmem:[#allocation2 + $0x78] sm:$0xf]
      %v855 = vld [vmem:[#allocation2 + $0x7c] sm:$0xf]
      %v856 = vld [vmem:[#allocation2 + $0x80] sm:$0xf]
      %v857 = vld [vmem:[#allocation2 + $0x84] sm:$0xf]
      %vm858 = vmpackc.low %vm657, %vm657
      %vm859 = vmpackc.low %vm658, %vm658
      %vm860 = vmpackc.low %vm659, %vm659
      %vm861 = vmpackc.low %vm660, %vm660
      %vm862 = vmpackc.low %vm661, %vm661
      %vm863 = vmpackc.low %vm662, %vm662
      %vm864 = vmpackc.low %vm663, %vm663
      %vm865 = vmpackc.low %vm664, %vm664
      %vm866 = vmpackc.low %vm665, %vm665
      %vm867 = vmpackc.low %vm666, %vm666
      %vm868 = vmpackc.low %vm667, %vm667
      %vm869 = vmpackc.low %vm668, %vm668
      %vm870 = vmpackc.low %vm669, %vm669
      %vm871 = vmpackc.low %vm670, %vm670
      %vm872 = vmpackc.low %vm671, %vm671
      %vm873 = vmpackc.low %vm672, %vm672
      %vm874 = vmpackc.low %vm673, %vm673
      %vm875 = vmpackc.low %vm674, %vm674
      %vm876 = vmpackc.low %vm675, %vm675
      %vm877 = vmpackc.low %vm676, %vm676
      %vm878 = vmpackc.low %vm677, %vm677
      %vm879 = vmpackc.low %vm678, %vm678
      %vm880 = vmpackc.low %vm679, %vm679
      %vm881 = vmpackc.low %vm680, %vm680
      %vm882 = vmpackc.low %vm681, %vm681
      %vm883 = vmpackc.low %vm682, %vm682
      %vm884 = vmpackc.low %vm683, %vm683
      %vm885 = vmpackc.low %vm684, %vm684
      %vm886 = vmpackc.low %vm685, %vm685
      %vm887 = vmpackc.low %vm686, %vm686
      %vm888 = vmpackc.low %vm687, %vm687
      %vm889 = vmpackc.low %vm688, %vm688
      %v890 = vsel %vm858, 65537, 0
      %v891 = vsel %vm859, 65537, 0
      %v892 = vsel %vm860, 65537, 0
      %v893 = vsel %vm861, 65537, 0
      %v894 = vsel %vm862, 65537, 0
      %v895 = vsel %vm863, 65537, 0
      %v896 = vsel %vm864, 65537, 0
      %v897 = vsel %vm865, 65537, 0
      %v898 = vsel %vm866, 65537, 0
      %v899 = vsel %vm867, 65537, 0
      %v900 = vsel %vm868, 65537, 0
      %v901 = vsel %vm869, 65537, 0
      %v902 = vsel %vm870, 65537, 0
      %v903 = vsel %vm871, 65537, 0
      %v904 = vsel %vm872, 65537, 0
      %v905 = vsel %vm873, 65537, 0
      %v906 = vsel %vm874, 65537, 0
      %v907 = vsel %vm875, 65537, 0
      %v908 = vsel %vm876, 65537, 0
      %v909 = vsel %vm877, 65537, 0
      %v910 = vsel %vm878, 65537, 0
      %v911 = vsel %vm879, 65537, 0
      %v912 = vsel %vm880, 65537, 0
      %v913 = vsel %vm881, 65537, 0
      %v914 = vsel %vm882, 65537, 0
      %v915 = vsel %vm883, 65537, 0
      %v916 = vsel %vm884, 65537, 0
      %v917 = vsel %vm885, 65537, 0
      %v918 = vsel %vm886, 65537, 0
      %v919 = vsel %vm887, 65537, 0
      %v920 = vsel %vm888, 65537, 0
      %v921 = vsel %vm889, 65537, 0
      %vm922 = vsmask.f32 3328
      %vm923 = vsmask.f32 7440
      %vm924 = vmor %vm922, %vm923
      %v926 = vshll.u32 %v890, 16
      %v928 = vrot.slane %v926, 5
      %v929 = vshrl.u32 %v890, 16
      %v931 = vrot.slane %v929, 4
      %v932 = vor.u32 %v931, %v928
      %v933 = vrot.slane %v932, 4
      %v935 = vshll.u32 %v891, 16
      %v937 = vrot.slane %v935, 5
      %v938 = vsel %vm924, %v933, %v937
      %v939 = vshrl.u32 %v891, 16
      %v941 = vrot.slane %v939, 4
      %v942 = vor.u32 %v941, %v937
      %v943 = vrot.slane %v942, 4
      %v945 = vshll.u32 %v892, 16
      %v947 = vrot.slane %v945, 5
      %v948 = vsel %vm924, %v943, %v947
      %v949 = vshrl.u32 %v892, 16
      %v951 = vrot.slane %v949, 4
      %v952 = vor.u32 %v951, %v947
      %v953 = vrot.slane %v952, 4
      %v955 = vshll.u32 %v893, 16
      %v957 = vrot.slane %v955, 5
      %v958 = vsel %vm924, %v953, %v957
      %v959 = vshrl.u32 %v893, 16
      %v961 = vrot.slane %v959, 4
      %v962 = vor.u32 %v961, %v957
      %v963 = vrot.slane %v962, 4
      %v965 = vshll.u32 %v894, 16
      %v967 = vrot.slane %v965, 5
      %v968 = vsel %vm924, %v963, %v967
      %v969 = vshrl.u32 %v894, 16
      %v971 = vrot.slane %v969, 4
      %v972 = vor.u32 %v971, %v967
      %v973 = vrot.slane %v972, 4
      %v975 = vshll.u32 %v895, 16
      %v977 = vrot.slane %v975, 5
      %v978 = vsel %vm924, %v973, %v977
      %v979 = vshrl.u32 %v895, 16
      %v981 = vrot.slane %v979, 4
      %v982 = vor.u32 %v981, %v977
      %v983 = vrot.slane %v982, 4
      %v985 = vshll.u32 %v896, 16
      %v987 = vrot.slane %v985, 5
      %v988 = vsel %vm924, %v983, %v987
      %v989 = vshrl.u32 %v896, 16
      %v991 = vrot.slane %v989, 4
      %v992 = vor.u32 %v991, %v987
      %v993 = vrot.slane %v992, 4
      %v995 = vshll.u32 %v897, 16
      %v997 = vrot.slane %v995, 5
      %v998 = vsel %vm924, %v993, %v997
      %v999 = vshrl.u32 %v897, 16
      %v1001 = vrot.slane %v999, 4
      %v1002 = vor.u32 %v1001, %v997
      %v1003 = vrot.slane %v1002, 4
      %v1005 = vshll.u32 %v898, 16
      %v1007 = vrot.slane %v1005, 5
      %v1008 = vsel %vm924, %v1003, %v1007
      %v1009 = vshrl.u32 %v898, 16
      %v1011 = vrot.slane %v1009, 4
      %v1012 = vor.u32 %v1011, %v1007
      %v1013 = vrot.slane %v1012, 4
      %v1015 = vshll.u32 %v899, 16
      %v1017 = vrot.slane %v1015, 5
      %v1018 = vsel %vm924, %v1013, %v1017
      %v1019 = vshrl.u32 %v899, 16
      %v1021 = vrot.slane %v1019, 4
      %v1022 = vor.u32 %v1021, %v1017
      %v1023 = vrot.slane %v1022, 4
      %v1025 = vshll.u32 %v900, 16
      %v1027 = vrot.slane %v1025, 5
      %v1028 = vsel %vm924, %v1023, %v1027
      %v1029 = vshrl.u32 %v900, 16
      %v1031 = vrot.slane %v1029, 4
      %v1032 = vor.u32 %v1031, %v1027
      %v1033 = vrot.slane %v1032, 4
      %v1035 = vshll.u32 %v901, 16
      %v1037 = vrot.slane %v1035, 5
      %v1038 = vsel %vm924, %v1033, %v1037
      %v1039 = vshrl.u32 %v901, 16
      %v1041 = vrot.slane %v1039, 4
      %v1042 = vor.u32 %v1041, %v1037
      %v1043 = vrot.slane %v1042, 4
      %v1045 = vshll.u32 %v902, 16
      %v1047 = vrot.slane %v1045, 5
      %v1048 = vsel %vm924, %v1043, %v1047
      %v1049 = vshrl.u32 %v902, 16
      %v1051 = vrot.slane %v1049, 4
      %v1052 = vor.u32 %v1051, %v1047
      %v1053 = vrot.slane %v1052, 4
      %v1055 = vshll.u32 %v903, 16
      %v1057 = vrot.slane %v1055, 5
      %v1058 = vsel %vm924, %v1053, %v1057
      %v1059 = vshrl.u32 %v903, 16
      %v1061 = vrot.slane %v1059, 4
      %v1062 = vor.u32 %v1061, %v1057
      %v1063 = vrot.slane %v1062, 4
      %v1065 = vshll.u32 %v904, 16
      %v1067 = vrot.slane %v1065, 5
      %v1068 = vsel %vm924, %v1063, %v1067
      %v1069 = vshrl.u32 %v904, 16
      %v1071 = vrot.slane %v1069, 4
      %v1072 = vor.u32 %v1071, %v1067
      %v1073 = vrot.slane %v1072, 4
      %v1075 = vshll.u32 %v905, 16
      %v1077 = vrot.slane %v1075, 5
      %v1078 = vsel %vm924, %v1073, %v1077
      %v1079 = vshrl.u32 %v905, 16
      %v1081 = vrot.slane %v1079, 4
      %v1082 = vor.u32 %v1081, %v1077
      %v1083 = vrot.slane %v1082, 4
      %v1085 = vshll.u32 %v906, 16
      %v1087 = vrot.slane %v1085, 5
      %v1088 = vsel %vm924, %v1083, %v1087
      %v1089 = vshrl.u32 %v906, 16
      %v1091 = vrot.slane %v1089, 4
      %v1092 = vor.u32 %v1091, %v1087
      %v1093 = vrot.slane %v1092, 4
      %v1095 = vshll.u32 %v907, 16
      %v1097 = vrot.slane %v1095, 5
      %v1098 = vsel %vm924, %v1093, %v1097
      %v1099 = vshrl.u32 %v907, 16
      %v1101 = vrot.slane %v1099, 4
      %v1102 = vor.u32 %v1101, %v1097
      %v1103 = vrot.slane %v1102, 4
      %v1105 = vshll.u32 %v908, 16
      %v1107 = vrot.slane %v1105, 5
      %v1108 = vsel %vm924, %v1103, %v1107
      %v1109 = vshrl.u32 %v908, 16
      %v1111 = vrot.slane %v1109, 4
      %v1112 = vor.u32 %v1111, %v1107
      %v1113 = vrot.slane %v1112, 4
      %v1115 = vshll.u32 %v909, 16
      %v1117 = vrot.slane %v1115, 5
      %v1118 = vsel %vm924, %v1113, %v1117
      %v1119 = vshrl.u32 %v909, 16
      %v1121 = vrot.slane %v1119, 4
      %v1122 = vor.u32 %v1121, %v1117
      %v1123 = vrot.slane %v1122, 4
      %v1125 = vshll.u32 %v910, 16
      %v1127 = vrot.slane %v1125, 5
      %v1128 = vsel %vm924, %v1123, %v1127
      %v1129 = vshrl.u32 %v910, 16
      %v1131 = vrot.slane %v1129, 4
      %v1132 = vor.u32 %v1131, %v1127
      %v1133 = vrot.slane %v1132, 4
      %v1135 = vshll.u32 %v911, 16
      %v1137 = vrot.slane %v1135, 5
      %v1138 = vsel %vm924, %v1133, %v1137
      %v1139 = vshrl.u32 %v911, 16
      %v1141 = vrot.slane %v1139, 4
      %v1142 = vor.u32 %v1141, %v1137
      %v1143 = vrot.slane %v1142, 4
      %v1145 = vshll.u32 %v912, 16
      %v1147 = vrot.slane %v1145, 5
      %v1148 = vsel %vm924, %v1143, %v1147
      %v1149 = vshrl.u32 %v912, 16
      %v1151 = vrot.slane %v1149, 4
      %v1152 = vor.u32 %v1151, %v1147
      %v1153 = vrot.slane %v1152, 4
      %v1155 = vshll.u32 %v913, 16
      %v1157 = vrot.slane %v1155, 5
      %v1158 = vsel %vm924, %v1153, %v1157
      %v1159 = vshrl.u32 %v913, 16
      %v1161 = vrot.slane %v1159, 4
      %v1162 = vor.u32 %v1161, %v1157
      %v1163 = vrot.slane %v1162, 4
      %v1165 = vshll.u32 %v914, 16
      %v1167 = vrot.slane %v1165, 5
      %v1168 = vsel %vm924, %v1163, %v1167
      %v1169 = vshrl.u32 %v914, 16
      %v1171 = vrot.slane %v1169, 4
      %v1172 = vor.u32 %v1171, %v1167
      %v1173 = vrot.slane %v1172, 4
      %v1175 = vshll.u32 %v915, 16
      %v1177 = vrot.slane %v1175, 5
      %v1178 = vsel %vm924, %v1173, %v1177
      %v1179 = vshrl.u32 %v915, 16
      %v1181 = vrot.slane %v1179, 4
      %v1182 = vor.u32 %v1181, %v1177
      %v1183 = vrot.slane %v1182, 4
      %v1185 = vshll.u32 %v916, 16
      %v1187 = vrot.slane %v1185, 5
      %v1188 = vsel %vm924, %v1183, %v1187
      %v1189 = vshrl.u32 %v916, 16
      %v1191 = vrot.slane %v1189, 4
      %v1192 = vor.u32 %v1191, %v1187
      %v1193 = vrot.slane %v1192, 4
      %v1195 = vshll.u32 %v917, 16
      %v1197 = vrot.slane %v1195, 5
      %v1198 = vsel %vm924, %v1193, %v1197
      %v1199 = vshrl.u32 %v917, 16
      %v1201 = vrot.slane %v1199, 4
      %v1202 = vor.u32 %v1201, %v1197
      %v1203 = vrot.slane %v1202, 4
      %v1205 = vshll.u32 %v918, 16
      %v1207 = vrot.slane %v1205, 5
      %v1208 = vsel %vm924, %v1203, %v1207
      %v1209 = vshrl.u32 %v918, 16
      %v1211 = vrot.slane %v1209, 4
      %v1212 = vor.u32 %v1211, %v1207
      %v1213 = vrot.slane %v1212, 4
      %v1215 = vshll.u32 %v919, 16
      %v1217 = vrot.slane %v1215, 5
      %v1218 = vsel %vm924, %v1213, %v1217
      %v1219 = vshrl.u32 %v919, 16
      %v1221 = vrot.slane %v1219, 4
      %v1222 = vor.u32 %v1221, %v1217
      %v1223 = vrot.slane %v1222, 4
      %v1225 = vshll.u32 %v920, 16
      %v1227 = vrot.slane %v1225, 5
      %v1228 = vsel %vm924, %v1223, %v1227
      %v1229 = vshrl.u32 %v920, 16
      %v1231 = vrot.slane %v1229, 4
      %v1232 = vor.u32 %v1231, %v1227
      %v1233 = vrot.slane %v1232, 4
      %v1235 = vshll.u32 %v921, 16
      %v1237 = vrot.slane %v1235, 5
      %v1238 = vsel %vm924, %v1233, %v1237
      %v1239 = vshrl.u32 %v921, 16
      %v1241 = vrot.slane %v1239, 4
      %v1242 = vor.u32 %v1241, %v1237
      %v1243 = vrot.slane %v1242, 4
      %vm1244 = vcmp.ne.s16.totalorder %v928, 0
      %vm1245 = vcmp.ne.s16.totalorder %v938, 0
      %vm1246 = vcmp.ne.s16.totalorder %v948, 0
      %vm1247 = vcmp.ne.s16.totalorder %v958, 0
      %vm1248 = vcmp.ne.s16.totalorder %v968, 0
      %vm1249 = vcmp.ne.s16.totalorder %v978, 0
      %vm1250 = vcmp.ne.s16.totalorder %v988, 0
      %vm1251 = vcmp.ne.s16.totalorder %v998, 0
      %vm1252 = vcmp.ne.s16.totalorder %v1008, 0
      %vm1253 = vcmp.ne.s16.totalorder %v1018, 0
      %vm1254 = vcmp.ne.s16.totalorder %v1028, 0
      %vm1255 = vcmp.ne.s16.totalorder %v1038, 0
      %vm1256 = vcmp.ne.s16.totalorder %v1048, 0
      %vm1257 = vcmp.ne.s16.totalorder %v1058, 0
      %vm1258 = vcmp.ne.s16.totalorder %v1068, 0
      %vm1259 = vcmp.ne.s16.totalorder %v1078, 0
      %vm1260 = vcmp.ne.s16.totalorder %v1088, 0
      %vm1261 = vcmp.ne.s16.totalorder %v1098, 0
      %vm1262 = vcmp.ne.s16.totalorder %v1108, 0
      %vm1263 = vcmp.ne.s16.totalorder %v1118, 0
      %vm1264 = vcmp.ne.s16.totalorder %v1128, 0
      %vm1265 = vcmp.ne.s16.totalorder %v1138, 0
      %vm1266 = vcmp.ne.s16.totalorder %v1148, 0
      %vm1267 = vcmp.ne.s16.totalorder %v1158, 0
      %vm1268 = vcmp.ne.s16.totalorder %v1168, 0
      %vm1269 = vcmp.ne.s16.totalorder %v1178, 0
      %vm1270 = vcmp.ne.s16.totalorder %v1188, 0
      %vm1271 = vcmp.ne.s16.totalorder %v1198, 0
      %vm1272 = vcmp.ne.s16.totalorder %v1208, 0
      %vm1273 = vcmp.ne.s16.totalorder %v1218, 0
      %vm1274 = vcmp.ne.s16.totalorder %v1228, 0
      %vm1275 = vcmp.ne.s16.totalorder %v1238, 0
      %vm1276 = vcmp.ne.s16.totalorder %v1243, 0
      %v1277 = vsel %vm1244, %v825, 0
      %v1278 = vsel %vm1245, %v826, 0
      %v1279 = vsel %vm1246, %v827, 0
      %v1280 = vsel %vm1247, %v828, 0
      %v1281 = vsel %vm1248, %v829, 0
      %v1282 = vsel %vm1249, %v830, 0
      %v1283 = vsel %vm1250, %v831, 0
      %v1284 = vsel %vm1251, %v832, 0
      %v1285 = vsel %vm1252, %v833, 0
      %v1286 = vsel %vm1253, %v834, 0
      %v1287 = vsel %vm1254, %v835, 0
      %v1288 = vsel %vm1255, %v836, 0
      %v1289 = vsel %vm1256, %v837, 0
      %v1290 = vsel %vm1257, %v838, 0
      %v1291 = vsel %vm1258, %v839, 0
      %v1292 = vsel %vm1259, %v840, 0
      %v1293 = vsel %vm1260, %v841, 0
      %v1294 = vsel %vm1261, %v842, 0
      %v1295 = vsel %vm1262, %v843, 0
      %v1296 = vsel %vm1263, %v844, 0
      %v1297 = vsel %vm1264, %v845, 0
      %v1298 = vsel %vm1265, %v846, 0
      %v1299 = vsel %vm1266, %v847, 0
      %v1300 = vsel %vm1267, %v848, 0
      %v1301 = vsel %vm1268, %v849, 0
      %v1302 = vsel %vm1269, %v850, 0
      %v1303 = vsel %vm1270, %v851, 0
      %v1304 = vsel %vm1271, %v852, 0
      %v1305 = vsel %vm1272, %v853, 0
      %v1306 = vsel %vm1273, %v854, 0
      %v1307 = vsel %vm1274, %v855, 0
      %v1308 = vsel %vm1275, %v856, 0
      %v1309 = vsel %vm1276, %v857, 0
      %v1310 = vld [vmem:[%s2] sm:$0xf]
      %v1311 = vld [vmem:[%s2 + $0x4] sm:$0xf]
      %v1345 = vunpack.c.l.b16 %v1277
      %v1346 = vunpack.c.l.b16 %v1278
      %v1347 = vunpack.c.l.b16 %v1279
      %v1348 = vunpack.c.l.b16 %v1280
      %v1349 = vunpack.c.l.b16 %v1281
      %v1350 = vunpack.c.l.b16 %v1282
      %v1351 = vunpack.c.l.b16 %v1283
      %v1352 = vunpack.c.l.b16 %v1284
      %v1353 = vunpack.c.l.b16 %v1285
      %v1354 = vunpack.c.l.b16 %v1286
      %v1355 = vunpack.c.l.b16 %v1287
      %v1356 = vunpack.c.l.b16 %v1288
      %v1357 = vunpack.c.l.b16 %v1289
      %v1358 = vunpack.c.l.b16 %v1290
      %v1359 = vunpack.c.l.b16 %v1291
      %v1360 = vunpack.c.l.b16 %v1292
      %v1361 = vunpack.c.l.b16 %v1293
      %v1362 = vunpack.c.l.b16 %v1294
      %v1363 = vunpack.c.l.b16 %v1295
      %v1364 = vunpack.c.l.b16 %v1296
      %v1365 = vunpack.c.l.b16 %v1297
      %v1366 = vunpack.c.l.b16 %v1298
      %v1367 = vunpack.c.l.b16 %v1299
      %v1368 = vunpack.c.l.b16 %v1300
      %v1369 = vunpack.c.l.b16 %v1301
      %v1370 = vunpack.c.l.b16 %v1302
      %v1371 = vunpack.c.l.b16 %v1303
      %v1372 = vunpack.c.l.b16 %v1304
      %v1373 = vunpack.c.l.b16 %v1305
      %v1374 = vunpack.c.l.b16 %v1306
      %v1375 = vunpack.c.l.b16 %v1307
      %v1376 = vunpack.c.l.b16 %v1308
      %v1377 = vunpack.c.l.b16 %v1309
      %v1378 = vpack.c.b16 %v1346, %v1345
      %v1379 = vpack.c.b16 %v1348, %v1347
      %v1380 = vpack.c.b16 %v1350, %v1349
      %v1381 = vpack.c.b16 %v1352, %v1351
      %v1382 = vpack.c.b16 %v1354, %v1353
      %v1383 = vpack.c.b16 %v1356, %v1355
      %v1384 = vpack.c.b16 %v1358, %v1357
      %v1385 = vpack.c.b16 %v1360, %v1359
      %v1386 = vpack.c.b16 %v1362, %v1361
      %v1387 = vpack.c.b16 %v1364, %v1363
      %v1388 = vpack.c.b16 %v1366, %v1365
      %v1389 = vpack.c.b16 %v1368, %v1367
      %v1390 = vpack.c.b16 %v1370, %v1369
      %v1391 = vpack.c.b16 %v1372, %v1371
      %v1392 = vpack.c.b16 %v1374, %v1373
      %v1393 = vpack.c.b16 %v1376, %v1375
      %v1394 = vpack.c.b16 %v1377, %v1377
      %vm1395 = vsmask.f32 4352
      %v1397 = vshrl.u32 %v1378, 16
      %v1399 = vrot.slane %v1397, 3
      %v1400 = vshll.u32 %v1378, 16
      %v1402 = vrot.slane %v1400, 4
      %v1403 = vor.u32 %v1399, %v1402
      %v1405 = vshrl.u32 %v1379, 16
      %v1407 = vrot.slane %v1405, 3
      %v1408 = vshll.u32 %v1379, 16
      %v1410 = vrot.slane %v1408, 4
      %v1411 = vor.u32 %v1407, %v1410
      %v1412 = vsel %vm1395, %v1403, %v1411
      %v1414 = vshrl.u32 %v1380, 16
      %v1416 = vrot.slane %v1414, 3
      %v1417 = vshll.u32 %v1380, 16
      %v1419 = vrot.slane %v1417, 4
      %v1420 = vor.u32 %v1416, %v1419
      %v1421 = vsel %vm1395, %v1411, %v1420
      %v1423 = vshrl.u32 %v1381, 16
      %v1425 = vrot.slane %v1423, 3
      %v1426 = vshll.u32 %v1381, 16
      %v1428 = vrot.slane %v1426, 4
      %v1429 = vor.u32 %v1425, %v1428
      %v1430 = vsel %vm1395, %v1420, %v1429
      %v1432 = vshrl.u32 %v1382, 16
      %v1434 = vrot.slane %v1432, 3
      %v1435 = vshll.u32 %v1382, 16
      %v1437 = vrot.slane %v1435, 4
      %v1438 = vor.u32 %v1434, %v1437
      %v1439 = vsel %vm1395, %v1429, %v1438
      %v1441 = vshrl.u32 %v1383, 16
      %v1443 = vrot.slane %v1441, 3
      %v1444 = vshll.u32 %v1383, 16
      %v1446 = vrot.slane %v1444, 4
      %v1447 = vor.u32 %v1443, %v1446
      %v1448 = vsel %vm1395, %v1438, %v1447
      %v1450 = vshrl.u32 %v1384, 16
      %v1452 = vrot.slane %v1450, 3
      %v1453 = vshll.u32 %v1384, 16
      %v1455 = vrot.slane %v1453, 4
      %v1456 = vor.u32 %v1452, %v1455
      %v1457 = vsel %vm1395, %v1447, %v1456
      %v1459 = vshrl.u32 %v1385, 16
      %v1461 = vrot.slane %v1459, 3
      %v1462 = vshll.u32 %v1385, 16
      %v1464 = vrot.slane %v1462, 4
      %v1465 = vor.u32 %v1461, %v1464
      %v1466 = vsel %vm1395, %v1456, %v1465
      %v1468 = vshrl.u32 %v1386, 16
      %v1470 = vrot.slane %v1468, 3
      %v1471 = vshll.u32 %v1386, 16
      %v1473 = vrot.slane %v1471, 4
      %v1474 = vor.u32 %v1470, %v1473
      %v1475 = vsel %vm1395, %v1465, %v1474
      %v1477 = vshrl.u32 %v1387, 16
      %v1479 = vrot.slane %v1477, 3
      %v1480 = vshll.u32 %v1387, 16
      %v1482 = vrot.slane %v1480, 4
      %v1483 = vor.u32 %v1479, %v1482
      %v1484 = vsel %vm1395, %v1474, %v1483
      %v1486 = vshrl.u32 %v1388, 16
      %v1488 = vrot.slane %v1486, 3
      %v1489 = vshll.u32 %v1388, 16
      %v1491 = vrot.slane %v1489, 4
      %v1492 = vor.u32 %v1488, %v1491
      %v1493 = vsel %vm1395, %v1483, %v1492
      %v1495 = vshrl.u32 %v1389, 16
      %v1497 = vrot.slane %v1495, 3
      %v1498 = vshll.u32 %v1389, 16
      %v1500 = vrot.slane %v1498, 4
      %v1501 = vor.u32 %v1497, %v1500
      %v1502 = vsel %vm1395, %v1492, %v1501
      %v1504 = vshrl.u32 %v1390, 16
      %v1506 = vrot.slane %v1504, 3
      %v1507 = vshll.u32 %v1390, 16
      %v1509 = vrot.slane %v1507, 4
      %v1510 = vor.u32 %v1506, %v1509
      %v1511 = vsel %vm1395, %v1501, %v1510
      %v1513 = vshrl.u32 %v1391, 16
      %v1515 = vrot.slane %v1513, 3
      %v1516 = vshll.u32 %v1391, 16
      %v1518 = vrot.slane %v1516, 4
      %v1519 = vor.u32 %v1515, %v1518
      %v1520 = vsel %vm1395, %v1510, %v1519
      %v1522 = vshrl.u32 %v1392, 16
      %v1524 = vrot.slane %v1522, 3
      %v1525 = vshll.u32 %v1392, 16
      %v1527 = vrot.slane %v1525, 4
      %v1528 = vor.u32 %v1524, %v1527
      %v1529 = vsel %vm1395, %v1519, %v1528
      %v1531 = vshrl.u32 %v1393, 16
      %v1533 = vrot.slane %v1531, 3
      %v1534 = vshll.u32 %v1393, 16
      %v1536 = vrot.slane %v1534, 4
      %v1537 = vor.u32 %v1533, %v1536
      %v1538 = vsel %vm1395, %v1528, %v1537
      %v1540 = vshrl.u32 %v1394, 16
      %v1542 = vrot.slane %v1540, 3
      %v1543 = vshll.u32 %v1394, 16
      %v1545 = vrot.slane %v1543, 4
      %v1546 = vor.u32 %v1542, %v1545
      %v1547 = vsel %vm1395, %v1537, %v1546
      %v1550 = vunpack.c.l.b16 %v1310
      %v1551 = vunpack.c.l.b16 %v1311
      %v1552 = vpack.c.b16 %v1551, %v1550
      %vm1554 = vcmask 130048
      %v1556 = vsel %vm1554, %v1412, 0
      %v1559 = vsel %vm1554, %v1421, 0
      %v1562 = vsel %vm1554, %v1430, 0
      %v1565 = vsel %vm1554, %v1439, 0
      %v1568 = vsel %vm1554, %v1448, 0
      %v1571 = vsel %vm1554, %v1457, 0
      %v1574 = vsel %vm1554, %v1466, 0
      %v1577 = vsel %vm1554, %v1475, 0
      %v1580 = vsel %vm1554, %v1484, 0
      %v1583 = vsel %vm1554, %v1493, 0
      %v1586 = vsel %vm1554, %v1502, 0
      %v1589 = vsel %vm1554, %v1511, 0
      %v1592 = vsel %vm1554, %v1520, 0
      %v1595 = vsel %vm1554, %v1529, 0
      %v1598 = vsel %vm1554, %v1538, 0
      %v1601 = vsel %vm1554, %v1547, 0
      %1603 = vmatprep.subr.bf16.mxu0 0
      %1604 = vmatpush1.bf16.msra.mxu0 0
      %1605 = vmatprep.subr.bf16.mxu0 0
      %1606 = vmatpush1.bf16.msra.mxu0 0
      %1607 = vmatprep.subr.bf16.mxu0 0
      %1608 = vmatpush1.bf16.msra.mxu0 0
      %1609 = vmatprep.subr.bf16.mxu0 0
      %1610 = vmatpush1.bf16.msra.mxu0 0
      %1611 = vmatprep.subr.bf16.mxu0 0
      %1612 = vmatpush1.bf16.msra.mxu0 0
      %1613 = vmatprep.subr.bf16.mxu0 0
      %1614 = vmatpush1.bf16.msra.mxu0 0
      %1615 = vmatprep.subr.bf16.mxu0 0
      %1616 = vmatpush1.bf16.msra.mxu0 0
      %1617 = vmatprep.subr.bf16.mxu0 0
      %1618 = vmatpush1.bf16.msra.mxu0 %v1552
      %1619 = vmatprep.subr.bf16.mxu0 0
      %1620 = vmatpush2.bf16.msra.mxu0 0
      %1621 = vmatprep.subr.bf16.mxu0 0
      %1622 = vmatpush2.bf16.msra.mxu0 0
      %1623 = vmatprep.subr.bf16.mxu0 0
      %1624 = vmatpush2.bf16.msra.mxu0 0
      %1625 = vmatprep.subr.bf16.mxu0 0
      %1626 = vmatpush2.bf16.msra.mxu0 0
      %1627 = vmatprep.subr.bf16.mxu0 0
      %1628 = vmatpush2.bf16.msra.mxu0 0
      %1629 = vmatprep.subr.bf16.mxu0 0
      %1630 = vmatpush2.bf16.msra.mxu0 0
      %1631 = vmatprep.subr.bf16.mxu0 0
      %1632 = vmatpush2.bf16.msra.mxu0 0
      %1633 = vmatprep.subr.bf16.mxu0 0
      %1634 = vmatpush2.bf16.msra.mxu0 0
      %1635 = vmatprep.mubr.bf16.mxu0 0
      %1636 = vmatmul.mubr.bf16.gmra.mxu0 %v1556
      %v1637 = vpop.f32.mrf.mxu0
      %v1638 = vadd.f32 0.0, %v1637
      %v1639 = vpop.f32.mrf.mxu0
      %v1640 = vpop.f32.mrf.mxu0
      %v1641 = vadd.f32 0.0, %v1640
      %v1642 = vpop.f32.mrf.mxu0
      %1643 = vmatprep.mubr.bf16.mxu0 0
      %1644 = vmatmul.mubr.bf16.gmra.mxu0 %v1559
      %v1645 = vpop.f32.mrf.mxu0
      %v1646 = vadd.f32 0.0, %v1645
      %v1647 = vpop.f32.mrf.mxu0
      %v1648 = vpop.f32.mrf.mxu0
      %v1649 = vadd.f32 0.0, %v1648
      %v1650 = vpop.f32.mrf.mxu0
      %1651 = vmatprep.mubr.bf16.mxu0 0
      %1652 = vmatmul.mubr.bf16.gmra.mxu0 %v1562
      %v1653 = vpop.f32.mrf.mxu0
      %v1654 = vadd.f32 0.0, %v1653
      %v1655 = vpop.f32.mrf.mxu0
      %v1656 = vpop.f32.mrf.mxu0
      %v1657 = vadd.f32 0.0, %v1656
      %v1658 = vpop.f32.mrf.mxu0
      %1659 = vmatprep.mubr.bf16.mxu0 0
      %1660 = vmatmul.mubr.bf16.gmra.mxu0 %v1565
      %v1661 = vpop.f32.mrf.mxu0
      %v1662 = vadd.f32 0.0, %v1661
      %v1663 = vpop.f32.mrf.mxu0
      %v1664 = vpop.f32.mrf.mxu0
      %v1665 = vadd.f32 0.0, %v1664
      %v1666 = vpop.f32.mrf.mxu0
      %1667 = vmatprep.mubr.bf16.mxu0 0
      %1668 = vmatmul.mubr.bf16.gmra.mxu0 %v1568
      %v1669 = vpop.f32.mrf.mxu0
      %v1670 = vadd.f32 0.0, %v1669
      %v1671 = vpop.f32.mrf.mxu0
      %v1672 = vpop.f32.mrf.mxu0
      %v1673 = vadd.f32 0.0, %v1672
      %v1674 = vpop.f32.mrf.mxu0
      %1675 = vmatprep.mubr.bf16.mxu0 0
      %1676 = vmatmul.mubr.bf16.gmra.mxu0 %v1571
      %v1677 = vpop.f32.mrf.mxu0
      %v1678 = vadd.f32 0.0, %v1677
      %v1679 = vpop.f32.mrf.mxu0
      %v1680 = vpop.f32.mrf.mxu0
      %v1681 = vadd.f32 0.0, %v1680
      %v1682 = vpop.f32.mrf.mxu0
      %1683 = vmatprep.mubr.bf16.mxu0 0
      %1684 = vmatmul.mubr.bf16.gmra.mxu0 %v1574
      %v1685 = vpop.f32.mrf.mxu0
      %v1686 = vadd.f32 0.0, %v1685
      %v1687 = vpop.f32.mrf.mxu0
      %v1688 = vpop.f32.mrf.mxu0
      %v1689 = vadd.f32 0.0, %v1688
      %v1690 = vpop.f32.mrf.mxu0
      %1691 = vmatprep.mubr.bf16.mxu0 0
      %1692 = vmatmul.mubr.bf16.gmra.mxu0 %v1577
      %v1693 = vpop.f32.mrf.mxu0
      %v1694 = vadd.f32 0.0, %v1693
      %v1695 = vpop.f32.mrf.mxu0
      %v1696 = vpop.f32.mrf.mxu0
      %v1697 = vadd.f32 0.0, %v1696
      %v1698 = vpop.f32.mrf.mxu0
      %1699 = vmatprep.mubr.bf16.mxu0 0
      %1700 = vmatmul.mubr.bf16.gmra.mxu0 %v1580
      %v1701 = vpop.f32.mrf.mxu0
      %v1702 = vadd.f32 0.0, %v1701
      %v1703 = vpop.f32.mrf.mxu0
      %v1704 = vpop.f32.mrf.mxu0
      %v1705 = vadd.f32 0.0, %v1704
      %v1706 = vpop.f32.mrf.mxu0
      %1707 = vmatprep.mubr.bf16.mxu0 0
      %1708 = vmatmul.mubr.bf16.gmra.mxu0 %v1583
      %v1709 = vpop.f32.mrf.mxu0
      %v1710 = vadd.f32 0.0, %v1709
      %v1711 = vpop.f32.mrf.mxu0
      %v1712 = vpop.f32.mrf.mxu0
      %v1713 = vadd.f32 0.0, %v1712
      %v1714 = vpop.f32.mrf.mxu0
      %1715 = vmatprep.mubr.bf16.mxu0 0
      %1716 = vmatmul.mubr.bf16.gmra.mxu0 %v1586
      %v1717 = vpop.f32.mrf.mxu0
      %v1718 = vadd.f32 0.0, %v1717
      %v1719 = vpop.f32.mrf.mxu0
      %v1720 = vpop.f32.mrf.mxu0
      %v1721 = vadd.f32 0.0, %v1720
      %v1722 = vpop.f32.mrf.mxu0
      %1723 = vmatprep.mubr.bf16.mxu0 0
      %1724 = vmatmul.mubr.bf16.gmra.mxu0 %v1589
      %v1725 = vpop.f32.mrf.mxu0
      %v1726 = vadd.f32 0.0, %v1725
      %v1727 = vpop.f32.mrf.mxu0
      %v1728 = vpop.f32.mrf.mxu0
      %v1729 = vadd.f32 0.0, %v1728
      %v1730 = vpop.f32.mrf.mxu0
      %1731 = vmatprep.mubr.bf16.mxu0 0
      %1732 = vmatmul.mubr.bf16.gmra.mxu0 %v1592
      %v1733 = vpop.f32.mrf.mxu0
      %v1734 = vadd.f32 0.0, %v1733
      %v1735 = vpop.f32.mrf.mxu0
      %v1736 = vpop.f32.mrf.mxu0
      %v1737 = vadd.f32 0.0, %v1736
      %v1738 = vpop.f32.mrf.mxu0
      %1739 = vmatprep.mubr.bf16.mxu0 0
      %1740 = vmatmul.mubr.bf16.gmra.mxu0 %v1595
      %v1741 = vpop.f32.mrf.mxu0
      %v1742 = vadd.f32 0.0, %v1741
      %v1743 = vpop.f32.mrf.mxu0
      %v1744 = vpop.f32.mrf.mxu0
      %v1745 = vadd.f32 0.0, %v1744
      %v1746 = vpop.f32.mrf.mxu0
      %1747 = vmatprep.mubr.bf16.mxu0 0
      %1748 = vmatmul.mubr.bf16.gmra.mxu0 %v1598
      %v1749 = vpop.f32.mrf.mxu0
      %v1750 = vadd.f32 0.0, %v1749
      %v1751 = vpop.f32.mrf.mxu0
      %v1752 = vpop.f32.mrf.mxu0
      %v1753 = vadd.f32 0.0, %v1752
      %v1754 = vpop.f32.mrf.mxu0
      %1755 = vmatprep.mubr.bf16.mxu0 0
      %1756 = vmatmul.mubr.bf16.gmra.mxu0 %v1601
      %v1757 = vpop.f32.mrf.mxu0
      %v1758 = vadd.f32 0.0, %v1757
      %v1759 = vpop.f32.mrf.mxu0
      %v1760 = vpop.f32.mrf.mxu0
      %v1761 = vadd.f32 0.0, %v1760
      %v1762 = vpop.f32.mrf.mxu0
      %1763 = vdwg.mxu0
      %v1796 = vunpack.c.l.b16 %v721
      %v1797 = vunpack.c.l.b16 %v722
      %v1798 = vunpack.c.l.b16 %v723
      %v1799 = vunpack.c.l.b16 %v724
      %v1800 = vunpack.c.l.b16 %v725
      %v1801 = vunpack.c.l.b16 %v726
      %v1802 = vunpack.c.l.b16 %v727
      %v1803 = vunpack.c.l.b16 %v728
      %v1804 = vunpack.c.l.b16 %v729
      %v1805 = vunpack.c.l.b16 %v730
      %v1806 = vunpack.c.l.b16 %v731
      %v1807 = vunpack.c.l.b16 %v732
      %v1808 = vunpack.c.l.b16 %v733
      %v1809 = vunpack.c.l.b16 %v734
      %v1810 = vunpack.c.l.b16 %v735
      %v1811 = vunpack.c.l.b16 %v736
      %v1812 = vunpack.c.l.b16 %v737
      %v1813 = vunpack.c.l.b16 %v738
      %v1814 = vunpack.c.l.b16 %v739
      %v1815 = vunpack.c.l.b16 %v740
      %v1816 = vunpack.c.l.b16 %v741
      %v1817 = vunpack.c.l.b16 %v742
      %v1818 = vunpack.c.l.b16 %v743
      %v1819 = vunpack.c.l.b16 %v744
      %v1820 = vunpack.c.l.b16 %v745
      %v1821 = vunpack.c.l.b16 %v746
      %v1822 = vunpack.c.l.b16 %v747
      %v1823 = vunpack.c.l.b16 %v748
      %v1824 = vunpack.c.l.b16 %v749
      %v1825 = vunpack.c.l.b16 %v750
      %v1826 = vunpack.c.l.b16 %v751
      %v1827 = vunpack.c.l.b16 %v752
      %v1828 = vpack.c.b16 %v1797, %v1796
      %v1829 = vpack.c.b16 %v1799, %v1798
      %v1830 = vpack.c.b16 %v1801, %v1800
      %v1831 = vpack.c.b16 %v1803, %v1802
      %v1832 = vpack.c.b16 %v1805, %v1804
      %v1833 = vpack.c.b16 %v1807, %v1806
      %v1834 = vpack.c.b16 %v1809, %v1808
      %v1835 = vpack.c.b16 %v1811, %v1810
      %v1836 = vpack.c.b16 %v1813, %v1812
      %v1837 = vpack.c.b16 %v1815, %v1814
      %v1838 = vpack.c.b16 %v1817, %v1816
      %v1839 = vpack.c.b16 %v1819, %v1818
      %v1840 = vpack.c.b16 %v1821, %v1820
      %v1841 = vpack.c.b16 %v1823, %v1822
      %v1842 = vpack.c.b16 %v1825, %v1824
      %v1843 = vpack.c.b16 %v1827, %v1826
      %v1852 = vunpack.c.l.b16 %v817
      %v1853 = vunpack.c.l.b16 %v818
      %v1854 = vunpack.c.l.b16 %v819
      %v1855 = vunpack.c.l.b16 %v820
      %v1856 = vunpack.c.l.b16 %v821
      %v1857 = vunpack.c.l.b16 %v822
      %v1858 = vunpack.c.l.b16 %v823
      %v1859 = vunpack.c.l.b16 %v824
      %v1860 = vpack.c.b16 %v1853, %v1852
      %v1861 = vpack.c.b16 %v1855, %v1854
      %v1862 = vpack.c.b16 %v1857, %v1856
      %v1863 = vpack.c.b16 %v1859, %v1858
      %vm1868 = vcmask 523264
      %v1870 = vsel %vm1868, %v1828, 0
      %v1873 = vsel %vm1868, %v1829, 0
      %v1876 = vsel %vm1868, %v1830, 0
      %v1879 = vsel %vm1868, %v1831, 0
      %v1882 = vsel %vm1868, %v1832, 0
      %v1885 = vsel %vm1868, %v1833, 0
      %v1888 = vsel %vm1868, %v1834, 0
      %v1891 = vsel %vm1868, %v1835, 0
      %v1894 = vsel %vm1868, %v1836, 0
      %v1897 = vsel %vm1868, %v1837, 0
      %v1900 = vsel %vm1868, %v1838, 0
      %v1903 = vsel %vm1868, %v1839, 0
      %v1906 = vsel %vm1868, %v1840, 0
      %v1909 = vsel %vm1868, %v1841, 0
      %v1912 = vsel %vm1868, %v1842, 0
      %v1915 = vsel %vm1868, %v1843, 0
      %1917 = vmatprep.subr.bf16.mxu0 0
      %1918 = vmatpush1.bf16.msra.mxu0 0
      %1919 = vmatprep.subr.bf16.mxu0 0
      %1920 = vmatpush1.bf16.msra.mxu0 0
      %1921 = vmatprep.subr.bf16.mxu0 0
      %1922 = vmatpush1.bf16.msra.mxu0 0
      %1923 = vmatprep.subr.bf16.mxu0 0
      %1924 = vmatpush1.bf16.msra.mxu0 0
      %1925 = vmatprep.subr.bf16.mxu0 0
      %1926 = vmatpush1.bf16.msra.mxu0 %v1863
      %1927 = vmatprep.subr.bf16.mxu0 0
      %1928 = vmatpush1.bf16.msra.mxu0 %v1862
      %1929 = vmatprep.subr.bf16.mxu0 0
      %1930 = vmatpush1.bf16.msra.mxu0 %v1861
      %1931 = vmatprep.subr.bf16.mxu0 0
      %1932 = vmatpush1.bf16.msra.mxu0 %v1860
      %1933 = vmatprep.subr.bf16.mxu0 0
      %1934 = vmatpush2.bf16.msra.mxu0 0
      %1935 = vmatprep.subr.bf16.mxu0 0
      %1936 = vmatpush2.bf16.msra.mxu0 0
      %1937 = vmatprep.subr.bf16.mxu0 0
      %1938 = vmatpush2.bf16.msra.mxu0 0
      %1939 = vmatprep.subr.bf16.mxu0 0
      %1940 = vmatpush2.bf16.msra.mxu0 0
      %1941 = vmatprep.subr.bf16.mxu0 0
      %1942 = vmatpush2.bf16.msra.mxu0 0
      %1943 = vmatprep.subr.bf16.mxu0 0
      %1944 = vmatpush2.bf16.msra.mxu0 0
      %1945 = vmatprep.subr.bf16.mxu0 0
      %1946 = vmatpush2.bf16.msra.mxu0 0
      %1947 = vmatprep.subr.bf16.mxu0 0
      %1948 = vmatpush2.bf16.msra.mxu0 0
      %1949 = vmatprep.mubr.bf16.mxu0 0
      %1950 = vmatmul.mubr.bf16.gmra.mxu0 %v1870
      %v1951 = vpop.f32.mrf.mxu0
      %v1952 = vadd.f32 %v1638, %v1951
      %v1953 = vpop.f32.mrf.mxu0
      %v1954 = vpop.f32.mrf.mxu0
      %v1955 = vadd.f32 %v1641, %v1954
      %v1956 = vpop.f32.mrf.mxu0
      %1957 = vmatprep.mubr.bf16.mxu0 0
      %1958 = vmatmul.mubr.bf16.gmra.mxu0 %v1873
      %v1959 = vpop.f32.mrf.mxu0
      %v1960 = vadd.f32 %v1646, %v1959
      %v1961 = vpop.f32.mrf.mxu0
      %v1962 = vpop.f32.mrf.mxu0
      %v1963 = vadd.f32 %v1649, %v1962
      %v1964 = vpop.f32.mrf.mxu0
      %1965 = vmatprep.mubr.bf16.mxu0 0
      %1966 = vmatmul.mubr.bf16.gmra.mxu0 %v1876
      %v1967 = vpop.f32.mrf.mxu0
      %v1968 = vadd.f32 %v1654, %v1967
      %v1969 = vpop.f32.mrf.mxu0
      %v1970 = vpop.f32.mrf.mxu0
      %v1971 = vadd.f32 %v1657, %v1970
      %v1972 = vpop.f32.mrf.mxu0
      %1973 = vmatprep.mubr.bf16.mxu0 0
      %1974 = vmatmul.mubr.bf16.gmra.mxu0 %v1879
      %v1975 = vpop.f32.mrf.mxu0
      %v1976 = vadd.f32 %v1662, %v1975
      %v1977 = vpop.f32.mrf.mxu0
      %v1978 = vpop.f32.mrf.mxu0
      %v1979 = vadd.f32 %v1665, %v1978
      %v1980 = vpop.f32.mrf.mxu0
      %1981 = vmatprep.mubr.bf16.mxu0 0
      %1982 = vmatmul.mubr.bf16.gmra.mxu0 %v1882
      %v1983 = vpop.f32.mrf.mxu0
      %v1984 = vadd.f32 %v1670, %v1983
      %v1985 = vpop.f32.mrf.mxu0
      %v1986 = vpop.f32.mrf.mxu0
      %v1987 = vadd.f32 %v1673, %v1986
      %v1988 = vpop.f32.mrf.mxu0
      %1989 = vmatprep.mubr.bf16.mxu0 0
      %1990 = vmatmul.mubr.bf16.gmra.mxu0 %v1885
      %v1991 = vpop.f32.mrf.mxu0
      %v1992 = vadd.f32 %v1678, %v1991
      %v1993 = vpop.f32.mrf.mxu0
      %v1994 = vpop.f32.mrf.mxu0
      %v1995 = vadd.f32 %v1681, %v1994
      %v1996 = vpop.f32.mrf.mxu0
      %1997 = vmatprep.mubr.bf16.mxu0 0
      %1998 = vmatmul.mubr.bf16.gmra.mxu0 %v1888
      %v1999 = vpop.f32.mrf.mxu0
      %v2000 = vadd.f32 %v1686, %v1999
      %v2001 = vpop.f32.mrf.mxu0
      %v2002 = vpop.f32.mrf.mxu0
      %v2003 = vadd.f32 %v1689, %v2002
      %v2004 = vpop.f32.mrf.mxu0
      %2005 = vmatprep.mubr.bf16.mxu0 0
      %2006 = vmatmul.mubr.bf16.gmra.mxu0 %v1891
      %v2007 = vpop.f32.mrf.mxu0
      %v2008 = vadd.f32 %v1694, %v2007
      %v2009 = vpop.f32.mrf.mxu0
      %v2010 = vpop.f32.mrf.mxu0
      %v2011 = vadd.f32 %v1697, %v2010
      %v2012 = vpop.f32.mrf.mxu0
      %2013 = vmatprep.mubr.bf16.mxu0 0
      %2014 = vmatmul.mubr.bf16.gmra.mxu0 %v1894
      %v2015 = vpop.f32.mrf.mxu0
      %v2016 = vadd.f32 %v1702, %v2015
      %v2017 = vpop.f32.mrf.mxu0
      %v2018 = vpop.f32.mrf.mxu0
      %v2019 = vadd.f32 %v1705, %v2018
      %v2020 = vpop.f32.mrf.mxu0
      %2021 = vmatprep.mubr.bf16.mxu0 0
      %2022 = vmatmul.mubr.bf16.gmra.mxu0 %v1897
      %v2023 = vpop.f32.mrf.mxu0
      %v2024 = vadd.f32 %v1710, %v2023
      %v2025 = vpop.f32.mrf.mxu0
      %v2026 = vpop.f32.mrf.mxu0
      %v2027 = vadd.f32 %v1713, %v2026
      %v2028 = vpop.f32.mrf.mxu0
      %2029 = vmatprep.mubr.bf16.mxu0 0
      %2030 = vmatmul.mubr.bf16.gmra.mxu0 %v1900
      %v2031 = vpop.f32.mrf.mxu0
      %v2032 = vadd.f32 %v1718, %v2031
      %v2033 = vpop.f32.mrf.mxu0
      %v2034 = vpop.f32.mrf.mxu0
      %v2035 = vadd.f32 %v1721, %v2034
      %v2036 = vpop.f32.mrf.mxu0
      %2037 = vmatprep.mubr.bf16.mxu0 0
      %2038 = vmatmul.mubr.bf16.gmra.mxu0 %v1903
      %v2039 = vpop.f32.mrf.mxu0
      %v2040 = vadd.f32 %v1726, %v2039
      %v2041 = vpop.f32.mrf.mxu0
      %v2042 = vpop.f32.mrf.mxu0
      %v2043 = vadd.f32 %v1729, %v2042
      %v2044 = vpop.f32.mrf.mxu0
      %2045 = vmatprep.mubr.bf16.mxu0 0
      %2046 = vmatmul.mubr.bf16.gmra.mxu0 %v1906
      %v2047 = vpop.f32.mrf.mxu0
      %v2048 = vadd.f32 %v1734, %v2047
      %v2049 = vpop.f32.mrf.mxu0
      %v2050 = vpop.f32.mrf.mxu0
      %v2051 = vadd.f32 %v1737, %v2050
      %v2052 = vpop.f32.mrf.mxu0
      %2053 = vmatprep.mubr.bf16.mxu0 0
      %2054 = vmatmul.mubr.bf16.gmra.mxu0 %v1909
      %v2055 = vpop.f32.mrf.mxu0
      %v2056 = vadd.f32 %v1742, %v2055
      %v2057 = vpop.f32.mrf.mxu0
      %v2058 = vpop.f32.mrf.mxu0
      %v2059 = vadd.f32 %v1745, %v2058
      %v2060 = vpop.f32.mrf.mxu0
      %2061 = vmatprep.mubr.bf16.mxu0 0
      %2062 = vmatmul.mubr.bf16.gmra.mxu0 %v1912
      %v2063 = vpop.f32.mrf.mxu0
      %v2064 = vadd.f32 %v1750, %v2063
      %v2065 = vpop.f32.mrf.mxu0
      %v2066 = vpop.f32.mrf.mxu0
      %v2067 = vadd.f32 %v1753, %v2066
      %v2068 = vpop.f32.mrf.mxu0
      %2069 = vmatprep.mubr.bf16.mxu0 0
      %2070 = vmatmul.mubr.bf16.gmra.mxu0 %v1915
      %v2071 = vpop.f32.mrf.mxu0
      %v2072 = vadd.f32 %v1758, %v2071
      %v2073 = vpop.f32.mrf.mxu0
      %v2074 = vpop.f32.mrf.mxu0
      %v2075 = vadd.f32 %v1761, %v2074
      %v2076 = vpop.f32.mrf.mxu0
      %2077 = vdwg.mxu0
      %s2078 = scalar_lea.vmem %s2, 8
      %v2079 = vld [vmem:[%s2078] sm:$0xf]
      %v2080 = vld [vmem:[%s2078 + $0x4] sm:$0xf]
      %v2113 = vunpack.c.l.b16 %v826
      %v2114 = vunpack.c.l.b16 %v827
      %v2115 = vunpack.c.l.b16 %v828
      %v2116 = vunpack.c.l.b16 %v829
      %v2117 = vunpack.c.l.b16 %v830
      %v2118 = vunpack.c.l.b16 %v831
      %v2119 = vunpack.c.l.b16 %v832
      %v2120 = vunpack.c.l.b16 %v833
      %v2121 = vunpack.c.l.b16 %v834
      %v2122 = vunpack.c.l.b16 %v835
      %v2123 = vunpack.c.l.b16 %v836
      %v2124 = vunpack.c.l.b16 %v837
      %v2125 = vunpack.c.l.b16 %v838
      %v2126 = vunpack.c.l.b16 %v839
      %v2127 = vunpack.c.l.b16 %v840
      %v2128 = vunpack.c.l.b16 %v841
      %v2129 = vunpack.c.l.b16 %v842
      %v2130 = vunpack.c.l.b16 %v843
      %v2131 = vunpack.c.l.b16 %v844
      %v2132 = vunpack.c.l.b16 %v845
      %v2133 = vunpack.c.l.b16 %v846
      %v2134 = vunpack.c.l.b16 %v847
      %v2135 = vunpack.c.l.b16 %v848
      %v2136 = vunpack.c.l.b16 %v849
      %v2137 = vunpack.c.l.b16 %v850
      %v2138 = vunpack.c.l.b16 %v851
      %v2139 = vunpack.c.l.b16 %v852
      %v2140 = vunpack.c.l.b16 %v853
      %v2141 = vunpack.c.l.b16 %v854
      %v2142 = vunpack.c.l.b16 %v855
      %v2143 = vunpack.c.l.b16 %v856
      %v2144 = vunpack.c.l.b16 %v857
      %v2145 = vpack.c.b16 %v2114, %v2113
      %v2146 = vpack.c.b16 %v2116, %v2115
      %v2147 = vpack.c.b16 %v2118, %v2117
      %v2148 = vpack.c.b16 %v2120, %v2119
      %v2149 = vpack.c.b16 %v2122, %v2121
      %v2150 = vpack.c.b16 %v2124, %v2123
      %v2151 = vpack.c.b16 %v2126, %v2125
      %v2152 = vpack.c.b16 %v2128, %v2127
      %v2153 = vpack.c.b16 %v2130, %v2129
      %v2154 = vpack.c.b16 %v2132, %v2131
      %v2155 = vpack.c.b16 %v2134, %v2133
      %v2156 = vpack.c.b16 %v2136, %v2135
      %v2157 = vpack.c.b16 %v2138, %v2137
      %v2158 = vpack.c.b16 %v2140, %v2139
      %v2159 = vpack.c.b16 %v2142, %v2141
      %v2160 = vpack.c.b16 %v2144, %v2143
      %v2163 = vunpack.c.l.b16 %v2079
      %v2164 = vunpack.c.l.b16 %v2080
      %v2165 = vpack.c.b16 %v2164, %v2163
      %v2168 = vsel %vm1554, %v2145, 0
      %v2171 = vsel %vm1554, %v2146, 0
      %v2174 = vsel %vm1554, %v2147, 0
      %v2177 = vsel %vm1554, %v2148, 0
      %v2180 = vsel %vm1554, %v2149, 0
      %v2183 = vsel %vm1554, %v2150, 0
      %v2186 = vsel %vm1554, %v2151, 0
      %v2189 = vsel %vm1554, %v2152, 0
      %v2192 = vsel %vm1554, %v2153, 0
      %v2195 = vsel %vm1554, %v2154, 0
      %v2198 = vsel %vm1554, %v2155, 0
      %v2201 = vsel %vm1554, %v2156, 0
      %v2204 = vsel %vm1554, %v2157, 0
      %v2207 = vsel %vm1554, %v2158, 0
      %v2210 = vsel %vm1554, %v2159, 0
      %v2213 = vsel %vm1554, %v2160, 0
      %2215 = vmatprep.subr.bf16.mxu0 0
      %2216 = vmatpush1.bf16.msra.mxu0 0
      %2217 = vmatprep.subr.bf16.mxu0 0
      %2218 = vmatpush1.bf16.msra.mxu0 0
      %2219 = vmatprep.subr.bf16.mxu0 0
      %2220 = vmatpush1.bf16.msra.mxu0 0
      %2221 = vmatprep.subr.bf16.mxu0 0
      %2222 = vmatpush1.bf16.msra.mxu0 0
      %2223 = vmatprep.subr.bf16.mxu0 0
      %2224 = vmatpush1.bf16.msra.mxu0 0
      %2225 = vmatprep.subr.bf16.mxu0 0
      %2226 = vmatpush1.bf16.msra.mxu0 0
      %2227 = vmatprep.subr.bf16.mxu0 0
      %2228 = vmatpush1.bf16.msra.mxu0 0
      %2229 = vmatprep.subr.bf16.mxu0 0
      %2230 = vmatpush1.bf16.msra.mxu0 %v2165
      %2231 = vmatprep.subr.bf16.mxu0 0
      %2232 = vmatpush2.bf16.msra.mxu0 0
      %2233 = vmatprep.subr.bf16.mxu0 0
      %2234 = vmatpush2.bf16.msra.mxu0 0
      %2235 = vmatprep.subr.bf16.mxu0 0
      %2236 = vmatpush2.bf16.msra.mxu0 0
      %2237 = vmatprep.subr.bf16.mxu0 0
      %2238 = vmatpush2.bf16.msra.mxu0 0
      %2239 = vmatprep.subr.bf16.mxu0 0
      %2240 = vmatpush2.bf16.msra.mxu0 0
      %2241 = vmatprep.subr.bf16.mxu0 0
      %2242 = vmatpush2.bf16.msra.mxu0 0
      %2243 = vmatprep.subr.bf16.mxu0 0
      %2244 = vmatpush2.bf16.msra.mxu0 0
      %2245 = vmatprep.subr.bf16.mxu0 0
      %2246 = vmatpush2.bf16.msra.mxu0 0
      %2247 = vmatprep.mubr.bf16.mxu0 0
      %2248 = vmatmul.mubr.bf16.gmra.mxu0 %v2168
      %v2249 = vpop.f32.mrf.mxu0
      %v2250 = vadd.f32 0.0, %v2249
      %v2251 = vpop.f32.mrf.mxu0
      %v2252 = vpop.f32.mrf.mxu0
      %v2253 = vadd.f32 0.0, %v2252
      %v2254 = vpop.f32.mrf.mxu0
      %2255 = vmatprep.mubr.bf16.mxu0 0
      %2256 = vmatmul.mubr.bf16.gmra.mxu0 %v2171
      %v2257 = vpop.f32.mrf.mxu0
      %v2258 = vadd.f32 0.0, %v2257
      %v2259 = vpop.f32.mrf.mxu0
      %v2260 = vpop.f32.mrf.mxu0
      %v2261 = vadd.f32 0.0, %v2260
      %v2262 = vpop.f32.mrf.mxu0
      %2263 = vmatprep.mubr.bf16.mxu0 0
      %2264 = vmatmul.mubr.bf16.gmra.mxu0 %v2174
      %v2265 = vpop.f32.mrf.mxu0
      %v2266 = vadd.f32 0.0, %v2265
      %v2267 = vpop.f32.mrf.mxu0
      %v2268 = vpop.f32.mrf.mxu0
      %v2269 = vadd.f32 0.0, %v2268
      %v2270 = vpop.f32.mrf.mxu0
      %2271 = vmatprep.mubr.bf16.mxu0 0
      %2272 = vmatmul.mubr.bf16.gmra.mxu0 %v2177
      %v2273 = vpop.f32.mrf.mxu0
      %v2274 = vadd.f32 0.0, %v2273
      %v2275 = vpop.f32.mrf.mxu0
      %v2276 = vpop.f32.mrf.mxu0
      %v2277 = vadd.f32 0.0, %v2276
      %v2278 = vpop.f32.mrf.mxu0
      %2279 = vmatprep.mubr.bf16.mxu0 0
      %2280 = vmatmul.mubr.bf16.gmra.mxu0 %v2180
      %v2281 = vpop.f32.mrf.mxu0
      %v2282 = vadd.f32 0.0, %v2281
      %v2283 = vpop.f32.mrf.mxu0
      %v2284 = vpop.f32.mrf.mxu0
      %v2285 = vadd.f32 0.0, %v2284
      %v2286 = vpop.f32.mrf.mxu0
      %2287 = vmatprep.mubr.bf16.mxu0 0
      %2288 = vmatmul.mubr.bf16.gmra.mxu0 %v2183
      %v2289 = vpop.f32.mrf.mxu0
      %v2290 = vadd.f32 0.0, %v2289
      %v2291 = vpop.f32.mrf.mxu0
      %v2292 = vpop.f32.mrf.mxu0
      %v2293 = vadd.f32 0.0, %v2292
      %v2294 = vpop.f32.mrf.mxu0
      %2295 = vmatprep.mubr.bf16.mxu0 0
      %2296 = vmatmul.mubr.bf16.gmra.mxu0 %v2186
      %v2297 = vpop.f32.mrf.mxu0
      %v2298 = vadd.f32 0.0, %v2297
      %v2299 = vpop.f32.mrf.mxu0
      %v2300 = vpop.f32.mrf.mxu0
      %v2301 = vadd.f32 0.0, %v2300
      %v2302 = vpop.f32.mrf.mxu0
      %2303 = vmatprep.mubr.bf16.mxu0 0
      %2304 = vmatmul.mubr.bf16.gmra.mxu0 %v2189
      %v2305 = vpop.f32.mrf.mxu0
      %v2306 = vadd.f32 0.0, %v2305
      %v2307 = vpop.f32.mrf.mxu0
      %v2308 = vpop.f32.mrf.mxu0
      %v2309 = vadd.f32 0.0, %v2308
      %v2310 = vpop.f32.mrf.mxu0
      %2311 = vmatprep.mubr.bf16.mxu0 0
      %2312 = vmatmul.mubr.bf16.gmra.mxu0 %v2192
      %v2313 = vpop.f32.mrf.mxu0
      %v2314 = vadd.f32 0.0, %v2313
      %v2315 = vpop.f32.mrf.mxu0
      %v2316 = vpop.f32.mrf.mxu0
      %v2317 = vadd.f32 0.0, %v2316
      %v2318 = vpop.f32.mrf.mxu0
      %2319 = vmatprep.mubr.bf16.mxu0 0
      %2320 = vmatmul.mubr.bf16.gmra.mxu0 %v2195
      %v2321 = vpop.f32.mrf.mxu0
      %v2322 = vadd.f32 0.0, %v2321
      %v2323 = vpop.f32.mrf.mxu0
      %v2324 = vpop.f32.mrf.mxu0
      %v2325 = vadd.f32 0.0, %v2324
      %v2326 = vpop.f32.mrf.mxu0
      %2327 = vmatprep.mubr.bf16.mxu0 0
      %2328 = vmatmul.mubr.bf16.gmra.mxu0 %v2198
      %v2329 = vpop.f32.mrf.mxu0
      %v2330 = vadd.f32 0.0, %v2329
      %v2331 = vpop.f32.mrf.mxu0
      %v2332 = vpop.f32.mrf.mxu0
      %v2333 = vadd.f32 0.0, %v2332
      %v2334 = vpop.f32.mrf.mxu0
      %2335 = vmatprep.mubr.bf16.mxu0 0
      %2336 = vmatmul.mubr.bf16.gmra.mxu0 %v2201
      %v2337 = vpop.f32.mrf.mxu0
      %v2338 = vadd.f32 0.0, %v2337
      %v2339 = vpop.f32.mrf.mxu0
      %v2340 = vpop.f32.mrf.mxu0
      %v2341 = vadd.f32 0.0, %v2340
      %v2342 = vpop.f32.mrf.mxu0
      %2343 = vmatprep.mubr.bf16.mxu0 0
      %2344 = vmatmul.mubr.bf16.gmra.mxu0 %v2204
      %v2345 = vpop.f32.mrf.mxu0
      %v2346 = vadd.f32 0.0, %v2345
      %v2347 = vpop.f32.mrf.mxu0
      %v2348 = vpop.f32.mrf.mxu0
      %v2349 = vadd.f32 0.0, %v2348
      %v2350 = vpop.f32.mrf.mxu0
      %2351 = vmatprep.mubr.bf16.mxu0 0
      %2352 = vmatmul.mubr.bf16.gmra.mxu0 %v2207
      %v2353 = vpop.f32.mrf.mxu0
      %v2354 = vadd.f32 0.0, %v2353
      %v2355 = vpop.f32.mrf.mxu0
      %v2356 = vpop.f32.mrf.mxu0
      %v2357 = vadd.f32 0.0, %v2356
      %v2358 = vpop.f32.mrf.mxu0
      %2359 = vmatprep.mubr.bf16.mxu0 0
      %2360 = vmatmul.mubr.bf16.gmra.mxu0 %v2210
      %v2361 = vpop.f32.mrf.mxu0
      %v2362 = vadd.f32 0.0, %v2361
      %v2363 = vpop.f32.mrf.mxu0
      %v2364 = vpop.f32.mrf.mxu0
      %v2365 = vadd.f32 0.0, %v2364
      %v2366 = vpop.f32.mrf.mxu0
      %2367 = vmatprep.mubr.bf16.mxu0 0
      %2368 = vmatmul.mubr.bf16.gmra.mxu0 %v2213
      %v2369 = vpop.f32.mrf.mxu0
      %v2370 = vadd.f32 0.0, %v2369
      %v2371 = vpop.f32.mrf.mxu0
      %v2372 = vpop.f32.mrf.mxu0
      %v2373 = vadd.f32 0.0, %v2372
      %v2374 = vpop.f32.mrf.mxu0
      %2375 = vdwg.mxu0
      %v2376 = vadd.f32 %v1952, %v2250
      %v2377 = vadd.f32 %v1955, %v2253
      %v2378 = vadd.f32 %v1960, %v2258
      %v2379 = vadd.f32 %v1963, %v2261
      %v2380 = vadd.f32 %v1968, %v2266
      %v2381 = vadd.f32 %v1971, %v2269
      %v2382 = vadd.f32 %v1976, %v2274
      %v2383 = vadd.f32 %v1979, %v2277
      %v2384 = vadd.f32 %v1984, %v2282
      %v2385 = vadd.f32 %v1987, %v2285
      %v2386 = vadd.f32 %v1992, %v2290
      %v2387 = vadd.f32 %v1995, %v2293
      %v2388 = vadd.f32 %v2000, %v2298
      %v2389 = vadd.f32 %v2003, %v2301
      %v2390 = vadd.f32 %v2008, %v2306
      %v2391 = vadd.f32 %v2011, %v2309
      %v2392 = vadd.f32 %v2016, %v2314
      %v2393 = vadd.f32 %v2019, %v2317
      %v2394 = vadd.f32 %v2024, %v2322
      %v2395 = vadd.f32 %v2027, %v2325
      %v2396 = vadd.f32 %v2032, %v2330
      %v2397 = vadd.f32 %v2035, %v2333
      %v2398 = vadd.f32 %v2040, %v2338
      %v2399 = vadd.f32 %v2043, %v2341
      %v2400 = vadd.f32 %v2048, %v2346
      %v2401 = vadd.f32 %v2051, %v2349
      %v2402 = vadd.f32 %v2056, %v2354
      %v2403 = vadd.f32 %v2059, %v2357
      %v2404 = vadd.f32 %v2064, %v2362
      %v2405 = vadd.f32 %v2067, %v2365
      %v2406 = vadd.f32 %v2072, %v2370
      %v2407 = vadd.f32 %v2075, %v2373
      %v2408 = vld [vmem:[#allocation2 + $0x8] sm:$0xf]
      %v2409 = vld [vmem:[#allocation2 + $0xc] sm:$0xf]
      %v2410 = vld [vmem:[#allocation2 + $0x10] sm:$0xf]
      %v2411 = vld [vmem:[#allocation2 + $0x14] sm:$0xf]
      %v2412 = vld [vmem:[#allocation2 + $0x18] sm:$0xf]
      %v2413 = vld [vmem:[#allocation2 + $0x1c] sm:$0xf]
      %v2414 = vld [vmem:[#allocation2 + $0x20] sm:$0xf]
      %v2415 = vld [vmem:[#allocation2 + $0x24] sm:$0xf]
      %v2416 = vld [vmem:[#allocation2 + $0x28] sm:$0xf]
      %v2417 = vld [vmem:[#allocation2 + $0x2c] sm:$0xf]
      %v2418 = vld [vmem:[#allocation2 + $0x30] sm:$0xf]
      %v2419 = vld [vmem:[#allocation2 + $0x34] sm:$0xf]
      %v2420 = vld [vmem:[#allocation2 + $0x38] sm:$0xf]
      %v2421 = vld [vmem:[#allocation2 + $0x3c] sm:$0xf]
      %v2422 = vld [vmem:[#allocation2 + $0x40] sm:$0xf]
      %v2423 = vld [vmem:[#allocation2 + $0x44] sm:$0xf]
      %v2424 = vld [vmem:[#allocation2 + $0x48] sm:$0xf]
      %v2425 = vld [vmem:[#allocation2 + $0x4c] sm:$0xf]
      %v2426 = vld [vmem:[#allocation2 + $0x50] sm:$0xf]
      %v2427 = vld [vmem:[#allocation2 + $0x54] sm:$0xf]
      %v2428 = vld [vmem:[#allocation2 + $0x58] sm:$0xf]
      %v2429 = vld [vmem:[#allocation2 + $0x5c] sm:$0xf]
      %v2430 = vld [vmem:[#allocation2 + $0x60] sm:$0xf]
      %v2431 = vld [vmem:[#allocation2 + $0x64] sm:$0xf]
      %v2432 = vld [vmem:[#allocation2 + $0x68] sm:$0xf]
      %v2433 = vld [vmem:[#allocation2 + $0x6c] sm:$0xf]
      %v2434 = vld [vmem:[#allocation2 + $0x70] sm:$0xf]
      %v2435 = vld [vmem:[#allocation2 + $0x74] sm:$0xf]
      %v2436 = vld [vmem:[#allocation2 + $0x78] sm:$0xf]
      %v2437 = vld [vmem:[#allocation2 + $0x7c] sm:$0xf]
      %v2438 = vld [vmem:[#allocation2 + $0x80] sm:$0xf]
      %v2439 = vld [vmem:[#allocation2 + $0x84] sm:$0xf]
      %v2440 = vld [vmem:[#allocation2 + $0x88] sm:$0x1]
      %vm2441 = vmpackc.low %vm689, %vm689
      %vm2442 = vmpackc.low %vm690, %vm690
      %vm2443 = vmpackc.low %vm691, %vm691
      %vm2444 = vmpackc.low %vm692, %vm692
      %vm2445 = vmpackc.low %vm693, %vm693
      %vm2446 = vmpackc.low %vm694, %vm694
      %vm2447 = vmpackc.low %vm695, %vm695
      %vm2448 = vmpackc.low %vm696, %vm696
      %vm2449 = vmpackc.low %vm697, %vm697
      %vm2450 = vmpackc.low %vm698, %vm698
      %vm2451 = vmpackc.low %vm699, %vm699
      %vm2452 = vmpackc.low %vm700, %vm700
      %vm2453 = vmpackc.low %vm701, %vm701
      %vm2454 = vmpackc.low %vm702, %vm702
      %vm2455 = vmpackc.low %vm703, %vm703
      %vm2456 = vmpackc.low %vm704, %vm704
      %vm2457 = vmpackc.low %vm705, %vm705
      %vm2458 = vmpackc.low %vm706, %vm706
      %vm2459 = vmpackc.low %vm707, %vm707
      %vm2460 = vmpackc.low %vm708, %vm708
      %vm2461 = vmpackc.low %vm709, %vm709
      %vm2462 = vmpackc.low %vm710, %vm710
      %vm2463 = vmpackc.low %vm711, %vm711
      %vm2464 = vmpackc.low %vm712, %vm712
      %vm2465 = vmpackc.low %vm713, %vm713
      %vm2466 = vmpackc.low %vm714, %vm714
      %vm2467 = vmpackc.low %vm715, %vm715
      %vm2468 = vmpackc.low %vm716, %vm716
      %vm2469 = vmpackc.low %vm717, %vm717
      %vm2470 = vmpackc.low %vm718, %vm718
      %vm2471 = vmpackc.low %vm719, %vm719
      %vm2472 = vmpackc.low %vm720, %vm720
      %v2473 = vsel %vm2441, 65537, 0
      %v2474 = vsel %vm2442, 65537, 0
      %v2475 = vsel %vm2443, 65537, 0
      %v2476 = vsel %vm2444, 65537, 0
      %v2477 = vsel %vm2445, 65537, 0
      %v2478 = vsel %vm2446, 65537, 0
      %v2479 = vsel %vm2447, 65537, 0
      %v2480 = vsel %vm2448, 65537, 0
      %v2481 = vsel %vm2449, 65537, 0
      %v2482 = vsel %vm2450, 65537, 0
      %v2483 = vsel %vm2451, 65537, 0
      %v2484 = vsel %vm2452, 65537, 0
      %v2485 = vsel %vm2453, 65537, 0
      %v2486 = vsel %vm2454, 65537, 0
      %v2487 = vsel %vm2455, 65537, 0
      %v2488 = vsel %vm2456, 65537, 0
      %v2489 = vsel %vm2457, 65537, 0
      %v2490 = vsel %vm2458, 65537, 0
      %v2491 = vsel %vm2459, 65537, 0
      %v2492 = vsel %vm2460, 65537, 0
      %v2493 = vsel %vm2461, 65537, 0
      %v2494 = vsel %vm2462, 65537, 0
      %v2495 = vsel %vm2463, 65537, 0
      %v2496 = vsel %vm2464, 65537, 0
      %v2497 = vsel %vm2465, 65537, 0
      %v2498 = vsel %vm2466, 65537, 0
      %v2499 = vsel %vm2467, 65537, 0
      %v2500 = vsel %vm2468, 65537, 0
      %v2501 = vsel %vm2469, 65537, 0
      %v2502 = vsel %vm2470, 65537, 0
      %v2503 = vsel %vm2471, 65537, 0
      %v2504 = vsel %vm2472, 65537, 0
      %vm2505 = vsmask.f32 256
      %vm2506 = vsmask.f32 4368
      %vm2507 = vmor %vm2505, %vm2506
      %v2509 = vshrl.u32 %v2473, 16
      %v2511 = vrot.slane %v2509, 7
      %v2512 = vshll.u32 %v2473, 16
      %v2514 = vor.u32 %v2511, %v2512
      %v2515 = vrot.slane %v2511, 4
      %v2517 = vshrl.u32 %v2474, 16
      %v2519 = vrot.slane %v2517, 7
      %v2520 = vshll.u32 %v2474, 16
      %v2522 = vor.u32 %v2519, %v2520
      %v2523 = vsel %vm2507, %v2515, %v2522
      %v2524 = vrot.slane %v2519, 4
      %v2526 = vshrl.u32 %v2475, 16
      %v2528 = vrot.slane %v2526, 7
      %v2529 = vshll.u32 %v2475, 16
      %v2531 = vor.u32 %v2528, %v2529
      %v2532 = vsel %vm2507, %v2524, %v2531
      %v2533 = vrot.slane %v2528, 4
      %v2535 = vshrl.u32 %v2476, 16
      %v2537 = vrot.slane %v2535, 7
      %v2538 = vshll.u32 %v2476, 16
      %v2540 = vor.u32 %v2537, %v2538
      %v2541 = vsel %vm2507, %v2533, %v2540
      %v2542 = vrot.slane %v2537, 4
      %v2544 = vshrl.u32 %v2477, 16
      %v2546 = vrot.slane %v2544, 7
      %v2547 = vshll.u32 %v2477, 16
      %v2549 = vor.u32 %v2546, %v2547
      %v2550 = vsel %vm2507, %v2542, %v2549
      %v2551 = vrot.slane %v2546, 4
      %v2553 = vshrl.u32 %v2478, 16
      %v2555 = vrot.slane %v2553, 7
      %v2556 = vshll.u32 %v2478, 16
      %v2558 = vor.u32 %v2555, %v2556
      %v2559 = vsel %vm2507, %v2551, %v2558
      %v2560 = vrot.slane %v2555, 4
      %v2562 = vshrl.u32 %v2479, 16
      %v2564 = vrot.slane %v2562, 7
      %v2565 = vshll.u32 %v2479, 16
      %v2567 = vor.u32 %v2564, %v2565
      %v2568 = vsel %vm2507, %v2560, %v2567
      %v2569 = vrot.slane %v2564, 4
      %v2571 = vshrl.u32 %v2480, 16
      %v2573 = vrot.slane %v2571, 7
      %v2574 = vshll.u32 %v2480, 16
      %v2576 = vor.u32 %v2573, %v2574
      %v2577 = vsel %vm2507, %v2569, %v2576
      %v2578 = vrot.slane %v2573, 4
      %v2580 = vshrl.u32 %v2481, 16
      %v2582 = vrot.slane %v2580, 7
      %v2583 = vshll.u32 %v2481, 16
      %v2585 = vor.u32 %v2582, %v2583
      %v2586 = vsel %vm2507, %v2578, %v2585
      %v2587 = vrot.slane %v2582, 4
      %v2589 = vshrl.u32 %v2482, 16
      %v2591 = vrot.slane %v2589, 7
      %v2592 = vshll.u32 %v2482, 16
      %v2594 = vor.u32 %v2591, %v2592
      %v2595 = vsel %vm2507, %v2587, %v2594
      %v2596 = vrot.slane %v2591, 4
      %v2598 = vshrl.u32 %v2483, 16
      %v2600 = vrot.slane %v2598, 7
      %v2601 = vshll.u32 %v2483, 16
      %v2603 = vor.u32 %v2600, %v2601
      %v2604 = vsel %vm2507, %v2596, %v2603
      %v2605 = vrot.slane %v2600, 4
      %v2607 = vshrl.u32 %v2484, 16
      %v2609 = vrot.slane %v2607, 7
      %v2610 = vshll.u32 %v2484, 16
      %v2612 = vor.u32 %v2609, %v2610
      %v2613 = vsel %vm2507, %v2605, %v2612
      %v2614 = vrot.slane %v2609, 4
      %v2616 = vshrl.u32 %v2485, 16
      %v2618 = vrot.slane %v2616, 7
      %v2619 = vshll.u32 %v2485, 16
      %v2621 = vor.u32 %v2618, %v2619
      %v2622 = vsel %vm2507, %v2614, %v2621
      %v2623 = vrot.slane %v2618, 4
      %v2625 = vshrl.u32 %v2486, 16
      %v2627 = vrot.slane %v2625, 7
      %v2628 = vshll.u32 %v2486, 16
      %v2630 = vor.u32 %v2627, %v2628
      %v2631 = vsel %vm2507, %v2623, %v2630
      %v2632 = vrot.slane %v2627, 4
      %v2634 = vshrl.u32 %v2487, 16
      %v2636 = vrot.slane %v2634, 7
      %v2637 = vshll.u32 %v2487, 16
      %v2639 = vor.u32 %v2636, %v2637
      %v2640 = vsel %vm2507, %v2632, %v2639
      %v2641 = vrot.slane %v2636, 4
      %v2643 = vshrl.u32 %v2488, 16
      %v2645 = vrot.slane %v2643, 7
      %v2646 = vshll.u32 %v2488, 16
      %v2648 = vor.u32 %v2645, %v2646
      %v2649 = vsel %vm2507, %v2641, %v2648
      %v2650 = vrot.slane %v2645, 4
      %v2652 = vshrl.u32 %v2489, 16
      %v2654 = vrot.slane %v2652, 7
      %v2655 = vshll.u32 %v2489, 16
      %v2657 = vor.u32 %v2654, %v2655
      %v2658 = vsel %vm2507, %v2650, %v2657
      %v2659 = vrot.slane %v2654, 4
      %v2661 = vshrl.u32 %v2490, 16
      %v2663 = vrot.slane %v2661, 7
      %v2664 = vshll.u32 %v2490, 16
      %v2666 = vor.u32 %v2663, %v2664
      %v2667 = vsel %vm2507, %v2659, %v2666
      %v2668 = vrot.slane %v2663, 4
      %v2670 = vshrl.u32 %v2491, 16
      %v2672 = vrot.slane %v2670, 7
      %v2673 = vshll.u32 %v2491, 16
      %v2675 = vor.u32 %v2672, %v2673
      %v2676 = vsel %vm2507, %v2668, %v2675
      %v2677 = vrot.slane %v2672, 4
      %v2679 = vshrl.u32 %v2492, 16
      %v2681 = vrot.slane %v2679, 7
      %v2682 = vshll.u32 %v2492, 16
      %v2684 = vor.u32 %v2681, %v2682
      %v2685 = vsel %vm2507, %v2677, %v2684
      %v2686 = vrot.slane %v2681, 4
      %v2688 = vshrl.u32 %v2493, 16
      %v2690 = vrot.slane %v2688, 7
      %v2691 = vshll.u32 %v2493, 16
      %v2693 = vor.u32 %v2690, %v2691
      %v2694 = vsel %vm2507, %v2686, %v2693
      %v2695 = vrot.slane %v2690, 4
      %v2697 = vshrl.u32 %v2494, 16
      %v2699 = vrot.slane %v2697, 7
      %v2700 = vshll.u32 %v2494, 16
      %v2702 = vor.u32 %v2699, %v2700
      %v2703 = vsel %vm2507, %v2695, %v2702
      %v2704 = vrot.slane %v2699, 4
      %v2706 = vshrl.u32 %v2495, 16
      %v2708 = vrot.slane %v2706, 7
      %v2709 = vshll.u32 %v2495, 16
      %v2711 = vor.u32 %v2708, %v2709
      %v2712 = vsel %vm2507, %v2704, %v2711
      %v2713 = vrot.slane %v2708, 4
      %v2715 = vshrl.u32 %v2496, 16
      %v2717 = vrot.slane %v2715, 7
      %v2718 = vshll.u32 %v2496, 16
      %v2720 = vor.u32 %v2717, %v2718
      %v2721 = vsel %vm2507, %v2713, %v2720
      %v2722 = vrot.slane %v2717, 4
      %v2724 = vshrl.u32 %v2497, 16
      %v2726 = vrot.slane %v2724, 7
      %v2727 = vshll.u32 %v2497, 16
      %v2729 = vor.u32 %v2726, %v2727
      %v2730 = vsel %vm2507, %v2722, %v2729
      %v2731 = vrot.slane %v2726, 4
      %v2733 = vshrl.u32 %v2498, 16
      %v2735 = vrot.slane %v2733, 7
      %v2736 = vshll.u32 %v2498, 16
      %v2738 = vor.u32 %v2735, %v2736
      %v2739 = vsel %vm2507, %v2731, %v2738
      %v2740 = vrot.slane %v2735, 4
      %v2742 = vshrl.u32 %v2499, 16
      %v2744 = vrot.slane %v2742, 7
      %v2745 = vshll.u32 %v2499, 16
      %v2747 = vor.u32 %v2744, %v2745
      %v2748 = vsel %vm2507, %v2740, %v2747
      %v2749 = vrot.slane %v2744, 4
      %v2751 = vshrl.u32 %v2500, 16
      %v2753 = vrot.slane %v2751, 7
      %v2754 = vshll.u32 %v2500, 16
      %v2756 = vor.u32 %v2753, %v2754
      %v2757 = vsel %vm2507, %v2749, %v2756
      %v2758 = vrot.slane %v2753, 4
      %v2760 = vshrl.u32 %v2501, 16
      %v2762 = vrot.slane %v2760, 7
      %v2763 = vshll.u32 %v2501, 16
      %v2765 = vor.u32 %v2762, %v2763
      %v2766 = vsel %vm2507, %v2758, %v2765
      %v2767 = vrot.slane %v2762, 4
      %v2769 = vshrl.u32 %v2502, 16
      %v2771 = vrot.slane %v2769, 7
      %v2772 = vshll.u32 %v2502, 16
      %v2774 = vor.u32 %v2771, %v2772
      %v2775 = vsel %vm2507, %v2767, %v2774
      %v2776 = vrot.slane %v2771, 4
      %v2778 = vshrl.u32 %v2503, 16
      %v2780 = vrot.slane %v2778, 7
      %v2781 = vshll.u32 %v2503, 16
      %v2783 = vor.u32 %v2780, %v2781
      %v2784 = vsel %vm2507, %v2776, %v2783
      %v2785 = vrot.slane %v2780, 4
      %v2787 = vshrl.u32 %v2504, 16
      %v2789 = vrot.slane %v2787, 7
      %v2790 = vshll.u32 %v2504, 16
      %v2792 = vor.u32 %v2789, %v2790
      %v2793 = vsel %vm2507, %v2785, %v2792
      %v2794 = vrot.slane %v2789, 4
      %vm2795 = vcmp.ne.s16.totalorder %v2514, 0
      %vm2796 = vcmp.ne.s16.totalorder %v2523, 0
      %vm2797 = vcmp.ne.s16.totalorder %v2532, 0
      %vm2798 = vcmp.ne.s16.totalorder %v2541, 0
      %vm2799 = vcmp.ne.s16.totalorder %v2550, 0
      %vm2800 = vcmp.ne.s16.totalorder %v2559, 0
      %vm2801 = vcmp.ne.s16.totalorder %v2568, 0
      %vm2802 = vcmp.ne.s16.totalorder %v2577, 0
      %vm2803 = vcmp.ne.s16.totalorder %v2586, 0
      %vm2804 = vcmp.ne.s16.totalorder %v2595, 0
      %vm2805 = vcmp.ne.s16.totalorder %v2604, 0
      %vm2806 = vcmp.ne.s16.totalorder %v2613, 0
      %vm2807 = vcmp.ne.s16.totalorder %v2622, 0
      %vm2808 = vcmp.ne.s16.totalorder %v2631, 0
      %vm2809 = vcmp.ne.s16.totalorder %v2640, 0
      %vm2810 = vcmp.ne.s16.totalorder %v2649, 0
      %vm2811 = vcmp.ne.s16.totalorder %v2658, 0
      %vm2812 = vcmp.ne.s16.totalorder %v2667, 0
      %vm2813 = vcmp.ne.s16.totalorder %v2676, 0
      %vm2814 = vcmp.ne.s16.totalorder %v2685, 0
      %vm2815 = vcmp.ne.s16.totalorder %v2694, 0
      %vm2816 = vcmp.ne.s16.totalorder %v2703, 0
      %vm2817 = vcmp.ne.s16.totalorder %v2712, 0
      %vm2818 = vcmp.ne.s16.totalorder %v2721, 0
      %vm2819 = vcmp.ne.s16.totalorder %v2730, 0
      %vm2820 = vcmp.ne.s16.totalorder %v2739, 0
      %vm2821 = vcmp.ne.s16.totalorder %v2748, 0
      %vm2822 = vcmp.ne.s16.totalorder %v2757, 0
      %vm2823 = vcmp.ne.s16.totalorder %v2766, 0
      %vm2824 = vcmp.ne.s16.totalorder %v2775, 0
      %vm2825 = vcmp.ne.s16.totalorder %v2784, 0
      %vm2826 = vcmp.ne.s16.totalorder %v2793, 0
      %vm2827 = vcmp.ne.s16.totalorder %v2794, 0
      %v2828 = vsel %vm2795, %v2408, 0
      %v2829 = vsel %vm2796, %v2409, 0
      %v2830 = vsel %vm2797, %v2410, 0
      %v2831 = vsel %vm2798, %v2411, 0
      %v2832 = vsel %vm2799, %v2412, 0
      %v2833 = vsel %vm2800, %v2413, 0
      %v2834 = vsel %vm2801, %v2414, 0
      %v2835 = vsel %vm2802, %v2415, 0
      %v2836 = vsel %vm2803, %v2416, 0
      %v2837 = vsel %vm2804, %v2417, 0
      %v2838 = vsel %vm2805, %v2418, 0
      %v2839 = vsel %vm2806, %v2419, 0
      %v2840 = vsel %vm2807, %v2420, 0
      %v2841 = vsel %vm2808, %v2421, 0
      %v2842 = vsel %vm2809, %v2422, 0
      %v2843 = vsel %vm2810, %v2423, 0
      %v2844 = vsel %vm2811, %v2424, 0
      %v2845 = vsel %vm2812, %v2425, 0
      %v2846 = vsel %vm2813, %v2426, 0
      %v2847 = vsel %vm2814, %v2427, 0
      %v2848 = vsel %vm2815, %v2428, 0
      %v2849 = vsel %vm2816, %v2429, 0
      %v2850 = vsel %vm2817, %v2430, 0
      %v2851 = vsel %vm2818, %v2431, 0
      %v2852 = vsel %vm2819, %v2432, 0
      %v2853 = vsel %vm2820, %v2433, 0
      %v2854 = vsel %vm2821, %v2434, 0
      %v2855 = vsel %vm2822, %v2435, 0
      %v2856 = vsel %vm2823, %v2436, 0
      %v2857 = vsel %vm2824, %v2437, 0
      %v2858 = vsel %vm2825, %v2438, 0
      %v2859 = vsel %vm2826, %v2439, 0
      %v2860 = vsel %vm2827, %v2440, 0
      %s2861 = scalar_lea.vmem %s2, 16
      %v2862 = vld [vmem:[%s2861] sm:$0xf]
      %v2863 = vld [vmem:[%s2861 + $0x4] sm:$0xf]
      %v2897 = vunpack.c.l.b16 %v2828
      %v2898 = vunpack.c.l.b16 %v2829
      %v2899 = vunpack.c.l.b16 %v2830
      %v2900 = vunpack.c.l.b16 %v2831
      %v2901 = vunpack.c.l.b16 %v2832
      %v2902 = vunpack.c.l.b16 %v2833
      %v2903 = vunpack.c.l.b16 %v2834
      %v2904 = vunpack.c.l.b16 %v2835
      %v2905 = vunpack.c.l.b16 %v2836
      %v2906 = vunpack.c.l.b16 %v2837
      %v2907 = vunpack.c.l.b16 %v2838
      %v2908 = vunpack.c.l.b16 %v2839
      %v2909 = vunpack.c.l.b16 %v2840
      %v2910 = vunpack.c.l.b16 %v2841
      %v2911 = vunpack.c.l.b16 %v2842
      %v2912 = vunpack.c.l.b16 %v2843
      %v2913 = vunpack.c.l.b16 %v2844
      %v2914 = vunpack.c.l.b16 %v2845
      %v2915 = vunpack.c.l.b16 %v2846
      %v2916 = vunpack.c.l.b16 %v2847
      %v2917 = vunpack.c.l.b16 %v2848
      %v2918 = vunpack.c.l.b16 %v2849
      %v2919 = vunpack.c.l.b16 %v2850
      %v2920 = vunpack.c.l.b16 %v2851
      %v2921 = vunpack.c.l.b16 %v2852
      %v2922 = vunpack.c.l.b16 %v2853
      %v2923 = vunpack.c.l.b16 %v2854
      %v2924 = vunpack.c.l.b16 %v2855
      %v2925 = vunpack.c.l.b16 %v2856
      %v2926 = vunpack.c.l.b16 %v2857
      %v2927 = vunpack.c.l.b16 %v2858
      %v2928 = vunpack.c.l.b16 %v2859
      %v2929 = vunpack.c.l.b16 %v2860
      %v2930 = vpack.c.b16 %v2898, %v2897
      %v2931 = vpack.c.b16 %v2900, %v2899
      %v2932 = vpack.c.b16 %v2902, %v2901
      %v2933 = vpack.c.b16 %v2904, %v2903
      %v2934 = vpack.c.b16 %v2906, %v2905
      %v2935 = vpack.c.b16 %v2908, %v2907
      %v2936 = vpack.c.b16 %v2910, %v2909
      %v2937 = vpack.c.b16 %v2912, %v2911
      %v2938 = vpack.c.b16 %v2914, %v2913
      %v2939 = vpack.c.b16 %v2916, %v2915
      %v2940 = vpack.c.b16 %v2918, %v2917
      %v2941 = vpack.c.b16 %v2920, %v2919
      %v2942 = vpack.c.b16 %v2922, %v2921
      %v2943 = vpack.c.b16 %v2924, %v2923
      %v2944 = vpack.c.b16 %v2926, %v2925
      %v2945 = vpack.c.b16 %v2928, %v2927
      %v2946 = vpack.c.b16 %v2929, %v2929
      %vm2947 = vsmask.f32 7424
      %v2949 = vshrl.u32 %v2930, 16
      %v2951 = vshll.u32 %v2930, 16
      %v2953 = vrot.slane %v2951, 1
      %v2954 = vor.u32 %v2949, %v2953
      %v2956 = vshll.u32 %v2931, 16
      %v2958 = vrot.slane %v2956, 1
      %v2959 = vsel %vm2947, %v2954, %v2958
      %v2960 = vshrl.u32 %v2931, 16
      %v2962 = vor.u32 %v2960, %v2958
      %v2964 = vshll.u32 %v2932, 16
      %v2966 = vrot.slane %v2964, 1
      %v2967 = vsel %vm2947, %v2962, %v2966
      %v2968 = vshrl.u32 %v2932, 16
      %v2970 = vor.u32 %v2968, %v2966
      %v2972 = vshll.u32 %v2933, 16
      %v2974 = vrot.slane %v2972, 1
      %v2975 = vsel %vm2947, %v2970, %v2974
      %v2976 = vshrl.u32 %v2933, 16
      %v2978 = vor.u32 %v2976, %v2974
      %v2980 = vshll.u32 %v2934, 16
      %v2982 = vrot.slane %v2980, 1
      %v2983 = vsel %vm2947, %v2978, %v2982
      %v2984 = vshrl.u32 %v2934, 16
      %v2986 = vor.u32 %v2984, %v2982
      %v2988 = vshll.u32 %v2935, 16
      %v2990 = vrot.slane %v2988, 1
      %v2991 = vsel %vm2947, %v2986, %v2990
      %v2992 = vshrl.u32 %v2935, 16
      %v2994 = vor.u32 %v2992, %v2990
      %v2996 = vshll.u32 %v2936, 16
      %v2998 = vrot.slane %v2996, 1
      %v2999 = vsel %vm2947, %v2994, %v2998
      %v3000 = vshrl.u32 %v2936, 16
      %v3002 = vor.u32 %v3000, %v2998
      %v3004 = vshll.u32 %v2937, 16
      %v3006 = vrot.slane %v3004, 1
      %v3007 = vsel %vm2947, %v3002, %v3006
      %v3008 = vshrl.u32 %v2937, 16
      %v3010 = vor.u32 %v3008, %v3006
      %v3012 = vshll.u32 %v2938, 16
      %v3014 = vrot.slane %v3012, 1
      %v3015 = vsel %vm2947, %v3010, %v3014
      %v3016 = vshrl.u32 %v2938, 16
      %v3018 = vor.u32 %v3016, %v3014
      %v3020 = vshll.u32 %v2939, 16
      %v3022 = vrot.slane %v3020, 1
      %v3023 = vsel %vm2947, %v3018, %v3022
      %v3024 = vshrl.u32 %v2939, 16
      %v3026 = vor.u32 %v3024, %v3022
      %v3028 = vshll.u32 %v2940, 16
      %v3030 = vrot.slane %v3028, 1
      %v3031 = vsel %vm2947, %v3026, %v3030
      %v3032 = vshrl.u32 %v2940, 16
      %v3034 = vor.u32 %v3032, %v3030
      %v3036 = vshll.u32 %v2941, 16
      %v3038 = vrot.slane %v3036, 1
      %v3039 = vsel %vm2947, %v3034, %v3038
      %v3040 = vshrl.u32 %v2941, 16
      %v3042 = vor.u32 %v3040, %v3038
      %v3044 = vshll.u32 %v2942, 16
      %v3046 = vrot.slane %v3044, 1
      %v3047 = vsel %vm2947, %v3042, %v3046
      %v3048 = vshrl.u32 %v2942, 16
      %v3050 = vor.u32 %v3048, %v3046
      %v3052 = vshll.u32 %v2943, 16
      %v3054 = vrot.slane %v3052, 1
      %v3055 = vsel %vm2947, %v3050, %v3054
      %v3056 = vshrl.u32 %v2943, 16
      %v3058 = vor.u32 %v3056, %v3054
      %v3060 = vshll.u32 %v2944, 16
      %v3062 = vrot.slane %v3060, 1
      %v3063 = vsel %vm2947, %v3058, %v3062
      %v3064 = vshrl.u32 %v2944, 16
      %v3066 = vor.u32 %v3064, %v3062
      %v3068 = vshll.u32 %v2945, 16
      %v3070 = vrot.slane %v3068, 1
      %v3071 = vsel %vm2947, %v3066, %v3070
      %v3072 = vshrl.u32 %v2945, 16
      %v3074 = vor.u32 %v3072, %v3070
      %v3076 = vshll.u32 %v2946, 16
      %v3078 = vrot.slane %v3076, 1
      %v3079 = vsel %vm2947, %v3074, %v3078
      %v3082 = vunpack.c.l.b16 %v2862
      %v3083 = vunpack.c.l.b16 %v2863
      %v3084 = vpack.c.b16 %v3083, %v3082
      %v3087 = vsel %vm1554, %v2959, 0
      %v3090 = vsel %vm1554, %v2967, 0
      %v3093 = vsel %vm1554, %v2975, 0
      %v3096 = vsel %vm1554, %v2983, 0
      %v3099 = vsel %vm1554, %v2991, 0
      %v3102 = vsel %vm1554, %v2999, 0
      %v3105 = vsel %vm1554, %v3007, 0
      %v3108 = vsel %vm1554, %v3015, 0
      %v3111 = vsel %vm1554, %v3023, 0
      %v3114 = vsel %vm1554, %v3031, 0
      %v3117 = vsel %vm1554, %v3039, 0
      %v3120 = vsel %vm1554, %v3047, 0
      %v3123 = vsel %vm1554, %v3055, 0
      %v3126 = vsel %vm1554, %v3063, 0
      %v3129 = vsel %vm1554, %v3071, 0
      %v3132 = vsel %vm1554, %v3079, 0
      %3134 = vmatprep.subr.bf16.mxu0 0
      %3135 = vmatpush1.bf16.msra.mxu0 0
      %3136 = vmatprep.subr.bf16.mxu0 0
      %3137 = vmatpush1.bf16.msra.mxu0 0
      %3138 = vmatprep.subr.bf16.mxu0 0
      %3139 = vmatpush1.bf16.msra.mxu0 0
      %3140 = vmatprep.subr.bf16.mxu0 0
      %3141 = vmatpush1.bf16.msra.mxu0 0
      %3142 = vmatprep.subr.bf16.mxu0 0
      %3143 = vmatpush1.bf16.msra.mxu0 0
      %3144 = vmatprep.subr.bf16.mxu0 0
      %3145 = vmatpush1.bf16.msra.mxu0 0
      %3146 = vmatprep.subr.bf16.mxu0 0
      %3147 = vmatpush1.bf16.msra.mxu0 0
      %3148 = vmatprep.subr.bf16.mxu0 0
      %3149 = vmatpush1.bf16.msra.mxu0 %v3084
      %3150 = vmatprep.subr.bf16.mxu0 0
      %3151 = vmatpush2.bf16.msra.mxu0 0
      %3152 = vmatprep.subr.bf16.mxu0 0
      %3153 = vmatpush2.bf16.msra.mxu0 0
      %3154 = vmatprep.subr.bf16.mxu0 0
      %3155 = vmatpush2.bf16.msra.mxu0 0
      %3156 = vmatprep.subr.bf16.mxu0 0
      %3157 = vmatpush2.bf16.msra.mxu0 0
      %3158 = vmatprep.subr.bf16.mxu0 0
      %3159 = vmatpush2.bf16.msra.mxu0 0
      %3160 = vmatprep.subr.bf16.mxu0 0
      %3161 = vmatpush2.bf16.msra.mxu0 0
      %3162 = vmatprep.subr.bf16.mxu0 0
      %3163 = vmatpush2.bf16.msra.mxu0 0
      %3164 = vmatprep.subr.bf16.mxu0 0
      %3165 = vmatpush2.bf16.msra.mxu0 0
      %3166 = vmatprep.mubr.bf16.mxu0 0
      %3167 = vmatmul.mubr.bf16.gmra.mxu0 %v3087
      %v3168 = vpop.f32.mrf.mxu0
      %v3169 = vadd.f32 0.0, %v3168
      %v3170 = vpop.f32.mrf.mxu0
      %v3171 = vpop.f32.mrf.mxu0
      %v3172 = vadd.f32 0.0, %v3171
      %v3173 = vpop.f32.mrf.mxu0
      %3174 = vmatprep.mubr.bf16.mxu0 0
      %3175 = vmatmul.mubr.bf16.gmra.mxu0 %v3090
      %v3176 = vpop.f32.mrf.mxu0
      %v3177 = vadd.f32 0.0, %v3176
      %v3178 = vpop.f32.mrf.mxu0
      %v3179 = vpop.f32.mrf.mxu0
      %v3180 = vadd.f32 0.0, %v3179
      %v3181 = vpop.f32.mrf.mxu0
      %3182 = vmatprep.mubr.bf16.mxu0 0
      %3183 = vmatmul.mubr.bf16.gmra.mxu0 %v3093
      %v3184 = vpop.f32.mrf.mxu0
      %v3185 = vadd.f32 0.0, %v3184
      %v3186 = vpop.f32.mrf.mxu0
      %v3187 = vpop.f32.mrf.mxu0
      %v3188 = vadd.f32 0.0, %v3187
      %v3189 = vpop.f32.mrf.mxu0
      %3190 = vmatprep.mubr.bf16.mxu0 0
      %3191 = vmatmul.mubr.bf16.gmra.mxu0 %v3096
      %v3192 = vpop.f32.mrf.mxu0
      %v3193 = vadd.f32 0.0, %v3192
      %v3194 = vpop.f32.mrf.mxu0
      %v3195 = vpop.f32.mrf.mxu0
      %v3196 = vadd.f32 0.0, %v3195
      %v3197 = vpop.f32.mrf.mxu0
      %3198 = vmatprep.mubr.bf16.mxu0 0
      %3199 = vmatmul.mubr.bf16.gmra.mxu0 %v3099
      %v3200 = vpop.f32.mrf.mxu0
      %v3201 = vadd.f32 0.0, %v3200
      %v3202 = vpop.f32.mrf.mxu0
      %v3203 = vpop.f32.mrf.mxu0
      %v3204 = vadd.f32 0.0, %v3203
      %v3205 = vpop.f32.mrf.mxu0
      %3206 = vmatprep.mubr.bf16.mxu0 0
      %3207 = vmatmul.mubr.bf16.gmra.mxu0 %v3102
      %v3208 = vpop.f32.mrf.mxu0
      %v3209 = vadd.f32 0.0, %v3208
      %v3210 = vpop.f32.mrf.mxu0
      %v3211 = vpop.f32.mrf.mxu0
      %v3212 = vadd.f32 0.0, %v3211
      %v3213 = vpop.f32.mrf.mxu0
      %3214 = vmatprep.mubr.bf16.mxu0 0
      %3215 = vmatmul.mubr.bf16.gmra.mxu0 %v3105
      %v3216 = vpop.f32.mrf.mxu0
      %v3217 = vadd.f32 0.0, %v3216
      %v3218 = vpop.f32.mrf.mxu0
      %v3219 = vpop.f32.mrf.mxu0
      %v3220 = vadd.f32 0.0, %v3219
      %v3221 = vpop.f32.mrf.mxu0
      %3222 = vmatprep.mubr.bf16.mxu0 0
      %3223 = vmatmul.mubr.bf16.gmra.mxu0 %v3108
      %v3224 = vpop.f32.mrf.mxu0
      %v3225 = vadd.f32 0.0, %v3224
      %v3226 = vpop.f32.mrf.mxu0
      %v3227 = vpop.f32.mrf.mxu0
      %v3228 = vadd.f32 0.0, %v3227
      %v3229 = vpop.f32.mrf.mxu0
      %3230 = vmatprep.mubr.bf16.mxu0 0
      %3231 = vmatmul.mubr.bf16.gmra.mxu0 %v3111
      %v3232 = vpop.f32.mrf.mxu0
      %v3233 = vadd.f32 0.0, %v3232
      %v3234 = vpop.f32.mrf.mxu0
      %v3235 = vpop.f32.mrf.mxu0
      %v3236 = vadd.f32 0.0, %v3235
      %v3237 = vpop.f32.mrf.mxu0
      %3238 = vmatprep.mubr.bf16.mxu0 0
      %3239 = vmatmul.mubr.bf16.gmra.mxu0 %v3114
      %v3240 = vpop.f32.mrf.mxu0
      %v3241 = vadd.f32 0.0, %v3240
      %v3242 = vpop.f32.mrf.mxu0
      %v3243 = vpop.f32.mrf.mxu0
      %v3244 = vadd.f32 0.0, %v3243
      %v3245 = vpop.f32.mrf.mxu0
      %3246 = vmatprep.mubr.bf16.mxu0 0
      %3247 = vmatmul.mubr.bf16.gmra.mxu0 %v3117
      %v3248 = vpop.f32.mrf.mxu0
      %v3249 = vadd.f32 0.0, %v3248
      %v3250 = vpop.f32.mrf.mxu0
      %v3251 = vpop.f32.mrf.mxu0
      %v3252 = vadd.f32 0.0, %v3251
      %v3253 = vpop.f32.mrf.mxu0
      %3254 = vmatprep.mubr.bf16.mxu0 0
      %3255 = vmatmul.mubr.bf16.gmra.mxu0 %v3120
      %v3256 = vpop.f32.mrf.mxu0
      %v3257 = vadd.f32 0.0, %v3256
      %v3258 = vpop.f32.mrf.mxu0
      %v3259 = vpop.f32.mrf.mxu0
      %v3260 = vadd.f32 0.0, %v3259
      %v3261 = vpop.f32.mrf.mxu0
      %3262 = vmatprep.mubr.bf16.mxu0 0
      %3263 = vmatmul.mubr.bf16.gmra.mxu0 %v3123
      %v3264 = vpop.f32.mrf.mxu0
      %v3265 = vadd.f32 0.0, %v3264
      %v3266 = vpop.f32.mrf.mxu0
      %v3267 = vpop.f32.mrf.mxu0
      %v3268 = vadd.f32 0.0, %v3267
      %v3269 = vpop.f32.mrf.mxu0
      %3270 = vmatprep.mubr.bf16.mxu0 0
      %3271 = vmatmul.mubr.bf16.gmra.mxu0 %v3126
      %v3272 = vpop.f32.mrf.mxu0
      %v3273 = vadd.f32 0.0, %v3272
      %v3274 = vpop.f32.mrf.mxu0
      %v3275 = vpop.f32.mrf.mxu0
      %v3276 = vadd.f32 0.0, %v3275
      %v3277 = vpop.f32.mrf.mxu0
      %3278 = vmatprep.mubr.bf16.mxu0 0
      %3279 = vmatmul.mubr.bf16.gmra.mxu0 %v3129
      %v3280 = vpop.f32.mrf.mxu0
      %v3281 = vadd.f32 0.0, %v3280
      %v3282 = vpop.f32.mrf.mxu0
      %v3283 = vpop.f32.mrf.mxu0
      %v3284 = vadd.f32 0.0, %v3283
      %v3285 = vpop.f32.mrf.mxu0
      %3286 = vmatprep.mubr.bf16.mxu0 0
      %3287 = vmatmul.mubr.bf16.gmra.mxu0 %v3132
      %v3288 = vpop.f32.mrf.mxu0
      %v3289 = vadd.f32 0.0, %v3288
      %v3290 = vpop.f32.mrf.mxu0
      %v3291 = vpop.f32.mrf.mxu0
      %v3292 = vadd.f32 0.0, %v3291
      %v3293 = vpop.f32.mrf.mxu0
      %3294 = vdwg.mxu0
      %v3295 = vadd.f32 %v2376, %v3169
      %v3296 = vadd.f32 %v2377, %v3172
      %v3297 = vadd.f32 %v2378, %v3177
      %v3298 = vadd.f32 %v2379, %v3180
      %v3299 = vadd.f32 %v2380, %v3185
      %v3300 = vadd.f32 %v2381, %v3188
      %v3301 = vadd.f32 %v2382, %v3193
      %v3302 = vadd.f32 %v2383, %v3196
      %v3303 = vadd.f32 %v2384, %v3201
      %v3304 = vadd.f32 %v2385, %v3204
      %v3305 = vadd.f32 %v2386, %v3209
      %v3306 = vadd.f32 %v2387, %v3212
      %v3307 = vadd.f32 %v2388, %v3217
      %v3308 = vadd.f32 %v2389, %v3220
      %v3309 = vadd.f32 %v2390, %v3225
      %v3310 = vadd.f32 %v2391, %v3228
      %v3311 = vadd.f32 %v2392, %v3233
      %v3312 = vadd.f32 %v2393, %v3236
      %v3313 = vadd.f32 %v2394, %v3241
      %v3314 = vadd.f32 %v2395, %v3244
      %v3315 = vadd.f32 %v2396, %v3249
      %v3316 = vadd.f32 %v2397, %v3252
      %v3317 = vadd.f32 %v2398, %v3257
      %v3318 = vadd.f32 %v2399, %v3260
      %v3319 = vadd.f32 %v2400, %v3265
      %v3320 = vadd.f32 %v2401, %v3268
      %v3321 = vadd.f32 %v2402, %v3273
      %v3322 = vadd.f32 %v2403, %v3276
      %v3323 = vadd.f32 %v2404, %v3281
      %v3324 = vadd.f32 %v2405, %v3284
      %v3325 = vadd.f32 %v2406, %v3289
      %v3326 = vadd.f32 %v2407, %v3292
      %v3327 = vld [vmem:[#allocation2 + $0xc] sm:$0x8]
      %v3328 = vld [vmem:[#allocation2 + $0x10] sm:$0xf]
      %v3329 = vld [vmem:[#allocation2 + $0x14] sm:$0xf]
      %v3330 = vld [vmem:[#allocation2 + $0x18] sm:$0xf]
      %v3331 = vld [vmem:[#allocation2 + $0x1c] sm:$0xf]
      %v3332 = vld [vmem:[#allocation2 + $0x20] sm:$0xf]
      %v3333 = vld [vmem:[#allocation2 + $0x24] sm:$0xf]
      %v3334 = vld [vmem:[#allocation2 + $0x28] sm:$0xf]
      %v3335 = vld [vmem:[#allocation2 + $0x2c] sm:$0xf]
      %v3336 = vld [vmem:[#allocation2 + $0x30] sm:$0xf]
      %v3337 = vld [vmem:[#allocation2 + $0x34] sm:$0xf]
      %v3338 = vld [vmem:[#allocation2 + $0x38] sm:$0xf]
      %v3339 = vld [vmem:[#allocation2 + $0x3c] sm:$0xf]
      %v3340 = vld [vmem:[#allocation2 + $0x40] sm:$0xf]
      %v3341 = vld [vmem:[#allocation2 + $0x44] sm:$0xf]
      %v3342 = vld [vmem:[#allocation2 + $0x48] sm:$0xf]
      %v3343 = vld [vmem:[#allocation2 + $0x4c] sm:$0xf]
      %v3344 = vld [vmem:[#allocation2 + $0x50] sm:$0xf]
      %v3345 = vld [vmem:[#allocation2 + $0x54] sm:$0xf]
      %v3346 = vld [vmem:[#allocation2 + $0x58] sm:$0xf]
      %v3347 = vld [vmem:[#allocation2 + $0x5c] sm:$0xf]
      %v3348 = vld [vmem:[#allocation2 + $0x60] sm:$0xf]
      %v3349 = vld [vmem:[#allocation2 + $0x64] sm:$0xf]
      %v3350 = vld [vmem:[#allocation2 + $0x68] sm:$0xf]
      %v3351 = vld [vmem:[#allocation2 + $0x6c] sm:$0xf]
      %v3352 = vld [vmem:[#allocation2 + $0x70] sm:$0xf]
      %v3353 = vld [vmem:[#allocation2 + $0x74] sm:$0xf]
      %v3354 = vld [vmem:[#allocation2 + $0x78] sm:$0xf]
      %v3355 = vld [vmem:[#allocation2 + $0x7c] sm:$0xf]
      %v3356 = vld [vmem:[#allocation2 + $0x80] sm:$0xf]
      %v3357 = vld [vmem:[#allocation2 + $0x84] sm:$0xf]
      %v3358 = vld [vmem:[#allocation2 + $0x88] sm:$0xf]
      %v3359 = vld [vmem:[#allocation2 + $0x8c] sm:$0xf]
      %v3360 = vsel %vm1244, %v3327, 0
      %v3361 = vsel %vm1245, %v3328, 0
      %v3362 = vsel %vm1246, %v3329, 0
      %v3363 = vsel %vm1247, %v3330, 0
      %v3364 = vsel %vm1248, %v3331, 0
      %v3365 = vsel %vm1249, %v3332, 0
      %v3366 = vsel %vm1250, %v3333, 0
      %v3367 = vsel %vm1251, %v3334, 0
      %v3368 = vsel %vm1252, %v3335, 0
      %v3369 = vsel %vm1253, %v3336, 0
      %v3370 = vsel %vm1254, %v3337, 0
      %v3371 = vsel %vm1255, %v3338, 0
      %v3372 = vsel %vm1256, %v3339, 0
      %v3373 = vsel %vm1257, %v3340, 0
      %v3374 = vsel %vm1258, %v3341, 0
      %v3375 = vsel %vm1259, %v3342, 0
      %v3376 = vsel %vm1260, %v3343, 0
      %v3377 = vsel %vm1261, %v3344, 0
      %v3378 = vsel %vm1262, %v3345, 0
      %v3379 = vsel %vm1263, %v3346, 0
      %v3380 = vsel %vm1264, %v3347, 0
      %v3381 = vsel %vm1265, %v3348, 0
      %v3382 = vsel %vm1266, %v3349, 0
      %v3383 = vsel %vm1267, %v3350, 0
      %v3384 = vsel %vm1268, %v3351, 0
      %v3385 = vsel %vm1269, %v3352, 0
      %v3386 = vsel %vm1270, %v3353, 0
      %v3387 = vsel %vm1271, %v3354, 0
      %v3388 = vsel %vm1272, %v3355, 0
      %v3389 = vsel %vm1273, %v3356, 0
      %v3390 = vsel %vm1274, %v3357, 0
      %v3391 = vsel %vm1275, %v3358, 0
      %v3392 = vsel %vm1276, %v3359, 0
      %s3393 = scalar_lea.vmem %s2, 24
      %v3394 = vld [vmem:[%s3393] sm:$0xf]
      %v3395 = vld [vmem:[%s3393 + $0x4] sm:$0xf]
      %v3429 = vunpack.c.l.b16 %v3360
      %v3430 = vunpack.c.l.b16 %v3361
      %v3431 = vunpack.c.l.b16 %v3362
      %v3432 = vunpack.c.l.b16 %v3363
      %v3433 = vunpack.c.l.b16 %v3364
      %v3434 = vunpack.c.l.b16 %v3365
      %v3435 = vunpack.c.l.b16 %v3366
      %v3436 = vunpack.c.l.b16 %v3367
      %v3437 = vunpack.c.l.b16 %v3368
      %v3438 = vunpack.c.l.b16 %v3369
      %v3439 = vunpack.c.l.b16 %v3370
      %v3440 = vunpack.c.l.b16 %v3371
      %v3441 = vunpack.c.l.b16 %v3372
      %v3442 = vunpack.c.l.b16 %v3373
      %v3443 = vunpack.c.l.b16 %v3374
      %v3444 = vunpack.c.l.b16 %v3375
      %v3445 = vunpack.c.l.b16 %v3376
      %v3446 = vunpack.c.l.b16 %v3377
      %v3447 = vunpack.c.l.b16 %v3378
      %v3448 = vunpack.c.l.b16 %v3379
      %v3449 = vunpack.c.l.b16 %v3380
      %v3450 = vunpack.c.l.b16 %v3381
      %v3451 = vunpack.c.l.b16 %v3382
      %v3452 = vunpack.c.l.b16 %v3383
      %v3453 = vunpack.c.l.b16 %v3384
      %v3454 = vunpack.c.l.b16 %v3385
      %v3455 = vunpack.c.l.b16 %v3386
      %v3456 = vunpack.c.l.b16 %v3387
      %v3457 = vunpack.c.l.b16 %v3388
      %v3458 = vunpack.c.l.b16 %v3389
      %v3459 = vunpack.c.l.b16 %v3390
      %v3460 = vunpack.c.l.b16 %v3391
      %v3461 = vunpack.c.l.b16 %v3392
      %v3462 = vpack.c.b16 %v3430, %v3429
      %v3463 = vpack.c.b16 %v3432, %v3431
      %v3464 = vpack.c.b16 %v3434, %v3433
      %v3465 = vpack.c.b16 %v3436, %v3435
      %v3466 = vpack.c.b16 %v3438, %v3437
      %v3467 = vpack.c.b16 %v3440, %v3439
      %v3468 = vpack.c.b16 %v3442, %v3441
      %v3469 = vpack.c.b16 %v3444, %v3443
      %v3470 = vpack.c.b16 %v3446, %v3445
      %v3471 = vpack.c.b16 %v3448, %v3447
      %v3472 = vpack.c.b16 %v3450, %v3449
      %v3473 = vpack.c.b16 %v3452, %v3451
      %v3474 = vpack.c.b16 %v3454, %v3453
      %v3475 = vpack.c.b16 %v3456, %v3455
      %v3476 = vpack.c.b16 %v3458, %v3457
      %v3477 = vpack.c.b16 %v3460, %v3459
      %v3478 = vpack.c.b16 %v3461, %v3461
      %v3480 = vshrl.u32 %v3462, 16
      %v3482 = vrot.slane %v3480, 3
      %v3483 = vshll.u32 %v3462, 16
      %v3485 = vrot.slane %v3483, 4
      %v3486 = vor.u32 %v3482, %v3485
      %v3488 = vshrl.u32 %v3463, 16
      %v3490 = vrot.slane %v3488, 3
      %v3491 = vshll.u32 %v3463, 16
      %v3493 = vrot.slane %v3491, 4
      %v3494 = vor.u32 %v3490, %v3493
      %v3495 = vsel %vm1395, %v3486, %v3494
      %v3497 = vshrl.u32 %v3464, 16
      %v3499 = vrot.slane %v3497, 3
      %v3500 = vshll.u32 %v3464, 16
      %v3502 = vrot.slane %v3500, 4
      %v3503 = vor.u32 %v3499, %v3502
      %v3504 = vsel %vm1395, %v3494, %v3503
      %v3506 = vshrl.u32 %v3465, 16
      %v3508 = vrot.slane %v3506, 3
      %v3509 = vshll.u32 %v3465, 16
      %v3511 = vrot.slane %v3509, 4
      %v3512 = vor.u32 %v3508, %v3511
      %v3513 = vsel %vm1395, %v3503, %v3512
      %v3515 = vshrl.u32 %v3466, 16
      %v3517 = vrot.slane %v3515, 3
      %v3518 = vshll.u32 %v3466, 16
      %v3520 = vrot.slane %v3518, 4
      %v3521 = vor.u32 %v3517, %v3520
      %v3522 = vsel %vm1395, %v3512, %v3521
      %v3524 = vshrl.u32 %v3467, 16
      %v3526 = vrot.slane %v3524, 3
      %v3527 = vshll.u32 %v3467, 16
      %v3529 = vrot.slane %v3527, 4
      %v3530 = vor.u32 %v3526, %v3529
      %v3531 = vsel %vm1395, %v3521, %v3530
      %v3533 = vshrl.u32 %v3468, 16
      %v3535 = vrot.slane %v3533, 3
      %v3536 = vshll.u32 %v3468, 16
      %v3538 = vrot.slane %v3536, 4
      %v3539 = vor.u32 %v3535, %v3538
      %v3540 = vsel %vm1395, %v3530, %v3539
      %v3542 = vshrl.u32 %v3469, 16
      %v3544 = vrot.slane %v3542, 3
      %v3545 = vshll.u32 %v3469, 16
      %v3547 = vrot.slane %v3545, 4
      %v3548 = vor.u32 %v3544, %v3547
      %v3549 = vsel %vm1395, %v3539, %v3548
      %v3551 = vshrl.u32 %v3470, 16
      %v3553 = vrot.slane %v3551, 3
      %v3554 = vshll.u32 %v3470, 16
      %v3556 = vrot.slane %v3554, 4
      %v3557 = vor.u32 %v3553, %v3556
      %v3558 = vsel %vm1395, %v3548, %v3557
      %v3560 = vshrl.u32 %v3471, 16
      %v3562 = vrot.slane %v3560, 3
      %v3563 = vshll.u32 %v3471, 16
      %v3565 = vrot.slane %v3563, 4
      %v3566 = vor.u32 %v3562, %v3565
      %v3567 = vsel %vm1395, %v3557, %v3566
      %v3569 = vshrl.u32 %v3472, 16
      %v3571 = vrot.slane %v3569, 3
      %v3572 = vshll.u32 %v3472, 16
      %v3574 = vrot.slane %v3572, 4
      %v3575 = vor.u32 %v3571, %v3574
      %v3576 = vsel %vm1395, %v3566, %v3575
      %v3578 = vshrl.u32 %v3473, 16
      %v3580 = vrot.slane %v3578, 3
      %v3581 = vshll.u32 %v3473, 16
      %v3583 = vrot.slane %v3581, 4
      %v3584 = vor.u32 %v3580, %v3583
      %v3585 = vsel %vm1395, %v3575, %v3584
      %v3587 = vshrl.u32 %v3474, 16
      %v3589 = vrot.slane %v3587, 3
      %v3590 = vshll.u32 %v3474, 16
      %v3592 = vrot.slane %v3590, 4
      %v3593 = vor.u32 %v3589, %v3592
      %v3594 = vsel %vm1395, %v3584, %v3593
      %v3596 = vshrl.u32 %v3475, 16
      %v3598 = vrot.slane %v3596, 3
      %v3599 = vshll.u32 %v3475, 16
      %v3601 = vrot.slane %v3599, 4
      %v3602 = vor.u32 %v3598, %v3601
      %v3603 = vsel %vm1395, %v3593, %v3602
      %v3605 = vshrl.u32 %v3476, 16
      %v3607 = vrot.slane %v3605, 3
      %v3608 = vshll.u32 %v3476, 16
      %v3610 = vrot.slane %v3608, 4
      %v3611 = vor.u32 %v3607, %v3610
      %v3612 = vsel %vm1395, %v3602, %v3611
      %v3614 = vshrl.u32 %v3477, 16
      %v3616 = vrot.slane %v3614, 3
      %v3617 = vshll.u32 %v3477, 16
      %v3619 = vrot.slane %v3617, 4
      %v3620 = vor.u32 %v3616, %v3619
      %v3621 = vsel %vm1395, %v3611, %v3620
      %v3623 = vshrl.u32 %v3478, 16
      %v3625 = vrot.slane %v3623, 3
      %v3626 = vshll.u32 %v3478, 16
      %v3628 = vrot.slane %v3626, 4
      %v3629 = vor.u32 %v3625, %v3628
      %v3630 = vsel %vm1395, %v3620, %v3629
      %v3633 = vunpack.c.l.b16 %v3394
      %v3634 = vunpack.c.l.b16 %v3395
      %v3635 = vpack.c.b16 %v3634, %v3633
      %v3638 = vsel %vm1554, %v3495, 0
      %v3641 = vsel %vm1554, %v3504, 0
      %v3644 = vsel %vm1554, %v3513, 0
      %v3647 = vsel %vm1554, %v3522, 0
      %v3650 = vsel %vm1554, %v3531, 0
      %v3653 = vsel %vm1554, %v3540, 0
      %v3656 = vsel %vm1554, %v3549, 0
      %v3659 = vsel %vm1554, %v3558, 0
      %v3662 = vsel %vm1554, %v3567, 0
      %v3665 = vsel %vm1554, %v3576, 0
      %v3668 = vsel %vm1554, %v3585, 0
      %v3671 = vsel %vm1554, %v3594, 0
      %v3674 = vsel %vm1554, %v3603, 0
      %v3677 = vsel %vm1554, %v3612, 0
      %v3680 = vsel %vm1554, %v3621, 0
      %v3683 = vsel %vm1554, %v3630, 0
      %3685 = vmatprep.subr.bf16.mxu0 0
      %3686 = vmatpush1.bf16.msra.mxu0 0
      %3687 = vmatprep.subr.bf16.mxu0 0
      %3688 = vmatpush1.bf16.msra.mxu0 0
      %3689 = vmatprep.subr.bf16.mxu0 0
      %3690 = vmatpush1.bf16.msra.mxu0 0
      %3691 = vmatprep.subr.bf16.mxu0 0
      %3692 = vmatpush1.bf16.msra.mxu0 0
      %3693 = vmatprep.subr.bf16.mxu0 0
      %3694 = vmatpush1.bf16.msra.mxu0 0
      %3695 = vmatprep.subr.bf16.mxu0 0
      %3696 = vmatpush1.bf16.msra.mxu0 0
      %3697 = vmatprep.subr.bf16.mxu0 0
      %3698 = vmatpush1.bf16.msra.mxu0 0
      %3699 = vmatprep.subr.bf16.mxu0 0
      %3700 = vmatpush1.bf16.msra.mxu0 %v3635
      %3701 = vmatprep.subr.bf16.mxu0 0
      %3702 = vmatpush2.bf16.msra.mxu0 0
      %3703 = vmatprep.subr.bf16.mxu0 0
      %3704 = vmatpush2.bf16.msra.mxu0 0
      %3705 = vmatprep.subr.bf16.mxu0 0
      %3706 = vmatpush2.bf16.msra.mxu0 0
      %3707 = vmatprep.subr.bf16.mxu0 0
      %3708 = vmatpush2.bf16.msra.mxu0 0
      %3709 = vmatprep.subr.bf16.mxu0 0
      %3710 = vmatpush2.bf16.msra.mxu0 0
      %3711 = vmatprep.subr.bf16.mxu0 0
      %3712 = vmatpush2.bf16.msra.mxu0 0
      %3713 = vmatprep.subr.bf16.mxu0 0
      %3714 = vmatpush2.bf16.msra.mxu0 0
      %3715 = vmatprep.subr.bf16.mxu0 0
      %3716 = vmatpush2.bf16.msra.mxu0 0
      %3717 = vmatprep.mubr.bf16.mxu0 0
      %3718 = vmatmul.mubr.bf16.gmra.mxu0 %v3638
      %v3719 = vpop.f32.mrf.mxu0
      %v3720 = vadd.f32 0.0, %v3719
      %v3721 = vpop.f32.mrf.mxu0
      %v3722 = vpop.f32.mrf.mxu0
      %v3723 = vadd.f32 0.0, %v3722
      %v3724 = vpop.f32.mrf.mxu0
      %3725 = vmatprep.mubr.bf16.mxu0 0
      %3726 = vmatmul.mubr.bf16.gmra.mxu0 %v3641
      %v3727 = vpop.f32.mrf.mxu0
      %v3728 = vadd.f32 0.0, %v3727
      %v3729 = vpop.f32.mrf.mxu0
      %v3730 = vpop.f32.mrf.mxu0
      %v3731 = vadd.f32 0.0, %v3730
      %v3732 = vpop.f32.mrf.mxu0
      %3733 = vmatprep.mubr.bf16.mxu0 0
      %3734 = vmatmul.mubr.bf16.gmra.mxu0 %v3644
      %v3735 = vpop.f32.mrf.mxu0
      %v3736 = vadd.f32 0.0, %v3735
      %v3737 = vpop.f32.mrf.mxu0
      %v3738 = vpop.f32.mrf.mxu0
      %v3739 = vadd.f32 0.0, %v3738
      %v3740 = vpop.f32.mrf.mxu0
      %3741 = vmatprep.mubr.bf16.mxu0 0
      %3742 = vmatmul.mubr.bf16.gmra.mxu0 %v3647
      %v3743 = vpop.f32.mrf.mxu0
      %v3744 = vadd.f32 0.0, %v3743
      %v3745 = vpop.f32.mrf.mxu0
      %v3746 = vpop.f32.mrf.mxu0
      %v3747 = vadd.f32 0.0, %v3746
      %v3748 = vpop.f32.mrf.mxu0
      %3749 = vmatprep.mubr.bf16.mxu0 0
      %3750 = vmatmul.mubr.bf16.gmra.mxu0 %v3650
      %v3751 = vpop.f32.mrf.mxu0
      %v3752 = vadd.f32 0.0, %v3751
      %v3753 = vpop.f32.mrf.mxu0
      %v3754 = vpop.f32.mrf.mxu0
      %v3755 = vadd.f32 0.0, %v3754
      %v3756 = vpop.f32.mrf.mxu0
      %3757 = vmatprep.mubr.bf16.mxu0 0
      %3758 = vmatmul.mubr.bf16.gmra.mxu0 %v3653
      %v3759 = vpop.f32.mrf.mxu0
      %v3760 = vadd.f32 0.0, %v3759
      %v3761 = vpop.f32.mrf.mxu0
      %v3762 = vpop.f32.mrf.mxu0
      %v3763 = vadd.f32 0.0, %v3762
      %v3764 = vpop.f32.mrf.mxu0
      %3765 = vmatprep.mubr.bf16.mxu0 0
      %3766 = vmatmul.mubr.bf16.gmra.mxu0 %v3656
      %v3767 = vpop.f32.mrf.mxu0
      %v3768 = vadd.f32 0.0, %v3767
      %v3769 = vpop.f32.mrf.mxu0
      %v3770 = vpop.f32.mrf.mxu0
      %v3771 = vadd.f32 0.0, %v3770
      %v3772 = vpop.f32.mrf.mxu0
      %3773 = vmatprep.mubr.bf16.mxu0 0
      %3774 = vmatmul.mubr.bf16.gmra.mxu0 %v3659
      %v3775 = vpop.f32.mrf.mxu0
      %v3776 = vadd.f32 0.0, %v3775
      %v3777 = vpop.f32.mrf.mxu0
      %v3778 = vpop.f32.mrf.mxu0
      %v3779 = vadd.f32 0.0, %v3778
      %v3780 = vpop.f32.mrf.mxu0
      %3781 = vmatprep.mubr.bf16.mxu0 0
      %3782 = vmatmul.mubr.bf16.gmra.mxu0 %v3662
      %v3783 = vpop.f32.mrf.mxu0
      %v3784 = vadd.f32 0.0, %v3783
      %v3785 = vpop.f32.mrf.mxu0
      %v3786 = vpop.f32.mrf.mxu0
      %v3787 = vadd.f32 0.0, %v3786
      %v3788 = vpop.f32.mrf.mxu0
      %3789 = vmatprep.mubr.bf16.mxu0 0
      %3790 = vmatmul.mubr.bf16.gmra.mxu0 %v3665
      %v3791 = vpop.f32.mrf.mxu0
      %v3792 = vadd.f32 0.0, %v3791
      %v3793 = vpop.f32.mrf.mxu0
      %v3794 = vpop.f32.mrf.mxu0
      %v3795 = vadd.f32 0.0, %v3794
      %v3796 = vpop.f32.mrf.mxu0
      %3797 = vmatprep.mubr.bf16.mxu0 0
      %3798 = vmatmul.mubr.bf16.gmra.mxu0 %v3668
      %v3799 = vpop.f32.mrf.mxu0
      %v3800 = vadd.f32 0.0, %v3799
      %v3801 = vpop.f32.mrf.mxu0
      %v3802 = vpop.f32.mrf.mxu0
      %v3803 = vadd.f32 0.0, %v3802
      %v3804 = vpop.f32.mrf.mxu0
      %3805 = vmatprep.mubr.bf16.mxu0 0
      %3806 = vmatmul.mubr.bf16.gmra.mxu0 %v3671
      %v3807 = vpop.f32.mrf.mxu0
      %v3808 = vadd.f32 0.0, %v3807
      %v3809 = vpop.f32.mrf.mxu0
      %v3810 = vpop.f32.mrf.mxu0
      %v3811 = vadd.f32 0.0, %v3810
      %v3812 = vpop.f32.mrf.mxu0
      %3813 = vmatprep.mubr.bf16.mxu0 0
      %3814 = vmatmul.mubr.bf16.gmra.mxu0 %v3674
      %v3815 = vpop.f32.mrf.mxu0
      %v3816 = vadd.f32 0.0, %v3815
      %v3817 = vpop.f32.mrf.mxu0
      %v3818 = vpop.f32.mrf.mxu0
      %v3819 = vadd.f32 0.0, %v3818
      %v3820 = vpop.f32.mrf.mxu0
      %3821 = vmatprep.mubr.bf16.mxu0 0
      %3822 = vmatmul.mubr.bf16.gmra.mxu0 %v3677
      %v3823 = vpop.f32.mrf.mxu0
      %v3824 = vadd.f32 0.0, %v3823
      %v3825 = vpop.f32.mrf.mxu0
      %v3826 = vpop.f32.mrf.mxu0
      %v3827 = vadd.f32 0.0, %v3826
      %v3828 = vpop.f32.mrf.mxu0
      %3829 = vmatprep.mubr.bf16.mxu0 0
      %3830 = vmatmul.mubr.bf16.gmra.mxu0 %v3680
      %v3831 = vpop.f32.mrf.mxu0
      %v3832 = vadd.f32 0.0, %v3831
      %v3833 = vpop.f32.mrf.mxu0
      %v3834 = vpop.f32.mrf.mxu0
      %v3835 = vadd.f32 0.0, %v3834
      %v3836 = vpop.f32.mrf.mxu0
      %3837 = vmatprep.mubr.bf16.mxu0 0
      %3838 = vmatmul.mubr.bf16.gmra.mxu0 %v3683
      %v3839 = vpop.f32.mrf.mxu0
      %v3840 = vadd.f32 0.0, %v3839
      %v3841 = vpop.f32.mrf.mxu0
      %v3842 = vpop.f32.mrf.mxu0
      %v3843 = vadd.f32 0.0, %v3842
      %v3844 = vpop.f32.mrf.mxu0
      %3845 = vdwg.mxu0
      %v3846 = vadd.f32 %v3295, %v3720
      %v3847 = vadd.f32 %v3296, %v3723
      %v3848 = vadd.f32 %v3297, %v3728
      %v3849 = vadd.f32 %v3298, %v3731
      %v3850 = vadd.f32 %v3299, %v3736
      %v3851 = vadd.f32 %v3300, %v3739
      %v3852 = vadd.f32 %v3301, %v3744
      %v3853 = vadd.f32 %v3302, %v3747
      %v3854 = vadd.f32 %v3303, %v3752
      %v3855 = vadd.f32 %v3304, %v3755
      %v3856 = vadd.f32 %v3305, %v3760
      %v3857 = vadd.f32 %v3306, %v3763
      %v3858 = vadd.f32 %v3307, %v3768
      %v3859 = vadd.f32 %v3308, %v3771
      %v3860 = vadd.f32 %v3309, %v3776
      %v3861 = vadd.f32 %v3310, %v3779
      %v3862 = vadd.f32 %v3311, %v3784
      %v3863 = vadd.f32 %v3312, %v3787
      %v3864 = vadd.f32 %v3313, %v3792
      %v3865 = vadd.f32 %v3314, %v3795
      %v3866 = vadd.f32 %v3315, %v3800
      %v3867 = vadd.f32 %v3316, %v3803
      %v3868 = vadd.f32 %v3317, %v3808
      %v3869 = vadd.f32 %v3318, %v3811
      %v3870 = vadd.f32 %v3319, %v3816
      %v3871 = vadd.f32 %v3320, %v3819
      %v3872 = vadd.f32 %v3321, %v3824
      %v3873 = vadd.f32 %v3322, %v3827
      %v3874 = vadd.f32 %v3323, %v3832
      %v3875 = vadd.f32 %v3324, %v3835
      %v3876 = vadd.f32 %v3325, %v3840
      %v3877 = vadd.f32 %v3326, %v3843
      %v3878 = vld [vmem:[#allocation2 + $0x10] sm:$0xf]
      %v3879 = vld [vmem:[#allocation2 + $0x14] sm:$0xf]
      %v3880 = vld [vmem:[#allocation2 + $0x18] sm:$0xf]
      %v3881 = vld [vmem:[#allocation2 + $0x1c] sm:$0xf]
      %v3882 = vld [vmem:[#allocation2 + $0x20] sm:$0xf]
      %v3883 = vld [vmem:[#allocation2 + $0x24] sm:$0xf]
      %v3884 = vld [vmem:[#allocation2 + $0x28] sm:$0xf]
      %v3885 = vld [vmem:[#allocation2 + $0x2c] sm:$0xf]
      %v3886 = vld [vmem:[#allocation2 + $0x30] sm:$0xf]
      %v3887 = vld [vmem:[#allocation2 + $0x34] sm:$0xf]
      %v3888 = vld [vmem:[#allocation2 + $0x38] sm:$0xf]
      %v3889 = vld [vmem:[#allocation2 + $0x3c] sm:$0xf]
      %v3890 = vld [vmem:[#allocation2 + $0x40] sm:$0xf]
      %v3891 = vld [vmem:[#allocation2 + $0x44] sm:$0xf]
      %v3892 = vld [vmem:[#allocation2 + $0x48] sm:$0xf]
      %v3893 = vld [vmem:[#allocation2 + $0x4c] sm:$0xf]
      %v3894 = vld [vmem:[#allocation2 + $0x50] sm:$0xf]
      %v3895 = vld [vmem:[#allocation2 + $0x54] sm:$0xf]
      %v3896 = vld [vmem:[#allocation2 + $0x58] sm:$0xf]
      %v3897 = vld [vmem:[#allocation2 + $0x5c] sm:$0xf]
      %v3898 = vld [vmem:[#allocation2 + $0x60] sm:$0xf]
      %v3899 = vld [vmem:[#allocation2 + $0x64] sm:$0xf]
      %v3900 = vld [vmem:[#allocation2 + $0x68] sm:$0xf]
      %v3901 = vld [vmem:[#allocation2 + $0x6c] sm:$0xf]
      %v3902 = vld [vmem:[#allocation2 + $0x70] sm:$0xf]
      %v3903 = vld [vmem:[#allocation2 + $0x74] sm:$0xf]
      %v3904 = vld [vmem:[#allocation2 + $0x78] sm:$0xf]
      %v3905 = vld [vmem:[#allocation2 + $0x7c] sm:$0xf]
      %v3906 = vld [vmem:[#allocation2 + $0x80] sm:$0xf]
      %v3907 = vld [vmem:[#allocation2 + $0x84] sm:$0xf]
      %v3908 = vld [vmem:[#allocation2 + $0x88] sm:$0xf]
      %v3909 = vld [vmem:[#allocation2 + $0x8c] sm:$0xf]
      %v3910 = vld [vmem:[#allocation2 + $0x90] sm:$0x1]
      %v3911 = vsel %vm2795, %v3878, 0
      %v3912 = vsel %vm2796, %v3879, 0
      %v3913 = vsel %vm2797, %v3880, 0
      %v3914 = vsel %vm2798, %v3881, 0
      %v3915 = vsel %vm2799, %v3882, 0
      %v3916 = vsel %vm2800, %v3883, 0
      %v3917 = vsel %vm2801, %v3884, 0
      %v3918 = vsel %vm2802, %v3885, 0
      %v3919 = vsel %vm2803, %v3886, 0
      %v3920 = vsel %vm2804, %v3887, 0
      %v3921 = vsel %vm2805, %v3888, 0
      %v3922 = vsel %vm2806, %v3889, 0
      %v3923 = vsel %vm2807, %v3890, 0
      %v3924 = vsel %vm2808, %v3891, 0
      %v3925 = vsel %vm2809, %v3892, 0
      %v3926 = vsel %vm2810, %v3893, 0
      %v3927 = vsel %vm2811, %v3894, 0
      %v3928 = vsel %vm2812, %v3895, 0
      %v3929 = vsel %vm2813, %v3896, 0
      %v3930 = vsel %vm2814, %v3897, 0
      %v3931 = vsel %vm2815, %v3898, 0
      %v3932 = vsel %vm2816, %v3899, 0
      %v3933 = vsel %vm2817, %v3900, 0
      %v3934 = vsel %vm2818, %v3901, 0
      %v3935 = vsel %vm2819, %v3902, 0
      %v3936 = vsel %vm2820, %v3903, 0
      %v3937 = vsel %vm2821, %v3904, 0
      %v3938 = vsel %vm2822, %v3905, 0
      %v3939 = vsel %vm2823, %v3906, 0
      %v3940 = vsel %vm2824, %v3907, 0
      %v3941 = vsel %vm2825, %v3908, 0
      %v3942 = vsel %vm2826, %v3909, 0
      %v3943 = vsel %vm2827, %v3910, 0
      %s3944 = scalar_lea.vmem %s2, 32
      %v3945 = vld [vmem:[%s3944] sm:$0xf]
      %v3946 = vld [vmem:[%s3944 + $0x4] sm:$0xf]
      %v3980 = vunpack.c.l.b16 %v3911
      %v3981 = vunpack.c.l.b16 %v3912
      %v3982 = vunpack.c.l.b16 %v3913
      %v3983 = vunpack.c.l.b16 %v3914
      %v3984 = vunpack.c.l.b16 %v3915
      %v3985 = vunpack.c.l.b16 %v3916
      %v3986 = vunpack.c.l.b16 %v3917
      %v3987 = vunpack.c.l.b16 %v3918
      %v3988 = vunpack.c.l.b16 %v3919
      %v3989 = vunpack.c.l.b16 %v3920
      %v3990 = vunpack.c.l.b16 %v3921
      %v3991 = vunpack.c.l.b16 %v3922
      %v3992 = vunpack.c.l.b16 %v3923
      %v3993 = vunpack.c.l.b16 %v3924
      %v3994 = vunpack.c.l.b16 %v3925
      %v3995 = vunpack.c.l.b16 %v3926
      %v3996 = vunpack.c.l.b16 %v3927
      %v3997 = vunpack.c.l.b16 %v3928
      %v3998 = vunpack.c.l.b16 %v3929
      %v3999 = vunpack.c.l.b16 %v3930
      %v4000 = vunpack.c.l.b16 %v3931
      %v4001 = vunpack.c.l.b16 %v3932
      %v4002 = vunpack.c.l.b16 %v3933
      %v4003 = vunpack.c.l.b16 %v3934
      %v4004 = vunpack.c.l.b16 %v3935
      %v4005 = vunpack.c.l.b16 %v3936
      %v4006 = vunpack.c.l.b16 %v3937
      %v4007 = vunpack.c.l.b16 %v3938
      %v4008 = vunpack.c.l.b16 %v3939
      %v4009 = vunpack.c.l.b16 %v3940
      %v4010 = vunpack.c.l.b16 %v3941
      %v4011 = vunpack.c.l.b16 %v3942
      %v4012 = vunpack.c.l.b16 %v3943
      %v4013 = vpack.c.b16 %v3981, %v3980
      %v4014 = vpack.c.b16 %v3983, %v3982
      %v4015 = vpack.c.b16 %v3985, %v3984
      %v4016 = vpack.c.b16 %v3987, %v3986
      %v4017 = vpack.c.b16 %v3989, %v3988
      %v4018 = vpack.c.b16 %v3991, %v3990
      %v4019 = vpack.c.b16 %v3993, %v3992
      %v4020 = vpack.c.b16 %v3995, %v3994
      %v4021 = vpack.c.b16 %v3997, %v3996
      %v4022 = vpack.c.b16 %v3999, %v3998
      %v4023 = vpack.c.b16 %v4001, %v4000
      %v4024 = vpack.c.b16 %v4003, %v4002
      %v4025 = vpack.c.b16 %v4005, %v4004
      %v4026 = vpack.c.b16 %v4007, %v4006
      %v4027 = vpack.c.b16 %v4009, %v4008
      %v4028 = vpack.c.b16 %v4011, %v4010
      %v4029 = vpack.c.b16 %v4012, %v4012
      %v4031 = vshrl.u32 %v4013, 16
      %v4033 = vshll.u32 %v4013, 16
      %v4035 = vrot.slane %v4033, 1
      %v4036 = vor.u32 %v4031, %v4035
      %v4038 = vshll.u32 %v4014, 16
      %v4040 = vrot.slane %v4038, 1
      %v4041 = vsel %vm2947, %v4036, %v4040
      %v4042 = vshrl.u32 %v4014, 16
      %v4044 = vor.u32 %v4042, %v4040
      %v4046 = vshll.u32 %v4015, 16
      %v4048 = vrot.slane %v4046, 1
      %v4049 = vsel %vm2947, %v4044, %v4048
      %v4050 = vshrl.u32 %v4015, 16
      %v4052 = vor.u32 %v4050, %v4048
      %v4054 = vshll.u32 %v4016, 16
      %v4056 = vrot.slane %v4054, 1
      %v4057 = vsel %vm2947, %v4052, %v4056
      %v4058 = vshrl.u32 %v4016, 16
      %v4060 = vor.u32 %v4058, %v4056
      %v4062 = vshll.u32 %v4017, 16
      %v4064 = vrot.slane %v4062, 1
      %v4065 = vsel %vm2947, %v4060, %v4064
      %v4066 = vshrl.u32 %v4017, 16
      %v4068 = vor.u32 %v4066, %v4064
      %v4070 = vshll.u32 %v4018, 16
      %v4072 = vrot.slane %v4070, 1
      %v4073 = vsel %vm2947, %v4068, %v4072
      %v4074 = vshrl.u32 %v4018, 16
      %v4076 = vor.u32 %v4074, %v4072
      %v4078 = vshll.u32 %v4019, 16
      %v4080 = vrot.slane %v4078, 1
      %v4081 = vsel %vm2947, %v4076, %v4080
      %v4082 = vshrl.u32 %v4019, 16
      %v4084 = vor.u32 %v4082, %v4080
      %v4086 = vshll.u32 %v4020, 16
      %v4088 = vrot.slane %v4086, 1
      %v4089 = vsel %vm2947, %v4084, %v4088
      %v4090 = vshrl.u32 %v4020, 16
      %v4092 = vor.u32 %v4090, %v4088
      %v4094 = vshll.u32 %v4021, 16
      %v4096 = vrot.slane %v4094, 1
      %v4097 = vsel %vm2947, %v4092, %v4096
      %v4098 = vshrl.u32 %v4021, 16
      %v4100 = vor.u32 %v4098, %v4096
      %v4102 = vshll.u32 %v4022, 16
      %v4104 = vrot.slane %v4102, 1
      %v4105 = vsel %vm2947, %v4100, %v4104
      %v4106 = vshrl.u32 %v4022, 16
      %v4108 = vor.u32 %v4106, %v4104
      %v4110 = vshll.u32 %v4023, 16
      %v4112 = vrot.slane %v4110, 1
      %v4113 = vsel %vm2947, %v4108, %v4112
      %v4114 = vshrl.u32 %v4023, 16
      %v4116 = vor.u32 %v4114, %v4112
      %v4118 = vshll.u32 %v4024, 16
      %v4120 = vrot.slane %v4118, 1
      %v4121 = vsel %vm2947, %v4116, %v4120
      %v4122 = vshrl.u32 %v4024, 16
      %v4124 = vor.u32 %v4122, %v4120
      %v4126 = vshll.u32 %v4025, 16
      %v4128 = vrot.slane %v4126, 1
      %v4129 = vsel %vm2947, %v4124, %v4128
      %v4130 = vshrl.u32 %v4025, 16
      %v4132 = vor.u32 %v4130, %v4128
      %v4134 = vshll.u32 %v4026, 16
      %v4136 = vrot.slane %v4134, 1
      %v4137 = vsel %vm2947, %v4132, %v4136
      %v4138 = vshrl.u32 %v4026, 16
      %v4140 = vor.u32 %v4138, %v4136
      %v4142 = vshll.u32 %v4027, 16
      %v4144 = vrot.slane %v4142, 1
      %v4145 = vsel %vm2947, %v4140, %v4144
      %v4146 = vshrl.u32 %v4027, 16
      %v4148 = vor.u32 %v4146, %v4144
      %v4150 = vshll.u32 %v4028, 16
      %v4152 = vrot.slane %v4150, 1
      %v4153 = vsel %vm2947, %v4148, %v4152
      %v4154 = vshrl.u32 %v4028, 16
      %v4156 = vor.u32 %v4154, %v4152
      %v4158 = vshll.u32 %v4029, 16
      %v4160 = vrot.slane %v4158, 1
      %v4161 = vsel %vm2947, %v4156, %v4160
      %v4164 = vunpack.c.l.b16 %v3945
      %v4165 = vunpack.c.l.b16 %v3946
      %v4166 = vpack.c.b16 %v4165, %v4164
      %v4169 = vsel %vm1554, %v4041, 0
      %v4172 = vsel %vm1554, %v4049, 0
      %v4175 = vsel %vm1554, %v4057, 0
      %v4178 = vsel %vm1554, %v4065, 0
      %v4181 = vsel %vm1554, %v4073, 0
      %v4184 = vsel %vm1554, %v4081, 0
      %v4187 = vsel %vm1554, %v4089, 0
      %v4190 = vsel %vm1554, %v4097, 0
      %v4193 = vsel %vm1554, %v4105, 0
      %v4196 = vsel %vm1554, %v4113, 0
      %v4199 = vsel %vm1554, %v4121, 0
      %v4202 = vsel %vm1554, %v4129, 0
      %v4205 = vsel %vm1554, %v4137, 0
      %v4208 = vsel %vm1554, %v4145, 0
      %v4211 = vsel %vm1554, %v4153, 0
      %v4214 = vsel %vm1554, %v4161, 0
      %4216 = vmatprep.subr.bf16.mxu0 0
      %4217 = vmatpush1.bf16.msra.mxu0 0
      %4218 = vmatprep.subr.bf16.mxu0 0
      %4219 = vmatpush1.bf16.msra.mxu0 0
      %4220 = vmatprep.subr.bf16.mxu0 0
      %4221 = vmatpush1.bf16.msra.mxu0 0
      %4222 = vmatprep.subr.bf16.mxu0 0
      %4223 = vmatpush1.bf16.msra.mxu0 0
      %4224 = vmatprep.subr.bf16.mxu0 0
      %4225 = vmatpush1.bf16.msra.mxu0 0
      %4226 = vmatprep.subr.bf16.mxu0 0
      %4227 = vmatpush1.bf16.msra.mxu0 0
      %4228 = vmatprep.subr.bf16.mxu0 0
      %4229 = vmatpush1.bf16.msra.mxu0 0
      %4230 = vmatprep.subr.bf16.mxu0 0
      %4231 = vmatpush1.bf16.msra.mxu0 %v4166
      %4232 = vmatprep.subr.bf16.mxu0 0
      %4233 = vmatpush2.bf16.msra.mxu0 0
      %4234 = vmatprep.subr.bf16.mxu0 0
      %4235 = vmatpush2.bf16.msra.mxu0 0
      %4236 = vmatprep.subr.bf16.mxu0 0
      %4237 = vmatpush2.bf16.msra.mxu0 0
      %4238 = vmatprep.subr.bf16.mxu0 0
      %4239 = vmatpush2.bf16.msra.mxu0 0
      %4240 = vmatprep.subr.bf16.mxu0 0
      %4241 = vmatpush2.bf16.msra.mxu0 0
      %4242 = vmatprep.subr.bf16.mxu0 0
      %4243 = vmatpush2.bf16.msra.mxu0 0
      %4244 = vmatprep.subr.bf16.mxu0 0
      %4245 = vmatpush2.bf16.msra.mxu0 0
      %4246 = vmatprep.subr.bf16.mxu0 0
      %4247 = vmatpush2.bf16.msra.mxu0 0
      %4248 = vmatprep.mubr.bf16.mxu0 0
      %4249 = vmatmul.mubr.bf16.gmra.mxu0 %v4169
      %v4250 = vpop.f32.mrf.mxu0
      %v4251 = vadd.f32 0.0, %v4250
      %v4252 = vpop.f32.mrf.mxu0
      %v4253 = vpop.f32.mrf.mxu0
      %v4254 = vadd.f32 0.0, %v4253
      %v4255 = vpop.f32.mrf.mxu0
      %4256 = vmatprep.mubr.bf16.mxu0 0
      %4257 = vmatmul.mubr.bf16.gmra.mxu0 %v4172
      %v4258 = vpop.f32.mrf.mxu0
      %v4259 = vadd.f32 0.0, %v4258
      %v4260 = vpop.f32.mrf.mxu0
      %v4261 = vpop.f32.mrf.mxu0
      %v4262 = vadd.f32 0.0, %v4261
      %v4263 = vpop.f32.mrf.mxu0
      %4264 = vmatprep.mubr.bf16.mxu0 0
      %4265 = vmatmul.mubr.bf16.gmra.mxu0 %v4175
      %v4266 = vpop.f32.mrf.mxu0
      %v4267 = vadd.f32 0.0, %v4266
      %v4268 = vpop.f32.mrf.mxu0
      %v4269 = vpop.f32.mrf.mxu0
      %v4270 = vadd.f32 0.0, %v4269
      %v4271 = vpop.f32.mrf.mxu0
      %4272 = vmatprep.mubr.bf16.mxu0 0
      %4273 = vmatmul.mubr.bf16.gmra.mxu0 %v4178
      %v4274 = vpop.f32.mrf.mxu0
      %v4275 = vadd.f32 0.0, %v4274
      %v4276 = vpop.f32.mrf.mxu0
      %v4277 = vpop.f32.mrf.mxu0
      %v4278 = vadd.f32 0.0, %v4277
      %v4279 = vpop.f32.mrf.mxu0
      %4280 = vmatprep.mubr.bf16.mxu0 0
      %4281 = vmatmul.mubr.bf16.gmra.mxu0 %v4181
      %v4282 = vpop.f32.mrf.mxu0
      %v4283 = vadd.f32 0.0, %v4282
      %v4284 = vpop.f32.mrf.mxu0
      %v4285 = vpop.f32.mrf.mxu0
      %v4286 = vadd.f32 0.0, %v4285
      %v4287 = vpop.f32.mrf.mxu0
      %4288 = vmatprep.mubr.bf16.mxu0 0
      %4289 = vmatmul.mubr.bf16.gmra.mxu0 %v4184
      %v4290 = vpop.f32.mrf.mxu0
      %v4291 = vadd.f32 0.0, %v4290
      %v4292 = vpop.f32.mrf.mxu0
      %v4293 = vpop.f32.mrf.mxu0
      %v4294 = vadd.f32 0.0, %v4293
      %v4295 = vpop.f32.mrf.mxu0
      %4296 = vmatprep.mubr.bf16.mxu0 0
      %4297 = vmatmul.mubr.bf16.gmra.mxu0 %v4187
      %v4298 = vpop.f32.mrf.mxu0
      %v4299 = vadd.f32 0.0, %v4298
      %v4300 = vpop.f32.mrf.mxu0
      %v4301 = vpop.f32.mrf.mxu0
      %v4302 = vadd.f32 0.0, %v4301
      %v4303 = vpop.f32.mrf.mxu0
      %4304 = vmatprep.mubr.bf16.mxu0 0
      %4305 = vmatmul.mubr.bf16.gmra.mxu0 %v4190
      %v4306 = vpop.f32.mrf.mxu0
      %v4307 = vadd.f32 0.0, %v4306
      %v4308 = vpop.f32.mrf.mxu0
      %v4309 = vpop.f32.mrf.mxu0
      %v4310 = vadd.f32 0.0, %v4309
      %v4311 = vpop.f32.mrf.mxu0
      %4312 = vmatprep.mubr.bf16.mxu0 0
      %4313 = vmatmul.mubr.bf16.gmra.mxu0 %v4193
      %v4314 = vpop.f32.mrf.mxu0
      %v4315 = vadd.f32 0.0, %v4314
      %v4316 = vpop.f32.mrf.mxu0
      %v4317 = vpop.f32.mrf.mxu0
      %v4318 = vadd.f32 0.0, %v4317
      %v4319 = vpop.f32.mrf.mxu0
      %4320 = vmatprep.mubr.bf16.mxu0 0
      %4321 = vmatmul.mubr.bf16.gmra.mxu0 %v4196
      %v4322 = vpop.f32.mrf.mxu0
      %v4323 = vadd.f32 0.0, %v4322
      %v4324 = vpop.f32.mrf.mxu0
      %v4325 = vpop.f32.mrf.mxu0
      %v4326 = vadd.f32 0.0, %v4325
      %v4327 = vpop.f32.mrf.mxu0
      %4328 = vmatprep.mubr.bf16.mxu0 0
      %4329 = vmatmul.mubr.bf16.gmra.mxu0 %v4199
      %v4330 = vpop.f32.mrf.mxu0
      %v4331 = vadd.f32 0.0, %v4330
      %v4332 = vpop.f32.mrf.mxu0
      %v4333 = vpop.f32.mrf.mxu0
      %v4334 = vadd.f32 0.0, %v4333
      %v4335 = vpop.f32.mrf.mxu0
      %4336 = vmatprep.mubr.bf16.mxu0 0
      %4337 = vmatmul.mubr.bf16.gmra.mxu0 %v4202
      %v4338 = vpop.f32.mrf.mxu0
      %v4339 = vadd.f32 0.0, %v4338
      %v4340 = vpop.f32.mrf.mxu0
      %v4341 = vpop.f32.mrf.mxu0
      %v4342 = vadd.f32 0.0, %v4341
      %v4343 = vpop.f32.mrf.mxu0
      %4344 = vmatprep.mubr.bf16.mxu0 0
      %4345 = vmatmul.mubr.bf16.gmra.mxu0 %v4205
      %v4346 = vpop.f32.mrf.mxu0
      %v4347 = vadd.f32 0.0, %v4346
      %v4348 = vpop.f32.mrf.mxu0
      %v4349 = vpop.f32.mrf.mxu0
      %v4350 = vadd.f32 0.0, %v4349
      %v4351 = vpop.f32.mrf.mxu0
      %4352 = vmatprep.mubr.bf16.mxu0 0
      %4353 = vmatmul.mubr.bf16.gmra.mxu0 %v4208
      %v4354 = vpop.f32.mrf.mxu0
      %v4355 = vadd.f32 0.0, %v4354
      %v4356 = vpop.f32.mrf.mxu0
      %v4357 = vpop.f32.mrf.mxu0
      %v4358 = vadd.f32 0.0, %v4357
      %v4359 = vpop.f32.mrf.mxu0
      %4360 = vmatprep.mubr.bf16.mxu0 0
      %4361 = vmatmul.mubr.bf16.gmra.mxu0 %v4211
      %v4362 = vpop.f32.mrf.mxu0
      %v4363 = vadd.f32 0.0, %v4362
      %v4364 = vpop.f32.mrf.mxu0
      %v4365 = vpop.f32.mrf.mxu0
      %v4366 = vadd.f32 0.0, %v4365
      %v4367 = vpop.f32.mrf.mxu0
      %4368 = vmatprep.mubr.bf16.mxu0 0
      %4369 = vmatmul.mubr.bf16.gmra.mxu0 %v4214
      %v4370 = vpop.f32.mrf.mxu0
      %v4371 = vadd.f32 0.0, %v4370
      %v4372 = vpop.f32.mrf.mxu0
      %v4373 = vpop.f32.mrf.mxu0
      %v4374 = vadd.f32 0.0, %v4373
      %v4375 = vpop.f32.mrf.mxu0
      %4376 = vdwg.mxu0
      %v4377 = vadd.f32 %v3846, %v4251
      %v4378 = vadd.f32 %v3847, %v4254
      %v4379 = vadd.f32 %v3848, %v4259
      %v4380 = vadd.f32 %v3849, %v4262
      %v4381 = vadd.f32 %v3850, %v4267
      %v4382 = vadd.f32 %v3851, %v4270
      %v4383 = vadd.f32 %v3852, %v4275
      %v4384 = vadd.f32 %v3853, %v4278
      %v4385 = vadd.f32 %v3854, %v4283
      %v4386 = vadd.f32 %v3855, %v4286
      %v4387 = vadd.f32 %v3856, %v4291
      %v4388 = vadd.f32 %v3857, %v4294
      %v4389 = vadd.f32 %v3858, %v4299
      %v4390 = vadd.f32 %v3859, %v4302
      %v4391 = vadd.f32 %v3860, %v4307
      %v4392 = vadd.f32 %v3861, %v4310
      %v4393 = vadd.f32 %v3862, %v4315
      %v4394 = vadd.f32 %v3863, %v4318
      %v4395 = vadd.f32 %v3864, %v4323
      %v4396 = vadd.f32 %v3865, %v4326
      %v4397 = vadd.f32 %v3866, %v4331
      %v4398 = vadd.f32 %v3867, %v4334
      %v4399 = vadd.f32 %v3868, %v4339
      %v4400 = vadd.f32 %v3869, %v4342
      %v4401 = vadd.f32 %v3870, %v4347
      %v4402 = vadd.f32 %v3871, %v4350
      %v4403 = vadd.f32 %v3872, %v4355
      %v4404 = vadd.f32 %v3873, %v4358
      %v4405 = vadd.f32 %v3874, %v4363
      %v4406 = vadd.f32 %v3875, %v4366
      %v4407 = vadd.f32 %v3876, %v4371
      %v4408 = vadd.f32 %v3877, %v4374
      %v4409 = vld [vmem:[#allocation2 + $0x14] sm:$0x8]
      %v4410 = vld [vmem:[#allocation2 + $0x18] sm:$0xf]
      %v4411 = vld [vmem:[#allocation2 + $0x1c] sm:$0xf]
      %v4412 = vld [vmem:[#allocation2 + $0x20] sm:$0xf]
      %v4413 = vld [vmem:[#allocation2 + $0x24] sm:$0xf]
      %v4414 = vld [vmem:[#allocation2 + $0x28] sm:$0xf]
      %v4415 = vld [vmem:[#allocation2 + $0x2c] sm:$0xf]
      %v4416 = vld [vmem:[#allocation2 + $0x30] sm:$0xf]
      %v4417 = vld [vmem:[#allocation2 + $0x34] sm:$0xf]
      %v4418 = vld [vmem:[#allocation2 + $0x38] sm:$0xf]
      %v4419 = vld [vmem:[#allocation2 + $0x3c] sm:$0xf]
      %v4420 = vld [vmem:[#allocation2 + $0x40] sm:$0xf]
      %v4421 = vld [vmem:[#allocation2 + $0x44] sm:$0xf]
      %v4422 = vld [vmem:[#allocation2 + $0x48] sm:$0xf]
      %v4423 = vld [vmem:[#allocation2 + $0x4c] sm:$0xf]
      %v4424 = vld [vmem:[#allocation2 + $0x50] sm:$0xf]
      %v4425 = vld [vmem:[#allocation2 + $0x54] sm:$0xf]
      %v4426 = vld [vmem:[#allocation2 + $0x58] sm:$0xf]
      %v4427 = vld [vmem:[#allocation2 + $0x5c] sm:$0xf]
      %v4428 = vld [vmem:[#allocation2 + $0x60] sm:$0xf]
      %v4429 = vld [vmem:[#allocation2 + $0x64] sm:$0xf]
      %v4430 = vld [vmem:[#allocation2 + $0x68] sm:$0xf]
      %v4431 = vld [vmem:[#allocation2 + $0x6c] sm:$0xf]
      %v4432 = vld [vmem:[#allocation2 + $0x70] sm:$0xf]
      %v4433 = vld [vmem:[#allocation2 + $0x74] sm:$0xf]
      %v4434 = vld [vmem:[#allocation2 + $0x78] sm:$0xf]
      %v4435 = vld [vmem:[#allocation2 + $0x7c] sm:$0xf]
      %v4436 = vld [vmem:[#allocation2 + $0x80] sm:$0xf]
      %v4437 = vld [vmem:[#allocation2 + $0x84] sm:$0xf]
      %v4438 = vld [vmem:[#allocation2 + $0x88] sm:$0xf]
      %v4439 = vld [vmem:[#allocation2 + $0x8c] sm:$0xf]
      %v4440 = vld [vmem:[#allocation2 + $0x90] sm:$0xf]
      %v4441 = vld [vmem:[#allocation2 + $0x94] sm:$0xf]
      %v4442 = vsel %vm1244, %v4409, 0
      %v4443 = vsel %vm1245, %v4410, 0
      %v4444 = vsel %vm1246, %v4411, 0
      %v4445 = vsel %vm1247, %v4412, 0
      %v4446 = vsel %vm1248, %v4413, 0
      %v4447 = vsel %vm1249, %v4414, 0
      %v4448 = vsel %vm1250, %v4415, 0
      %v4449 = vsel %vm1251, %v4416, 0
      %v4450 = vsel %vm1252, %v4417, 0
      %v4451 = vsel %vm1253, %v4418, 0
      %v4452 = vsel %vm1254, %v4419, 0
      %v4453 = vsel %vm1255, %v4420, 0
      %v4454 = vsel %vm1256, %v4421, 0
      %v4455 = vsel %vm1257, %v4422, 0
      %v4456 = vsel %vm1258, %v4423, 0
      %v4457 = vsel %vm1259, %v4424, 0
      %v4458 = vsel %vm1260, %v4425, 0
      %v4459 = vsel %vm1261, %v4426, 0
      %v4460 = vsel %vm1262, %v4427, 0
      %v4461 = vsel %vm1263, %v4428, 0
      %v4462 = vsel %vm1264, %v4429, 0
      %v4463 = vsel %vm1265, %v4430, 0
      %v4464 = vsel %vm1266, %v4431, 0
      %v4465 = vsel %vm1267, %v4432, 0
      %v4466 = vsel %vm1268, %v4433, 0
      %v4467 = vsel %vm1269, %v4434, 0
      %v4468 = vsel %vm1270, %v4435, 0
      %v4469 = vsel %vm1271, %v4436, 0
      %v4470 = vsel %vm1272, %v4437, 0
      %v4471 = vsel %vm1273, %v4438, 0
      %v4472 = vsel %vm1274, %v4439, 0
      %v4473 = vsel %vm1275, %v4440, 0
      %v4474 = vsel %vm1276, %v4441, 0
      %s4475 = scalar_lea.vmem %s2, 40
      %v4476 = vld [vmem:[%s4475] sm:$0xf]
      %v4477 = vld [vmem:[%s4475 + $0x4] sm:$0xf]
      %v4511 = vunpack.c.l.b16 %v4442
      %v4512 = vunpack.c.l.b16 %v4443
      %v4513 = vunpack.c.l.b16 %v4444
      %v4514 = vunpack.c.l.b16 %v4445
      %v4515 = vunpack.c.l.b16 %v4446
      %v4516 = vunpack.c.l.b16 %v4447
      %v4517 = vunpack.c.l.b16 %v4448
      %v4518 = vunpack.c.l.b16 %v4449
      %v4519 = vunpack.c.l.b16 %v4450
      %v4520 = vunpack.c.l.b16 %v4451
      %v4521 = vunpack.c.l.b16 %v4452
      %v4522 = vunpack.c.l.b16 %v4453
      %v4523 = vunpack.c.l.b16 %v4454
      %v4524 = vunpack.c.l.b16 %v4455
      %v4525 = vunpack.c.l.b16 %v4456
      %v4526 = vunpack.c.l.b16 %v4457
      %v4527 = vunpack.c.l.b16 %v4458
      %v4528 = vunpack.c.l.b16 %v4459
      %v4529 = vunpack.c.l.b16 %v4460
      %v4530 = vunpack.c.l.b16 %v4461
      %v4531 = vunpack.c.l.b16 %v4462
      %v4532 = vunpack.c.l.b16 %v4463
      %v4533 = vunpack.c.l.b16 %v4464
      %v4534 = vunpack.c.l.b16 %v4465
      %v4535 = vunpack.c.l.b16 %v4466
      %v4536 = vunpack.c.l.b16 %v4467
      %v4537 = vunpack.c.l.b16 %v4468
      %v4538 = vunpack.c.l.b16 %v4469
      %v4539 = vunpack.c.l.b16 %v4470
      %v4540 = vunpack.c.l.b16 %v4471
      %v4541 = vunpack.c.l.b16 %v4472
      %v4542 = vunpack.c.l.b16 %v4473
      %v4543 = vunpack.c.l.b16 %v4474
      %v4544 = vpack.c.b16 %v4512, %v4511
      %v4545 = vpack.c.b16 %v4514, %v4513
      %v4546 = vpack.c.b16 %v4516, %v4515
      %v4547 = vpack.c.b16 %v4518, %v4517
      %v4548 = vpack.c.b16 %v4520, %v4519
      %v4549 = vpack.c.b16 %v4522, %v4521
      %v4550 = vpack.c.b16 %v4524, %v4523
      %v4551 = vpack.c.b16 %v4526, %v4525
      %v4552 = vpack.c.b16 %v4528, %v4527
      %v4553 = vpack.c.b16 %v4530, %v4529
      %v4554 = vpack.c.b16 %v4532, %v4531
      %v4555 = vpack.c.b16 %v4534, %v4533
      %v4556 = vpack.c.b16 %v4536, %v4535
      %v4557 = vpack.c.b16 %v4538, %v4537
      %v4558 = vpack.c.b16 %v4540, %v4539
      %v4559 = vpack.c.b16 %v4542, %v4541
      %v4560 = vpack.c.b16 %v4543, %v4543
      %v4562 = vshrl.u32 %v4544, 16
      %v4564 = vrot.slane %v4562, 3
      %v4565 = vshll.u32 %v4544, 16
      %v4567 = vrot.slane %v4565, 4
      %v4568 = vor.u32 %v4564, %v4567
      %v4570 = vshrl.u32 %v4545, 16
      %v4572 = vrot.slane %v4570, 3
      %v4573 = vshll.u32 %v4545, 16
      %v4575 = vrot.slane %v4573, 4
      %v4576 = vor.u32 %v4572, %v4575
      %v4577 = vsel %vm1395, %v4568, %v4576
      %v4579 = vshrl.u32 %v4546, 16
      %v4581 = vrot.slane %v4579, 3
      %v4582 = vshll.u32 %v4546, 16
      %v4584 = vrot.slane %v4582, 4
      %v4585 = vor.u32 %v4581, %v4584
      %v4586 = vsel %vm1395, %v4576, %v4585
      %v4588 = vshrl.u32 %v4547, 16
      %v4590 = vrot.slane %v4588, 3
      %v4591 = vshll.u32 %v4547, 16
      %v4593 = vrot.slane %v4591, 4
      %v4594 = vor.u32 %v4590, %v4593
      %v4595 = vsel %vm1395, %v4585, %v4594
      %v4597 = vshrl.u32 %v4548, 16
      %v4599 = vrot.slane %v4597, 3
      %v4600 = vshll.u32 %v4548, 16
      %v4602 = vrot.slane %v4600, 4
      %v4603 = vor.u32 %v4599, %v4602
      %v4604 = vsel %vm1395, %v4594, %v4603
      %v4606 = vshrl.u32 %v4549, 16
      %v4608 = vrot.slane %v4606, 3
      %v4609 = vshll.u32 %v4549, 16
      %v4611 = vrot.slane %v4609, 4
      %v4612 = vor.u32 %v4608, %v4611
      %v4613 = vsel %vm1395, %v4603, %v4612
      %v4615 = vshrl.u32 %v4550, 16
      %v4617 = vrot.slane %v4615, 3
      %v4618 = vshll.u32 %v4550, 16
      %v4620 = vrot.slane %v4618, 4
      %v4621 = vor.u32 %v4617, %v4620
      %v4622 = vsel %vm1395, %v4612, %v4621
      %v4624 = vshrl.u32 %v4551, 16
      %v4626 = vrot.slane %v4624, 3
      %v4627 = vshll.u32 %v4551, 16
      %v4629 = vrot.slane %v4627, 4
      %v4630 = vor.u32 %v4626, %v4629
      %v4631 = vsel %vm1395, %v4621, %v4630
      %v4633 = vshrl.u32 %v4552, 16
      %v4635 = vrot.slane %v4633, 3
      %v4636 = vshll.u32 %v4552, 16
      %v4638 = vrot.slane %v4636, 4
      %v4639 = vor.u32 %v4635, %v4638
      %v4640 = vsel %vm1395, %v4630, %v4639
      %v4642 = vshrl.u32 %v4553, 16
      %v4644 = vrot.slane %v4642, 3
      %v4645 = vshll.u32 %v4553, 16
      %v4647 = vrot.slane %v4645, 4
      %v4648 = vor.u32 %v4644, %v4647
      %v4649 = vsel %vm1395, %v4639, %v4648
      %v4651 = vshrl.u32 %v4554, 16
      %v4653 = vrot.slane %v4651, 3
      %v4654 = vshll.u32 %v4554, 16
      %v4656 = vrot.slane %v4654, 4
      %v4657 = vor.u32 %v4653, %v4656
      %v4658 = vsel %vm1395, %v4648, %v4657
      %v4660 = vshrl.u32 %v4555, 16
      %v4662 = vrot.slane %v4660, 3
      %v4663 = vshll.u32 %v4555, 16
      %v4665 = vrot.slane %v4663, 4
      %v4666 = vor.u32 %v4662, %v4665
      %v4667 = vsel %vm1395, %v4657, %v4666
      %v4669 = vshrl.u32 %v4556, 16
      %v4671 = vrot.slane %v4669, 3
      %v4672 = vshll.u32 %v4556, 16
      %v4674 = vrot.slane %v4672, 4
      %v4675 = vor.u32 %v4671, %v4674
      %v4676 = vsel %vm1395, %v4666, %v4675
      %v4678 = vshrl.u32 %v4557, 16
      %v4680 = vrot.slane %v4678, 3
      %v4681 = vshll.u32 %v4557, 16
      %v4683 = vrot.slane %v4681, 4
      %v4684 = vor.u32 %v4680, %v4683
      %v4685 = vsel %vm1395, %v4675, %v4684
      %v4687 = vshrl.u32 %v4558, 16
      %v4689 = vrot.slane %v4687, 3
      %v4690 = vshll.u32 %v4558, 16
      %v4692 = vrot.slane %v4690, 4
      %v4693 = vor.u32 %v4689, %v4692
      %v4694 = vsel %vm1395, %v4684, %v4693
      %v4696 = vshrl.u32 %v4559, 16
      %v4698 = vrot.slane %v4696, 3
      %v4699 = vshll.u32 %v4559, 16
      %v4701 = vrot.slane %v4699, 4
      %v4702 = vor.u32 %v4698, %v4701
      %v4703 = vsel %vm1395, %v4693, %v4702
      %v4705 = vshrl.u32 %v4560, 16
      %v4707 = vrot.slane %v4705, 3
      %v4708 = vshll.u32 %v4560, 16
      %v4710 = vrot.slane %v4708, 4
      %v4711 = vor.u32 %v4707, %v4710
      %v4712 = vsel %vm1395, %v4702, %v4711
      %v4715 = vunpack.c.l.b16 %v4476
      %v4716 = vunpack.c.l.b16 %v4477
      %v4717 = vpack.c.b16 %v4716, %v4715
      %v4720 = vsel %vm1554, %v4577, 0
      %v4723 = vsel %vm1554, %v4586, 0
      %v4726 = vsel %vm1554, %v4595, 0
      %v4729 = vsel %vm1554, %v4604, 0
      %v4732 = vsel %vm1554, %v4613, 0
      %v4735 = vsel %vm1554, %v4622, 0
      %v4738 = vsel %vm1554, %v4631, 0
      %v4741 = vsel %vm1554, %v4640, 0
      %v4744 = vsel %vm1554, %v4649, 0
      %v4747 = vsel %vm1554, %v4658, 0
      %v4750 = vsel %vm1554, %v4667, 0
      %v4753 = vsel %vm1554, %v4676, 0
      %v4756 = vsel %vm1554, %v4685, 0
      %v4759 = vsel %vm1554, %v4694, 0
      %v4762 = vsel %vm1554, %v4703, 0
      %v4765 = vsel %vm1554, %v4712, 0
      %4767 = vmatprep.subr.bf16.mxu0 0
      %4768 = vmatpush1.bf16.msra.mxu0 0
      %4769 = vmatprep.subr.bf16.mxu0 0
      %4770 = vmatpush1.bf16.msra.mxu0 0
      %4771 = vmatprep.subr.bf16.mxu0 0
      %4772 = vmatpush1.bf16.msra.mxu0 0
      %4773 = vmatprep.subr.bf16.mxu0 0
      %4774 = vmatpush1.bf16.msra.mxu0 0
      %4775 = vmatprep.subr.bf16.mxu0 0
      %4776 = vmatpush1.bf16.msra.mxu0 0
      %4777 = vmatprep.subr.bf16.mxu0 0
      %4778 = vmatpush1.bf16.msra.mxu0 0
      %4779 = vmatprep.subr.bf16.mxu0 0
      %4780 = vmatpush1.bf16.msra.mxu0 0
      %4781 = vmatprep.subr.bf16.mxu0 0
      %4782 = vmatpush1.bf16.msra.mxu0 %v4717
      %4783 = vmatprep.subr.bf16.mxu0 0
      %4784 = vmatpush2.bf16.msra.mxu0 0
      %4785 = vmatprep.subr.bf16.mxu0 0
      %4786 = vmatpush2.bf16.msra.mxu0 0
      %4787 = vmatprep.subr.bf16.mxu0 0
      %4788 = vmatpush2.bf16.msra.mxu0 0
      %4789 = vmatprep.subr.bf16.mxu0 0
      %4790 = vmatpush2.bf16.msra.mxu0 0
      %4791 = vmatprep.subr.bf16.mxu0 0
      %4792 = vmatpush2.bf16.msra.mxu0 0
      %4793 = vmatprep.subr.bf16.mxu0 0
      %4794 = vmatpush2.bf16.msra.mxu0 0
      %4795 = vmatprep.subr.bf16.mxu0 0
      %4796 = vmatpush2.bf16.msra.mxu0 0
      %4797 = vmatprep.subr.bf16.mxu0 0
      %4798 = vmatpush2.bf16.msra.mxu0 0
      %4799 = vmatprep.mubr.bf16.mxu0 0
      %4800 = vmatmul.mubr.bf16.gmra.mxu0 %v4720
      %v4801 = vpop.f32.mrf.mxu0
      %v4802 = vadd.f32 0.0, %v4801
      %v4803 = vpop.f32.mrf.mxu0
      %v4804 = vpop.f32.mrf.mxu0
      %v4805 = vadd.f32 0.0, %v4804
      %v4806 = vpop.f32.mrf.mxu0
      %4807 = vmatprep.mubr.bf16.mxu0 0
      %4808 = vmatmul.mubr.bf16.gmra.mxu0 %v4723
      %v4809 = vpop.f32.mrf.mxu0
      %v4810 = vadd.f32 0.0, %v4809
      %v4811 = vpop.f32.mrf.mxu0
      %v4812 = vpop.f32.mrf.mxu0
      %v4813 = vadd.f32 0.0, %v4812
      %v4814 = vpop.f32.mrf.mxu0
      %4815 = vmatprep.mubr.bf16.mxu0 0
      %4816 = vmatmul.mubr.bf16.gmra.mxu0 %v4726
      %v4817 = vpop.f32.mrf.mxu0
      %v4818 = vadd.f32 0.0, %v4817
      %v4819 = vpop.f32.mrf.mxu0
      %v4820 = vpop.f32.mrf.mxu0
      %v4821 = vadd.f32 0.0, %v4820
      %v4822 = vpop.f32.mrf.mxu0
      %4823 = vmatprep.mubr.bf16.mxu0 0
      %4824 = vmatmul.mubr.bf16.gmra.mxu0 %v4729
      %v4825 = vpop.f32.mrf.mxu0
      %v4826 = vadd.f32 0.0, %v4825
      %v4827 = vpop.f32.mrf.mxu0
      %v4828 = vpop.f32.mrf.mxu0
      %v4829 = vadd.f32 0.0, %v4828
      %v4830 = vpop.f32.mrf.mxu0
      %4831 = vmatprep.mubr.bf16.mxu0 0
      %4832 = vmatmul.mubr.bf16.gmra.mxu0 %v4732
      %v4833 = vpop.f32.mrf.mxu0
      %v4834 = vadd.f32 0.0, %v4833
      %v4835 = vpop.f32.mrf.mxu0
      %v4836 = vpop.f32.mrf.mxu0
      %v4837 = vadd.f32 0.0, %v4836
      %v4838 = vpop.f32.mrf.mxu0
      %4839 = vmatprep.mubr.bf16.mxu0 0
      %4840 = vmatmul.mubr.bf16.gmra.mxu0 %v4735
      %v4841 = vpop.f32.mrf.mxu0
      %v4842 = vadd.f32 0.0, %v4841
      %v4843 = vpop.f32.mrf.mxu0
      %v4844 = vpop.f32.mrf.mxu0
      %v4845 = vadd.f32 0.0, %v4844
      %v4846 = vpop.f32.mrf.mxu0
      %4847 = vmatprep.mubr.bf16.mxu0 0
      %4848 = vmatmul.mubr.bf16.gmra.mxu0 %v4738
      %v4849 = vpop.f32.mrf.mxu0
      %v4850 = vadd.f32 0.0, %v4849
      %v4851 = vpop.f32.mrf.mxu0
      %v4852 = vpop.f32.mrf.mxu0
      %v4853 = vadd.f32 0.0, %v4852
      %v4854 = vpop.f32.mrf.mxu0
      %4855 = vmatprep.mubr.bf16.mxu0 0
      %4856 = vmatmul.mubr.bf16.gmra.mxu0 %v4741
      %v4857 = vpop.f32.mrf.mxu0
      %v4858 = vadd.f32 0.0, %v4857
      %v4859 = vpop.f32.mrf.mxu0
      %v4860 = vpop.f32.mrf.mxu0
      %v4861 = vadd.f32 0.0, %v4860
      %v4862 = vpop.f32.mrf.mxu0
      %4863 = vmatprep.mubr.bf16.mxu0 0
      %4864 = vmatmul.mubr.bf16.gmra.mxu0 %v4744
      %v4865 = vpop.f32.mrf.mxu0
      %v4866 = vadd.f32 0.0, %v4865
      %v4867 = vpop.f32.mrf.mxu0
      %v4868 = vpop.f32.mrf.mxu0
      %v4869 = vadd.f32 0.0, %v4868
      %v4870 = vpop.f32.mrf.mxu0
      %4871 = vmatprep.mubr.bf16.mxu0 0
      %4872 = vmatmul.mubr.bf16.gmra.mxu0 %v4747
      %v4873 = vpop.f32.mrf.mxu0
      %v4874 = vadd.f32 0.0, %v4873
      %v4875 = vpop.f32.mrf.mxu0
      %v4876 = vpop.f32.mrf.mxu0
      %v4877 = vadd.f32 0.0, %v4876
      %v4878 = vpop.f32.mrf.mxu0
      %4879 = vmatprep.mubr.bf16.mxu0 0
      %4880 = vmatmul.mubr.bf16.gmra.mxu0 %v4750
      %v4881 = vpop.f32.mrf.mxu0
      %v4882 = vadd.f32 0.0, %v4881
      %v4883 = vpop.f32.mrf.mxu0
      %v4884 = vpop.f32.mrf.mxu0
      %v4885 = vadd.f32 0.0, %v4884
      %v4886 = vpop.f32.mrf.mxu0
      %4887 = vmatprep.mubr.bf16.mxu0 0
      %4888 = vmatmul.mubr.bf16.gmra.mxu0 %v4753
      %v4889 = vpop.f32.mrf.mxu0
      %v4890 = vadd.f32 0.0, %v4889
      %v4891 = vpop.f32.mrf.mxu0
      %v4892 = vpop.f32.mrf.mxu0
      %v4893 = vadd.f32 0.0, %v4892
      %v4894 = vpop.f32.mrf.mxu0
      %4895 = vmatprep.mubr.bf16.mxu0 0
      %4896 = vmatmul.mubr.bf16.gmra.mxu0 %v4756
      %v4897 = vpop.f32.mrf.mxu0
      %v4898 = vadd.f32 0.0, %v4897
      %v4899 = vpop.f32.mrf.mxu0
      %v4900 = vpop.f32.mrf.mxu0
      %v4901 = vadd.f32 0.0, %v4900
      %v4902 = vpop.f32.mrf.mxu0
      %4903 = vmatprep.mubr.bf16.mxu0 0
      %4904 = vmatmul.mubr.bf16.gmra.mxu0 %v4759
      %v4905 = vpop.f32.mrf.mxu0
      %v4906 = vadd.f32 0.0, %v4905
      %v4907 = vpop.f32.mrf.mxu0
      %v4908 = vpop.f32.mrf.mxu0
      %v4909 = vadd.f32 0.0, %v4908
      %v4910 = vpop.f32.mrf.mxu0
      %4911 = vmatprep.mubr.bf16.mxu0 0
      %4912 = vmatmul.mubr.bf16.gmra.mxu0 %v4762
      %v4913 = vpop.f32.mrf.mxu0
      %v4914 = vadd.f32 0.0, %v4913
      %v4915 = vpop.f32.mrf.mxu0
      %v4916 = vpop.f32.mrf.mxu0
      %v4917 = vadd.f32 0.0, %v4916
      %v4918 = vpop.f32.mrf.mxu0
      %4919 = vmatprep.mubr.bf16.mxu0 0
      %4920 = vmatmul.mubr.bf16.gmra.mxu0 %v4765
      %v4921 = vpop.f32.mrf.mxu0
      %v4922 = vadd.f32 0.0, %v4921
      %v4923 = vpop.f32.mrf.mxu0
      %v4924 = vpop.f32.mrf.mxu0
      %v4925 = vadd.f32 0.0, %v4924
      %v4926 = vpop.f32.mrf.mxu0
      %4927 = vdwg.mxu0
      %v4928 = vadd.f32 %v4377, %v4802
      %v4929 = vadd.f32 %v4378, %v4805
      %v4930 = vadd.f32 %v4379, %v4810
      %v4931 = vadd.f32 %v4380, %v4813
      %v4932 = vadd.f32 %v4381, %v4818
      %v4933 = vadd.f32 %v4382, %v4821
      %v4934 = vadd.f32 %v4383, %v4826
      %v4935 = vadd.f32 %v4384, %v4829
      %v4936 = vadd.f32 %v4385, %v4834
      %v4937 = vadd.f32 %v4386, %v4837
      %v4938 = vadd.f32 %v4387, %v4842
      %v4939 = vadd.f32 %v4388, %v4845
      %v4940 = vadd.f32 %v4389, %v4850
      %v4941 = vadd.f32 %v4390, %v4853
      %v4942 = vadd.f32 %v4391, %v4858
      %v4943 = vadd.f32 %v4392, %v4861
      %v4944 = vadd.f32 %v4393, %v4866
      %v4945 = vadd.f32 %v4394, %v4869
      %v4946 = vadd.f32 %v4395, %v4874
      %v4947 = vadd.f32 %v4396, %v4877
      %v4948 = vadd.f32 %v4397, %v4882
      %v4949 = vadd.f32 %v4398, %v4885
      %v4950 = vadd.f32 %v4399, %v4890
      %v4951 = vadd.f32 %v4400, %v4893
      %v4952 = vadd.f32 %v4401, %v4898
      %v4953 = vadd.f32 %v4402, %v4901
      %v4954 = vadd.f32 %v4403, %v4906
      %v4955 = vadd.f32 %v4404, %v4909
      %v4956 = vadd.f32 %v4405, %v4914
      %v4957 = vadd.f32 %v4406, %v4917
      %v4958 = vadd.f32 %v4407, %v4922
      %v4959 = vadd.f32 %v4408, %v4925
      %s4960 = scalar_lea.vmem %s2, 48
      %v4961 = vld [vmem:[%s4960] sm:$0xf]
      %v4962 = vld [vmem:[%s4960 + $0x4] sm:$0xf]
      %v4995 = vunpack.c.l.b16 %v4410
      %v4996 = vunpack.c.l.b16 %v4411
      %v4997 = vunpack.c.l.b16 %v4412
      %v4998 = vunpack.c.l.b16 %v4413
      %v4999 = vunpack.c.l.b16 %v4414
      %v5000 = vunpack.c.l.b16 %v4415
      %v5001 = vunpack.c.l.b16 %v4416
      %v5002 = vunpack.c.l.b16 %v4417
      %v5003 = vunpack.c.l.b16 %v4418
      %v5004 = vunpack.c.l.b16 %v4419
      %v5005 = vunpack.c.l.b16 %v4420
      %v5006 = vunpack.c.l.b16 %v4421
      %v5007 = vunpack.c.l.b16 %v4422
      %v5008 = vunpack.c.l.b16 %v4423
      %v5009 = vunpack.c.l.b16 %v4424
      %v5010 = vunpack.c.l.b16 %v4425
      %v5011 = vunpack.c.l.b16 %v4426
      %v5012 = vunpack.c.l.b16 %v4427
      %v5013 = vunpack.c.l.b16 %v4428
      %v5014 = vunpack.c.l.b16 %v4429
      %v5015 = vunpack.c.l.b16 %v4430
      %v5016 = vunpack.c.l.b16 %v4431
      %v5017 = vunpack.c.l.b16 %v4432
      %v5018 = vunpack.c.l.b16 %v4433
      %v5019 = vunpack.c.l.b16 %v4434
      %v5020 = vunpack.c.l.b16 %v4435
      %v5021 = vunpack.c.l.b16 %v4436
      %v5022 = vunpack.c.l.b16 %v4437
      %v5023 = vunpack.c.l.b16 %v4438
      %v5024 = vunpack.c.l.b16 %v4439
      %v5025 = vunpack.c.l.b16 %v4440
      %v5026 = vunpack.c.l.b16 %v4441
      %v5027 = vpack.c.b16 %v4996, %v4995
      %v5028 = vpack.c.b16 %v4998, %v4997
      %v5029 = vpack.c.b16 %v5000, %v4999
      %v5030 = vpack.c.b16 %v5002, %v5001
      %v5031 = vpack.c.b16 %v5004, %v5003
      %v5032 = vpack.c.b16 %v5006, %v5005
      %v5033 = vpack.c.b16 %v5008, %v5007
      %v5034 = vpack.c.b16 %v5010, %v5009
      %v5035 = vpack.c.b16 %v5012, %v5011
      %v5036 = vpack.c.b16 %v5014, %v5013
      %v5037 = vpack.c.b16 %v5016, %v5015
      %v5038 = vpack.c.b16 %v5018, %v5017
      %v5039 = vpack.c.b16 %v5020, %v5019
      %v5040 = vpack.c.b16 %v5022, %v5021
      %v5041 = vpack.c.b16 %v5024, %v5023
      %v5042 = vpack.c.b16 %v5026, %v5025
      %v5045 = vunpack.c.l.b16 %v4961
      %v5046 = vunpack.c.l.b16 %v4962
      %v5047 = vpack.c.b16 %v5046, %v5045
      %v5050 = vsel %vm1554, %v5027, 0
      %v5053 = vsel %vm1554, %v5028, 0
      %v5056 = vsel %vm1554, %v5029, 0
      %v5059 = vsel %vm1554, %v5030, 0
      %v5062 = vsel %vm1554, %v5031, 0
      %v5065 = vsel %vm1554, %v5032, 0
      %v5068 = vsel %vm1554, %v5033, 0
      %v5071 = vsel %vm1554, %v5034, 0
      %v5074 = vsel %vm1554, %v5035, 0
      %v5077 = vsel %vm1554, %v5036, 0
      %v5080 = vsel %vm1554, %v5037, 0
      %v5083 = vsel %vm1554, %v5038, 0
      %v5086 = vsel %vm1554, %v5039, 0
      %v5089 = vsel %vm1554, %v5040, 0
      %v5092 = vsel %vm1554, %v5041, 0
      %v5095 = vsel %vm1554, %v5042, 0
      %5097 = vmatprep.subr.bf16.mxu0 0
      %5098 = vmatpush1.bf16.msra.mxu0 0
      %5099 = vmatprep.subr.bf16.mxu0 0
      %5100 = vmatpush1.bf16.msra.mxu0 0
      %5101 = vmatprep.subr.bf16.mxu0 0
      %5102 = vmatpush1.bf16.msra.mxu0 0
      %5103 = vmatprep.subr.bf16.mxu0 0
      %5104 = vmatpush1.bf16.msra.mxu0 0
      %5105 = vmatprep.subr.bf16.mxu0 0
      %5106 = vmatpush1.bf16.msra.mxu0 0
      %5107 = vmatprep.subr.bf16.mxu0 0
      %5108 = vmatpush1.bf16.msra.mxu0 0
      %5109 = vmatprep.subr.bf16.mxu0 0
      %5110 = vmatpush1.bf16.msra.mxu0 0
      %5111 = vmatprep.subr.bf16.mxu0 0
      %5112 = vmatpush1.bf16.msra.mxu0 %v5047
      %5113 = vmatprep.subr.bf16.mxu0 0
      %5114 = vmatpush2.bf16.msra.mxu0 0
      %5115 = vmatprep.subr.bf16.mxu0 0
      %5116 = vmatpush2.bf16.msra.mxu0 0
      %5117 = vmatprep.subr.bf16.mxu0 0
      %5118 = vmatpush2.bf16.msra.mxu0 0
      %5119 = vmatprep.subr.bf16.mxu0 0
      %5120 = vmatpush2.bf16.msra.mxu0 0
      %5121 = vmatprep.subr.bf16.mxu0 0
      %5122 = vmatpush2.bf16.msra.mxu0 0
      %5123 = vmatprep.subr.bf16.mxu0 0
      %5124 = vmatpush2.bf16.msra.mxu0 0
      %5125 = vmatprep.subr.bf16.mxu0 0
      %5126 = vmatpush2.bf16.msra.mxu0 0
      %5127 = vmatprep.subr.bf16.mxu0 0
      %5128 = vmatpush2.bf16.msra.mxu0 0
      %5129 = vmatprep.mubr.bf16.mxu0 0
      %5130 = vmatmul.mubr.bf16.gmra.mxu0 %v5050
      %v5131 = vpop.f32.mrf.mxu0
      %v5132 = vadd.f32 0.0, %v5131
      %v5133 = vpop.f32.mrf.mxu0
      %v5134 = vpop.f32.mrf.mxu0
      %v5135 = vadd.f32 0.0, %v5134
      %v5136 = vpop.f32.mrf.mxu0
      %5137 = vmatprep.mubr.bf16.mxu0 0
      %5138 = vmatmul.mubr.bf16.gmra.mxu0 %v5053
      %v5139 = vpop.f32.mrf.mxu0
      %v5140 = vadd.f32 0.0, %v5139
      %v5141 = vpop.f32.mrf.mxu0
      %v5142 = vpop.f32.mrf.mxu0
      %v5143 = vadd.f32 0.0, %v5142
      %v5144 = vpop.f32.mrf.mxu0
      %5145 = vmatprep.mubr.bf16.mxu0 0
      %5146 = vmatmul.mubr.bf16.gmra.mxu0 %v5056
      %v5147 = vpop.f32.mrf.mxu0
      %v5148 = vadd.f32 0.0, %v5147
      %v5149 = vpop.f32.mrf.mxu0
      %v5150 = vpop.f32.mrf.mxu0
      %v5151 = vadd.f32 0.0, %v5150
      %v5152 = vpop.f32.mrf.mxu0
      %5153 = vmatprep.mubr.bf16.mxu0 0
      %5154 = vmatmul.mubr.bf16.gmra.mxu0 %v5059
      %v5155 = vpop.f32.mrf.mxu0
      %v5156 = vadd.f32 0.0, %v5155
      %v5157 = vpop.f32.mrf.mxu0
      %v5158 = vpop.f32.mrf.mxu0
      %v5159 = vadd.f32 0.0, %v5158
      %v5160 = vpop.f32.mrf.mxu0
      %5161 = vmatprep.mubr.bf16.mxu0 0
      %5162 = vmatmul.mubr.bf16.gmra.mxu0 %v5062
      %v5163 = vpop.f32.mrf.mxu0
      %v5164 = vadd.f32 0.0, %v5163
      %v5165 = vpop.f32.mrf.mxu0
      %v5166 = vpop.f32.mrf.mxu0
      %v5167 = vadd.f32 0.0, %v5166
      %v5168 = vpop.f32.mrf.mxu0
      %5169 = vmatprep.mubr.bf16.mxu0 0
      %5170 = vmatmul.mubr.bf16.gmra.mxu0 %v5065
      %v5171 = vpop.f32.mrf.mxu0
      %v5172 = vadd.f32 0.0, %v5171
      %v5173 = vpop.f32.mrf.mxu0
      %v5174 = vpop.f32.mrf.mxu0
      %v5175 = vadd.f32 0.0, %v5174
      %v5176 = vpop.f32.mrf.mxu0
      %5177 = vmatprep.mubr.bf16.mxu0 0
      %5178 = vmatmul.mubr.bf16.gmra.mxu0 %v5068
      %v5179 = vpop.f32.mrf.mxu0
      %v5180 = vadd.f32 0.0, %v5179
      %v5181 = vpop.f32.mrf.mxu0
      %v5182 = vpop.f32.mrf.mxu0
      %v5183 = vadd.f32 0.0, %v5182
      %v5184 = vpop.f32.mrf.mxu0
      %5185 = vmatprep.mubr.bf16.mxu0 0
      %5186 = vmatmul.mubr.bf16.gmra.mxu0 %v5071
      %v5187 = vpop.f32.mrf.mxu0
      %v5188 = vadd.f32 0.0, %v5187
      %v5189 = vpop.f32.mrf.mxu0
      %v5190 = vpop.f32.mrf.mxu0
      %v5191 = vadd.f32 0.0, %v5190
      %v5192 = vpop.f32.mrf.mxu0
      %5193 = vmatprep.mubr.bf16.mxu0 0
      %5194 = vmatmul.mubr.bf16.gmra.mxu0 %v5074
      %v5195 = vpop.f32.mrf.mxu0
      %v5196 = vadd.f32 0.0, %v5195
      %v5197 = vpop.f32.mrf.mxu0
      %v5198 = vpop.f32.mrf.mxu0
      %v5199 = vadd.f32 0.0, %v5198
      %v5200 = vpop.f32.mrf.mxu0
      %5201 = vmatprep.mubr.bf16.mxu0 0
      %5202 = vmatmul.mubr.bf16.gmra.mxu0 %v5077
      %v5203 = vpop.f32.mrf.mxu0
      %v5204 = vadd.f32 0.0, %v5203
      %v5205 = vpop.f32.mrf.mxu0
      %v5206 = vpop.f32.mrf.mxu0
      %v5207 = vadd.f32 0.0, %v5206
      %v5208 = vpop.f32.mrf.mxu0
      %5209 = vmatprep.mubr.bf16.mxu0 0
      %5210 = vmatmul.mubr.bf16.gmra.mxu0 %v5080
      %v5211 = vpop.f32.mrf.mxu0
      %v5212 = vadd.f32 0.0, %v5211
      %v5213 = vpop.f32.mrf.mxu0
      %v5214 = vpop.f32.mrf.mxu0
      %v5215 = vadd.f32 0.0, %v5214
      %v5216 = vpop.f32.mrf.mxu0
      %5217 = vmatprep.mubr.bf16.mxu0 0
      %5218 = vmatmul.mubr.bf16.gmra.mxu0 %v5083
      %v5219 = vpop.f32.mrf.mxu0
      %v5220 = vadd.f32 0.0, %v5219
      %v5221 = vpop.f32.mrf.mxu0
      %v5222 = vpop.f32.mrf.mxu0
      %v5223 = vadd.f32 0.0, %v5222
      %v5224 = vpop.f32.mrf.mxu0
      %5225 = vmatprep.mubr.bf16.mxu0 0
      %5226 = vmatmul.mubr.bf16.gmra.mxu0 %v5086
      %v5227 = vpop.f32.mrf.mxu0
      %v5228 = vadd.f32 0.0, %v5227
      %v5229 = vpop.f32.mrf.mxu0
      %v5230 = vpop.f32.mrf.mxu0
      %v5231 = vadd.f32 0.0, %v5230
      %v5232 = vpop.f32.mrf.mxu0
      %5233 = vmatprep.mubr.bf16.mxu0 0
      %5234 = vmatmul.mubr.bf16.gmra.mxu0 %v5089
      %v5235 = vpop.f32.mrf.mxu0
      %v5236 = vadd.f32 0.0, %v5235
      %v5237 = vpop.f32.mrf.mxu0
      %v5238 = vpop.f32.mrf.mxu0
      %v5239 = vadd.f32 0.0, %v5238
      %v5240 = vpop.f32.mrf.mxu0
      %5241 = vmatprep.mubr.bf16.mxu0 0
      %5242 = vmatmul.mubr.bf16.gmra.mxu0 %v5092
      %v5243 = vpop.f32.mrf.mxu0
      %v5244 = vadd.f32 0.0, %v5243
      %v5245 = vpop.f32.mrf.mxu0
      %v5246 = vpop.f32.mrf.mxu0
      %v5247 = vadd.f32 0.0, %v5246
      %v5248 = vpop.f32.mrf.mxu0
      %5249 = vmatprep.mubr.bf16.mxu0 0
      %5250 = vmatmul.mubr.bf16.gmra.mxu0 %v5095
      %v5251 = vpop.f32.mrf.mxu0
      %v5252 = vadd.f32 0.0, %v5251
      %v5253 = vpop.f32.mrf.mxu0
      %v5254 = vpop.f32.mrf.mxu0
      %v5255 = vadd.f32 0.0, %v5254
      %v5256 = vpop.f32.mrf.mxu0
      %5257 = vdwg.mxu0
      %v5258 = vadd.f32 %v4928, %v5132
      %v5259 = vadd.f32 %v4929, %v5135
      %v5260 = vadd.f32 %v4930, %v5140
      %v5261 = vadd.f32 %v4931, %v5143
      %v5262 = vadd.f32 %v4932, %v5148
      %v5263 = vadd.f32 %v4933, %v5151
      %v5264 = vadd.f32 %v4934, %v5156
      %v5265 = vadd.f32 %v4935, %v5159
      %v5266 = vadd.f32 %v4936, %v5164
      %v5267 = vadd.f32 %v4937, %v5167
      %v5268 = vadd.f32 %v4938, %v5172
      %v5269 = vadd.f32 %v4939, %v5175
      %v5270 = vadd.f32 %v4940, %v5180
      %v5271 = vadd.f32 %v4941, %v5183
      %v5272 = vadd.f32 %v4942, %v5188
      %v5273 = vadd.f32 %v4943, %v5191
      %v5274 = vadd.f32 %v4944, %v5196
      %v5275 = vadd.f32 %v4945, %v5199
      %v5276 = vadd.f32 %v4946, %v5204
      %v5277 = vadd.f32 %v4947, %v5207
      %v5278 = vadd.f32 %v4948, %v5212
      %v5279 = vadd.f32 %v4949, %v5215
      %v5280 = vadd.f32 %v4950, %v5220
      %v5281 = vadd.f32 %v4951, %v5223
      %v5282 = vadd.f32 %v4952, %v5228
      %v5283 = vadd.f32 %v4953, %v5231
      %v5284 = vadd.f32 %v4954, %v5236
      %v5285 = vadd.f32 %v4955, %v5239
      %v5286 = vadd.f32 %v4956, %v5244
      %v5287 = vadd.f32 %v4957, %v5247
      %v5288 = vadd.f32 %v4958, %v5252
      %v5289 = vadd.f32 %v4959, %v5255
      %v5290 = vld [vmem:[#allocation2 + $0x18] sm:$0xf]
      %v5291 = vld [vmem:[#allocation2 + $0x1c] sm:$0xf]
      %v5292 = vld [vmem:[#allocation2 + $0x20] sm:$0xf]
      %v5293 = vld [vmem:[#allocation2 + $0x24] sm:$0xf]
      %v5294 = vld [vmem:[#allocation2 + $0x28] sm:$0xf]
      %v5295 = vld [vmem:[#allocation2 + $0x2c] sm:$0xf]
      %v5296 = vld [vmem:[#allocation2 + $0x30] sm:$0xf]
      %v5297 = vld [vmem:[#allocation2 + $0x34] sm:$0xf]
      %v5298 = vld [vmem:[#allocation2 + $0x38] sm:$0xf]
      %v5299 = vld [vmem:[#allocation2 + $0x3c] sm:$0xf]
      %v5300 = vld [vmem:[#allocation2 + $0x40] sm:$0xf]
      %v5301 = vld [vmem:[#allocation2 + $0x44] sm:$0xf]
      %v5302 = vld [vmem:[#allocation2 + $0x48] sm:$0xf]
      %v5303 = vld [vmem:[#allocation2 + $0x4c] sm:$0xf]
      %v5304 = vld [vmem:[#allocation2 + $0x50] sm:$0xf]
      %v5305 = vld [vmem:[#allocation2 + $0x54] sm:$0xf]
      %v5306 = vld [vmem:[#allocation2 + $0x58] sm:$0xf]
      %v5307 = vld [vmem:[#allocation2 + $0x5c] sm:$0xf]
      %v5308 = vld [vmem:[#allocation2 + $0x60] sm:$0xf]
      %v5309 = vld [vmem:[#allocation2 + $0x64] sm:$0xf]
      %v5310 = vld [vmem:[#allocation2 + $0x68] sm:$0xf]
      %v5311 = vld [vmem:[#allocation2 + $0x6c] sm:$0xf]
      %v5312 = vld [vmem:[#allocation2 + $0x70] sm:$0xf]
      %v5313 = vld [vmem:[#allocation2 + $0x74] sm:$0xf]
      %v5314 = vld [vmem:[#allocation2 + $0x78] sm:$0xf]
      %v5315 = vld [vmem:[#allocation2 + $0x7c] sm:$0xf]
      %v5316 = vld [vmem:[#allocation2 + $0x80] sm:$0xf]
      %v5317 = vld [vmem:[#allocation2 + $0x84] sm:$0xf]
      %v5318 = vld [vmem:[#allocation2 + $0x88] sm:$0xf]
      %v5319 = vld [vmem:[#allocation2 + $0x8c] sm:$0xf]
      %v5320 = vld [vmem:[#allocation2 + $0x90] sm:$0xf]
      %v5321 = vld [vmem:[#allocation2 + $0x94] sm:$0xf]
      %v5322 = vld [vmem:[#allocation2 + $0x98] sm:$0x1]
      %v5323 = vsel %vm2795, %v5290, 0
      %v5324 = vsel %vm2796, %v5291, 0
      %v5325 = vsel %vm2797, %v5292, 0
      %v5326 = vsel %vm2798, %v5293, 0
      %v5327 = vsel %vm2799, %v5294, 0
      %v5328 = vsel %vm2800, %v5295, 0
      %v5329 = vsel %vm2801, %v5296, 0
      %v5330 = vsel %vm2802, %v5297, 0
      %v5331 = vsel %vm2803, %v5298, 0
      %v5332 = vsel %vm2804, %v5299, 0
      %v5333 = vsel %vm2805, %v5300, 0
      %v5334 = vsel %vm2806, %v5301, 0
      %v5335 = vsel %vm2807, %v5302, 0
      %v5336 = vsel %vm2808, %v5303, 0
      %v5337 = vsel %vm2809, %v5304, 0
      %v5338 = vsel %vm2810, %v5305, 0
      %v5339 = vsel %vm2811, %v5306, 0
      %v5340 = vsel %vm2812, %v5307, 0
      %v5341 = vsel %vm2813, %v5308, 0
      %v5342 = vsel %vm2814, %v5309, 0
      %v5343 = vsel %vm2815, %v5310, 0
      %v5344 = vsel %vm2816, %v5311, 0
      %v5345 = vsel %vm2817, %v5312, 0
      %v5346 = vsel %vm2818, %v5313, 0
      %v5347 = vsel %vm2819, %v5314, 0
      %v5348 = vsel %vm2820, %v5315, 0
      %v5349 = vsel %vm2821, %v5316, 0
      %v5350 = vsel %vm2822, %v5317, 0
      %v5351 = vsel %vm2823, %v5318, 0
      %v5352 = vsel %vm2824, %v5319, 0
      %v5353 = vsel %vm2825, %v5320, 0
      %v5354 = vsel %vm2826, %v5321, 0
      %v5355 = vsel %vm2827, %v5322, 0
      %s5356 = scalar_lea.vmem %s2, 56
      %v5357 = vld [vmem:[%s5356] sm:$0xf]
      %v5358 = vld [vmem:[%s5356 + $0x4] sm:$0xf]
      %v5392 = vunpack.c.l.b16 %v5323
      %v5393 = vunpack.c.l.b16 %v5324
      %v5394 = vunpack.c.l.b16 %v5325
      %v5395 = vunpack.c.l.b16 %v5326
      %v5396 = vunpack.c.l.b16 %v5327
      %v5397 = vunpack.c.l.b16 %v5328
      %v5398 = vunpack.c.l.b16 %v5329
      %v5399 = vunpack.c.l.b16 %v5330
      %v5400 = vunpack.c.l.b16 %v5331
      %v5401 = vunpack.c.l.b16 %v5332
      %v5402 = vunpack.c.l.b16 %v5333
      %v5403 = vunpack.c.l.b16 %v5334
      %v5404 = vunpack.c.l.b16 %v5335
      %v5405 = vunpack.c.l.b16 %v5336
      %v5406 = vunpack.c.l.b16 %v5337
      %v5407 = vunpack.c.l.b16 %v5338
      %v5408 = vunpack.c.l.b16 %v5339
      %v5409 = vunpack.c.l.b16 %v5340
      %v5410 = vunpack.c.l.b16 %v5341
      %v5411 = vunpack.c.l.b16 %v5342
      %v5412 = vunpack.c.l.b16 %v5343
      %v5413 = vunpack.c.l.b16 %v5344
      %v5414 = vunpack.c.l.b16 %v5345
      %v5415 = vunpack.c.l.b16 %v5346
      %v5416 = vunpack.c.l.b16 %v5347
      %v5417 = vunpack.c.l.b16 %v5348
      %v5418 = vunpack.c.l.b16 %v5349
      %v5419 = vunpack.c.l.b16 %v5350
      %v5420 = vunpack.c.l.b16 %v5351
      %v5421 = vunpack.c.l.b16 %v5352
      %v5422 = vunpack.c.l.b16 %v5353
      %v5423 = vunpack.c.l.b16 %v5354
      %v5424 = vunpack.c.l.b16 %v5355
      %v5425 = vpack.c.b16 %v5393, %v5392
      %v5426 = vpack.c.b16 %v5395, %v5394
      %v5427 = vpack.c.b16 %v5397, %v5396
      %v5428 = vpack.c.b16 %v5399, %v5398
      %v5429 = vpack.c.b16 %v5401, %v5400
      %v5430 = vpack.c.b16 %v5403, %v5402
      %v5431 = vpack.c.b16 %v5405, %v5404
      %v5432 = vpack.c.b16 %v5407, %v5406
      %v5433 = vpack.c.b16 %v5409, %v5408
      %v5434 = vpack.c.b16 %v5411, %v5410
      %v5435 = vpack.c.b16 %v5413, %v5412
      %v5436 = vpack.c.b16 %v5415, %v5414
      %v5437 = vpack.c.b16 %v5417, %v5416
      %v5438 = vpack.c.b16 %v5419, %v5418
      %v5439 = vpack.c.b16 %v5421, %v5420
      %v5440 = vpack.c.b16 %v5423, %v5422
      %v5441 = vpack.c.b16 %v5424, %v5424
      %v5443 = vshrl.u32 %v5425, 16
      %v5445 = vshll.u32 %v5425, 16
      %v5447 = vrot.slane %v5445, 1
      %v5448 = vor.u32 %v5443, %v5447
      %v5450 = vshll.u32 %v5426, 16
      %v5452 = vrot.slane %v5450, 1
      %v5453 = vsel %vm2947, %v5448, %v5452
      %v5454 = vshrl.u32 %v5426, 16
      %v5456 = vor.u32 %v5454, %v5452
      %v5458 = vshll.u32 %v5427, 16
      %v5460 = vrot.slane %v5458, 1
      %v5461 = vsel %vm2947, %v5456, %v5460
      %v5462 = vshrl.u32 %v5427, 16
      %v5464 = vor.u32 %v5462, %v5460
      %v5466 = vshll.u32 %v5428, 16
      %v5468 = vrot.slane %v5466, 1
      %v5469 = vsel %vm2947, %v5464, %v5468
      %v5470 = vshrl.u32 %v5428, 16
      %v5472 = vor.u32 %v5470, %v5468
      %v5474 = vshll.u32 %v5429, 16
      %v5476 = vrot.slane %v5474, 1
      %v5477 = vsel %vm2947, %v5472, %v5476
      %v5478 = vshrl.u32 %v5429, 16
      %v5480 = vor.u32 %v5478, %v5476
      %v5482 = vshll.u32 %v5430, 16
      %v5484 = vrot.slane %v5482, 1
      %v5485 = vsel %vm2947, %v5480, %v5484
      %v5486 = vshrl.u32 %v5430, 16
      %v5488 = vor.u32 %v5486, %v5484
      %v5490 = vshll.u32 %v5431, 16
      %v5492 = vrot.slane %v5490, 1
      %v5493 = vsel %vm2947, %v5488, %v5492
      %v5494 = vshrl.u32 %v5431, 16
      %v5496 = vor.u32 %v5494, %v5492
      %v5498 = vshll.u32 %v5432, 16
      %v5500 = vrot.slane %v5498, 1
      %v5501 = vsel %vm2947, %v5496, %v5500
      %v5502 = vshrl.u32 %v5432, 16
      %v5504 = vor.u32 %v5502, %v5500
      %v5506 = vshll.u32 %v5433, 16
      %v5508 = vrot.slane %v5506, 1
      %v5509 = vsel %vm2947, %v5504, %v5508
      %v5510 = vshrl.u32 %v5433, 16
      %v5512 = vor.u32 %v5510, %v5508
      %v5514 = vshll.u32 %v5434, 16
      %v5516 = vrot.slane %v5514, 1
      %v5517 = vsel %vm2947, %v5512, %v5516
      %v5518 = vshrl.u32 %v5434, 16
      %v5520 = vor.u32 %v5518, %v5516
      %v5522 = vshll.u32 %v5435, 16
      %v5524 = vrot.slane %v5522, 1
      %v5525 = vsel %vm2947, %v5520, %v5524
      %v5526 = vshrl.u32 %v5435, 16
      %v5528 = vor.u32 %v5526, %v5524
      %v5530 = vshll.u32 %v5436, 16
      %v5532 = vrot.slane %v5530, 1
      %v5533 = vsel %vm2947, %v5528, %v5532
      %v5534 = vshrl.u32 %v5436, 16
      %v5536 = vor.u32 %v5534, %v5532
      %v5538 = vshll.u32 %v5437, 16
      %v5540 = vrot.slane %v5538, 1
      %v5541 = vsel %vm2947, %v5536, %v5540
      %v5542 = vshrl.u32 %v5437, 16
      %v5544 = vor.u32 %v5542, %v5540
      %v5546 = vshll.u32 %v5438, 16
      %v5548 = vrot.slane %v5546, 1
      %v5549 = vsel %vm2947, %v5544, %v5548
      %v5550 = vshrl.u32 %v5438, 16
      %v5552 = vor.u32 %v5550, %v5548
      %v5554 = vshll.u32 %v5439, 16
      %v5556 = vrot.slane %v5554, 1
      %v5557 = vsel %vm2947, %v5552, %v5556
      %v5558 = vshrl.u32 %v5439, 16
      %v5560 = vor.u32 %v5558, %v5556
      %v5562 = vshll.u32 %v5440, 16
      %v5564 = vrot.slane %v5562, 1
      %v5565 = vsel %vm2947, %v5560, %v5564
      %v5566 = vshrl.u32 %v5440, 16
      %v5568 = vor.u32 %v5566, %v5564
      %v5570 = vshll.u32 %v5441, 16
      %v5572 = vrot.slane %v5570, 1
      %v5573 = vsel %vm2947, %v5568, %v5572
      %v5576 = vunpack.c.l.b16 %v5357
      %v5577 = vunpack.c.l.b16 %v5358
      %v5578 = vpack.c.b16 %v5577, %v5576
      %v5581 = vsel %vm1554, %v5453, 0
      %v5584 = vsel %vm1554, %v5461, 0
      %v5587 = vsel %vm1554, %v5469, 0
      %v5590 = vsel %vm1554, %v5477, 0
      %v5593 = vsel %vm1554, %v5485, 0
      %v5596 = vsel %vm1554, %v5493, 0
      %v5599 = vsel %vm1554, %v5501, 0
      %v5602 = vsel %vm1554, %v5509, 0
      %v5605 = vsel %vm1554, %v5517, 0
      %v5608 = vsel %vm1554, %v5525, 0
      %v5611 = vsel %vm1554, %v5533, 0
      %v5614 = vsel %vm1554, %v5541, 0
      %v5617 = vsel %vm1554, %v5549, 0
      %v5620 = vsel %vm1554, %v5557, 0
      %v5623 = vsel %vm1554, %v5565, 0
      %v5626 = vsel %vm1554, %v5573, 0
      %5628 = vmatprep.subr.bf16.mxu0 0
      %5629 = vmatpush1.bf16.msra.mxu0 0
      %5630 = vmatprep.subr.bf16.mxu0 0
      %5631 = vmatpush1.bf16.msra.mxu0 0
      %5632 = vmatprep.subr.bf16.mxu0 0
      %5633 = vmatpush1.bf16.msra.mxu0 0
      %5634 = vmatprep.subr.bf16.mxu0 0
      %5635 = vmatpush1.bf16.msra.mxu0 0
      %5636 = vmatprep.subr.bf16.mxu0 0
      %5637 = vmatpush1.bf16.msra.mxu0 0
      %5638 = vmatprep.subr.bf16.mxu0 0
      %5639 = vmatpush1.bf16.msra.mxu0 0
      %5640 = vmatprep.subr.bf16.mxu0 0
      %5641 = vmatpush1.bf16.msra.mxu0 0
      %5642 = vmatprep.subr.bf16.mxu0 0
      %5643 = vmatpush1.bf16.msra.mxu0 %v5578
      %5644 = vmatprep.subr.bf16.mxu0 0
      %5645 = vmatpush2.bf16.msra.mxu0 0
      %5646 = vmatprep.subr.bf16.mxu0 0
      %5647 = vmatpush2.bf16.msra.mxu0 0
      %5648 = vmatprep.subr.bf16.mxu0 0
      %5649 = vmatpush2.bf16.msra.mxu0 0
      %5650 = vmatprep.subr.bf16.mxu0 0
      %5651 = vmatpush2.bf16.msra.mxu0 0
      %5652 = vmatprep.subr.bf16.mxu0 0
      %5653 = vmatpush2.bf16.msra.mxu0 0
      %5654 = vmatprep.subr.bf16.mxu0 0
      %5655 = vmatpush2.bf16.msra.mxu0 0
      %5656 = vmatprep.subr.bf16.mxu0 0
      %5657 = vmatpush2.bf16.msra.mxu0 0
      %5658 = vmatprep.subr.bf16.mxu0 0
      %5659 = vmatpush2.bf16.msra.mxu0 0
      %5660 = vmatprep.mubr.bf16.mxu0 0
      %5661 = vmatmul.mubr.bf16.gmra.mxu0 %v5581
      %v5662 = vpop.f32.mrf.mxu0
      %v5663 = vadd.f32 0.0, %v5662
      %v5664 = vpop.f32.mrf.mxu0
      %v5665 = vpop.f32.mrf.mxu0
      %v5666 = vadd.f32 0.0, %v5665
      %v5667 = vpop.f32.mrf.mxu0
      %5668 = vmatprep.mubr.bf16.mxu0 0
      %5669 = vmatmul.mubr.bf16.gmra.mxu0 %v5584
      %v5670 = vpop.f32.mrf.mxu0
      %v5671 = vadd.f32 0.0, %v5670
      %v5672 = vpop.f32.mrf.mxu0
      %v5673 = vpop.f32.mrf.mxu0
      %v5674 = vadd.f32 0.0, %v5673
      %v5675 = vpop.f32.mrf.mxu0
      %5676 = vmatprep.mubr.bf16.mxu0 0
      %5677 = vmatmul.mubr.bf16.gmra.mxu0 %v5587
      %v5678 = vpop.f32.mrf.mxu0
      %v5679 = vadd.f32 0.0, %v5678
      %v5680 = vpop.f32.mrf.mxu0
      %v5681 = vpop.f32.mrf.mxu0
      %v5682 = vadd.f32 0.0, %v5681
      %v5683 = vpop.f32.mrf.mxu0
      %5684 = vmatprep.mubr.bf16.mxu0 0
      %5685 = vmatmul.mubr.bf16.gmra.mxu0 %v5590
      %v5686 = vpop.f32.mrf.mxu0
      %v5687 = vadd.f32 0.0, %v5686
      %v5688 = vpop.f32.mrf.mxu0
      %v5689 = vpop.f32.mrf.mxu0
      %v5690 = vadd.f32 0.0, %v5689
      %v5691 = vpop.f32.mrf.mxu0
      %5692 = vmatprep.mubr.bf16.mxu0 0
      %5693 = vmatmul.mubr.bf16.gmra.mxu0 %v5593
      %v5694 = vpop.f32.mrf.mxu0
      %v5695 = vadd.f32 0.0, %v5694
      %v5696 = vpop.f32.mrf.mxu0
      %v5697 = vpop.f32.mrf.mxu0
      %v5698 = vadd.f32 0.0, %v5697
      %v5699 = vpop.f32.mrf.mxu0
      %5700 = vmatprep.mubr.bf16.mxu0 0
      %5701 = vmatmul.mubr.bf16.gmra.mxu0 %v5596
      %v5702 = vpop.f32.mrf.mxu0
      %v5703 = vadd.f32 0.0, %v5702
      %v5704 = vpop.f32.mrf.mxu0
      %v5705 = vpop.f32.mrf.mxu0
      %v5706 = vadd.f32 0.0, %v5705
      %v5707 = vpop.f32.mrf.mxu0
      %5708 = vmatprep.mubr.bf16.mxu0 0
      %5709 = vmatmul.mubr.bf16.gmra.mxu0 %v5599
      %v5710 = vpop.f32.mrf.mxu0
      %v5711 = vadd.f32 0.0, %v5710
      %v5712 = vpop.f32.mrf.mxu0
      %v5713 = vpop.f32.mrf.mxu0
      %v5714 = vadd.f32 0.0, %v5713
      %v5715 = vpop.f32.mrf.mxu0
      %5716 = vmatprep.mubr.bf16.mxu0 0
      %5717 = vmatmul.mubr.bf16.gmra.mxu0 %v5602
      %v5718 = vpop.f32.mrf.mxu0
      %v5719 = vadd.f32 0.0, %v5718
      %v5720 = vpop.f32.mrf.mxu0
      %v5721 = vpop.f32.mrf.mxu0
      %v5722 = vadd.f32 0.0, %v5721
      %v5723 = vpop.f32.mrf.mxu0
      %5724 = vmatprep.mubr.bf16.mxu0 0
      %5725 = vmatmul.mubr.bf16.gmra.mxu0 %v5605
      %v5726 = vpop.f32.mrf.mxu0
      %v5727 = vadd.f32 0.0, %v5726
      %v5728 = vpop.f32.mrf.mxu0
      %v5729 = vpop.f32.mrf.mxu0
      %v5730 = vadd.f32 0.0, %v5729
      %v5731 = vpop.f32.mrf.mxu0
      %5732 = vmatprep.mubr.bf16.mxu0 0
      %5733 = vmatmul.mubr.bf16.gmra.mxu0 %v5608
      %v5734 = vpop.f32.mrf.mxu0
      %v5735 = vadd.f32 0.0, %v5734
      %v5736 = vpop.f32.mrf.mxu0
      %v5737 = vpop.f32.mrf.mxu0
      %v5738 = vadd.f32 0.0, %v5737
      %v5739 = vpop.f32.mrf.mxu0
      %5740 = vmatprep.mubr.bf16.mxu0 0
      %5741 = vmatmul.mubr.bf16.gmra.mxu0 %v5611
      %v5742 = vpop.f32.mrf.mxu0
      %v5743 = vadd.f32 0.0, %v5742
      %v5744 = vpop.f32.mrf.mxu0
      %v5745 = vpop.f32.mrf.mxu0
      %v5746 = vadd.f32 0.0, %v5745
      %v5747 = vpop.f32.mrf.mxu0
      %5748 = vmatprep.mubr.bf16.mxu0 0
      %5749 = vmatmul.mubr.bf16.gmra.mxu0 %v5614
      %v5750 = vpop.f32.mrf.mxu0
      %v5751 = vadd.f32 0.0, %v5750
      %v5752 = vpop.f32.mrf.mxu0
      %v5753 = vpop.f32.mrf.mxu0
      %v5754 = vadd.f32 0.0, %v5753
      %v5755 = vpop.f32.mrf.mxu0
      %5756 = vmatprep.mubr.bf16.mxu0 0
      %5757 = vmatmul.mubr.bf16.gmra.mxu0 %v5617
      %v5758 = vpop.f32.mrf.mxu0
      %v5759 = vadd.f32 0.0, %v5758
      %v5760 = vpop.f32.mrf.mxu0
      %v5761 = vpop.f32.mrf.mxu0
      %v5762 = vadd.f32 0.0, %v5761
      %v5763 = vpop.f32.mrf.mxu0
      %5764 = vmatprep.mubr.bf16.mxu0 0
      %5765 = vmatmul.mubr.bf16.gmra.mxu0 %v5620
      %v5766 = vpop.f32.mrf.mxu0
      %v5767 = vadd.f32 0.0, %v5766
      %v5768 = vpop.f32.mrf.mxu0
      %v5769 = vpop.f32.mrf.mxu0
      %v5770 = vadd.f32 0.0, %v5769
      %v5771 = vpop.f32.mrf.mxu0
      %5772 = vmatprep.mubr.bf16.mxu0 0
      %5773 = vmatmul.mubr.bf16.gmra.mxu0 %v5623
      %v5774 = vpop.f32.mrf.mxu0
      %v5775 = vadd.f32 0.0, %v5774
      %v5776 = vpop.f32.mrf.mxu0
      %v5777 = vpop.f32.mrf.mxu0
      %v5778 = vadd.f32 0.0, %v5777
      %v5779 = vpop.f32.mrf.mxu0
      %5780 = vmatprep.mubr.bf16.mxu0 0
      %5781 = vmatmul.mubr.bf16.gmra.mxu0 %v5626
      %v5782 = vpop.f32.mrf.mxu0
      %v5783 = vadd.f32 0.0, %v5782
      %v5784 = vpop.f32.mrf.mxu0
      %v5785 = vpop.f32.mrf.mxu0
      %v5786 = vadd.f32 0.0, %v5785
      %v5787 = vpop.f32.mrf.mxu0
      %5788 = vdwg.mxu0
      %v5789 = vadd.f32 %v5258, %v5663
      %v5790 = vadd.f32 %v5259, %v5666
      %v5791 = vadd.f32 %v5260, %v5671
      %v5792 = vadd.f32 %v5261, %v5674
      %v5793 = vadd.f32 %v5262, %v5679
      %v5794 = vadd.f32 %v5263, %v5682
      %v5795 = vadd.f32 %v5264, %v5687
      %v5796 = vadd.f32 %v5265, %v5690
      %v5797 = vadd.f32 %v5266, %v5695
      %v5798 = vadd.f32 %v5267, %v5698
      %v5799 = vadd.f32 %v5268, %v5703
      %v5800 = vadd.f32 %v5269, %v5706
      %v5801 = vadd.f32 %v5270, %v5711
      %v5802 = vadd.f32 %v5271, %v5714
      %v5803 = vadd.f32 %v5272, %v5719
      %v5804 = vadd.f32 %v5273, %v5722
      %v5805 = vadd.f32 %v5274, %v5727
      %v5806 = vadd.f32 %v5275, %v5730
      %v5807 = vadd.f32 %v5276, %v5735
      %v5808 = vadd.f32 %v5277, %v5738
      %v5809 = vadd.f32 %v5278, %v5743
      %v5810 = vadd.f32 %v5279, %v5746
      %v5811 = vadd.f32 %v5280, %v5751
      %v5812 = vadd.f32 %v5281, %v5754
      %v5813 = vadd.f32 %v5282, %v5759
      %v5814 = vadd.f32 %v5283, %v5762
      %v5815 = vadd.f32 %v5284, %v5767
      %v5816 = vadd.f32 %v5285, %v5770
      %v5817 = vadd.f32 %v5286, %v5775
      %v5818 = vadd.f32 %v5287, %v5778
      %v5819 = vadd.f32 %v5288, %v5783
      %v5820 = vadd.f32 %v5289, %v5786
      %v5821 = vld [vmem:[%s3] sm:$0x1]
      %v5823 = vlaneseq
      %v5824 = vshrl.u32 %v5823, 7
      %v5825 = vsub.s32 0, %v5824
      %v5826 = vrot.slane %v5821, %v5825
      %v5828 = vadd.f32 %v5789, %v5826
      %v5829 = vadd.f32 %v5790, %v5826
      %v5830 = vadd.f32 %v5791, %v5826
      %v5831 = vadd.f32 %v5792, %v5826
      %v5832 = vadd.f32 %v5793, %v5826
      %v5833 = vadd.f32 %v5794, %v5826
      %v5834 = vadd.f32 %v5795, %v5826
      %v5835 = vadd.f32 %v5796, %v5826
      %v5836 = vadd.f32 %v5797, %v5826
      %v5837 = vadd.f32 %v5798, %v5826
      %v5838 = vadd.f32 %v5799, %v5826
      %v5839 = vadd.f32 %v5800, %v5826
      %v5840 = vadd.f32 %v5801, %v5826
      %v5841 = vadd.f32 %v5802, %v5826
      %v5842 = vadd.f32 %v5803, %v5826
      %v5843 = vadd.f32 %v5804, %v5826
      %v5844 = vadd.f32 %v5805, %v5826
      %v5845 = vadd.f32 %v5806, %v5826
      %v5846 = vadd.f32 %v5807, %v5826
      %v5847 = vadd.f32 %v5808, %v5826
      %v5848 = vadd.f32 %v5809, %v5826
      %v5849 = vadd.f32 %v5810, %v5826
      %v5850 = vadd.f32 %v5811, %v5826
      %v5851 = vadd.f32 %v5812, %v5826
      %v5852 = vadd.f32 %v5813, %v5826
      %v5853 = vadd.f32 %v5814, %v5826
      %v5854 = vadd.f32 %v5815, %v5826
      %v5855 = vadd.f32 %v5816, %v5826
      %v5856 = vadd.f32 %v5817, %v5826
      %v5857 = vadd.f32 %v5818, %v5826
      %v5858 = vadd.f32 %v5819, %v5826
      %v5859 = vadd.f32 %v5820, %v5826
      %v5860 = vmax.f32 %v5828, 0.0
      %v5861 = vmax.f32 %v5829, 0.0
      %v5862 = vmax.f32 %v5830, 0.0
      %v5863 = vmax.f32 %v5831, 0.0
      %v5864 = vmax.f32 %v5832, 0.0
      %v5865 = vmax.f32 %v5833, 0.0
      %v5866 = vmax.f32 %v5834, 0.0
      %v5867 = vmax.f32 %v5835, 0.0
      %v5868 = vmax.f32 %v5836, 0.0
      %v5869 = vmax.f32 %v5837, 0.0
      %v5870 = vmax.f32 %v5838, 0.0
      %v5871 = vmax.f32 %v5839, 0.0
      %v5872 = vmax.f32 %v5840, 0.0
      %v5873 = vmax.f32 %v5841, 0.0
      %v5874 = vmax.f32 %v5842, 0.0
      %v5875 = vmax.f32 %v5843, 0.0
      %v5876 = vmax.f32 %v5844, 0.0
      %v5877 = vmax.f32 %v5845, 0.0
      %v5878 = vmax.f32 %v5846, 0.0
      %v5879 = vmax.f32 %v5847, 0.0
      %v5880 = vmax.f32 %v5848, 0.0
      %v5881 = vmax.f32 %v5849, 0.0
      %v5882 = vmax.f32 %v5850, 0.0
      %v5883 = vmax.f32 %v5851, 0.0
      %v5884 = vmax.f32 %v5852, 0.0
      %v5885 = vmax.f32 %v5853, 0.0
      %v5886 = vmax.f32 %v5854, 0.0
      %v5887 = vmax.f32 %v5855, 0.0
      %v5888 = vmax.f32 %v5856, 0.0
      %v5889 = vmax.f32 %v5857, 0.0
      %v5890 = vmax.f32 %v5858, 0.0
      %v5891 = vmax.f32 %v5859, 0.0
      %v5892 = vpack.c.bf16 %v5861, %v5860
      %v5893 = vpack.c.bf16 %v5863, %v5862
      %v5894 = vpack.c.bf16 %v5865, %v5864
      %v5895 = vpack.c.bf16 %v5867, %v5866
      %v5896 = vpack.c.bf16 %v5869, %v5868
      %v5897 = vpack.c.bf16 %v5871, %v5870
      %v5898 = vpack.c.bf16 %v5873, %v5872
      %v5899 = vpack.c.bf16 %v5875, %v5874
      %v5900 = vpack.c.bf16 %v5877, %v5876
      %v5901 = vpack.c.bf16 %v5879, %v5878
      %v5902 = vpack.c.bf16 %v5881, %v5880
      %v5903 = vpack.c.bf16 %v5883, %v5882
      %v5904 = vpack.c.bf16 %v5885, %v5884
      %v5905 = vpack.c.bf16 %v5887, %v5886
      %v5906 = vpack.c.bf16 %v5889, %v5888
      %v5907 = vpack.c.bf16 %v5891, %v5890
      %v5908 = vld [vmem:[%s4] sm:$0xf]
      %v5909 = vld [vmem:[%s4 + $0x4] sm:$0xf]
      %v5910 = vld [vmem:[%s4 + $0x8] sm:$0xf]
      %v5911 = vld [vmem:[%s4 + $0xc] sm:$0xf]
      %v5912 = vld [vmem:[%s4 + $0x10] sm:$0xf]
      %v5913 = vld [vmem:[%s4 + $0x14] sm:$0xf]
      %v5914 = vld [vmem:[%s4 + $0x18] sm:$0xf]
      %v5915 = vld [vmem:[%s4 + $0x1c] sm:$0xf]
      %v5916 = vld [vmem:[%s4 + $0x20] sm:$0xf]
      %v5917 = vld [vmem:[%s4 + $0x24] sm:$0xf]
      %v5918 = vld [vmem:[%s4 + $0x28] sm:$0xf]
      %v5919 = vld [vmem:[%s4 + $0x2c] sm:$0xf]
      %v5920 = vld [vmem:[%s4 + $0x30] sm:$0xf]
      %v5921 = vld [vmem:[%s4 + $0x34] sm:$0xf]
      %v5922 = vld [vmem:[%s4 + $0x38] sm:$0xf]
      %v5923 = vld [vmem:[%s4 + $0x3c] sm:$0xf]
      %v5940 = vunpack.c.l.b16 %v5908
      %v5941 = vunpack.c.l.b16 %v5909
      %v5942 = vunpack.c.l.b16 %v5910
      %v5943 = vunpack.c.l.b16 %v5911
      %v5944 = vunpack.c.l.b16 %v5912
      %v5945 = vunpack.c.l.b16 %v5913
      %v5946 = vunpack.c.l.b16 %v5914
      %v5947 = vunpack.c.l.b16 %v5915
      %v5948 = vunpack.c.l.b16 %v5916
      %v5949 = vunpack.c.l.b16 %v5917
      %v5950 = vunpack.c.l.b16 %v5918
      %v5951 = vunpack.c.l.b16 %v5919
      %v5952 = vunpack.c.l.b16 %v5920
      %v5953 = vunpack.c.l.b16 %v5921
      %v5954 = vunpack.c.l.b16 %v5922
      %v5955 = vunpack.c.l.b16 %v5923
      %v5956 = vpack.c.b16 %v5941, %v5940
      %v5957 = vpack.c.b16 %v5943, %v5942
      %v5958 = vpack.c.b16 %v5945, %v5944
      %v5959 = vpack.c.b16 %v5947, %v5946
      %v5960 = vpack.c.b16 %v5949, %v5948
      %v5961 = vpack.c.b16 %v5951, %v5950
      %v5962 = vpack.c.b16 %v5953, %v5952
      %v5963 = vpack.c.b16 %v5955, %v5954
      %5972 = vmatprep.subr.bf16.mxu0 0
      %5973 = vmatpush1.bf16.msra.mxu0 %v5963
      %5974 = vmatprep.subr.bf16.mxu0 0
      %5975 = vmatpush1.bf16.msra.mxu0 %v5962
      %5976 = vmatprep.subr.bf16.mxu0 0
      %5977 = vmatpush1.bf16.msra.mxu0 %v5961
      %5978 = vmatprep.subr.bf16.mxu0 0
      %5979 = vmatpush1.bf16.msra.mxu0 %v5960
      %5980 = vmatprep.subr.bf16.mxu0 0
      %5981 = vmatpush1.bf16.msra.mxu0 %v5959
      %5982 = vmatprep.subr.bf16.mxu0 0
      %5983 = vmatpush1.bf16.msra.mxu0 %v5958
      %5984 = vmatprep.subr.bf16.mxu0 0
      %5985 = vmatpush1.bf16.msra.mxu0 %v5957
      %5986 = vmatprep.subr.bf16.mxu0 0
      %5987 = vmatpush1.bf16.msra.mxu0 %v5956
      %5988 = vmatprep.subr.bf16.mxu0 0
      %5989 = vmatpush2.bf16.msra.mxu0 0
      %5990 = vmatprep.subr.bf16.mxu0 0
      %5991 = vmatpush2.bf16.msra.mxu0 0
      %5992 = vmatprep.subr.bf16.mxu0 0
      %5993 = vmatpush2.bf16.msra.mxu0 0
      %5994 = vmatprep.subr.bf16.mxu0 0
      %5995 = vmatpush2.bf16.msra.mxu0 0
      %5996 = vmatprep.subr.bf16.mxu0 0
      %5997 = vmatpush2.bf16.msra.mxu0 0
      %5998 = vmatprep.subr.bf16.mxu0 0
      %5999 = vmatpush2.bf16.msra.mxu0 0
      %6000 = vmatprep.subr.bf16.mxu0 0
      %6001 = vmatpush2.bf16.msra.mxu0 0
      %6002 = vmatprep.subr.bf16.mxu0 0
      %6003 = vmatpush2.bf16.msra.mxu0 0
      %6004 = vmatprep.mubr.bf16.mxu0 0
      %6005 = vmatmul.mubr.bf16.gmra.mxu0 %v5892
      %v6006 = vpop.f32.mrf.mxu0
      %v6007 = vadd.f32 0.0, %v6006
      %v6008 = vpop.f32.mrf.mxu0
      %v6009 = vpop.f32.mrf.mxu0
      %v6010 = vadd.f32 0.0, %v6009
      %v6011 = vpop.f32.mrf.mxu0
      %6012 = vmatprep.mubr.bf16.mxu0 0
      %6013 = vmatmul.mubr.bf16.gmra.mxu0 %v5893
      %v6014 = vpop.f32.mrf.mxu0
      %v6015 = vadd.f32 0.0, %v6014
      %v6016 = vpop.f32.mrf.mxu0
      %v6017 = vpop.f32.mrf.mxu0
      %v6018 = vadd.f32 0.0, %v6017
      %v6019 = vpop.f32.mrf.mxu0
      %6020 = vmatprep.mubr.bf16.mxu0 0
      %6021 = vmatmul.mubr.bf16.gmra.mxu0 %v5894
      %v6022 = vpop.f32.mrf.mxu0
      %v6023 = vadd.f32 0.0, %v6022
      %v6024 = vpop.f32.mrf.mxu0
      %v6025 = vpop.f32.mrf.mxu0
      %v6026 = vadd.f32 0.0, %v6025
      %v6027 = vpop.f32.mrf.mxu0
      %6028 = vmatprep.mubr.bf16.mxu0 0
      %6029 = vmatmul.mubr.bf16.gmra.mxu0 %v5895
      %v6030 = vpop.f32.mrf.mxu0
      %v6031 = vadd.f32 0.0, %v6030
      %v6032 = vpop.f32.mrf.mxu0
      %v6033 = vpop.f32.mrf.mxu0
      %v6034 = vadd.f32 0.0, %v6033
      %v6035 = vpop.f32.mrf.mxu0
      %6036 = vmatprep.mubr.bf16.mxu0 0
      %6037 = vmatmul.mubr.bf16.gmra.mxu0 %v5896
      %v6038 = vpop.f32.mrf.mxu0
      %v6039 = vadd.f32 0.0, %v6038
      %v6040 = vpop.f32.mrf.mxu0
      %v6041 = vpop.f32.mrf.mxu0
      %v6042 = vadd.f32 0.0, %v6041
      %v6043 = vpop.f32.mrf.mxu0
      %6044 = vmatprep.mubr.bf16.mxu0 0
      %6045 = vmatmul.mubr.bf16.gmra.mxu0 %v5897
      %v6046 = vpop.f32.mrf.mxu0
      %v6047 = vadd.f32 0.0, %v6046
      %v6048 = vpop.f32.mrf.mxu0
      %v6049 = vpop.f32.mrf.mxu0
      %v6050 = vadd.f32 0.0, %v6049
      %v6051 = vpop.f32.mrf.mxu0
      %6052 = vmatprep.mubr.bf16.mxu0 0
      %6053 = vmatmul.mubr.bf16.gmra.mxu0 %v5898
      %v6054 = vpop.f32.mrf.mxu0
      %v6055 = vadd.f32 0.0, %v6054
      %v6056 = vpop.f32.mrf.mxu0
      %v6057 = vpop.f32.mrf.mxu0
      %v6058 = vadd.f32 0.0, %v6057
      %v6059 = vpop.f32.mrf.mxu0
      %6060 = vmatprep.mubr.bf16.mxu0 0
      %6061 = vmatmul.mubr.bf16.gmra.mxu0 %v5899
      %v6062 = vpop.f32.mrf.mxu0
      %v6063 = vadd.f32 0.0, %v6062
      %v6064 = vpop.f32.mrf.mxu0
      %v6065 = vpop.f32.mrf.mxu0
      %v6066 = vadd.f32 0.0, %v6065
      %v6067 = vpop.f32.mrf.mxu0
      %6068 = vmatprep.mubr.bf16.mxu0 0
      %6069 = vmatmul.mubr.bf16.gmra.mxu0 %v5900
      %v6070 = vpop.f32.mrf.mxu0
      %v6071 = vadd.f32 0.0, %v6070
      %v6072 = vpop.f32.mrf.mxu0
      %v6073 = vpop.f32.mrf.mxu0
      %v6074 = vadd.f32 0.0, %v6073
      %v6075 = vpop.f32.mrf.mxu0
      %6076 = vmatprep.mubr.bf16.mxu0 0
      %6077 = vmatmul.mubr.bf16.gmra.mxu0 %v5901
      %v6078 = vpop.f32.mrf.mxu0
      %v6079 = vadd.f32 0.0, %v6078
      %v6080 = vpop.f32.mrf.mxu0
      %v6081 = vpop.f32.mrf.mxu0
      %v6082 = vadd.f32 0.0, %v6081
      %v6083 = vpop.f32.mrf.mxu0
      %6084 = vmatprep.mubr.bf16.mxu0 0
      %6085 = vmatmul.mubr.bf16.gmra.mxu0 %v5902
      %v6086 = vpop.f32.mrf.mxu0
      %v6087 = vadd.f32 0.0, %v6086
      %v6088 = vpop.f32.mrf.mxu0
      %v6089 = vpop.f32.mrf.mxu0
      %v6090 = vadd.f32 0.0, %v6089
      %v6091 = vpop.f32.mrf.mxu0
      %6092 = vmatprep.mubr.bf16.mxu0 0
      %6093 = vmatmul.mubr.bf16.gmra.mxu0 %v5903
      %v6094 = vpop.f32.mrf.mxu0
      %v6095 = vadd.f32 0.0, %v6094
      %v6096 = vpop.f32.mrf.mxu0
      %v6097 = vpop.f32.mrf.mxu0
      %v6098 = vadd.f32 0.0, %v6097
      %v6099 = vpop.f32.mrf.mxu0
      %6100 = vmatprep.mubr.bf16.mxu0 0
      %6101 = vmatmul.mubr.bf16.gmra.mxu0 %v5904
      %v6102 = vpop.f32.mrf.mxu0
      %v6103 = vadd.f32 0.0, %v6102
      %v6104 = vpop.f32.mrf.mxu0
      %v6105 = vpop.f32.mrf.mxu0
      %v6106 = vadd.f32 0.0, %v6105
      %v6107 = vpop.f32.mrf.mxu0
      %6108 = vmatprep.mubr.bf16.mxu0 0
      %6109 = vmatmul.mubr.bf16.gmra.mxu0 %v5905
      %v6110 = vpop.f32.mrf.mxu0
      %v6111 = vadd.f32 0.0, %v6110
      %v6112 = vpop.f32.mrf.mxu0
      %v6113 = vpop.f32.mrf.mxu0
      %v6114 = vadd.f32 0.0, %v6113
      %v6115 = vpop.f32.mrf.mxu0
      %6116 = vmatprep.mubr.bf16.mxu0 0
      %6117 = vmatmul.mubr.bf16.gmra.mxu0 %v5906
      %v6118 = vpop.f32.mrf.mxu0
      %v6119 = vadd.f32 0.0, %v6118
      %v6120 = vpop.f32.mrf.mxu0
      %v6121 = vpop.f32.mrf.mxu0
      %v6122 = vadd.f32 0.0, %v6121
      %v6123 = vpop.f32.mrf.mxu0
      %6124 = vmatprep.mubr.bf16.mxu0 0
      %6125 = vmatmul.mubr.bf16.gmra.mxu0 %v5907
      %v6126 = vpop.f32.mrf.mxu0
      %v6127 = vadd.f32 0.0, %v6126
      %v6128 = vpop.f32.mrf.mxu0
      %v6129 = vpop.f32.mrf.mxu0
      %v6130 = vadd.f32 0.0, %v6129
      %v6131 = vpop.f32.mrf.mxu0
      %6132 = vdwg.mxu0
      %v6133 = vadd.f32 %v753, %v6007
      %v6134 = vadd.f32 %v754, %v6010
      %v6135 = vadd.f32 %v755, %v6015
      %v6136 = vadd.f32 %v756, %v6018
      %v6137 = vadd.f32 %v757, %v6023
      %v6138 = vadd.f32 %v758, %v6026
      %v6139 = vadd.f32 %v759, %v6031
      %v6140 = vadd.f32 %v760, %v6034
      %v6141 = vadd.f32 %v761, %v6039
      %v6142 = vadd.f32 %v762, %v6042
      %v6143 = vadd.f32 %v763, %v6047
      %v6144 = vadd.f32 %v764, %v6050
      %v6145 = vadd.f32 %v765, %v6055
      %v6146 = vadd.f32 %v766, %v6058
      %v6147 = vadd.f32 %v767, %v6063
      %v6148 = vadd.f32 %v768, %v6066
      %v6149 = vadd.f32 %v769, %v6071
      %v6150 = vadd.f32 %v770, %v6074
      %v6151 = vadd.f32 %v771, %v6079
      %v6152 = vadd.f32 %v772, %v6082
      %v6153 = vadd.f32 %v773, %v6087
      %v6154 = vadd.f32 %v774, %v6090
      %v6155 = vadd.f32 %v775, %v6095
      %v6156 = vadd.f32 %v776, %v6098
      %v6157 = vadd.f32 %v777, %v6103
      %v6158 = vadd.f32 %v778, %v6106
      %v6159 = vadd.f32 %v779, %v6111
      %v6160 = vadd.f32 %v780, %v6114
      %v6161 = vadd.f32 %v781, %v6119
      %v6162 = vadd.f32 %v782, %v6122
      %v6163 = vadd.f32 %v783, %v6127
      %v6164 = vadd.f32 %v784, %v6130
      %v6165 = vpack.c.bf16 %v6134, %v6133
      %v6166 = vpack.c.bf16 %v6136, %v6135
      %v6167 = vpack.c.bf16 %v6138, %v6137
      %v6168 = vpack.c.bf16 %v6140, %v6139
      %v6169 = vpack.c.bf16 %v6142, %v6141
      %v6170 = vpack.c.bf16 %v6144, %v6143
      %v6171 = vpack.c.bf16 %v6146, %v6145
      %v6172 = vpack.c.bf16 %v6148, %v6147
      %v6173 = vpack.c.bf16 %v6150, %v6149
      %v6174 = vpack.c.bf16 %v6152, %v6151
      %v6175 = vpack.c.bf16 %v6154, %v6153
      %v6176 = vpack.c.bf16 %v6156, %v6155
      %v6177 = vpack.c.bf16 %v6158, %v6157
      %v6178 = vpack.c.bf16 %v6160, %v6159
      %v6179 = vpack.c.bf16 %v6162, %v6161
      %v6180 = vpack.c.bf16 %v6164, %v6163
      %v6197 = vunpack.c.l.b16 %v6165
      %v6198 = vunpack.c.h.b16 %v6165
      %v6199 = vunpack.c.l.b16 %v6166
      %v6200 = vunpack.c.h.b16 %v6166
      %v6201 = vunpack.c.l.b16 %v6167
      %v6202 = vunpack.c.h.b16 %v6167
      %v6203 = vunpack.c.l.b16 %v6168
      %v6204 = vunpack.c.h.b16 %v6168
      %v6205 = vunpack.c.l.b16 %v6169
      %v6206 = vunpack.c.h.b16 %v6169
      %v6207 = vunpack.c.l.b16 %v6170
      %v6208 = vunpack.c.h.b16 %v6170
      %v6209 = vunpack.c.l.b16 %v6171
      %v6210 = vunpack.c.h.b16 %v6171
      %v6211 = vunpack.c.l.b16 %v6172
      %v6212 = vunpack.c.h.b16 %v6172
      %v6213 = vunpack.c.l.b16 %v6173
      %v6214 = vunpack.c.h.b16 %v6173
      %v6215 = vunpack.c.l.b16 %v6174
      %v6216 = vunpack.c.h.b16 %v6174
      %v6217 = vunpack.c.l.b16 %v6175
      %v6218 = vunpack.c.h.b16 %v6175
      %v6219 = vunpack.c.l.b16 %v6176
      %v6220 = vunpack.c.h.b16 %v6176
      %v6221 = vunpack.c.l.b16 %v6177
      %v6222 = vunpack.c.h.b16 %v6177
      %v6223 = vunpack.c.l.b16 %v6178
      %v6224 = vunpack.c.h.b16 %v6178
      %v6225 = vunpack.c.l.b16 %v6179
      %v6226 = vunpack.c.h.b16 %v6179
      %v6227 = vunpack.c.l.b16 %v6180
      %v6228 = vunpack.c.h.b16 %v6180
      %v6229 = vpack.c.b16 %v6197, %v6197
      %v6230 = vpack.c.b16 %v6198, %v6198
      %v6231 = vpack.c.b16 %v6199, %v6199
      %v6232 = vpack.c.b16 %v6200, %v6200
      %v6233 = vpack.c.b16 %v6201, %v6201
      %v6234 = vpack.c.b16 %v6202, %v6202
      %v6235 = vpack.c.b16 %v6203, %v6203
      %v6236 = vpack.c.b16 %v6204, %v6204
      %v6237 = vpack.c.b16 %v6205, %v6205
      %v6238 = vpack.c.b16 %v6206, %v6206
      %v6239 = vpack.c.b16 %v6207, %v6207
      %v6240 = vpack.c.b16 %v6208, %v6208
      %v6241 = vpack.c.b16 %v6209, %v6209
      %v6242 = vpack.c.b16 %v6210, %v6210
      %v6243 = vpack.c.b16 %v6211, %v6211
      %v6244 = vpack.c.b16 %v6212, %v6212
      %v6245 = vpack.c.b16 %v6213, %v6213
      %v6246 = vpack.c.b16 %v6214, %v6214
      %v6247 = vpack.c.b16 %v6215, %v6215
      %v6248 = vpack.c.b16 %v6216, %v6216
      %v6249 = vpack.c.b16 %v6217, %v6217
      %v6250 = vpack.c.b16 %v6218, %v6218
      %v6251 = vpack.c.b16 %v6219, %v6219
      %v6252 = vpack.c.b16 %v6220, %v6220
      %v6253 = vpack.c.b16 %v6221, %v6221
      %v6254 = vpack.c.b16 %v6222, %v6222
      %v6255 = vpack.c.b16 %v6223, %v6223
      %v6256 = vpack.c.b16 %v6224, %v6224
      %v6257 = vpack.c.b16 %v6225, %v6225
      %v6258 = vpack.c.b16 %v6226, %v6226
      %v6259 = vpack.c.b16 %v6227, %v6227
      %v6260 = vpack.c.b16 %v6228, %v6228
      %6293 = vst.msk [vmem:[#allocation2 + $0x10] sm:$0xf] %vm231, %v6229
      %6294 = vst.msk [vmem:[#allocation2 + $0x14] sm:$0xf] %vm231, %v6230
      %6295 = vst.msk [vmem:[#allocation2 + $0x18] sm:$0xf] %vm231, %v6231
      %6296 = vst.msk [vmem:[#allocation2 + $0x1c] sm:$0xf] %vm231, %v6232
      %6297 = vst.msk [vmem:[#allocation2 + $0x20] sm:$0xf] %vm231, %v6233
      %6298 = vst.msk [vmem:[#allocation2 + $0x24] sm:$0xf] %vm231, %v6234
      %6299 = vst.msk [vmem:[#allocation2 + $0x28] sm:$0xf] %vm231, %v6235
      %6300 = vst.msk [vmem:[#allocation2 + $0x2c] sm:$0xf] %vm231, %v6236
      %6301 = vst.msk [vmem:[#allocation2 + $0x30] sm:$0xf] %vm231, %v6237
      %6302 = vst.msk [vmem:[#allocation2 + $0x34] sm:$0xf] %vm231, %v6238
      %6303 = vst.msk [vmem:[#allocation2 + $0x38] sm:$0xf] %vm231, %v6239
      %6304 = vst.msk [vmem:[#allocation2 + $0x3c] sm:$0xf] %vm231, %v6240
      %6305 = vst.msk [vmem:[#allocation2 + $0x40] sm:$0xf] %vm231, %v6241
      %6306 = vst.msk [vmem:[#allocation2 + $0x44] sm:$0xf] %vm231, %v6242
      %6307 = vst.msk [vmem:[#allocation2 + $0x48] sm:$0xf] %vm231, %v6243
      %6308 = vst.msk [vmem:[#allocation2 + $0x4c] sm:$0xf] %vm231, %v6244
      %6309 = vst.msk [vmem:[#allocation2 + $0x50] sm:$0xf] %vm231, %v6245
      %6310 = vst.msk [vmem:[#allocation2 + $0x54] sm:$0xf] %vm231, %v6246
      %6311 = vst.msk [vmem:[#allocation2 + $0x58] sm:$0xf] %vm231, %v6247
      %6312 = vst.msk [vmem:[#allocation2 + $0x5c] sm:$0xf] %vm231, %v6248
      %6313 = vst.msk [vmem:[#allocation2 + $0x60] sm:$0xf] %vm231, %v6249
      %6314 = vst.msk [vmem:[#allocation2 + $0x64] sm:$0xf] %vm231, %v6250
      %6315 = vst.msk [vmem:[#allocation2 + $0x68] sm:$0xf] %vm231, %v6251
      %6316 = vst.msk [vmem:[#allocation2 + $0x6c] sm:$0xf] %vm231, %v6252
      %6317 = vst.msk [vmem:[#allocation2 + $0x70] sm:$0xf] %vm231, %v6253
      %6318 = vst.msk [vmem:[#allocation2 + $0x74] sm:$0xf] %vm231, %v6254
      %6319 = vst.msk [vmem:[#allocation2 + $0x78] sm:$0xf] %vm231, %v6255
      %6320 = vst.msk [vmem:[#allocation2 + $0x7c] sm:$0xf] %vm231, %v6256
      %6321 = vst.msk [vmem:[#allocation2 + $0x80] sm:$0xf] %vm231, %v6257
      %6322 = vst.msk [vmem:[#allocation2 + $0x84] sm:$0xf] %vm231, %v6258
      %6323 = vst.msk [vmem:[#allocation2 + $0x88] sm:$0xf] %vm231, %v6259
      %6324 = vst.msk [vmem:[#allocation2 + $0x8c] sm:$0xf] %vm231, %v6260
      %s6325 = scalar_lea.vmem %s1, 32
      %v6326 = vld [vmem:[%s6325] sm:$0xf]
      %v6327 = vld [vmem:[%s6325 + $0x4] sm:$0xf]
      %v6328 = vld [vmem:[%s6325 + $0x8] sm:$0xf]
      %v6329 = vld [vmem:[%s6325 + $0xc] sm:$0xf]
      %v6330 = vld [vmem:[%s6325 + $0x10] sm:$0xf]
      %v6331 = vld [vmem:[%s6325 + $0x14] sm:$0xf]
      %v6332 = vld [vmem:[%s6325 + $0x18] sm:$0xf]
      %v6333 = vld [vmem:[%s6325 + $0x1c] sm:$0xf]
      %v6334 = vld [vmem:[#allocation2 + $0x4] sm:$0x8]
      %v6335 = vld [vmem:[#allocation2 + $0x8] sm:$0xf]
      %v6336 = vld [vmem:[#allocation2 + $0xc] sm:$0xf]
      %v6337 = vld [vmem:[#allocation2 + $0x10] sm:$0xf]
      %v6338 = vld [vmem:[#allocation2 + $0x14] sm:$0xf]
      %v6339 = vld [vmem:[#allocation2 + $0x18] sm:$0xf]
      %v6340 = vld [vmem:[#allocation2 + $0x1c] sm:$0xf]
      %v6341 = vld [vmem:[#allocation2 + $0x20] sm:$0xf]
      %v6342 = vld [vmem:[#allocation2 + $0x24] sm:$0xf]
      %v6343 = vld [vmem:[#allocation2 + $0x28] sm:$0xf]
      %v6344 = vld [vmem:[#allocation2 + $0x2c] sm:$0xf]
      %v6345 = vld [vmem:[#allocation2 + $0x30] sm:$0xf]
      %v6346 = vld [vmem:[#allocation2 + $0x34] sm:$0xf]
      %v6347 = vld [vmem:[#allocation2 + $0x38] sm:$0xf]
      %v6348 = vld [vmem:[#allocation2 + $0x3c] sm:$0xf]
      %v6349 = vld [vmem:[#allocation2 + $0x40] sm:$0xf]
      %v6350 = vld [vmem:[#allocation2 + $0x44] sm:$0xf]
      %v6351 = vld [vmem:[#allocation2 + $0x48] sm:$0xf]
      %v6352 = vld [vmem:[#allocation2 + $0x4c] sm:$0xf]
      %v6353 = vld [vmem:[#allocation2 + $0x50] sm:$0xf]
      %v6354 = vld [vmem:[#allocation2 + $0x54] sm:$0xf]
      %v6355 = vld [vmem:[#allocation2 + $0x58] sm:$0xf]
      %v6356 = vld [vmem:[#allocation2 + $0x5c] sm:$0xf]
      %v6357 = vld [vmem:[#allocation2 + $0x60] sm:$0xf]
      %v6358 = vld [vmem:[#allocation2 + $0x64] sm:$0xf]
      %v6359 = vld [vmem:[#allocation2 + $0x68] sm:$0xf]
      %v6360 = vld [vmem:[#allocation2 + $0x6c] sm:$0xf]
      %v6361 = vld [vmem:[#allocation2 + $0x70] sm:$0xf]
      %v6362 = vld [vmem:[#allocation2 + $0x74] sm:$0xf]
      %v6363 = vld [vmem:[#allocation2 + $0x78] sm:$0xf]
      %v6364 = vld [vmem:[#allocation2 + $0x7c] sm:$0xf]
      %v6365 = vld [vmem:[#allocation2 + $0x80] sm:$0xf]
      %v6366 = vld [vmem:[#allocation2 + $0x84] sm:$0xf]
      %v6367 = vsel %vm1244, %v6334, 0
      %v6368 = vsel %vm1245, %v6335, 0
      %v6369 = vsel %vm1246, %v6336, 0
      %v6370 = vsel %vm1247, %v6337, 0
      %v6371 = vsel %vm1248, %v6338, 0
      %v6372 = vsel %vm1249, %v6339, 0
      %v6373 = vsel %vm1250, %v6340, 0
      %v6374 = vsel %vm1251, %v6341, 0
      %v6375 = vsel %vm1252, %v6342, 0
      %v6376 = vsel %vm1253, %v6343, 0
      %v6377 = vsel %vm1254, %v6344, 0
      %v6378 = vsel %vm1255, %v6345, 0
      %v6379 = vsel %vm1256, %v6346, 0
      %v6380 = vsel %vm1257, %v6347, 0
      %v6381 = vsel %vm1258, %v6348, 0
      %v6382 = vsel %vm1259, %v6349, 0
      %v6383 = vsel %vm1260, %v6350, 0
      %v6384 = vsel %vm1261, %v6351, 0
      %v6385 = vsel %vm1262, %v6352, 0
      %v6386 = vsel %vm1263, %v6353, 0
      %v6387 = vsel %vm1264, %v6354, 0
      %v6388 = vsel %vm1265, %v6355, 0
      %v6389 = vsel %vm1266, %v6356, 0
      %v6390 = vsel %vm1267, %v6357, 0
      %v6391 = vsel %vm1268, %v6358, 0
      %v6392 = vsel %vm1269, %v6359, 0
      %v6393 = vsel %vm1270, %v6360, 0
      %v6394 = vsel %vm1271, %v6361, 0
      %v6395 = vsel %vm1272, %v6362, 0
      %v6396 = vsel %vm1273, %v6363, 0
      %v6397 = vsel %vm1274, %v6364, 0
      %v6398 = vsel %vm1275, %v6365, 0
      %v6399 = vsel %vm1276, %v6366, 0
      %s6400 = scalar_lea.vmem %s2, 64
      %v6401 = vld [vmem:[%s6400] sm:$0xf]
      %v6402 = vld [vmem:[%s6400 + $0x4] sm:$0xf]
      %v6436 = vunpack.c.l.b16 %v6367
      %v6437 = vunpack.c.l.b16 %v6368
      %v6438 = vunpack.c.l.b16 %v6369
      %v6439 = vunpack.c.l.b16 %v6370
      %v6440 = vunpack.c.l.b16 %v6371
      %v6441 = vunpack.c.l.b16 %v6372
      %v6442 = vunpack.c.l.b16 %v6373
      %v6443 = vunpack.c.l.b16 %v6374
      %v6444 = vunpack.c.l.b16 %v6375
      %v6445 = vunpack.c.l.b16 %v6376
      %v6446 = vunpack.c.l.b16 %v6377
      %v6447 = vunpack.c.l.b16 %v6378
      %v6448 = vunpack.c.l.b16 %v6379
      %v6449 = vunpack.c.l.b16 %v6380
      %v6450 = vunpack.c.l.b16 %v6381
      %v6451 = vunpack.c.l.b16 %v6382
      %v6452 = vunpack.c.l.b16 %v6383
      %v6453 = vunpack.c.l.b16 %v6384
      %v6454 = vunpack.c.l.b16 %v6385
      %v6455 = vunpack.c.l.b16 %v6386
      %v6456 = vunpack.c.l.b16 %v6387
      %v6457 = vunpack.c.l.b16 %v6388
      %v6458 = vunpack.c.l.b16 %v6389
      %v6459 = vunpack.c.l.b16 %v6390
      %v6460 = vunpack.c.l.b16 %v6391
      %v6461 = vunpack.c.l.b16 %v6392
      %v6462 = vunpack.c.l.b16 %v6393
      %v6463 = vunpack.c.l.b16 %v6394
      %v6464 = vunpack.c.l.b16 %v6395
      %v6465 = vunpack.c.l.b16 %v6396
      %v6466 = vunpack.c.l.b16 %v6397
      %v6467 = vunpack.c.l.b16 %v6398
      %v6468 = vunpack.c.l.b16 %v6399
      %v6469 = vpack.c.b16 %v6437, %v6436
      %v6470 = vpack.c.b16 %v6439, %v6438
      %v6471 = vpack.c.b16 %v6441, %v6440
      %v6472 = vpack.c.b16 %v6443, %v6442
      %v6473 = vpack.c.b16 %v6445, %v6444
      %v6474 = vpack.c.b16 %v6447, %v6446
      %v6475 = vpack.c.b16 %v6449, %v6448
      %v6476 = vpack.c.b16 %v6451, %v6450
      %v6477 = vpack.c.b16 %v6453, %v6452
      %v6478 = vpack.c.b16 %v6455, %v6454
      %v6479 = vpack.c.b16 %v6457, %v6456
      %v6480 = vpack.c.b16 %v6459, %v6458
      %v6481 = vpack.c.b16 %v6461, %v6460
      %v6482 = vpack.c.b16 %v6463, %v6462
      %v6483 = vpack.c.b16 %v6465, %v6464
      %v6484 = vpack.c.b16 %v6467, %v6466
      %v6485 = vpack.c.b16 %v6468, %v6468
      %v6487 = vshrl.u32 %v6469, 16
      %v6489 = vrot.slane %v6487, 3
      %v6490 = vshll.u32 %v6469, 16
      %v6492 = vrot.slane %v6490, 4
      %v6493 = vor.u32 %v6489, %v6492
      %v6495 = vshrl.u32 %v6470, 16
      %v6497 = vrot.slane %v6495, 3
      %v6498 = vshll.u32 %v6470, 16
      %v6500 = vrot.slane %v6498, 4
      %v6501 = vor.u32 %v6497, %v6500
      %v6502 = vsel %vm1395, %v6493, %v6501
      %v6504 = vshrl.u32 %v6471, 16
      %v6506 = vrot.slane %v6504, 3
      %v6507 = vshll.u32 %v6471, 16
      %v6509 = vrot.slane %v6507, 4
      %v6510 = vor.u32 %v6506, %v6509
      %v6511 = vsel %vm1395, %v6501, %v6510
      %v6513 = vshrl.u32 %v6472, 16
      %v6515 = vrot.slane %v6513, 3
      %v6516 = vshll.u32 %v6472, 16
      %v6518 = vrot.slane %v6516, 4
      %v6519 = vor.u32 %v6515, %v6518
      %v6520 = vsel %vm1395, %v6510, %v6519
      %v6522 = vshrl.u32 %v6473, 16
      %v6524 = vrot.slane %v6522, 3
      %v6525 = vshll.u32 %v6473, 16
      %v6527 = vrot.slane %v6525, 4
      %v6528 = vor.u32 %v6524, %v6527
      %v6529 = vsel %vm1395, %v6519, %v6528
      %v6531 = vshrl.u32 %v6474, 16
      %v6533 = vrot.slane %v6531, 3
      %v6534 = vshll.u32 %v6474, 16
      %v6536 = vrot.slane %v6534, 4
      %v6537 = vor.u32 %v6533, %v6536
      %v6538 = vsel %vm1395, %v6528, %v6537
      %v6540 = vshrl.u32 %v6475, 16
      %v6542 = vrot.slane %v6540, 3
      %v6543 = vshll.u32 %v6475, 16
      %v6545 = vrot.slane %v6543, 4
      %v6546 = vor.u32 %v6542, %v6545
      %v6547 = vsel %vm1395, %v6537, %v6546
      %v6549 = vshrl.u32 %v6476, 16
      %v6551 = vrot.slane %v6549, 3
      %v6552 = vshll.u32 %v6476, 16
      %v6554 = vrot.slane %v6552, 4
      %v6555 = vor.u32 %v6551, %v6554
      %v6556 = vsel %vm1395, %v6546, %v6555
      %v6558 = vshrl.u32 %v6477, 16
      %v6560 = vrot.slane %v6558, 3
      %v6561 = vshll.u32 %v6477, 16
      %v6563 = vrot.slane %v6561, 4
      %v6564 = vor.u32 %v6560, %v6563
      %v6565 = vsel %vm1395, %v6555, %v6564
      %v6567 = vshrl.u32 %v6478, 16
      %v6569 = vrot.slane %v6567, 3
      %v6570 = vshll.u32 %v6478, 16
      %v6572 = vrot.slane %v6570, 4
      %v6573 = vor.u32 %v6569, %v6572
      %v6574 = vsel %vm1395, %v6564, %v6573
      %v6576 = vshrl.u32 %v6479, 16
      %v6578 = vrot.slane %v6576, 3
      %v6579 = vshll.u32 %v6479, 16
      %v6581 = vrot.slane %v6579, 4
      %v6582 = vor.u32 %v6578, %v6581
      %v6583 = vsel %vm1395, %v6573, %v6582
      %v6585 = vshrl.u32 %v6480, 16
      %v6587 = vrot.slane %v6585, 3
      %v6588 = vshll.u32 %v6480, 16
      %v6590 = vrot.slane %v6588, 4
      %v6591 = vor.u32 %v6587, %v6590
      %v6592 = vsel %vm1395, %v6582, %v6591
      %v6594 = vshrl.u32 %v6481, 16
      %v6596 = vrot.slane %v6594, 3
      %v6597 = vshll.u32 %v6481, 16
      %v6599 = vrot.slane %v6597, 4
      %v6600 = vor.u32 %v6596, %v6599
      %v6601 = vsel %vm1395, %v6591, %v6600
      %v6603 = vshrl.u32 %v6482, 16
      %v6605 = vrot.slane %v6603, 3
      %v6606 = vshll.u32 %v6482, 16
      %v6608 = vrot.slane %v6606, 4
      %v6609 = vor.u32 %v6605, %v6608
      %v6610 = vsel %vm1395, %v6600, %v6609
      %v6612 = vshrl.u32 %v6483, 16
      %v6614 = vrot.slane %v6612, 3
      %v6615 = vshll.u32 %v6483, 16
      %v6617 = vrot.slane %v6615, 4
      %v6618 = vor.u32 %v6614, %v6617
      %v6619 = vsel %vm1395, %v6609, %v6618
      %v6621 = vshrl.u32 %v6484, 16
      %v6623 = vrot.slane %v6621, 3
      %v6624 = vshll.u32 %v6484, 16
      %v6626 = vrot.slane %v6624, 4
      %v6627 = vor.u32 %v6623, %v6626
      %v6628 = vsel %vm1395, %v6618, %v6627
      %v6630 = vshrl.u32 %v6485, 16
      %v6632 = vrot.slane %v6630, 3
      %v6633 = vshll.u32 %v6485, 16
      %v6635 = vrot.slane %v6633, 4
      %v6636 = vor.u32 %v6632, %v6635
      %v6637 = vsel %vm1395, %v6627, %v6636
      %v6640 = vunpack.c.l.b16 %v6401
      %v6641 = vunpack.c.l.b16 %v6402
      %v6642 = vpack.c.b16 %v6641, %v6640
      %v6645 = vsel %vm1554, %v6502, 0
      %v6648 = vsel %vm1554, %v6511, 0
      %v6651 = vsel %vm1554, %v6520, 0
      %v6654 = vsel %vm1554, %v6529, 0
      %v6657 = vsel %vm1554, %v6538, 0
      %v6660 = vsel %vm1554, %v6547, 0
      %v6663 = vsel %vm1554, %v6556, 0
      %v6666 = vsel %vm1554, %v6565, 0
      %v6669 = vsel %vm1554, %v6574, 0
      %v6672 = vsel %vm1554, %v6583, 0
      %v6675 = vsel %vm1554, %v6592, 0
      %v6678 = vsel %vm1554, %v6601, 0
      %v6681 = vsel %vm1554, %v6610, 0
      %v6684 = vsel %vm1554, %v6619, 0
      %v6687 = vsel %vm1554, %v6628, 0
      %v6690 = vsel %vm1554, %v6637, 0
      %6692 = vmatprep.subr.bf16.mxu0 0
      %6693 = vmatpush1.bf16.msra.mxu0 0
      %6694 = vmatprep.subr.bf16.mxu0 0
      %6695 = vmatpush1.bf16.msra.mxu0 0
      %6696 = vmatprep.subr.bf16.mxu0 0
      %6697 = vmatpush1.bf16.msra.mxu0 0
      %6698 = vmatprep.subr.bf16.mxu0 0
      %6699 = vmatpush1.bf16.msra.mxu0 0
      %6700 = vmatprep.subr.bf16.mxu0 0
      %6701 = vmatpush1.bf16.msra.mxu0 0
      %6702 = vmatprep.subr.bf16.mxu0 0
      %6703 = vmatpush1.bf16.msra.mxu0 0
      %6704 = vmatprep.subr.bf16.mxu0 0
      %6705 = vmatpush1.bf16.msra.mxu0 0
      %6706 = vmatprep.subr.bf16.mxu0 0
      %6707 = vmatpush1.bf16.msra.mxu0 %v6642
      %6708 = vmatprep.subr.bf16.mxu0 0
      %6709 = vmatpush2.bf16.msra.mxu0 0
      %6710 = vmatprep.subr.bf16.mxu0 0
      %6711 = vmatpush2.bf16.msra.mxu0 0
      %6712 = vmatprep.subr.bf16.mxu0 0
      %6713 = vmatpush2.bf16.msra.mxu0 0
      %6714 = vmatprep.subr.bf16.mxu0 0
      %6715 = vmatpush2.bf16.msra.mxu0 0
      %6716 = vmatprep.subr.bf16.mxu0 0
      %6717 = vmatpush2.bf16.msra.mxu0 0
      %6718 = vmatprep.subr.bf16.mxu0 0
      %6719 = vmatpush2.bf16.msra.mxu0 0
      %6720 = vmatprep.subr.bf16.mxu0 0
      %6721 = vmatpush2.bf16.msra.mxu0 0
      %6722 = vmatprep.subr.bf16.mxu0 0
      %6723 = vmatpush2.bf16.msra.mxu0 0
      %6724 = vmatprep.mubr.bf16.mxu0 0
      %6725 = vmatmul.mubr.bf16.gmra.mxu0 %v6645
      %v6726 = vpop.f32.mrf.mxu0
      %v6727 = vadd.f32 0.0, %v6726
      %v6728 = vpop.f32.mrf.mxu0
      %v6729 = vpop.f32.mrf.mxu0
      %v6730 = vadd.f32 0.0, %v6729
      %v6731 = vpop.f32.mrf.mxu0
      %6732 = vmatprep.mubr.bf16.mxu0 0
      %6733 = vmatmul.mubr.bf16.gmra.mxu0 %v6648
      %v6734 = vpop.f32.mrf.mxu0
      %v6735 = vadd.f32 0.0, %v6734
      %v6736 = vpop.f32.mrf.mxu0
      %v6737 = vpop.f32.mrf.mxu0
      %v6738 = vadd.f32 0.0, %v6737
      %v6739 = vpop.f32.mrf.mxu0
      %6740 = vmatprep.mubr.bf16.mxu0 0
      %6741 = vmatmul.mubr.bf16.gmra.mxu0 %v6651
      %v6742 = vpop.f32.mrf.mxu0
      %v6743 = vadd.f32 0.0, %v6742
      %v6744 = vpop.f32.mrf.mxu0
      %v6745 = vpop.f32.mrf.mxu0
      %v6746 = vadd.f32 0.0, %v6745
      %v6747 = vpop.f32.mrf.mxu0
      %6748 = vmatprep.mubr.bf16.mxu0 0
      %6749 = vmatmul.mubr.bf16.gmra.mxu0 %v6654
      %v6750 = vpop.f32.mrf.mxu0
      %v6751 = vadd.f32 0.0, %v6750
      %v6752 = vpop.f32.mrf.mxu0
      %v6753 = vpop.f32.mrf.mxu0
      %v6754 = vadd.f32 0.0, %v6753
      %v6755 = vpop.f32.mrf.mxu0
      %6756 = vmatprep.mubr.bf16.mxu0 0
      %6757 = vmatmul.mubr.bf16.gmra.mxu0 %v6657
      %v6758 = vpop.f32.mrf.mxu0
      %v6759 = vadd.f32 0.0, %v6758
      %v6760 = vpop.f32.mrf.mxu0
      %v6761 = vpop.f32.mrf.mxu0
      %v6762 = vadd.f32 0.0, %v6761
      %v6763 = vpop.f32.mrf.mxu0
      %6764 = vmatprep.mubr.bf16.mxu0 0
      %6765 = vmatmul.mubr.bf16.gmra.mxu0 %v6660
      %v6766 = vpop.f32.mrf.mxu0
      %v6767 = vadd.f32 0.0, %v6766
      %v6768 = vpop.f32.mrf.mxu0
      %v6769 = vpop.f32.mrf.mxu0
      %v6770 = vadd.f32 0.0, %v6769
      %v6771 = vpop.f32.mrf.mxu0
      %6772 = vmatprep.mubr.bf16.mxu0 0
      %6773 = vmatmul.mubr.bf16.gmra.mxu0 %v6663
      %v6774 = vpop.f32.mrf.mxu0
      %v6775 = vadd.f32 0.0, %v6774
      %v6776 = vpop.f32.mrf.mxu0
      %v6777 = vpop.f32.mrf.mxu0
      %v6778 = vadd.f32 0.0, %v6777
      %v6779 = vpop.f32.mrf.mxu0
      %6780 = vmatprep.mubr.bf16.mxu0 0
      %6781 = vmatmul.mubr.bf16.gmra.mxu0 %v6666
      %v6782 = vpop.f32.mrf.mxu0
      %v6783 = vadd.f32 0.0, %v6782
      %v6784 = vpop.f32.mrf.mxu0
      %v6785 = vpop.f32.mrf.mxu0
      %v6786 = vadd.f32 0.0, %v6785
      %v6787 = vpop.f32.mrf.mxu0
      %6788 = vmatprep.mubr.bf16.mxu0 0
      %6789 = vmatmul.mubr.bf16.gmra.mxu0 %v6669
      %v6790 = vpop.f32.mrf.mxu0
      %v6791 = vadd.f32 0.0, %v6790
      %v6792 = vpop.f32.mrf.mxu0
      %v6793 = vpop.f32.mrf.mxu0
      %v6794 = vadd.f32 0.0, %v6793
      %v6795 = vpop.f32.mrf.mxu0
      %6796 = vmatprep.mubr.bf16.mxu0 0
      %6797 = vmatmul.mubr.bf16.gmra.mxu0 %v6672
      %v6798 = vpop.f32.mrf.mxu0
      %v6799 = vadd.f32 0.0, %v6798
      %v6800 = vpop.f32.mrf.mxu0
      %v6801 = vpop.f32.mrf.mxu0
      %v6802 = vadd.f32 0.0, %v6801
      %v6803 = vpop.f32.mrf.mxu0
      %6804 = vmatprep.mubr.bf16.mxu0 0
      %6805 = vmatmul.mubr.bf16.gmra.mxu0 %v6675
      %v6806 = vpop.f32.mrf.mxu0
      %v6807 = vadd.f32 0.0, %v6806
      %v6808 = vpop.f32.mrf.mxu0
      %v6809 = vpop.f32.mrf.mxu0
      %v6810 = vadd.f32 0.0, %v6809
      %v6811 = vpop.f32.mrf.mxu0
      %6812 = vmatprep.mubr.bf16.mxu0 0
      %6813 = vmatmul.mubr.bf16.gmra.mxu0 %v6678
      %v6814 = vpop.f32.mrf.mxu0
      %v6815 = vadd.f32 0.0, %v6814
      %v6816 = vpop.f32.mrf.mxu0
      %v6817 = vpop.f32.mrf.mxu0
      %v6818 = vadd.f32 0.0, %v6817
      %v6819 = vpop.f32.mrf.mxu0
      %6820 = vmatprep.mubr.bf16.mxu0 0
      %6821 = vmatmul.mubr.bf16.gmra.mxu0 %v6681
      %v6822 = vpop.f32.mrf.mxu0
      %v6823 = vadd.f32 0.0, %v6822
      %v6824 = vpop.f32.mrf.mxu0
      %v6825 = vpop.f32.mrf.mxu0
      %v6826 = vadd.f32 0.0, %v6825
      %v6827 = vpop.f32.mrf.mxu0
      %6828 = vmatprep.mubr.bf16.mxu0 0
      %6829 = vmatmul.mubr.bf16.gmra.mxu0 %v6684
      %v6830 = vpop.f32.mrf.mxu0
      %v6831 = vadd.f32 0.0, %v6830
      %v6832 = vpop.f32.mrf.mxu0
      %v6833 = vpop.f32.mrf.mxu0
      %v6834 = vadd.f32 0.0, %v6833
      %v6835 = vpop.f32.mrf.mxu0
      %6836 = vmatprep.mubr.bf16.mxu0 0
      %6837 = vmatmul.mubr.bf16.gmra.mxu0 %v6687
      %v6838 = vpop.f32.mrf.mxu0
      %v6839 = vadd.f32 0.0, %v6838
      %v6840 = vpop.f32.mrf.mxu0
      %v6841 = vpop.f32.mrf.mxu0
      %v6842 = vadd.f32 0.0, %v6841
      %v6843 = vpop.f32.mrf.mxu0
      %6844 = vmatprep.mubr.bf16.mxu0 0
      %6845 = vmatmul.mubr.bf16.gmra.mxu0 %v6690
      %v6846 = vpop.f32.mrf.mxu0
      %v6847 = vadd.f32 0.0, %v6846
      %v6848 = vpop.f32.mrf.mxu0
      %v6849 = vpop.f32.mrf.mxu0
      %v6850 = vadd.f32 0.0, %v6849
      %v6851 = vpop.f32.mrf.mxu0
      %6852 = vdwg.mxu0
      %v6861 = vunpack.c.l.b16 %v6326
      %v6862 = vunpack.c.l.b16 %v6327
      %v6863 = vunpack.c.l.b16 %v6328
      %v6864 = vunpack.c.l.b16 %v6329
      %v6865 = vunpack.c.l.b16 %v6330
      %v6866 = vunpack.c.l.b16 %v6331
      %v6867 = vunpack.c.l.b16 %v6332
      %v6868 = vunpack.c.l.b16 %v6333
      %v6869 = vpack.c.b16 %v6862, %v6861
      %v6870 = vpack.c.b16 %v6864, %v6863
      %v6871 = vpack.c.b16 %v6866, %v6865
      %v6872 = vpack.c.b16 %v6868, %v6867
      %v6878 = vsel %vm1868, %v6165, 0
      %v6881 = vsel %vm1868, %v6166, 0
      %v6884 = vsel %vm1868, %v6167, 0
      %v6887 = vsel %vm1868, %v6168, 0
      %v6890 = vsel %vm1868, %v6169, 0
      %v6893 = vsel %vm1868, %v6170, 0
      %v6896 = vsel %vm1868, %v6171, 0
      %v6899 = vsel %vm1868, %v6172, 0
      %v6902 = vsel %vm1868, %v6173, 0
      %v6905 = vsel %vm1868, %v6174, 0
      %v6908 = vsel %vm1868, %v6175, 0
      %v6911 = vsel %vm1868, %v6176, 0
      %v6914 = vsel %vm1868, %v6177, 0
      %v6917 = vsel %vm1868, %v6178, 0
      %v6920 = vsel %vm1868, %v6179, 0
      %v6923 = vsel %vm1868, %v6180, 0
      %6925 = vmatprep.subr.bf16.mxu0 0
      %6926 = vmatpush1.bf16.msra.mxu0 0
      %6927 = vmatprep.subr.bf16.mxu0 0
      %6928 = vmatpush1.bf16.msra.mxu0 0
      %6929 = vmatprep.subr.bf16.mxu0 0
      %6930 = vmatpush1.bf16.msra.mxu0 0
      %6931 = vmatprep.subr.bf16.mxu0 0
      %6932 = vmatpush1.bf16.msra.mxu0 0
      %6933 = vmatprep.subr.bf16.mxu0 0
      %6934 = vmatpush1.bf16.msra.mxu0 %v6872
      %6935 = vmatprep.subr.bf16.mxu0 0
      %6936 = vmatpush1.bf16.msra.mxu0 %v6871
      %6937 = vmatprep.subr.bf16.mxu0 0
      %6938 = vmatpush1.bf16.msra.mxu0 %v6870
      %6939 = vmatprep.subr.bf16.mxu0 0
      %6940 = vmatpush1.bf16.msra.mxu0 %v6869
      %6941 = vmatprep.subr.bf16.mxu0 0
      %6942 = vmatpush2.bf16.msra.mxu0 0
      %6943 = vmatprep.subr.bf16.mxu0 0
      %6944 = vmatpush2.bf16.msra.mxu0 0
      %6945 = vmatprep.subr.bf16.mxu0 0
      %6946 = vmatpush2.bf16.msra.mxu0 0
      %6947 = vmatprep.subr.bf16.mxu0 0
      %6948 = vmatpush2.bf16.msra.mxu0 0
      %6949 = vmatprep.subr.bf16.mxu0 0
      %6950 = vmatpush2.bf16.msra.mxu0 0
      %6951 = vmatprep.subr.bf16.mxu0 0
      %6952 = vmatpush2.bf16.msra.mxu0 0
      %6953 = vmatprep.subr.bf16.mxu0 0
      %6954 = vmatpush2.bf16.msra.mxu0 0
      %6955 = vmatprep.subr.bf16.mxu0 0
      %6956 = vmatpush2.bf16.msra.mxu0 0
      %6957 = vmatprep.mubr.bf16.mxu0 0
      %6958 = vmatmul.mubr.bf16.gmra.mxu0 %v6878
      %v6959 = vpop.f32.mrf.mxu0
      %v6960 = vadd.f32 %v6727, %v6959
      %v6961 = vpop.f32.mrf.mxu0
      %v6962 = vpop.f32.mrf.mxu0
      %v6963 = vadd.f32 %v6730, %v6962
      %v6964 = vpop.f32.mrf.mxu0
      %6965 = vmatprep.mubr.bf16.mxu0 0
      %6966 = vmatmul.mubr.bf16.gmra.mxu0 %v6881
      %v6967 = vpop.f32.mrf.mxu0
      %v6968 = vadd.f32 %v6735, %v6967
      %v6969 = vpop.f32.mrf.mxu0
      %v6970 = vpop.f32.mrf.mxu0
      %v6971 = vadd.f32 %v6738, %v6970
      %v6972 = vpop.f32.mrf.mxu0
      %6973 = vmatprep.mubr.bf16.mxu0 0
      %6974 = vmatmul.mubr.bf16.gmra.mxu0 %v6884
      %v6975 = vpop.f32.mrf.mxu0
      %v6976 = vadd.f32 %v6743, %v6975
      %v6977 = vpop.f32.mrf.mxu0
      %v6978 = vpop.f32.mrf.mxu0
      %v6979 = vadd.f32 %v6746, %v6978
      %v6980 = vpop.f32.mrf.mxu0
      %6981 = vmatprep.mubr.bf16.mxu0 0
      %6982 = vmatmul.mubr.bf16.gmra.mxu0 %v6887
      %v6983 = vpop.f32.mrf.mxu0
      %v6984 = vadd.f32 %v6751, %v6983
      %v6985 = vpop.f32.mrf.mxu0
      %v6986 = vpop.f32.mrf.mxu0
      %v6987 = vadd.f32 %v6754, %v6986
      %v6988 = vpop.f32.mrf.mxu0
      %6989 = vmatprep.mubr.bf16.mxu0 0
      %6990 = vmatmul.mubr.bf16.gmra.mxu0 %v6890
      %v6991 = vpop.f32.mrf.mxu0
      %v6992 = vadd.f32 %v6759, %v6991
      %v6993 = vpop.f32.mrf.mxu0
      %v6994 = vpop.f32.mrf.mxu0
      %v6995 = vadd.f32 %v6762, %v6994
      %v6996 = vpop.f32.mrf.mxu0
      %6997 = vmatprep.mubr.bf16.mxu0 0
      %6998 = vmatmul.mubr.bf16.gmra.mxu0 %v6893
      %v6999 = vpop.f32.mrf.mxu0
      %v7000 = vadd.f32 %v6767, %v6999
      %v7001 = vpop.f32.mrf.mxu0
      %v7002 = vpop.f32.mrf.mxu0
      %v7003 = vadd.f32 %v6770, %v7002
      %v7004 = vpop.f32.mrf.mxu0
      %7005 = vmatprep.mubr.bf16.mxu0 0
      %7006 = vmatmul.mubr.bf16.gmra.mxu0 %v6896
      %v7007 = vpop.f32.mrf.mxu0
      %v7008 = vadd.f32 %v6775, %v7007
      %v7009 = vpop.f32.mrf.mxu0
      %v7010 = vpop.f32.mrf.mxu0
      %v7011 = vadd.f32 %v6778, %v7010
      %v7012 = vpop.f32.mrf.mxu0
      %7013 = vmatprep.mubr.bf16.mxu0 0
      %7014 = vmatmul.mubr.bf16.gmra.mxu0 %v6899
      %v7015 = vpop.f32.mrf.mxu0
      %v7016 = vadd.f32 %v6783, %v7015
      %v7017 = vpop.f32.mrf.mxu0
      %v7018 = vpop.f32.mrf.mxu0
      %v7019 = vadd.f32 %v6786, %v7018
      %v7020 = vpop.f32.mrf.mxu0
      %7021 = vmatprep.mubr.bf16.mxu0 0
      %7022 = vmatmul.mubr.bf16.gmra.mxu0 %v6902
      %v7023 = vpop.f32.mrf.mxu0
      %v7024 = vadd.f32 %v6791, %v7023
      %v7025 = vpop.f32.mrf.mxu0
      %v7026 = vpop.f32.mrf.mxu0
      %v7027 = vadd.f32 %v6794, %v7026
      %v7028 = vpop.f32.mrf.mxu0
      %7029 = vmatprep.mubr.bf16.mxu0 0
      %7030 = vmatmul.mubr.bf16.gmra.mxu0 %v6905
      %v7031 = vpop.f32.mrf.mxu0
      %v7032 = vadd.f32 %v6799, %v7031
      %v7033 = vpop.f32.mrf.mxu0
      %v7034 = vpop.f32.mrf.mxu0
      %v7035 = vadd.f32 %v6802, %v7034
      %v7036 = vpop.f32.mrf.mxu0
      %7037 = vmatprep.mubr.bf16.mxu0 0
      %7038 = vmatmul.mubr.bf16.gmra.mxu0 %v6908
      %v7039 = vpop.f32.mrf.mxu0
      %v7040 = vadd.f32 %v6807, %v7039
      %v7041 = vpop.f32.mrf.mxu0
      %v7042 = vpop.f32.mrf.mxu0
      %v7043 = vadd.f32 %v6810, %v7042
      %v7044 = vpop.f32.mrf.mxu0
      %7045 = vmatprep.mubr.bf16.mxu0 0
      %7046 = vmatmul.mubr.bf16.gmra.mxu0 %v6911
      %v7047 = vpop.f32.mrf.mxu0
      %v7048 = vadd.f32 %v6815, %v7047
      %v7049 = vpop.f32.mrf.mxu0
      %v7050 = vpop.f32.mrf.mxu0
      %v7051 = vadd.f32 %v6818, %v7050
      %v7052 = vpop.f32.mrf.mxu0
      %7053 = vmatprep.mubr.bf16.mxu0 0
      %7054 = vmatmul.mubr.bf16.gmra.mxu0 %v6914
      %v7055 = vpop.f32.mrf.mxu0
      %v7056 = vadd.f32 %v6823, %v7055
      %v7057 = vpop.f32.mrf.mxu0
      %v7058 = vpop.f32.mrf.mxu0
      %v7059 = vadd.f32 %v6826, %v7058
      %v7060 = vpop.f32.mrf.mxu0
      %7061 = vmatprep.mubr.bf16.mxu0 0
      %7062 = vmatmul.mubr.bf16.gmra.mxu0 %v6917
      %v7063 = vpop.f32.mrf.mxu0
      %v7064 = vadd.f32 %v6831, %v7063
      %v7065 = vpop.f32.mrf.mxu0
      %v7066 = vpop.f32.mrf.mxu0
      %v7067 = vadd.f32 %v6834, %v7066
      %v7068 = vpop.f32.mrf.mxu0
      %7069 = vmatprep.mubr.bf16.mxu0 0
      %7070 = vmatmul.mubr.bf16.gmra.mxu0 %v6920
      %v7071 = vpop.f32.mrf.mxu0
      %v7072 = vadd.f32 %v6839, %v7071
      %v7073 = vpop.f32.mrf.mxu0
      %v7074 = vpop.f32.mrf.mxu0
      %v7075 = vadd.f32 %v6842, %v7074
      %v7076 = vpop.f32.mrf.mxu0
      %7077 = vmatprep.mubr.bf16.mxu0 0
      %7078 = vmatmul.mubr.bf16.gmra.mxu0 %v6923
      %v7079 = vpop.f32.mrf.mxu0
      %v7080 = vadd.f32 %v6847, %v7079
      %v7081 = vpop.f32.mrf.mxu0
      %v7082 = vpop.f32.mrf.mxu0
      %v7083 = vadd.f32 %v6850, %v7082
      %v7084 = vpop.f32.mrf.mxu0
      %7085 = vdwg.mxu0
      %s7086 = scalar_lea.vmem %s2, 72
      %v7087 = vld [vmem:[%s7086] sm:$0xf]
      %v7088 = vld [vmem:[%s7086 + $0x4] sm:$0xf]
      %v7121 = vunpack.c.l.b16 %v6335
      %v7122 = vunpack.c.l.b16 %v6336
      %v7123 = vunpack.c.l.b16 %v6337
      %v7124 = vunpack.c.l.b16 %v6338
      %v7125 = vunpack.c.l.b16 %v6339
      %v7126 = vunpack.c.l.b16 %v6340
      %v7127 = vunpack.c.l.b16 %v6341
      %v7128 = vunpack.c.l.b16 %v6342
      %v7129 = vunpack.c.l.b16 %v6343
      %v7130 = vunpack.c.l.b16 %v6344
      %v7131 = vunpack.c.l.b16 %v6345
      %v7132 = vunpack.c.l.b16 %v6346
      %v7133 = vunpack.c.l.b16 %v6347
      %v7134 = vunpack.c.l.b16 %v6348
      %v7135 = vunpack.c.l.b16 %v6349
      %v7136 = vunpack.c.l.b16 %v6350
      %v7137 = vunpack.c.l.b16 %v6351
      %v7138 = vunpack.c.l.b16 %v6352
      %v7139 = vunpack.c.l.b16 %v6353
      %v7140 = vunpack.c.l.b16 %v6354
      %v7141 = vunpack.c.l.b16 %v6355
      %v7142 = vunpack.c.l.b16 %v6356
      %v7143 = vunpack.c.l.b16 %v6357
      %v7144 = vunpack.c.l.b16 %v6358
      %v7145 = vunpack.c.l.b16 %v6359
      %v7146 = vunpack.c.l.b16 %v6360
      %v7147 = vunpack.c.l.b16 %v6361
      %v7148 = vunpack.c.l.b16 %v6362
      %v7149 = vunpack.c.l.b16 %v6363
      %v7150 = vunpack.c.l.b16 %v6364
      %v7151 = vunpack.c.l.b16 %v6365
      %v7152 = vunpack.c.l.b16 %v6366
      %v7153 = vpack.c.b16 %v7122, %v7121
      %v7154 = vpack.c.b16 %v7124, %v7123
      %v7155 = vpack.c.b16 %v7126, %v7125
      %v7156 = vpack.c.b16 %v7128, %v7127
      %v7157 = vpack.c.b16 %v7130, %v7129
      %v7158 = vpack.c.b16 %v7132, %v7131
      %v7159 = vpack.c.b16 %v7134, %v7133
      %v7160 = vpack.c.b16 %v7136, %v7135
      %v7161 = vpack.c.b16 %v7138, %v7137
      %v7162 = vpack.c.b16 %v7140, %v7139
      %v7163 = vpack.c.b16 %v7142, %v7141
      %v7164 = vpack.c.b16 %v7144, %v7143
      %v7165 = vpack.c.b16 %v7146, %v7145
      %v7166 = vpack.c.b16 %v7148, %v7147
      %v7167 = vpack.c.b16 %v7150, %v7149
      %v7168 = vpack.c.b16 %v7152, %v7151
      %v7171 = vunpack.c.l.b16 %v7087
      %v7172 = vunpack.c.l.b16 %v7088
      %v7173 = vpack.c.b16 %v7172, %v7171
      %v7176 = vsel %vm1554, %v7153, 0
      %v7179 = vsel %vm1554, %v7154, 0
      %v7182 = vsel %vm1554, %v7155, 0
      %v7185 = vsel %vm1554, %v7156, 0
      %v7188 = vsel %vm1554, %v7157, 0
      %v7191 = vsel %vm1554, %v7158, 0
      %v7194 = vsel %vm1554, %v7159, 0
      %v7197 = vsel %vm1554, %v7160, 0
      %v7200 = vsel %vm1554, %v7161, 0
      %v7203 = vsel %vm1554, %v7162, 0
      %v7206 = vsel %vm1554, %v7163, 0
      %v7209 = vsel %vm1554, %v7164, 0
      %v7212 = vsel %vm1554, %v7165, 0
      %v7215 = vsel %vm1554, %v7166, 0
      %v7218 = vsel %vm1554, %v7167, 0
      %v7221 = vsel %vm1554, %v7168, 0
      %7223 = vmatprep.subr.bf16.mxu0 0
      %7224 = vmatpush1.bf16.msra.mxu0 0
      %7225 = vmatprep.subr.bf16.mxu0 0
      %7226 = vmatpush1.bf16.msra.mxu0 0
      %7227 = vmatprep.subr.bf16.mxu0 0
      %7228 = vmatpush1.bf16.msra.mxu0 0
      %7229 = vmatprep.subr.bf16.mxu0 0
      %7230 = vmatpush1.bf16.msra.mxu0 0
      %7231 = vmatprep.subr.bf16.mxu0 0
      %7232 = vmatpush1.bf16.msra.mxu0 0
      %7233 = vmatprep.subr.bf16.mxu0 0
      %7234 = vmatpush1.bf16.msra.mxu0 0
      %7235 = vmatprep.subr.bf16.mxu0 0
      %7236 = vmatpush1.bf16.msra.mxu0 0
      %7237 = vmatprep.subr.bf16.mxu0 0
      %7238 = vmatpush1.bf16.msra.mxu0 %v7173
      %7239 = vmatprep.subr.bf16.mxu0 0
      %7240 = vmatpush2.bf16.msra.mxu0 0
      %7241 = vmatprep.subr.bf16.mxu0 0
      %7242 = vmatpush2.bf16.msra.mxu0 0
      %7243 = vmatprep.subr.bf16.mxu0 0
      %7244 = vmatpush2.bf16.msra.mxu0 0
      %7245 = vmatprep.subr.bf16.mxu0 0
      %7246 = vmatpush2.bf16.msra.mxu0 0
      %7247 = vmatprep.subr.bf16.mxu0 0
      %7248 = vmatpush2.bf16.msra.mxu0 0
      %7249 = vmatprep.subr.bf16.mxu0 0
      %7250 = vmatpush2.bf16.msra.mxu0 0
      %7251 = vmatprep.subr.bf16.mxu0 0
      %7252 = vmatpush2.bf16.msra.mxu0 0
      %7253 = vmatprep.subr.bf16.mxu0 0
      %7254 = vmatpush2.bf16.msra.mxu0 0
      %7255 = vmatprep.mubr.bf16.mxu0 0
      %7256 = vmatmul.mubr.bf16.gmra.mxu0 %v7176
      %v7257 = vpop.f32.mrf.mxu0
      %v7258 = vadd.f32 0.0, %v7257
      %v7259 = vpop.f32.mrf.mxu0
      %v7260 = vpop.f32.mrf.mxu0
      %v7261 = vadd.f32 0.0, %v7260
      %v7262 = vpop.f32.mrf.mxu0
      %7263 = vmatprep.mubr.bf16.mxu0 0
      %7264 = vmatmul.mubr.bf16.gmra.mxu0 %v7179
      %v7265 = vpop.f32.mrf.mxu0
      %v7266 = vadd.f32 0.0, %v7265
      %v7267 = vpop.f32.mrf.mxu0
      %v7268 = vpop.f32.mrf.mxu0
      %v7269 = vadd.f32 0.0, %v7268
      %v7270 = vpop.f32.mrf.mxu0
      %7271 = vmatprep.mubr.bf16.mxu0 0
      %7272 = vmatmul.mubr.bf16.gmra.mxu0 %v7182
      %v7273 = vpop.f32.mrf.mxu0
      %v7274 = vadd.f32 0.0, %v7273
      %v7275 = vpop.f32.mrf.mxu0
      %v7276 = vpop.f32.mrf.mxu0
      %v7277 = vadd.f32 0.0, %v7276
      %v7278 = vpop.f32.mrf.mxu0
      %7279 = vmatprep.mubr.bf16.mxu0 0
      %7280 = vmatmul.mubr.bf16.gmra.mxu0 %v7185
      %v7281 = vpop.f32.mrf.mxu0
      %v7282 = vadd.f32 0.0, %v7281
      %v7283 = vpop.f32.mrf.mxu0
      %v7284 = vpop.f32.mrf.mxu0
      %v7285 = vadd.f32 0.0, %v7284
      %v7286 = vpop.f32.mrf.mxu0
      %7287 = vmatprep.mubr.bf16.mxu0 0
      %7288 = vmatmul.mubr.bf16.gmra.mxu0 %v7188
      %v7289 = vpop.f32.mrf.mxu0
      %v7290 = vadd.f32 0.0, %v7289
      %v7291 = vpop.f32.mrf.mxu0
      %v7292 = vpop.f32.mrf.mxu0
      %v7293 = vadd.f32 0.0, %v7292
      %v7294 = vpop.f32.mrf.mxu0
      %7295 = vmatprep.mubr.bf16.mxu0 0
      %7296 = vmatmul.mubr.bf16.gmra.mxu0 %v7191
      %v7297 = vpop.f32.mrf.mxu0
      %v7298 = vadd.f32 0.0, %v7297
      %v7299 = vpop.f32.mrf.mxu0
      %v7300 = vpop.f32.mrf.mxu0
      %v7301 = vadd.f32 0.0, %v7300
      %v7302 = vpop.f32.mrf.mxu0
      %7303 = vmatprep.mubr.bf16.mxu0 0
      %7304 = vmatmul.mubr.bf16.gmra.mxu0 %v7194
      %v7305 = vpop.f32.mrf.mxu0
      %v7306 = vadd.f32 0.0, %v7305
      %v7307 = vpop.f32.mrf.mxu0
      %v7308 = vpop.f32.mrf.mxu0
      %v7309 = vadd.f32 0.0, %v7308
      %v7310 = vpop.f32.mrf.mxu0
      %7311 = vmatprep.mubr.bf16.mxu0 0
      %7312 = vmatmul.mubr.bf16.gmra.mxu0 %v7197
      %v7313 = vpop.f32.mrf.mxu0
      %v7314 = vadd.f32 0.0, %v7313
      %v7315 = vpop.f32.mrf.mxu0
      %v7316 = vpop.f32.mrf.mxu0
      %v7317 = vadd.f32 0.0, %v7316
      %v7318 = vpop.f32.mrf.mxu0
      %7319 = vmatprep.mubr.bf16.mxu0 0
      %7320 = vmatmul.mubr.bf16.gmra.mxu0 %v7200
      %v7321 = vpop.f32.mrf.mxu0
      %v7322 = vadd.f32 0.0, %v7321
      %v7323 = vpop.f32.mrf.mxu0
      %v7324 = vpop.f32.mrf.mxu0
      %v7325 = vadd.f32 0.0, %v7324
      %v7326 = vpop.f32.mrf.mxu0
      %7327 = vmatprep.mubr.bf16.mxu0 0
      %7328 = vmatmul.mubr.bf16.gmra.mxu0 %v7203
      %v7329 = vpop.f32.mrf.mxu0
      %v7330 = vadd.f32 0.0, %v7329
      %v7331 = vpop.f32.mrf.mxu0
      %v7332 = vpop.f32.mrf.mxu0
      %v7333 = vadd.f32 0.0, %v7332
      %v7334 = vpop.f32.mrf.mxu0
      %7335 = vmatprep.mubr.bf16.mxu0 0
      %7336 = vmatmul.mubr.bf16.gmra.mxu0 %v7206
      %v7337 = vpop.f32.mrf.mxu0
      %v7338 = vadd.f32 0.0, %v7337
      %v7339 = vpop.f32.mrf.mxu0
      %v7340 = vpop.f32.mrf.mxu0
      %v7341 = vadd.f32 0.0, %v7340
      %v7342 = vpop.f32.mrf.mxu0
      %7343 = vmatprep.mubr.bf16.mxu0 0
      %7344 = vmatmul.mubr.bf16.gmra.mxu0 %v7209
      %v7345 = vpop.f32.mrf.mxu0
      %v7346 = vadd.f32 0.0, %v7345
      %v7347 = vpop.f32.mrf.mxu0
      %v7348 = vpop.f32.mrf.mxu0
      %v7349 = vadd.f32 0.0, %v7348
      %v7350 = vpop.f32.mrf.mxu0
      %7351 = vmatprep.mubr.bf16.mxu0 0
      %7352 = vmatmul.mubr.bf16.gmra.mxu0 %v7212
      %v7353 = vpop.f32.mrf.mxu0
      %v7354 = vadd.f32 0.0, %v7353
      %v7355 = vpop.f32.mrf.mxu0
      %v7356 = vpop.f32.mrf.mxu0
      %v7357 = vadd.f32 0.0, %v7356
      %v7358 = vpop.f32.mrf.mxu0
      %7359 = vmatprep.mubr.bf16.mxu0 0
      %7360 = vmatmul.mubr.bf16.gmra.mxu0 %v7215
      %v7361 = vpop.f32.mrf.mxu0
      %v7362 = vadd.f32 0.0, %v7361
      %v7363 = vpop.f32.mrf.mxu0
      %v7364 = vpop.f32.mrf.mxu0
      %v7365 = vadd.f32 0.0, %v7364
      %v7366 = vpop.f32.mrf.mxu0
      %7367 = vmatprep.mubr.bf16.mxu0 0
      %7368 = vmatmul.mubr.bf16.gmra.mxu0 %v7218
      %v7369 = vpop.f32.mrf.mxu0
      %v7370 = vadd.f32 0.0, %v7369
      %v7371 = vpop.f32.mrf.mxu0
      %v7372 = vpop.f32.mrf.mxu0
      %v7373 = vadd.f32 0.0, %v7372
      %v7374 = vpop.f32.mrf.mxu0
      %7375 = vmatprep.mubr.bf16.mxu0 0
      %7376 = vmatmul.mubr.bf16.gmra.mxu0 %v7221
      %v7377 = vpop.f32.mrf.mxu0
      %v7378 = vadd.f32 0.0, %v7377
      %v7379 = vpop.f32.mrf.mxu0
      %v7380 = vpop.f32.mrf.mxu0
      %v7381 = vadd.f32 0.0, %v7380
      %v7382 = vpop.f32.mrf.mxu0
      %7383 = vdwg.mxu0
      %v7384 = vadd.f32 %v6960, %v7258
      %v7385 = vadd.f32 %v6963, %v7261
      %v7386 = vadd.f32 %v6968, %v7266
      %v7387 = vadd.f32 %v6971, %v7269
      %v7388 = vadd.f32 %v6976, %v7274
      %v7389 = vadd.f32 %v6979, %v7277
      %v7390 = vadd.f32 %v6984, %v7282
      %v7391 = vadd.f32 %v6987, %v7285
      %v7392 = vadd.f32 %v6992, %v7290
      %v7393 = vadd.f32 %v6995, %v7293
      %v7394 = vadd.f32 %v7000, %v7298
      %v7395 = vadd.f32 %v7003, %v7301
      %v7396 = vadd.f32 %v7008, %v7306
      %v7397 = vadd.f32 %v7011, %v7309
      %v7398 = vadd.f32 %v7016, %v7314
      %v7399 = vadd.f32 %v7019, %v7317
      %v7400 = vadd.f32 %v7024, %v7322
      %v7401 = vadd.f32 %v7027, %v7325
      %v7402 = vadd.f32 %v7032, %v7330
      %v7403 = vadd.f32 %v7035, %v7333
      %v7404 = vadd.f32 %v7040, %v7338
      %v7405 = vadd.f32 %v7043, %v7341
      %v7406 = vadd.f32 %v7048, %v7346
      %v7407 = vadd.f32 %v7051, %v7349
      %v7408 = vadd.f32 %v7056, %v7354
      %v7409 = vadd.f32 %v7059, %v7357
      %v7410 = vadd.f32 %v7064, %v7362
      %v7411 = vadd.f32 %v7067, %v7365
      %v7412 = vadd.f32 %v7072, %v7370
      %v7413 = vadd.f32 %v7075, %v7373
      %v7414 = vadd.f32 %v7080, %v7378
      %v7415 = vadd.f32 %v7083, %v7381
      %v7416 = vld [vmem:[#allocation2 + $0x8] sm:$0xf]
      %v7417 = vld [vmem:[#allocation2 + $0xc] sm:$0xf]
      %v7418 = vld [vmem:[#allocation2 + $0x10] sm:$0xf]
      %v7419 = vld [vmem:[#allocation2 + $0x14] sm:$0xf]
      %v7420 = vld [vmem:[#allocation2 + $0x18] sm:$0xf]
      %v7421 = vld [vmem:[#allocation2 + $0x1c] sm:$0xf]
      %v7422 = vld [vmem:[#allocation2 + $0x20] sm:$0xf]
      %v7423 = vld [vmem:[#allocation2 + $0x24] sm:$0xf]
      %v7424 = vld [vmem:[#allocation2 + $0x28] sm:$0xf]
      %v7425 = vld [vmem:[#allocation2 + $0x2c] sm:$0xf]
      %v7426 = vld [vmem:[#allocation2 + $0x30] sm:$0xf]
      %v7427 = vld [vmem:[#allocation2 + $0x34] sm:$0xf]
      %v7428 = vld [vmem:[#allocation2 + $0x38] sm:$0xf]
      %v7429 = vld [vmem:[#allocation2 + $0x3c] sm:$0xf]
      %v7430 = vld [vmem:[#allocation2 + $0x40] sm:$0xf]
      %v7431 = vld [vmem:[#allocation2 + $0x44] sm:$0xf]
      %v7432 = vld [vmem:[#allocation2 + $0x48] sm:$0xf]
      %v7433 = vld [vmem:[#allocation2 + $0x4c] sm:$0xf]
      %v7434 = vld [vmem:[#allocation2 + $0x50] sm:$0xf]
      %v7435 = vld [vmem:[#allocation2 + $0x54] sm:$0xf]
      %v7436 = vld [vmem:[#allocation2 + $0x58] sm:$0xf]
      %v7437 = vld [vmem:[#allocation2 + $0x5c] sm:$0xf]
      %v7438 = vld [vmem:[#allocation2 + $0x60] sm:$0xf]
      %v7439 = vld [vmem:[#allocation2 + $0x64] sm:$0xf]
      %v7440 = vld [vmem:[#allocation2 + $0x68] sm:$0xf]
      %v7441 = vld [vmem:[#allocation2 + $0x6c] sm:$0xf]
      %v7442 = vld [vmem:[#allocation2 + $0x70] sm:$0xf]
      %v7443 = vld [vmem:[#allocation2 + $0x74] sm:$0xf]
      %v7444 = vld [vmem:[#allocation2 + $0x78] sm:$0xf]
      %v7445 = vld [vmem:[#allocation2 + $0x7c] sm:$0xf]
      %v7446 = vld [vmem:[#allocation2 + $0x80] sm:$0xf]
      %v7447 = vld [vmem:[#allocation2 + $0x84] sm:$0xf]
      %v7448 = vld [vmem:[#allocation2 + $0x88] sm:$0x1]
      %v7449 = vsel %vm2795, %v7416, 0
      %v7450 = vsel %vm2796, %v7417, 0
      %v7451 = vsel %vm2797, %v7418, 0
      %v7452 = vsel %vm2798, %v7419, 0
      %v7453 = vsel %vm2799, %v7420, 0
      %v7454 = vsel %vm2800, %v7421, 0
      %v7455 = vsel %vm2801, %v7422, 0
      %v7456 = vsel %vm2802, %v7423, 0
      %v7457 = vsel %vm2803, %v7424, 0
      %v7458 = vsel %vm2804, %v7425, 0
      %v7459 = vsel %vm2805, %v7426, 0
      %v7460 = vsel %vm2806, %v7427, 0
      %v7461 = vsel %vm2807, %v7428, 0
      %v7462 = vsel %vm2808, %v7429, 0
      %v7463 = vsel %vm2809, %v7430, 0
      %v7464 = vsel %vm2810, %v7431, 0
      %v7465 = vsel %vm2811, %v7432, 0
      %v7466 = vsel %vm2812, %v7433, 0
      %v7467 = vsel %vm2813, %v7434, 0
      %v7468 = vsel %vm2814, %v7435, 0
      %v7469 = vsel %vm2815, %v7436, 0
      %v7470 = vsel %vm2816, %v7437, 0
      %v7471 = vsel %vm2817, %v7438, 0
      %v7472 = vsel %vm2818, %v7439, 0
      %v7473 = vsel %vm2819, %v7440, 0
      %v7474 = vsel %vm2820, %v7441, 0
      %v7475 = vsel %vm2821, %v7442, 0
      %v7476 = vsel %vm2822, %v7443, 0
      %v7477 = vsel %vm2823, %v7444, 0
      %v7478 = vsel %vm2824, %v7445, 0
      %v7479 = vsel %vm2825, %v7446, 0
      %v7480 = vsel %vm2826, %v7447, 0
      %v7481 = vsel %vm2827, %v7448, 0
      %s7482 = scalar_lea.vmem %s2, 80
      %v7483 = vld [vmem:[%s7482] sm:$0xf]
      %v7484 = vld [vmem:[%s7482 + $0x4] sm:$0xf]
      %v7518 = vunpack.c.l.b16 %v7449
      %v7519 = vunpack.c.l.b16 %v7450
      %v7520 = vunpack.c.l.b16 %v7451
      %v7521 = vunpack.c.l.b16 %v7452
      %v7522 = vunpack.c.l.b16 %v7453
      %v7523 = vunpack.c.l.b16 %v7454
      %v7524 = vunpack.c.l.b16 %v7455
      %v7525 = vunpack.c.l.b16 %v7456
      %v7526 = vunpack.c.l.b16 %v7457
      %v7527 = vunpack.c.l.b16 %v7458
      %v7528 = vunpack.c.l.b16 %v7459
      %v7529 = vunpack.c.l.b16 %v7460
      %v7530 = vunpack.c.l.b16 %v7461
      %v7531 = vunpack.c.l.b16 %v7462
      %v7532 = vunpack.c.l.b16 %v7463
      %v7533 = vunpack.c.l.b16 %v7464
      %v7534 = vunpack.c.l.b16 %v7465
      %v7535 = vunpack.c.l.b16 %v7466
      %v7536 = vunpack.c.l.b16 %v7467
      %v7537 = vunpack.c.l.b16 %v7468
      %v7538 = vunpack.c.l.b16 %v7469
      %v7539 = vunpack.c.l.b16 %v7470
      %v7540 = vunpack.c.l.b16 %v7471
      %v7541 = vunpack.c.l.b16 %v7472
      %v7542 = vunpack.c.l.b16 %v7473
      %v7543 = vunpack.c.l.b16 %v7474
      %v7544 = vunpack.c.l.b16 %v7475
      %v7545 = vunpack.c.l.b16 %v7476
      %v7546 = vunpack.c.l.b16 %v7477
      %v7547 = vunpack.c.l.b16 %v7478
      %v7548 = vunpack.c.l.b16 %v7479
      %v7549 = vunpack.c.l.b16 %v7480
      %v7550 = vunpack.c.l.b16 %v7481
      %v7551 = vpack.c.b16 %v7519, %v7518
      %v7552 = vpack.c.b16 %v7521, %v7520
      %v7553 = vpack.c.b16 %v7523, %v7522
      %v7554 = vpack.c.b16 %v7525, %v7524
      %v7555 = vpack.c.b16 %v7527, %v7526
      %v7556 = vpack.c.b16 %v7529, %v7528
      %v7557 = vpack.c.b16 %v7531, %v7530
      %v7558 = vpack.c.b16 %v7533, %v7532
      %v7559 = vpack.c.b16 %v7535, %v7534
      %v7560 = vpack.c.b16 %v7537, %v7536
      %v7561 = vpack.c.b16 %v7539, %v7538
      %v7562 = vpack.c.b16 %v7541, %v7540
      %v7563 = vpack.c.b16 %v7543, %v7542
      %v7564 = vpack.c.b16 %v7545, %v7544
      %v7565 = vpack.c.b16 %v7547, %v7546
      %v7566 = vpack.c.b16 %v7549, %v7548
      %v7567 = vpack.c.b16 %v7550, %v7550
      %v7569 = vshrl.u32 %v7551, 16
      %v7571 = vshll.u32 %v7551, 16
      %v7573 = vrot.slane %v7571, 1
      %v7574 = vor.u32 %v7569, %v7573
      %v7576 = vshll.u32 %v7552, 16
      %v7578 = vrot.slane %v7576, 1
      %v7579 = vsel %vm2947, %v7574, %v7578
      %v7580 = vshrl.u32 %v7552, 16
      %v7582 = vor.u32 %v7580, %v7578
      %v7584 = vshll.u32 %v7553, 16
      %v7586 = vrot.slane %v7584, 1
      %v7587 = vsel %vm2947, %v7582, %v7586
      %v7588 = vshrl.u32 %v7553, 16
      %v7590 = vor.u32 %v7588, %v7586
      %v7592 = vshll.u32 %v7554, 16
      %v7594 = vrot.slane %v7592, 1
      %v7595 = vsel %vm2947, %v7590, %v7594
      %v7596 = vshrl.u32 %v7554, 16
      %v7598 = vor.u32 %v7596, %v7594
      %v7600 = vshll.u32 %v7555, 16
      %v7602 = vrot.slane %v7600, 1
      %v7603 = vsel %vm2947, %v7598, %v7602
      %v7604 = vshrl.u32 %v7555, 16
      %v7606 = vor.u32 %v7604, %v7602
      %v7608 = vshll.u32 %v7556, 16
      %v7610 = vrot.slane %v7608, 1
      %v7611 = vsel %vm2947, %v7606, %v7610
      %v7612 = vshrl.u32 %v7556, 16
      %v7614 = vor.u32 %v7612, %v7610
      %v7616 = vshll.u32 %v7557, 16
      %v7618 = vrot.slane %v7616, 1
      %v7619 = vsel %vm2947, %v7614, %v7618
      %v7620 = vshrl.u32 %v7557, 16
      %v7622 = vor.u32 %v7620, %v7618
      %v7624 = vshll.u32 %v7558, 16
      %v7626 = vrot.slane %v7624, 1
      %v7627 = vsel %vm2947, %v7622, %v7626
      %v7628 = vshrl.u32 %v7558, 16
      %v7630 = vor.u32 %v7628, %v7626
      %v7632 = vshll.u32 %v7559, 16
      %v7634 = vrot.slane %v7632, 1
      %v7635 = vsel %vm2947, %v7630, %v7634
      %v7636 = vshrl.u32 %v7559, 16
      %v7638 = vor.u32 %v7636, %v7634
      %v7640 = vshll.u32 %v7560, 16
      %v7642 = vrot.slane %v7640, 1
      %v7643 = vsel %vm2947, %v7638, %v7642
      %v7644 = vshrl.u32 %v7560, 16
      %v7646 = vor.u32 %v7644, %v7642
      %v7648 = vshll.u32 %v7561, 16
      %v7650 = vrot.slane %v7648, 1
      %v7651 = vsel %vm2947, %v7646, %v7650
      %v7652 = vshrl.u32 %v7561, 16
      %v7654 = vor.u32 %v7652, %v7650
      %v7656 = vshll.u32 %v7562, 16
      %v7658 = vrot.slane %v7656, 1
      %v7659 = vsel %vm2947, %v7654, %v7658
      %v7660 = vshrl.u32 %v7562, 16
      %v7662 = vor.u32 %v7660, %v7658
      %v7664 = vshll.u32 %v7563, 16
      %v7666 = vrot.slane %v7664, 1
      %v7667 = vsel %vm2947, %v7662, %v7666
      %v7668 = vshrl.u32 %v7563, 16
      %v7670 = vor.u32 %v7668, %v7666
      %v7672 = vshll.u32 %v7564, 16
      %v7674 = vrot.slane %v7672, 1
      %v7675 = vsel %vm2947, %v7670, %v7674
      %v7676 = vshrl.u32 %v7564, 16
      %v7678 = vor.u32 %v7676, %v7674
      %v7680 = vshll.u32 %v7565, 16
      %v7682 = vrot.slane %v7680, 1
      %v7683 = vsel %vm2947, %v7678, %v7682
      %v7684 = vshrl.u32 %v7565, 16
      %v7686 = vor.u32 %v7684, %v7682
      %v7688 = vshll.u32 %v7566, 16
      %v7690 = vrot.slane %v7688, 1
      %v7691 = vsel %vm2947, %v7686, %v7690
      %v7692 = vshrl.u32 %v7566, 16
      %v7694 = vor.u32 %v7692, %v7690
      %v7696 = vshll.u32 %v7567, 16
      %v7698 = vrot.slane %v7696, 1
      %v7699 = vsel %vm2947, %v7694, %v7698
      %v7702 = vunpack.c.l.b16 %v7483
      %v7703 = vunpack.c.l.b16 %v7484
      %v7704 = vpack.c.b16 %v7703, %v7702
      %v7707 = vsel %vm1554, %v7579, 0
      %v7710 = vsel %vm1554, %v7587, 0
      %v7713 = vsel %vm1554, %v7595, 0
      %v7716 = vsel %vm1554, %v7603, 0
      %v7719 = vsel %vm1554, %v7611, 0
      %v7722 = vsel %vm1554, %v7619, 0
      %v7725 = vsel %vm1554, %v7627, 0
      %v7728 = vsel %vm1554, %v7635, 0
      %v7731 = vsel %vm1554, %v7643, 0
      %v7734 = vsel %vm1554, %v7651, 0
      %v7737 = vsel %vm1554, %v7659, 0
      %v7740 = vsel %vm1554, %v7667, 0
      %v7743 = vsel %vm1554, %v7675, 0
      %v7746 = vsel %vm1554, %v7683, 0
      %v7749 = vsel %vm1554, %v7691, 0
      %v7752 = vsel %vm1554, %v7699, 0
      %7754 = vmatprep.subr.bf16.mxu0 0
      %7755 = vmatpush1.bf16.msra.mxu0 0
      %7756 = vmatprep.subr.bf16.mxu0 0
      %7757 = vmatpush1.bf16.msra.mxu0 0
      %7758 = vmatprep.subr.bf16.mxu0 0
      %7759 = vmatpush1.bf16.msra.mxu0 0
      %7760 = vmatprep.subr.bf16.mxu0 0
      %7761 = vmatpush1.bf16.msra.mxu0 0
      %7762 = vmatprep.subr.bf16.mxu0 0
      %7763 = vmatpush1.bf16.msra.mxu0 0
      %7764 = vmatprep.subr.bf16.mxu0 0
      %7765 = vmatpush1.bf16.msra.mxu0 0
      %7766 = vmatprep.subr.bf16.mxu0 0
      %7767 = vmatpush1.bf16.msra.mxu0 0
      %7768 = vmatprep.subr.bf16.mxu0 0
      %7769 = vmatpush1.bf16.msra.mxu0 %v7704
      %7770 = vmatprep.subr.bf16.mxu0 0
      %7771 = vmatpush2.bf16.msra.mxu0 0
      %7772 = vmatprep.subr.bf16.mxu0 0
      %7773 = vmatpush2.bf16.msra.mxu0 0
      %7774 = vmatprep.subr.bf16.mxu0 0
      %7775 = vmatpush2.bf16.msra.mxu0 0
      %7776 = vmatprep.subr.bf16.mxu0 0
      %7777 = vmatpush2.bf16.msra.mxu0 0
      %7778 = vmatprep.subr.bf16.mxu0 0
      %7779 = vmatpush2.bf16.msra.mxu0 0
      %7780 = vmatprep.subr.bf16.mxu0 0
      %7781 = vmatpush2.bf16.msra.mxu0 0
      %7782 = vmatprep.subr.bf16.mxu0 0
      %7783 = vmatpush2.bf16.msra.mxu0 0
      %7784 = vmatprep.subr.bf16.mxu0 0
      %7785 = vmatpush2.bf16.msra.mxu0 0
      %7786 = vmatprep.mubr.bf16.mxu0 0
      %7787 = vmatmul.mubr.bf16.gmra.mxu0 %v7707
      %v7788 = vpop.f32.mrf.mxu0
      %v7789 = vadd.f32 0.0, %v7788
      %v7790 = vpop.f32.mrf.mxu0
      %v7791 = vpop.f32.mrf.mxu0
      %v7792 = vadd.f32 0.0, %v7791
      %v7793 = vpop.f32.mrf.mxu0
      %7794 = vmatprep.mubr.bf16.mxu0 0
      %7795 = vmatmul.mubr.bf16.gmra.mxu0 %v7710
      %v7796 = vpop.f32.mrf.mxu0
      %v7797 = vadd.f32 0.0, %v7796
      %v7798 = vpop.f32.mrf.mxu0
      %v7799 = vpop.f32.mrf.mxu0
      %v7800 = vadd.f32 0.0, %v7799
      %v7801 = vpop.f32.mrf.mxu0
      %7802 = vmatprep.mubr.bf16.mxu0 0
      %7803 = vmatmul.mubr.bf16.gmra.mxu0 %v7713
      %v7804 = vpop.f32.mrf.mxu0
      %v7805 = vadd.f32 0.0, %v7804
      %v7806 = vpop.f32.mrf.mxu0
      %v7807 = vpop.f32.mrf.mxu0
      %v7808 = vadd.f32 0.0, %v7807
      %v7809 = vpop.f32.mrf.mxu0
      %7810 = vmatprep.mubr.bf16.mxu0 0
      %7811 = vmatmul.mubr.bf16.gmra.mxu0 %v7716
      %v7812 = vpop.f32.mrf.mxu0
      %v7813 = vadd.f32 0.0, %v7812
      %v7814 = vpop.f32.mrf.mxu0
      %v7815 = vpop.f32.mrf.mxu0
      %v7816 = vadd.f32 0.0, %v7815
      %v7817 = vpop.f32.mrf.mxu0
      %7818 = vmatprep.mubr.bf16.mxu0 0
      %7819 = vmatmul.mubr.bf16.gmra.mxu0 %v7719
      %v7820 = vpop.f32.mrf.mxu0
      %v7821 = vadd.f32 0.0, %v7820
      %v7822 = vpop.f32.mrf.mxu0
      %v7823 = vpop.f32.mrf.mxu0
      %v7824 = vadd.f32 0.0, %v7823
      %v7825 = vpop.f32.mrf.mxu0
      %7826 = vmatprep.mubr.bf16.mxu0 0
      %7827 = vmatmul.mubr.bf16.gmra.mxu0 %v7722
      %v7828 = vpop.f32.mrf.mxu0
      %v7829 = vadd.f32 0.0, %v7828
      %v7830 = vpop.f32.mrf.mxu0
      %v7831 = vpop.f32.mrf.mxu0
      %v7832 = vadd.f32 0.0, %v7831
      %v7833 = vpop.f32.mrf.mxu0
      %7834 = vmatprep.mubr.bf16.mxu0 0
      %7835 = vmatmul.mubr.bf16.gmra.mxu0 %v7725
      %v7836 = vpop.f32.mrf.mxu0
      %v7837 = vadd.f32 0.0, %v7836
      %v7838 = vpop.f32.mrf.mxu0
      %v7839 = vpop.f32.mrf.mxu0
      %v7840 = vadd.f32 0.0, %v7839
      %v7841 = vpop.f32.mrf.mxu0
      %7842 = vmatprep.mubr.bf16.mxu0 0
      %7843 = vmatmul.mubr.bf16.gmra.mxu0 %v7728
      %v7844 = vpop.f32.mrf.mxu0
      %v7845 = vadd.f32 0.0, %v7844
      %v7846 = vpop.f32.mrf.mxu0
      %v7847 = vpop.f32.mrf.mxu0
      %v7848 = vadd.f32 0.0, %v7847
      %v7849 = vpop.f32.mrf.mxu0
      %7850 = vmatprep.mubr.bf16.mxu0 0
      %7851 = vmatmul.mubr.bf16.gmra.mxu0 %v7731
      %v7852 = vpop.f32.mrf.mxu0
      %v7853 = vadd.f32 0.0, %v7852
      %v7854 = vpop.f32.mrf.mxu0
      %v7855 = vpop.f32.mrf.mxu0
      %v7856 = vadd.f32 0.0, %v7855
      %v7857 = vpop.f32.mrf.mxu0
      %7858 = vmatprep.mubr.bf16.mxu0 0
      %7859 = vmatmul.mubr.bf16.gmra.mxu0 %v7734
      %v7860 = vpop.f32.mrf.mxu0
      %v7861 = vadd.f32 0.0, %v7860
      %v7862 = vpop.f32.mrf.mxu0
      %v7863 = vpop.f32.mrf.mxu0
      %v7864 = vadd.f32 0.0, %v7863
      %v7865 = vpop.f32.mrf.mxu0
      %7866 = vmatprep.mubr.bf16.mxu0 0
      %7867 = vmatmul.mubr.bf16.gmra.mxu0 %v7737
      %v7868 = vpop.f32.mrf.mxu0
      %v7869 = vadd.f32 0.0, %v7868
      %v7870 = vpop.f32.mrf.mxu0
      %v7871 = vpop.f32.mrf.mxu0
      %v7872 = vadd.f32 0.0, %v7871
      %v7873 = vpop.f32.mrf.mxu0
      %7874 = vmatprep.mubr.bf16.mxu0 0
      %7875 = vmatmul.mubr.bf16.gmra.mxu0 %v7740
      %v7876 = vpop.f32.mrf.mxu0
      %v7877 = vadd.f32 0.0, %v7876
      %v7878 = vpop.f32.mrf.mxu0
      %v7879 = vpop.f32.mrf.mxu0
      %v7880 = vadd.f32 0.0, %v7879
      %v7881 = vpop.f32.mrf.mxu0
      %7882 = vmatprep.mubr.bf16.mxu0 0
      %7883 = vmatmul.mubr.bf16.gmra.mxu0 %v7743
      %v7884 = vpop.f32.mrf.mxu0
      %v7885 = vadd.f32 0.0, %v7884
      %v7886 = vpop.f32.mrf.mxu0
      %v7887 = vpop.f32.mrf.mxu0
      %v7888 = vadd.f32 0.0, %v7887
      %v7889 = vpop.f32.mrf.mxu0
      %7890 = vmatprep.mubr.bf16.mxu0 0
      %7891 = vmatmul.mubr.bf16.gmra.mxu0 %v7746
      %v7892 = vpop.f32.mrf.mxu0
      %v7893 = vadd.f32 0.0, %v7892
      %v7894 = vpop.f32.mrf.mxu0
      %v7895 = vpop.f32.mrf.mxu0
      %v7896 = vadd.f32 0.0, %v7895
      %v7897 = vpop.f32.mrf.mxu0
      %7898 = vmatprep.mubr.bf16.mxu0 0
      %7899 = vmatmul.mubr.bf16.gmra.mxu0 %v7749
      %v7900 = vpop.f32.mrf.mxu0
      %v7901 = vadd.f32 0.0, %v7900
      %v7902 = vpop.f32.mrf.mxu0
      %v7903 = vpop.f32.mrf.mxu0
      %v7904 = vadd.f32 0.0, %v7903
      %v7905 = vpop.f32.mrf.mxu0
      %7906 = vmatprep.mubr.bf16.mxu0 0
      %7907 = vmatmul.mubr.bf16.gmra.mxu0 %v7752
      %v7908 = vpop.f32.mrf.mxu0
      %v7909 = vadd.f32 0.0, %v7908
      %v7910 = vpop.f32.mrf.mxu0
      %v7911 = vpop.f32.mrf.mxu0
      %v7912 = vadd.f32 0.0, %v7911
      %v7913 = vpop.f32.mrf.mxu0
      %7914 = vdwg.mxu0
      %v7915 = vadd.f32 %v7384, %v7789
      %v7916 = vadd.f32 %v7385, %v7792
      %v7917 = vadd.f32 %v7386, %v7797
      %v7918 = vadd.f32 %v7387, %v7800
      %v7919 = vadd.f32 %v7388, %v7805
      %v7920 = vadd.f32 %v7389, %v7808
      %v7921 = vadd.f32 %v7390, %v7813
      %v7922 = vadd.f32 %v7391, %v7816
      %v7923 = vadd.f32 %v7392, %v7821
      %v7924 = vadd.f32 %v7393, %v7824
      %v7925 = vadd.f32 %v7394, %v7829
      %v7926 = vadd.f32 %v7395, %v7832
      %v7927 = vadd.f32 %v7396, %v7837
      %v7928 = vadd.f32 %v7397, %v7840
      %v7929 = vadd.f32 %v7398, %v7845
      %v7930 = vadd.f32 %v7399, %v7848
      %v7931 = vadd.f32 %v7400, %v7853
      %v7932 = vadd.f32 %v7401, %v7856
      %v7933 = vadd.f32 %v7402, %v7861
      %v7934 = vadd.f32 %v7403, %v7864
      %v7935 = vadd.f32 %v7404, %v7869
      %v7936 = vadd.f32 %v7405, %v7872
      %v7937 = vadd.f32 %v7406, %v7877
      %v7938 = vadd.f32 %v7407, %v7880
      %v7939 = vadd.f32 %v7408, %v7885
      %v7940 = vadd.f32 %v7409, %v7888
      %v7941 = vadd.f32 %v7410, %v7893
      %v7942 = vadd.f32 %v7411, %v7896
      %v7943 = vadd.f32 %v7412, %v7901
      %v7944 = vadd.f32 %v7413, %v7904
      %v7945 = vadd.f32 %v7414, %v7909
      %v7946 = vadd.f32 %v7415, %v7912
      %v7947 = vld [vmem:[#allocation2 + $0xc] sm:$0x8]
      %v7948 = vld [vmem:[#allocation2 + $0x10] sm:$0xf]
      %v7949 = vld [vmem:[#allocation2 + $0x14] sm:$0xf]
      %v7950 = vld [vmem:[#allocation2 + $0x18] sm:$0xf]
      %v7951 = vld [vmem:[#allocation2 + $0x1c] sm:$0xf]
      %v7952 = vld [vmem:[#allocation2 + $0x20] sm:$0xf]
      %v7953 = vld [vmem:[#allocation2 + $0x24] sm:$0xf]
      %v7954 = vld [vmem:[#allocation2 + $0x28] sm:$0xf]
      %v7955 = vld [vmem:[#allocation2 + $0x2c] sm:$0xf]
      %v7956 = vld [vmem:[#allocation2 + $0x30] sm:$0xf]
      %v7957 = vld [vmem:[#allocation2 + $0x34] sm:$0xf]
      %v7958 = vld [vmem:[#allocation2 + $0x38] sm:$0xf]
      %v7959 = vld [vmem:[#allocation2 + $0x3c] sm:$0xf]
      %v7960 = vld [vmem:[#allocation2 + $0x40] sm:$0xf]
      %v7961 = vld [vmem:[#allocation2 + $0x44] sm:$0xf]
      %v7962 = vld [vmem:[#allocation2 + $0x48] sm:$0xf]
      %v7963 = vld [vmem:[#allocation2 + $0x4c] sm:$0xf]
      %v7964 = vld [vmem:[#allocation2 + $0x50] sm:$0xf]
      %v7965 = vld [vmem:[#allocation2 + $0x54] sm:$0xf]
      %v7966 = vld [vmem:[#allocation2 + $0x58] sm:$0xf]
      %v7967 = vld [vmem:[#allocation2 + $0x5c] sm:$0xf]
      %v7968 = vld [vmem:[#allocation2 + $0x60] sm:$0xf]
      %v7969 = vld [vmem:[#allocation2 + $0x64] sm:$0xf]
      %v7970 = vld [vmem:[#allocation2 + $0x68] sm:$0xf]
      %v7971 = vld [vmem:[#allocation2 + $0x6c] sm:$0xf]
      %v7972 = vld [vmem:[#allocation2 + $0x70] sm:$0xf]
      %v7973 = vld [vmem:[#allocation2 + $0x74] sm:$0xf]
      %v7974 = vld [vmem:[#allocation2 + $0x78] sm:$0xf]
      %v7975 = vld [vmem:[#allocation2 + $0x7c] sm:$0xf]
      %v7976 = vld [vmem:[#allocation2 + $0x80] sm:$0xf]
      %v7977 = vld [vmem:[#allocation2 + $0x84] sm:$0xf]
      %v7978 = vld [vmem:[#allocation2 + $0x88] sm:$0xf]
      %v7979 = vld [vmem:[#allocation2 + $0x8c] sm:$0xf]
      %v7980 = vsel %vm1244, %v7947, 0
      %v7981 = vsel %vm1245, %v7948, 0
      %v7982 = vsel %vm1246, %v7949, 0
      %v7983 = vsel %vm1247, %v7950, 0
      %v7984 = vsel %vm1248, %v7951, 0
      %v7985 = vsel %vm1249, %v7952, 0
      %v7986 = vsel %vm1250, %v7953, 0
      %v7987 = vsel %vm1251, %v7954, 0
      %v7988 = vsel %vm1252, %v7955, 0
      %v7989 = vsel %vm1253, %v7956, 0
      %v7990 = vsel %vm1254, %v7957, 0
      %v7991 = vsel %vm1255, %v7958, 0
      %v7992 = vsel %vm1256, %v7959, 0
      %v7993 = vsel %vm1257, %v7960, 0
      %v7994 = vsel %vm1258, %v7961, 0
      %v7995 = vsel %vm1259, %v7962, 0
      %v7996 = vsel %vm1260, %v7963, 0
      %v7997 = vsel %vm1261, %v7964, 0
      %v7998 = vsel %vm1262, %v7965, 0
      %v7999 = vsel %vm1263, %v7966, 0
      %v8000 = vsel %vm1264, %v7967, 0
      %v8001 = vsel %vm1265, %v7968, 0
      %v8002 = vsel %vm1266, %v7969, 0
      %v8003 = vsel %vm1267, %v7970, 0
      %v8004 = vsel %vm1268, %v7971, 0
      %v8005 = vsel %vm1269, %v7972, 0
      %v8006 = vsel %vm1270, %v7973, 0
      %v8007 = vsel %vm1271, %v7974, 0
      %v8008 = vsel %vm1272, %v7975, 0
      %v8009 = vsel %vm1273, %v7976, 0
      %v8010 = vsel %vm1274, %v7977, 0
      %v8011 = vsel %vm1275, %v7978, 0
      %v8012 = vsel %vm1276, %v7979, 0
      %s8013 = scalar_lea.vmem %s2, 88
      %v8014 = vld [vmem:[%s8013] sm:$0xf]
      %v8015 = vld [vmem:[%s8013 + $0x4] sm:$0xf]
      %v8049 = vunpack.c.l.b16 %v7980
      %v8050 = vunpack.c.l.b16 %v7981
      %v8051 = vunpack.c.l.b16 %v7982
      %v8052 = vunpack.c.l.b16 %v7983
      %v8053 = vunpack.c.l.b16 %v7984
      %v8054 = vunpack.c.l.b16 %v7985
      %v8055 = vunpack.c.l.b16 %v7986
      %v8056 = vunpack.c.l.b16 %v7987
      %v8057 = vunpack.c.l.b16 %v7988
      %v8058 = vunpack.c.l.b16 %v7989
      %v8059 = vunpack.c.l.b16 %v7990
      %v8060 = vunpack.c.l.b16 %v7991
      %v8061 = vunpack.c.l.b16 %v7992
      %v8062 = vunpack.c.l.b16 %v7993
      %v8063 = vunpack.c.l.b16 %v7994
      %v8064 = vunpack.c.l.b16 %v7995
      %v8065 = vunpack.c.l.b16 %v7996
      %v8066 = vunpack.c.l.b16 %v7997
      %v8067 = vunpack.c.l.b16 %v7998
      %v8068 = vunpack.c.l.b16 %v7999
      %v8069 = vunpack.c.l.b16 %v8000
      %v8070 = vunpack.c.l.b16 %v8001
      %v8071 = vunpack.c.l.b16 %v8002
      %v8072 = vunpack.c.l.b16 %v8003
      %v8073 = vunpack.c.l.b16 %v8004
      %v8074 = vunpack.c.l.b16 %v8005
      %v8075 = vunpack.c.l.b16 %v8006
      %v8076 = vunpack.c.l.b16 %v8007
      %v8077 = vunpack.c.l.b16 %v8008
      %v8078 = vunpack.c.l.b16 %v8009
      %v8079 = vunpack.c.l.b16 %v8010
      %v8080 = vunpack.c.l.b16 %v8011
      %v8081 = vunpack.c.l.b16 %v8012
      %v8082 = vpack.c.b16 %v8050, %v8049
      %v8083 = vpack.c.b16 %v8052, %v8051
      %v8084 = vpack.c.b16 %v8054, %v8053
      %v8085 = vpack.c.b16 %v8056, %v8055
      %v8086 = vpack.c.b16 %v8058, %v8057
      %v8087 = vpack.c.b16 %v8060, %v8059
      %v8088 = vpack.c.b16 %v8062, %v8061
      %v8089 = vpack.c.b16 %v8064, %v8063
      %v8090 = vpack.c.b16 %v8066, %v8065
      %v8091 = vpack.c.b16 %v8068, %v8067
      %v8092 = vpack.c.b16 %v8070, %v8069
      %v8093 = vpack.c.b16 %v8072, %v8071
      %v8094 = vpack.c.b16 %v8074, %v8073
      %v8095 = vpack.c.b16 %v8076, %v8075
      %v8096 = vpack.c.b16 %v8078, %v8077
      %v8097 = vpack.c.b16 %v8080, %v8079
      %v8098 = vpack.c.b16 %v8081, %v8081
      %v8100 = vshrl.u32 %v8082, 16
      %v8102 = vrot.slane %v8100, 3
      %v8103 = vshll.u32 %v8082, 16
      %v8105 = vrot.slane %v8103, 4
      %v8106 = vor.u32 %v8102, %v8105
      %v8108 = vshrl.u32 %v8083, 16
      %v8110 = vrot.slane %v8108, 3
      %v8111 = vshll.u32 %v8083, 16
      %v8113 = vrot.slane %v8111, 4
      %v8114 = vor.u32 %v8110, %v8113
      %v8115 = vsel %vm1395, %v8106, %v8114
      %v8117 = vshrl.u32 %v8084, 16
      %v8119 = vrot.slane %v8117, 3
      %v8120 = vshll.u32 %v8084, 16
      %v8122 = vrot.slane %v8120, 4
      %v8123 = vor.u32 %v8119, %v8122
      %v8124 = vsel %vm1395, %v8114, %v8123
      %v8126 = vshrl.u32 %v8085, 16
      %v8128 = vrot.slane %v8126, 3
      %v8129 = vshll.u32 %v8085, 16
      %v8131 = vrot.slane %v8129, 4
      %v8132 = vor.u32 %v8128, %v8131
      %v8133 = vsel %vm1395, %v8123, %v8132
      %v8135 = vshrl.u32 %v8086, 16
      %v8137 = vrot.slane %v8135, 3
      %v8138 = vshll.u32 %v8086, 16
      %v8140 = vrot.slane %v8138, 4
      %v8141 = vor.u32 %v8137, %v8140
      %v8142 = vsel %vm1395, %v8132, %v8141
      %v8144 = vshrl.u32 %v8087, 16
      %v8146 = vrot.slane %v8144, 3
      %v8147 = vshll.u32 %v8087, 16
      %v8149 = vrot.slane %v8147, 4
      %v8150 = vor.u32 %v8146, %v8149
      %v8151 = vsel %vm1395, %v8141, %v8150
      %v8153 = vshrl.u32 %v8088, 16
      %v8155 = vrot.slane %v8153, 3
      %v8156 = vshll.u32 %v8088, 16
      %v8158 = vrot.slane %v8156, 4
      %v8159 = vor.u32 %v8155, %v8158
      %v8160 = vsel %vm1395, %v8150, %v8159
      %v8162 = vshrl.u32 %v8089, 16
      %v8164 = vrot.slane %v8162, 3
      %v8165 = vshll.u32 %v8089, 16
      %v8167 = vrot.slane %v8165, 4
      %v8168 = vor.u32 %v8164, %v8167
      %v8169 = vsel %vm1395, %v8159, %v8168
      %v8171 = vshrl.u32 %v8090, 16
      %v8173 = vrot.slane %v8171, 3
      %v8174 = vshll.u32 %v8090, 16
      %v8176 = vrot.slane %v8174, 4
      %v8177 = vor.u32 %v8173, %v8176
      %v8178 = vsel %vm1395, %v8168, %v8177
      %v8180 = vshrl.u32 %v8091, 16
      %v8182 = vrot.slane %v8180, 3
      %v8183 = vshll.u32 %v8091, 16
      %v8185 = vrot.slane %v8183, 4
      %v8186 = vor.u32 %v8182, %v8185
      %v8187 = vsel %vm1395, %v8177, %v8186
      %v8189 = vshrl.u32 %v8092, 16
      %v8191 = vrot.slane %v8189, 3
      %v8192 = vshll.u32 %v8092, 16
      %v8194 = vrot.slane %v8192, 4
      %v8195 = vor.u32 %v8191, %v8194
      %v8196 = vsel %vm1395, %v8186, %v8195
      %v8198 = vshrl.u32 %v8093, 16
      %v8200 = vrot.slane %v8198, 3
      %v8201 = vshll.u32 %v8093, 16
      %v8203 = vrot.slane %v8201, 4
      %v8204 = vor.u32 %v8200, %v8203
      %v8205 = vsel %vm1395, %v8195, %v8204
      %v8207 = vshrl.u32 %v8094, 16
      %v8209 = vrot.slane %v8207, 3
      %v8210 = vshll.u32 %v8094, 16
      %v8212 = vrot.slane %v8210, 4
      %v8213 = vor.u32 %v8209, %v8212
      %v8214 = vsel %vm1395, %v8204, %v8213
      %v8216 = vshrl.u32 %v8095, 16
      %v8218 = vrot.slane %v8216, 3
      %v8219 = vshll.u32 %v8095, 16
      %v8221 = vrot.slane %v8219, 4
      %v8222 = vor.u32 %v8218, %v8221
      %v8223 = vsel %vm1395, %v8213, %v8222
      %v8225 = vshrl.u32 %v8096, 16
      %v8227 = vrot.slane %v8225, 3
      %v8228 = vshll.u32 %v8096, 16
      %v8230 = vrot.slane %v8228, 4
      %v8231 = vor.u32 %v8227, %v8230
      %v8232 = vsel %vm1395, %v8222, %v8231
      %v8234 = vshrl.u32 %v8097, 16
      %v8236 = vrot.slane %v8234, 3
      %v8237 = vshll.u32 %v8097, 16
      %v8239 = vrot.slane %v8237, 4
      %v8240 = vor.u32 %v8236, %v8239
      %v8241 = vsel %vm1395, %v8231, %v8240
      %v8243 = vshrl.u32 %v8098, 16
      %v8245 = vrot.slane %v8243, 3
      %v8246 = vshll.u32 %v8098, 16
      %v8248 = vrot.slane %v8246, 4
      %v8249 = vor.u32 %v8245, %v8248
      %v8250 = vsel %vm1395, %v8240, %v8249
      %v8253 = vunpack.c.l.b16 %v8014
      %v8254 = vunpack.c.l.b16 %v8015
      %v8255 = vpack.c.b16 %v8254, %v8253
      %v8258 = vsel %vm1554, %v8115, 0
      %v8261 = vsel %vm1554, %v8124, 0
      %v8264 = vsel %vm1554, %v8133, 0
      %v8267 = vsel %vm1554, %v8142, 0
      %v8270 = vsel %vm1554, %v8151, 0
      %v8273 = vsel %vm1554, %v8160, 0
      %v8276 = vsel %vm1554, %v8169, 0
      %v8279 = vsel %vm1554, %v8178, 0
      %v8282 = vsel %vm1554, %v8187, 0
      %v8285 = vsel %vm1554, %v8196, 0
      %v8288 = vsel %vm1554, %v8205, 0
      %v8291 = vsel %vm1554, %v8214, 0
      %v8294 = vsel %vm1554, %v8223, 0
      %v8297 = vsel %vm1554, %v8232, 0
      %v8300 = vsel %vm1554, %v8241, 0
      %v8303 = vsel %vm1554, %v8250, 0
      %8305 = vmatprep.subr.bf16.mxu0 0
      %8306 = vmatpush1.bf16.msra.mxu0 0
      %8307 = vmatprep.subr.bf16.mxu0 0
      %8308 = vmatpush1.bf16.msra.mxu0 0
      %8309 = vmatprep.subr.bf16.mxu0 0
      %8310 = vmatpush1.bf16.msra.mxu0 0
      %8311 = vmatprep.subr.bf16.mxu0 0
      %8312 = vmatpush1.bf16.msra.mxu0 0
      %8313 = vmatprep.subr.bf16.mxu0 0
      %8314 = vmatpush1.bf16.msra.mxu0 0
      %8315 = vmatprep.subr.bf16.mxu0 0
      %8316 = vmatpush1.bf16.msra.mxu0 0
      %8317 = vmatprep.subr.bf16.mxu0 0
      %8318 = vmatpush1.bf16.msra.mxu0 0
      %8319 = vmatprep.subr.bf16.mxu0 0
      %8320 = vmatpush1.bf16.msra.mxu0 %v8255
      %8321 = vmatprep.subr.bf16.mxu0 0
      %8322 = vmatpush2.bf16.msra.mxu0 0
      %8323 = vmatprep.subr.bf16.mxu0 0
      %8324 = vmatpush2.bf16.msra.mxu0 0
      %8325 = vmatprep.subr.bf16.mxu0 0
      %8326 = vmatpush2.bf16.msra.mxu0 0
      %8327 = vmatprep.subr.bf16.mxu0 0
      %8328 = vmatpush2.bf16.msra.mxu0 0
      %8329 = vmatprep.subr.bf16.mxu0 0
      %8330 = vmatpush2.bf16.msra.mxu0 0
      %8331 = vmatprep.subr.bf16.mxu0 0
      %8332 = vmatpush2.bf16.msra.mxu0 0
      %8333 = vmatprep.subr.bf16.mxu0 0
      %8334 = vmatpush2.bf16.msra.mxu0 0
      %8335 = vmatprep.subr.bf16.mxu0 0
      %8336 = vmatpush2.bf16.msra.mxu0 0
      %8337 = vmatprep.mubr.bf16.mxu0 0
      %8338 = vmatmul.mubr.bf16.gmra.mxu0 %v8258
      %v8339 = vpop.f32.mrf.mxu0
      %v8340 = vadd.f32 0.0, %v8339
      %v8341 = vpop.f32.mrf.mxu0
      %v8342 = vpop.f32.mrf.mxu0
      %v8343 = vadd.f32 0.0, %v8342
      %v8344 = vpop.f32.mrf.mxu0
      %8345 = vmatprep.mubr.bf16.mxu0 0
      %8346 = vmatmul.mubr.bf16.gmra.mxu0 %v8261
      %v8347 = vpop.f32.mrf.mxu0
      %v8348 = vadd.f32 0.0, %v8347
      %v8349 = vpop.f32.mrf.mxu0
      %v8350 = vpop.f32.mrf.mxu0
      %v8351 = vadd.f32 0.0, %v8350
      %v8352 = vpop.f32.mrf.mxu0
      %8353 = vmatprep.mubr.bf16.mxu0 0
      %8354 = vmatmul.mubr.bf16.gmra.mxu0 %v8264
      %v8355 = vpop.f32.mrf.mxu0
      %v8356 = vadd.f32 0.0, %v8355
      %v8357 = vpop.f32.mrf.mxu0
      %v8358 = vpop.f32.mrf.mxu0
      %v8359 = vadd.f32 0.0, %v8358
      %v8360 = vpop.f32.mrf.mxu0
      %8361 = vmatprep.mubr.bf16.mxu0 0
      %8362 = vmatmul.mubr.bf16.gmra.mxu0 %v8267
      %v8363 = vpop.f32.mrf.mxu0
      %v8364 = vadd.f32 0.0, %v8363
      %v8365 = vpop.f32.mrf.mxu0
      %v8366 = vpop.f32.mrf.mxu0
      %v8367 = vadd.f32 0.0, %v8366
      %v8368 = vpop.f32.mrf.mxu0
      %8369 = vmatprep.mubr.bf16.mxu0 0
      %8370 = vmatmul.mubr.bf16.gmra.mxu0 %v8270
      %v8371 = vpop.f32.mrf.mxu0
      %v8372 = vadd.f32 0.0, %v8371
      %v8373 = vpop.f32.mrf.mxu0
      %v8374 = vpop.f32.mrf.mxu0
      %v8375 = vadd.f32 0.0, %v8374
      %v8376 = vpop.f32.mrf.mxu0
      %8377 = vmatprep.mubr.bf16.mxu0 0
      %8378 = vmatmul.mubr.bf16.gmra.mxu0 %v8273
      %v8379 = vpop.f32.mrf.mxu0
      %v8380 = vadd.f32 0.0, %v8379
      %v8381 = vpop.f32.mrf.mxu0
      %v8382 = vpop.f32.mrf.mxu0
      %v8383 = vadd.f32 0.0, %v8382
      %v8384 = vpop.f32.mrf.mxu0
      %8385 = vmatprep.mubr.bf16.mxu0 0
      %8386 = vmatmul.mubr.bf16.gmra.mxu0 %v8276
      %v8387 = vpop.f32.mrf.mxu0
      %v8388 = vadd.f32 0.0, %v8387
      %v8389 = vpop.f32.mrf.mxu0
      %v8390 = vpop.f32.mrf.mxu0
      %v8391 = vadd.f32 0.0, %v8390
      %v8392 = vpop.f32.mrf.mxu0
      %8393 = vmatprep.mubr.bf16.mxu0 0
      %8394 = vmatmul.mubr.bf16.gmra.mxu0 %v8279
      %v8395 = vpop.f32.mrf.mxu0
      %v8396 = vadd.f32 0.0, %v8395
      %v8397 = vpop.f32.mrf.mxu0
      %v8398 = vpop.f32.mrf.mxu0
      %v8399 = vadd.f32 0.0, %v8398
      %v8400 = vpop.f32.mrf.mxu0
      %8401 = vmatprep.mubr.bf16.mxu0 0
      %8402 = vmatmul.mubr.bf16.gmra.mxu0 %v8282
      %v8403 = vpop.f32.mrf.mxu0
      %v8404 = vadd.f32 0.0, %v8403
      %v8405 = vpop.f32.mrf.mxu0
      %v8406 = vpop.f32.mrf.mxu0
      %v8407 = vadd.f32 0.0, %v8406
      %v8408 = vpop.f32.mrf.mxu0
      %8409 = vmatprep.mubr.bf16.mxu0 0
      %8410 = vmatmul.mubr.bf16.gmra.mxu0 %v8285
      %v8411 = vpop.f32.mrf.mxu0
      %v8412 = vadd.f32 0.0, %v8411
      %v8413 = vpop.f32.mrf.mxu0
      %v8414 = vpop.f32.mrf.mxu0
      %v8415 = vadd.f32 0.0, %v8414
      %v8416 = vpop.f32.mrf.mxu0
      %8417 = vmatprep.mubr.bf16.mxu0 0
      %8418 = vmatmul.mubr.bf16.gmra.mxu0 %v8288
      %v8419 = vpop.f32.mrf.mxu0
      %v8420 = vadd.f32 0.0, %v8419
      %v8421 = vpop.f32.mrf.mxu0
      %v8422 = vpop.f32.mrf.mxu0
      %v8423 = vadd.f32 0.0, %v8422
      %v8424 = vpop.f32.mrf.mxu0
      %8425 = vmatprep.mubr.bf16.mxu0 0
      %8426 = vmatmul.mubr.bf16.gmra.mxu0 %v8291
      %v8427 = vpop.f32.mrf.mxu0
      %v8428 = vadd.f32 0.0, %v8427
      %v8429 = vpop.f32.mrf.mxu0
      %v8430 = vpop.f32.mrf.mxu0
      %v8431 = vadd.f32 0.0, %v8430
      %v8432 = vpop.f32.mrf.mxu0
      %8433 = vmatprep.mubr.bf16.mxu0 0
      %8434 = vmatmul.mubr.bf16.gmra.mxu0 %v8294
      %v8435 = vpop.f32.mrf.mxu0
      %v8436 = vadd.f32 0.0, %v8435
      %v8437 = vpop.f32.mrf.mxu0
      %v8438 = vpop.f32.mrf.mxu0
      %v8439 = vadd.f32 0.0, %v8438
      %v8440 = vpop.f32.mrf.mxu0
      %8441 = vmatprep.mubr.bf16.mxu0 0
      %8442 = vmatmul.mubr.bf16.gmra.mxu0 %v8297
      %v8443 = vpop.f32.mrf.mxu0
      %v8444 = vadd.f32 0.0, %v8443
      %v8445 = vpop.f32.mrf.mxu0
      %v8446 = vpop.f32.mrf.mxu0
      %v8447 = vadd.f32 0.0, %v8446
      %v8448 = vpop.f32.mrf.mxu0
      %8449 = vmatprep.mubr.bf16.mxu0 0
      %8450 = vmatmul.mubr.bf16.gmra.mxu0 %v8300
      %v8451 = vpop.f32.mrf.mxu0
      %v8452 = vadd.f32 0.0, %v8451
      %v8453 = vpop.f32.mrf.mxu0
      %v8454 = vpop.f32.mrf.mxu0
      %v8455 = vadd.f32 0.0, %v8454
      %v8456 = vpop.f32.mrf.mxu0
      %8457 = vmatprep.mubr.bf16.mxu0 0
      %8458 = vmatmul.mubr.bf16.gmra.mxu0 %v8303
      %v8459 = vpop.f32.mrf.mxu0
      %v8460 = vadd.f32 0.0, %v8459
      %v8461 = vpop.f32.mrf.mxu0
      %v8462 = vpop.f32.mrf.mxu0
      %v8463 = vadd.f32 0.0, %v8462
      %v8464 = vpop.f32.mrf.mxu0
      %8465 = vdwg.mxu0
      %v8466 = vadd.f32 %v7915, %v8340
      %v8467 = vadd.f32 %v7916, %v8343
      %v8468 = vadd.f32 %v7917, %v8348
      %v8469 = vadd.f32 %v7918, %v8351
      %v8470 = vadd.f32 %v7919, %v8356
      %v8471 = vadd.f32 %v7920, %v8359
      %v8472 = vadd.f32 %v7921, %v8364
      %v8473 = vadd.f32 %v7922, %v8367
      %v8474 = vadd.f32 %v7923, %v8372
      %v8475 = vadd.f32 %v7924, %v8375
      %v8476 = vadd.f32 %v7925, %v8380
      %v8477 = vadd.f32 %v7926, %v8383
      %v8478 = vadd.f32 %v7927, %v8388
      %v8479 = vadd.f32 %v7928, %v8391
      %v8480 = vadd.f32 %v7929, %v8396
      %v8481 = vadd.f32 %v7930, %v8399
      %v8482 = vadd.f32 %v7931, %v8404
      %v8483 = vadd.f32 %v7932, %v8407
      %v8484 = vadd.f32 %v7933, %v8412
      %v8485 = vadd.f32 %v7934, %v8415
      %v8486 = vadd.f32 %v7935, %v8420
      %v8487 = vadd.f32 %v7936, %v8423
      %v8488 = vadd.f32 %v7937, %v8428
      %v8489 = vadd.f32 %v7938, %v8431
      %v8490 = vadd.f32 %v7939, %v8436
      %v8491 = vadd.f32 %v7940, %v8439
      %v8492 = vadd.f32 %v7941, %v8444
      %v8493 = vadd.f32 %v7942, %v8447
      %v8494 = vadd.f32 %v7943, %v8452
      %v8495 = vadd.f32 %v7944, %v8455
      %v8496 = vadd.f32 %v7945, %v8460
      %v8497 = vadd.f32 %v7946, %v8463
      %v8498 = vld [vmem:[#allocation2 + $0x10] sm:$0xf]
      %v8499 = vld [vmem:[#allocation2 + $0x14] sm:$0xf]
      %v8500 = vld [vmem:[#allocation2 + $0x18] sm:$0xf]
      %v8501 = vld [vmem:[#allocation2 + $0x1c] sm:$0xf]
      %v8502 = vld [vmem:[#allocation2 + $0x20] sm:$0xf]
      %v8503 = vld [vmem:[#allocation2 + $0x24] sm:$0xf]
      %v8504 = vld [vmem:[#allocation2 + $0x28] sm:$0xf]
      %v8505 = vld [vmem:[#allocation2 + $0x2c] sm:$0xf]
      %v8506 = vld [vmem:[#allocation2 + $0x30] sm:$0xf]
      %v8507 = vld [vmem:[#allocation2 + $0x34] sm:$0xf]
      %v8508 = vld [vmem:[#allocation2 + $0x38] sm:$0xf]
      %v8509 = vld [vmem:[#allocation2 + $0x3c] sm:$0xf]
      %v8510 = vld [vmem:[#allocation2 + $0x40] sm:$0xf]
      %v8511 = vld [vmem:[#allocation2 + $0x44] sm:$0xf]
      %v8512 = vld [vmem:[#allocation2 + $0x48] sm:$0xf]
      %v8513 = vld [vmem:[#allocation2 + $0x4c] sm:$0xf]
      %v8514 = vld [vmem:[#allocation2 + $0x50] sm:$0xf]
      %v8515 = vld [vmem:[#allocation2 + $0x54] sm:$0xf]
      %v8516 = vld [vmem:[#allocation2 + $0x58] sm:$0xf]
      %v8517 = vld [vmem:[#allocation2 + $0x5c] sm:$0xf]
      %v8518 = vld [vmem:[#allocation2 + $0x60] sm:$0xf]
      %v8519 = vld [vmem:[#allocation2 + $0x64] sm:$0xf]
      %v8520 = vld [vmem:[#allocation2 + $0x68] sm:$0xf]
      %v8521 = vld [vmem:[#allocation2 + $0x6c] sm:$0xf]
      %v8522 = vld [vmem:[#allocation2 + $0x70] sm:$0xf]
      %v8523 = vld [vmem:[#allocation2 + $0x74] sm:$0xf]
      %v8524 = vld [vmem:[#allocation2 + $0x78] sm:$0xf]
      %v8525 = vld [vmem:[#allocation2 + $0x7c] sm:$0xf]
      %v8526 = vld [vmem:[#allocation2 + $0x80] sm:$0xf]
      %v8527 = vld [vmem:[#allocation2 + $0x84] sm:$0xf]
      %v8528 = vld [vmem:[#allocation2 + $0x88] sm:$0xf]
      %v8529 = vld [vmem:[#allocation2 + $0x8c] sm:$0xf]
      %v8530 = vld [vmem:[#allocation2 + $0x90] sm:$0x1]
      %v8531 = vsel %vm2795, %v8498, 0
      %v8532 = vsel %vm2796, %v8499, 0
      %v8533 = vsel %vm2797, %v8500, 0
      %v8534 = vsel %vm2798, %v8501, 0
      %v8535 = vsel %vm2799, %v8502, 0
      %v8536 = vsel %vm2800, %v8503, 0
      %v8537 = vsel %vm2801, %v8504, 0
      %v8538 = vsel %vm2802, %v8505, 0
      %v8539 = vsel %vm2803, %v8506, 0
      %v8540 = vsel %vm2804, %v8507, 0
      %v8541 = vsel %vm2805, %v8508, 0
      %v8542 = vsel %vm2806, %v8509, 0
      %v8543 = vsel %vm2807, %v8510, 0
      %v8544 = vsel %vm2808, %v8511, 0
      %v8545 = vsel %vm2809, %v8512, 0
      %v8546 = vsel %vm2810, %v8513, 0
      %v8547 = vsel %vm2811, %v8514, 0
      %v8548 = vsel %vm2812, %v8515, 0
      %v8549 = vsel %vm2813, %v8516, 0
      %v8550 = vsel %vm2814, %v8517, 0
      %v8551 = vsel %vm2815, %v8518, 0
      %v8552 = vsel %vm2816, %v8519, 0
      %v8553 = vsel %vm2817, %v8520, 0
      %v8554 = vsel %vm2818, %v8521, 0
      %v8555 = vsel %vm2819, %v8522, 0
      %v8556 = vsel %vm2820, %v8523, 0
      %v8557 = vsel %vm2821, %v8524, 0
      %v8558 = vsel %vm2822, %v8525, 0
      %v8559 = vsel %vm2823, %v8526, 0
      %v8560 = vsel %vm2824, %v8527, 0
      %v8561 = vsel %vm2825, %v8528, 0
      %v8562 = vsel %vm2826, %v8529, 0
      %v8563 = vsel %vm2827, %v8530, 0
      %s8564 = scalar_lea.vmem %s2, 96
      %v8565 = vld [vmem:[%s8564] sm:$0xf]
      %v8566 = vld [vmem:[%s8564 + $0x4] sm:$0xf]
      %v8600 = vunpack.c.l.b16 %v8531
      %v8601 = vunpack.c.l.b16 %v8532
      %v8602 = vunpack.c.l.b16 %v8533
      %v8603 = vunpack.c.l.b16 %v8534
      %v8604 = vunpack.c.l.b16 %v8535
      %v8605 = vunpack.c.l.b16 %v8536
      %v8606 = vunpack.c.l.b16 %v8537
      %v8607 = vunpack.c.l.b16 %v8538
      %v8608 = vunpack.c.l.b16 %v8539
      %v8609 = vunpack.c.l.b16 %v8540
      %v8610 = vunpack.c.l.b16 %v8541
      %v8611 = vunpack.c.l.b16 %v8542
      %v8612 = vunpack.c.l.b16 %v8543
      %v8613 = vunpack.c.l.b16 %v8544
      %v8614 = vunpack.c.l.b16 %v8545
      %v8615 = vunpack.c.l.b16 %v8546
      %v8616 = vunpack.c.l.b16 %v8547
      %v8617 = vunpack.c.l.b16 %v8548
      %v8618 = vunpack.c.l.b16 %v8549
      %v8619 = vunpack.c.l.b16 %v8550
      %v8620 = vunpack.c.l.b16 %v8551
      %v8621 = vunpack.c.l.b16 %v8552
      %v8622 = vunpack.c.l.b16 %v8553
      %v8623 = vunpack.c.l.b16 %v8554
      %v8624 = vunpack.c.l.b16 %v8555
      %v8625 = vunpack.c.l.b16 %v8556
      %v8626 = vunpack.c.l.b16 %v8557
      %v8627 = vunpack.c.l.b16 %v8558
      %v8628 = vunpack.c.l.b16 %v8559
      %v8629 = vunpack.c.l.b16 %v8560
      %v8630 = vunpack.c.l.b16 %v8561
      %v8631 = vunpack.c.l.b16 %v8562
      %v8632 = vunpack.c.l.b16 %v8563
      %v8633 = vpack.c.b16 %v8601, %v8600
      %v8634 = vpack.c.b16 %v8603, %v8602
      %v8635 = vpack.c.b16 %v8605, %v8604
      %v8636 = vpack.c.b16 %v8607, %v8606
      %v8637 = vpack.c.b16 %v8609, %v8608
      %v8638 = vpack.c.b16 %v8611, %v8610
      %v8639 = vpack.c.b16 %v8613, %v8612
      %v8640 = vpack.c.b16 %v8615, %v8614
      %v8641 = vpack.c.b16 %v8617, %v8616
      %v8642 = vpack.c.b16 %v8619, %v8618
      %v8643 = vpack.c.b16 %v8621, %v8620
      %v8644 = vpack.c.b16 %v8623, %v8622
      %v8645 = vpack.c.b16 %v8625, %v8624
      %v8646 = vpack.c.b16 %v8627, %v8626
      %v8647 = vpack.c.b16 %v8629, %v8628
      %v8648 = vpack.c.b16 %v8631, %v8630
      %v8649 = vpack.c.b16 %v8632, %v8632
      %v8651 = vshrl.u32 %v8633, 16
      %v8653 = vshll.u32 %v8633, 16
      %v8655 = vrot.slane %v8653, 1
      %v8656 = vor.u32 %v8651, %v8655
      %v8658 = vshll.u32 %v8634, 16
      %v8660 = vrot.slane %v8658, 1
      %v8661 = vsel %vm2947, %v8656, %v8660
      %v8662 = vshrl.u32 %v8634, 16
      %v8664 = vor.u32 %v8662, %v8660
      %v8666 = vshll.u32 %v8635, 16
      %v8668 = vrot.slane %v8666, 1
      %v8669 = vsel %vm2947, %v8664, %v8668
      %v8670 = vshrl.u32 %v8635, 16
      %v8672 = vor.u32 %v8670, %v8668
      %v8674 = vshll.u32 %v8636, 16
      %v8676 = vrot.slane %v8674, 1
      %v8677 = vsel %vm2947, %v8672, %v8676
      %v8678 = vshrl.u32 %v8636, 16
      %v8680 = vor.u32 %v8678, %v8676
      %v8682 = vshll.u32 %v8637, 16
      %v8684 = vrot.slane %v8682, 1
      %v8685 = vsel %vm2947, %v8680, %v8684
      %v8686 = vshrl.u32 %v8637, 16
      %v8688 = vor.u32 %v8686, %v8684
      %v8690 = vshll.u32 %v8638, 16
      %v8692 = vrot.slane %v8690, 1
      %v8693 = vsel %vm2947, %v8688, %v8692
      %v8694 = vshrl.u32 %v8638, 16
      %v8696 = vor.u32 %v8694, %v8692
      %v8698 = vshll.u32 %v8639, 16
      %v8700 = vrot.slane %v8698, 1
      %v8701 = vsel %vm2947, %v8696, %v8700
      %v8702 = vshrl.u32 %v8639, 16
      %v8704 = vor.u32 %v8702, %v8700
      %v8706 = vshll.u32 %v8640, 16
      %v8708 = vrot.slane %v8706, 1
      %v8709 = vsel %vm2947, %v8704, %v8708
      %v8710 = vshrl.u32 %v8640, 16
      %v8712 = vor.u32 %v8710, %v8708
      %v8714 = vshll.u32 %v8641, 16
      %v8716 = vrot.slane %v8714, 1
      %v8717 = vsel %vm2947, %v8712, %v8716
      %v8718 = vshrl.u32 %v8641, 16
      %v8720 = vor.u32 %v8718, %v8716
      %v8722 = vshll.u32 %v8642, 16
      %v8724 = vrot.slane %v8722, 1
      %v8725 = vsel %vm2947, %v8720, %v8724
      %v8726 = vshrl.u32 %v8642, 16
      %v8728 = vor.u32 %v8726, %v8724
      %v8730 = vshll.u32 %v8643, 16
      %v8732 = vrot.slane %v8730, 1
      %v8733 = vsel %vm2947, %v8728, %v8732
      %v8734 = vshrl.u32 %v8643, 16
      %v8736 = vor.u32 %v8734, %v8732
      %v8738 = vshll.u32 %v8644, 16
      %v8740 = vrot.slane %v8738, 1
      %v8741 = vsel %vm2947, %v8736, %v8740
      %v8742 = vshrl.u32 %v8644, 16
      %v8744 = vor.u32 %v8742, %v8740
      %v8746 = vshll.u32 %v8645, 16
      %v8748 = vrot.slane %v8746, 1
      %v8749 = vsel %vm2947, %v8744, %v8748
      %v8750 = vshrl.u32 %v8645, 16
      %v8752 = vor.u32 %v8750, %v8748
      %v8754 = vshll.u32 %v8646, 16
      %v8756 = vrot.slane %v8754, 1
      %v8757 = vsel %vm2947, %v8752, %v8756
      %v8758 = vshrl.u32 %v8646, 16
      %v8760 = vor.u32 %v8758, %v8756
      %v8762 = vshll.u32 %v8647, 16
      %v8764 = vrot.slane %v8762, 1
      %v8765 = vsel %vm2947, %v8760, %v8764
      %v8766 = vshrl.u32 %v8647, 16
      %v8768 = vor.u32 %v8766, %v8764
      %v8770 = vshll.u32 %v8648, 16
      %v8772 = vrot.slane %v8770, 1
      %v8773 = vsel %vm2947, %v8768, %v8772
      %v8774 = vshrl.u32 %v8648, 16
      %v8776 = vor.u32 %v8774, %v8772
      %v8778 = vshll.u32 %v8649, 16
      %v8780 = vrot.slane %v8778, 1
      %v8781 = vsel %vm2947, %v8776, %v8780
      %v8784 = vunpack.c.l.b16 %v8565
      %v8785 = vunpack.c.l.b16 %v8566
      %v8786 = vpack.c.b16 %v8785, %v8784
      %v8789 = vsel %vm1554, %v8661, 0
      %v8792 = vsel %vm1554, %v8669, 0
      %v8795 = vsel %vm1554, %v8677, 0
      %v8798 = vsel %vm1554, %v8685, 0
      %v8801 = vsel %vm1554, %v8693, 0
      %v8804 = vsel %vm1554, %v8701, 0
      %v8807 = vsel %vm1554, %v8709, 0
      %v8810 = vsel %vm1554, %v8717, 0
      %v8813 = vsel %vm1554, %v8725, 0
      %v8816 = vsel %vm1554, %v8733, 0
      %v8819 = vsel %vm1554, %v8741, 0
      %v8822 = vsel %vm1554, %v8749, 0
      %v8825 = vsel %vm1554, %v8757, 0
      %v8828 = vsel %vm1554, %v8765, 0
      %v8831 = vsel %vm1554, %v8773, 0
      %v8834 = vsel %vm1554, %v8781, 0
      %8836 = vmatprep.subr.bf16.mxu0 0
      %8837 = vmatpush1.bf16.msra.mxu0 0
      %8838 = vmatprep.subr.bf16.mxu0 0
      %8839 = vmatpush1.bf16.msra.mxu0 0
      %8840 = vmatprep.subr.bf16.mxu0 0
      %8841 = vmatpush1.bf16.msra.mxu0 0
      %8842 = vmatprep.subr.bf16.mxu0 0
      %8843 = vmatpush1.bf16.msra.mxu0 0
      %8844 = vmatprep.subr.bf16.mxu0 0
      %8845 = vmatpush1.bf16.msra.mxu0 0
      %8846 = vmatprep.subr.bf16.mxu0 0
      %8847 = vmatpush1.bf16.msra.mxu0 0
      %8848 = vmatprep.subr.bf16.mxu0 0
      %8849 = vmatpush1.bf16.msra.mxu0 0
      %8850 = vmatprep.subr.bf16.mxu0 0
      %8851 = vmatpush1.bf16.msra.mxu0 %v8786
      %8852 = vmatprep.subr.bf16.mxu0 0
      %8853 = vmatpush2.bf16.msra.mxu0 0
      %8854 = vmatprep.subr.bf16.mxu0 0
      %8855 = vmatpush2.bf16.msra.mxu0 0
      %8856 = vmatprep.subr.bf16.mxu0 0
      %8857 = vmatpush2.bf16.msra.mxu0 0
      %8858 = vmatprep.subr.bf16.mxu0 0
      %8859 = vmatpush2.bf16.msra.mxu0 0
      %8860 = vmatprep.subr.bf16.mxu0 0
      %8861 = vmatpush2.bf16.msra.mxu0 0
      %8862 = vmatprep.subr.bf16.mxu0 0
      %8863 = vmatpush2.bf16.msra.mxu0 0
      %8864 = vmatprep.subr.bf16.mxu0 0
      %8865 = vmatpush2.bf16.msra.mxu0 0
      %8866 = vmatprep.subr.bf16.mxu0 0
      %8867 = vmatpush2.bf16.msra.mxu0 0
      %8868 = vmatprep.mubr.bf16.mxu0 0
      %8869 = vmatmul.mubr.bf16.gmra.mxu0 %v8789
      %v8870 = vpop.f32.mrf.mxu0
      %v8871 = vadd.f32 0.0, %v8870
      %v8872 = vpop.f32.mrf.mxu0
      %v8873 = vpop.f32.mrf.mxu0
      %v8874 = vadd.f32 0.0, %v8873
      %v8875 = vpop.f32.mrf.mxu0
      %8876 = vmatprep.mubr.bf16.mxu0 0
      %8877 = vmatmul.mubr.bf16.gmra.mxu0 %v8792
      %v8878 = vpop.f32.mrf.mxu0
      %v8879 = vadd.f32 0.0, %v8878
      %v8880 = vpop.f32.mrf.mxu0
      %v8881 = vpop.f32.mrf.mxu0
      %v8882 = vadd.f32 0.0, %v8881
      %v8883 = vpop.f32.mrf.mxu0
      %8884 = vmatprep.mubr.bf16.mxu0 0
      %8885 = vmatmul.mubr.bf16.gmra.mxu0 %v8795
      %v8886 = vpop.f32.mrf.mxu0
      %v8887 = vadd.f32 0.0, %v8886
      %v8888 = vpop.f32.mrf.mxu0
      %v8889 = vpop.f32.mrf.mxu0
      %v8890 = vadd.f32 0.0, %v8889
      %v8891 = vpop.f32.mrf.mxu0
      %8892 = vmatprep.mubr.bf16.mxu0 0
      %8893 = vmatmul.mubr.bf16.gmra.mxu0 %v8798
      %v8894 = vpop.f32.mrf.mxu0
      %v8895 = vadd.f32 0.0, %v8894
      %v8896 = vpop.f32.mrf.mxu0
      %v8897 = vpop.f32.mrf.mxu0
      %v8898 = vadd.f32 0.0, %v8897
      %v8899 = vpop.f32.mrf.mxu0
      %8900 = vmatprep.mubr.bf16.mxu0 0
      %8901 = vmatmul.mubr.bf16.gmra.mxu0 %v8801
      %v8902 = vpop.f32.mrf.mxu0
      %v8903 = vadd.f32 0.0, %v8902
      %v8904 = vpop.f32.mrf.mxu0
      %v8905 = vpop.f32.mrf.mxu0
      %v8906 = vadd.f32 0.0, %v8905
      %v8907 = vpop.f32.mrf.mxu0
      %8908 = vmatprep.mubr.bf16.mxu0 0
      %8909 = vmatmul.mubr.bf16.gmra.mxu0 %v8804
      %v8910 = vpop.f32.mrf.mxu0
      %v8911 = vadd.f32 0.0, %v8910
      %v8912 = vpop.f32.mrf.mxu0
      %v8913 = vpop.f32.mrf.mxu0
      %v8914 = vadd.f32 0.0, %v8913
      %v8915 = vpop.f32.mrf.mxu0
      %8916 = vmatprep.mubr.bf16.mxu0 0
      %8917 = vmatmul.mubr.bf16.gmra.mxu0 %v8807
      %v8918 = vpop.f32.mrf.mxu0
      %v8919 = vadd.f32 0.0, %v8918
      %v8920 = vpop.f32.mrf.mxu0
      %v8921 = vpop.f32.mrf.mxu0
      %v8922 = vadd.f32 0.0, %v8921
      %v8923 = vpop.f32.mrf.mxu0
      %8924 = vmatprep.mubr.bf16.mxu0 0
      %8925 = vmatmul.mubr.bf16.gmra.mxu0 %v8810
      %v8926 = vpop.f32.mrf.mxu0
      %v8927 = vadd.f32 0.0, %v8926
      %v8928 = vpop.f32.mrf.mxu0
      %v8929 = vpop.f32.mrf.mxu0
      %v8930 = vadd.f32 0.0, %v8929
      %v8931 = vpop.f32.mrf.mxu0
      %8932 = vmatprep.mubr.bf16.mxu0 0
      %8933 = vmatmul.mubr.bf16.gmra.mxu0 %v8813
      %v8934 = vpop.f32.mrf.mxu0
      %v8935 = vadd.f32 0.0, %v8934
      %v8936 = vpop.f32.mrf.mxu0
      %v8937 = vpop.f32.mrf.mxu0
      %v8938 = vadd.f32 0.0, %v8937
      %v8939 = vpop.f32.mrf.mxu0
      %8940 = vmatprep.mubr.bf16.mxu0 0
      %8941 = vmatmul.mubr.bf16.gmra.mxu0 %v8816
      %v8942 = vpop.f32.mrf.mxu0
      %v8943 = vadd.f32 0.0, %v8942
      %v8944 = vpop.f32.mrf.mxu0
      %v8945 = vpop.f32.mrf.mxu0
      %v8946 = vadd.f32 0.0, %v8945
      %v8947 = vpop.f32.mrf.mxu0
      %8948 = vmatprep.mubr.bf16.mxu0 0
      %8949 = vmatmul.mubr.bf16.gmra.mxu0 %v8819
      %v8950 = vpop.f32.mrf.mxu0
      %v8951 = vadd.f32 0.0, %v8950
      %v8952 = vpop.f32.mrf.mxu0
      %v8953 = vpop.f32.mrf.mxu0
      %v8954 = vadd.f32 0.0, %v8953
      %v8955 = vpop.f32.mrf.mxu0
      %8956 = vmatprep.mubr.bf16.mxu0 0
      %8957 = vmatmul.mubr.bf16.gmra.mxu0 %v8822
      %v8958 = vpop.f32.mrf.mxu0
      %v8959 = vadd.f32 0.0, %v8958
      %v8960 = vpop.f32.mrf.mxu0
      %v8961 = vpop.f32.mrf.mxu0
      %v8962 = vadd.f32 0.0, %v8961
      %v8963 = vpop.f32.mrf.mxu0
      %8964 = vmatprep.mubr.bf16.mxu0 0
      %8965 = vmatmul.mubr.bf16.gmra.mxu0 %v8825
      %v8966 = vpop.f32.mrf.mxu0
      %v8967 = vadd.f32 0.0, %v8966
      %v8968 = vpop.f32.mrf.mxu0
      %v8969 = vpop.f32.mrf.mxu0
      %v8970 = vadd.f32 0.0, %v8969
      %v8971 = vpop.f32.mrf.mxu0
      %8972 = vmatprep.mubr.bf16.mxu0 0
      %8973 = vmatmul.mubr.bf16.gmra.mxu0 %v8828
      %v8974 = vpop.f32.mrf.mxu0
      %v8975 = vadd.f32 0.0, %v8974
      %v8976 = vpop.f32.mrf.mxu0
      %v8977 = vpop.f32.mrf.mxu0
      %v8978 = vadd.f32 0.0, %v8977
      %v8979 = vpop.f32.mrf.mxu0
      %8980 = vmatprep.mubr.bf16.mxu0 0
      %8981 = vmatmul.mubr.bf16.gmra.mxu0 %v8831
      %v8982 = vpop.f32.mrf.mxu0
      %v8983 = vadd.f32 0.0, %v8982
      %v8984 = vpop.f32.mrf.mxu0
      %v8985 = vpop.f32.mrf.mxu0
      %v8986 = vadd.f32 0.0, %v8985
      %v8987 = vpop.f32.mrf.mxu0
      %8988 = vmatprep.mubr.bf16.mxu0 0
      %8989 = vmatmul.mubr.bf16.gmra.mxu0 %v8834
      %v8990 = vpop.f32.mrf.mxu0
      %v8991 = vadd.f32 0.0, %v8990
      %v8992 = vpop.f32.mrf.mxu0
      %v8993 = vpop.f32.mrf.mxu0
      %v8994 = vadd.f32 0.0, %v8993
      %v8995 = vpop.f32.mrf.mxu0
      %8996 = vdwg.mxu0
      %v8997 = vadd.f32 %v8466, %v8871
      %v8998 = vadd.f32 %v8467, %v8874
      %v8999 = vadd.f32 %v8468, %v8879
      %v9000 = vadd.f32 %v8469, %v8882
      %v9001 = vadd.f32 %v8470, %v8887
      %v9002 = vadd.f32 %v8471, %v8890
      %v9003 = vadd.f32 %v8472, %v8895
      %v9004 = vadd.f32 %v8473, %v8898
      %v9005 = vadd.f32 %v8474, %v8903
      %v9006 = vadd.f32 %v8475, %v8906
      %v9007 = vadd.f32 %v8476, %v8911
      %v9008 = vadd.f32 %v8477, %v8914
      %v9009 = vadd.f32 %v8478, %v8919
      %v9010 = vadd.f32 %v8479, %v8922
      %v9011 = vadd.f32 %v8480, %v8927
      %v9012 = vadd.f32 %v8481, %v8930
      %v9013 = vadd.f32 %v8482, %v8935
      %v9014 = vadd.f32 %v8483, %v8938
      %v9015 = vadd.f32 %v8484, %v8943
      %v9016 = vadd.f32 %v8485, %v8946
      %v9017 = vadd.f32 %v8486, %v8951
      %v9018 = vadd.f32 %v8487, %v8954
      %v9019 = vadd.f32 %v8488, %v8959
      %v9020 = vadd.f32 %v8489, %v8962
      %v9021 = vadd.f32 %v8490, %v8967
      %v9022 = vadd.f32 %v8491, %v8970
      %v9023 = vadd.f32 %v8492, %v8975
      %v9024 = vadd.f32 %v8493, %v8978
      %v9025 = vadd.f32 %v8494, %v8983
      %v9026 = vadd.f32 %v8495, %v8986
      %v9027 = vadd.f32 %v8496, %v8991
      %v9028 = vadd.f32 %v8497, %v8994
      %v9029 = vld [vmem:[#allocation2 + $0x14] sm:$0x8]
      %v9030 = vld [vmem:[#allocation2 + $0x18] sm:$0xf]
      %v9031 = vld [vmem:[#allocation2 + $0x1c] sm:$0xf]
      %v9032 = vld [vmem:[#allocation2 + $0x20] sm:$0xf]
      %v9033 = vld [vmem:[#allocation2 + $0x24] sm:$0xf]
      %v9034 = vld [vmem:[#allocation2 + $0x28] sm:$0xf]
      %v9035 = vld [vmem:[#allocation2 + $0x2c] sm:$0xf]
      %v9036 = vld [vmem:[#allocation2 + $0x30] sm:$0xf]
      %v9037 = vld [vmem:[#allocation2 + $0x34] sm:$0xf]
      %v9038 = vld [vmem:[#allocation2 + $0x38] sm:$0xf]
      %v9039 = vld [vmem:[#allocation2 + $0x3c] sm:$0xf]
      %v9040 = vld [vmem:[#allocation2 + $0x40] sm:$0xf]
      %v9041 = vld [vmem:[#allocation2 + $0x44] sm:$0xf]
      %v9042 = vld [vmem:[#allocation2 + $0x48] sm:$0xf]
      %v9043 = vld [vmem:[#allocation2 + $0x4c] sm:$0xf]
      %v9044 = vld [vmem:[#allocation2 + $0x50] sm:$0xf]
      %v9045 = vld [vmem:[#allocation2 + $0x54] sm:$0xf]
      %v9046 = vld [vmem:[#allocation2 + $0x58] sm:$0xf]
      %v9047 = vld [vmem:[#allocation2 + $0x5c] sm:$0xf]
      %v9048 = vld [vmem:[#allocation2 + $0x60] sm:$0xf]
      %v9049 = vld [vmem:[#allocation2 + $0x64] sm:$0xf]
      %v9050 = vld [vmem:[#allocation2 + $0x68] sm:$0xf]
      %v9051 = vld [vmem:[#allocation2 + $0x6c] sm:$0xf]
      %v9052 = vld [vmem:[#allocation2 + $0x70] sm:$0xf]
      %v9053 = vld [vmem:[#allocation2 + $0x74] sm:$0xf]
      %v9054 = vld [vmem:[#allocation2 + $0x78] sm:$0xf]
      %v9055 = vld [vmem:[#allocation2 + $0x7c] sm:$0xf]
      %v9056 = vld [vmem:[#allocation2 + $0x80] sm:$0xf]
      %v9057 = vld [vmem:[#allocation2 + $0x84] sm:$0xf]
      %v9058 = vld [vmem:[#allocation2 + $0x88] sm:$0xf]
      %v9059 = vld [vmem:[#allocation2 + $0x8c] sm:$0xf]
      %v9060 = vld [vmem:[#allocation2 + $0x90] sm:$0xf]
      %v9061 = vld [vmem:[#allocation2 + $0x94] sm:$0xf]
      %v9062 = vsel %vm1244, %v9029, 0
      %v9063 = vsel %vm1245, %v9030, 0
      %v9064 = vsel %vm1246, %v9031, 0
      %v9065 = vsel %vm1247, %v9032, 0
      %v9066 = vsel %vm1248, %v9033, 0
      %v9067 = vsel %vm1249, %v9034, 0
      %v9068 = vsel %vm1250, %v9035, 0
      %v9069 = vsel %vm1251, %v9036, 0
      %v9070 = vsel %vm1252, %v9037, 0
      %v9071 = vsel %vm1253, %v9038, 0
      %v9072 = vsel %vm1254, %v9039, 0
      %v9073 = vsel %vm1255, %v9040, 0
      %v9074 = vsel %vm1256, %v9041, 0
      %v9075 = vsel %vm1257, %v9042, 0
      %v9076 = vsel %vm1258, %v9043, 0
      %v9077 = vsel %vm1259, %v9044, 0
      %v9078 = vsel %vm1260, %v9045, 0
      %v9079 = vsel %vm1261, %v9046, 0
      %v9080 = vsel %vm1262, %v9047, 0
      %v9081 = vsel %vm1263, %v9048, 0
      %v9082 = vsel %vm1264, %v9049, 0
      %v9083 = vsel %vm1265, %v9050, 0
      %v9084 = vsel %vm1266, %v9051, 0
      %v9085 = vsel %vm1267, %v9052, 0
      %v9086 = vsel %vm1268, %v9053, 0
      %v9087 = vsel %vm1269, %v9054, 0
      %v9088 = vsel %vm1270, %v9055, 0
      %v9089 = vsel %vm1271, %v9056, 0
      %v9090 = vsel %vm1272, %v9057, 0
      %v9091 = vsel %vm1273, %v9058, 0
      %v9092 = vsel %vm1274, %v9059, 0
      %v9093 = vsel %vm1275, %v9060, 0
      %v9094 = vsel %vm1276, %v9061, 0
      %s9095 = scalar_lea.vmem %s2, 104
      %v9096 = vld [vmem:[%s9095] sm:$0xf]
      %v9097 = vld [vmem:[%s9095 + $0x4] sm:$0xf]
      %v9131 = vunpack.c.l.b16 %v9062
      %v9132 = vunpack.c.l.b16 %v9063
      %v9133 = vunpack.c.l.b16 %v9064
      %v9134 = vunpack.c.l.b16 %v9065
      %v9135 = vunpack.c.l.b16 %v9066
      %v9136 = vunpack.c.l.b16 %v9067
      %v9137 = vunpack.c.l.b16 %v9068
      %v9138 = vunpack.c.l.b16 %v9069
      %v9139 = vunpack.c.l.b16 %v9070
      %v9140 = vunpack.c.l.b16 %v9071
      %v9141 = vunpack.c.l.b16 %v9072
      %v9142 = vunpack.c.l.b16 %v9073
      %v9143 = vunpack.c.l.b16 %v9074
      %v9144 = vunpack.c.l.b16 %v9075
      %v9145 = vunpack.c.l.b16 %v9076
      %v9146 = vunpack.c.l.b16 %v9077
      %v9147 = vunpack.c.l.b16 %v9078
      %v9148 = vunpack.c.l.b16 %v9079
      %v9149 = vunpack.c.l.b16 %v9080
      %v9150 = vunpack.c.l.b16 %v9081
      %v9151 = vunpack.c.l.b16 %v9082
      %v9152 = vunpack.c.l.b16 %v9083
      %v9153 = vunpack.c.l.b16 %v9084
      %v9154 = vunpack.c.l.b16 %v9085
      %v9155 = vunpack.c.l.b16 %v9086
      %v9156 = vunpack.c.l.b16 %v9087
      %v9157 = vunpack.c.l.b16 %v9088
      %v9158 = vunpack.c.l.b16 %v9089
      %v9159 = vunpack.c.l.b16 %v9090
      %v9160 = vunpack.c.l.b16 %v9091
      %v9161 = vunpack.c.l.b16 %v9092
      %v9162 = vunpack.c.l.b16 %v9093
      %v9163 = vunpack.c.l.b16 %v9094
      %v9164 = vpack.c.b16 %v9132, %v9131
      %v9165 = vpack.c.b16 %v9134, %v9133
      %v9166 = vpack.c.b16 %v9136, %v9135
      %v9167 = vpack.c.b16 %v9138, %v9137
      %v9168 = vpack.c.b16 %v9140, %v9139
      %v9169 = vpack.c.b16 %v9142, %v9141
      %v9170 = vpack.c.b16 %v9144, %v9143
      %v9171 = vpack.c.b16 %v9146, %v9145
      %v9172 = vpack.c.b16 %v9148, %v9147
      %v9173 = vpack.c.b16 %v9150, %v9149
      %v9174 = vpack.c.b16 %v9152, %v9151
      %v9175 = vpack.c.b16 %v9154, %v9153
      %v9176 = vpack.c.b16 %v9156, %v9155
      %v9177 = vpack.c.b16 %v9158, %v9157
      %v9178 = vpack.c.b16 %v9160, %v9159
      %v9179 = vpack.c.b16 %v9162, %v9161
      %v9180 = vpack.c.b16 %v9163, %v9163
      %v9182 = vshrl.u32 %v9164, 16
      %v9184 = vrot.slane %v9182, 3
      %v9185 = vshll.u32 %v9164, 16
      %v9187 = vrot.slane %v9185, 4
      %v9188 = vor.u32 %v9184, %v9187
      %v9190 = vshrl.u32 %v9165, 16
      %v9192 = vrot.slane %v9190, 3
      %v9193 = vshll.u32 %v9165, 16
      %v9195 = vrot.slane %v9193, 4
      %v9196 = vor.u32 %v9192, %v9195
      %v9197 = vsel %vm1395, %v9188, %v9196
      %v9199 = vshrl.u32 %v9166, 16
      %v9201 = vrot.slane %v9199, 3
      %v9202 = vshll.u32 %v9166, 16
      %v9204 = vrot.slane %v9202, 4
      %v9205 = vor.u32 %v9201, %v9204
      %v9206 = vsel %vm1395, %v9196, %v9205
      %v9208 = vshrl.u32 %v9167, 16
      %v9210 = vrot.slane %v9208, 3
      %v9211 = vshll.u32 %v9167, 16
      %v9213 = vrot.slane %v9211, 4
      %v9214 = vor.u32 %v9210, %v9213
      %v9215 = vsel %vm1395, %v9205, %v9214
      %v9217 = vshrl.u32 %v9168, 16
      %v9219 = vrot.slane %v9217, 3
      %v9220 = vshll.u32 %v9168, 16
      %v9222 = vrot.slane %v9220, 4
      %v9223 = vor.u32 %v9219, %v9222
      %v9224 = vsel %vm1395, %v9214, %v9223
      %v9226 = vshrl.u32 %v9169, 16
      %v9228 = vrot.slane %v9226, 3
      %v9229 = vshll.u32 %v9169, 16
      %v9231 = vrot.slane %v9229, 4
      %v9232 = vor.u32 %v9228, %v9231
      %v9233 = vsel %vm1395, %v9223, %v9232
      %v9235 = vshrl.u32 %v9170, 16
      %v9237 = vrot.slane %v9235, 3
      %v9238 = vshll.u32 %v9170, 16
      %v9240 = vrot.slane %v9238, 4
      %v9241 = vor.u32 %v9237, %v9240
      %v9242 = vsel %vm1395, %v9232, %v9241
      %v9244 = vshrl.u32 %v9171, 16
      %v9246 = vrot.slane %v9244, 3
      %v9247 = vshll.u32 %v9171, 16
      %v9249 = vrot.slane %v9247, 4
      %v9250 = vor.u32 %v9246, %v9249
      %v9251 = vsel %vm1395, %v9241, %v9250
      %v9253 = vshrl.u32 %v9172, 16
      %v9255 = vrot.slane %v9253, 3
      %v9256 = vshll.u32 %v9172, 16
      %v9258 = vrot.slane %v9256, 4
      %v9259 = vor.u32 %v9255, %v9258
      %v9260 = vsel %vm1395, %v9250, %v9259
      %v9262 = vshrl.u32 %v9173, 16
      %v9264 = vrot.slane %v9262, 3
      %v9265 = vshll.u32 %v9173, 16
      %v9267 = vrot.slane %v9265, 4
      %v9268 = vor.u32 %v9264, %v9267
      %v9269 = vsel %vm1395, %v9259, %v9268
      %v9271 = vshrl.u32 %v9174, 16
      %v9273 = vrot.slane %v9271, 3
      %v9274 = vshll.u32 %v9174, 16
      %v9276 = vrot.slane %v9274, 4
      %v9277 = vor.u32 %v9273, %v9276
      %v9278 = vsel %vm1395, %v9268, %v9277
      %v9280 = vshrl.u32 %v9175, 16
      %v9282 = vrot.slane %v9280, 3
      %v9283 = vshll.u32 %v9175, 16
      %v9285 = vrot.slane %v9283, 4
      %v9286 = vor.u32 %v9282, %v9285
      %v9287 = vsel %vm1395, %v9277, %v9286
      %v9289 = vshrl.u32 %v9176, 16
      %v9291 = vrot.slane %v9289, 3
      %v9292 = vshll.u32 %v9176, 16
      %v9294 = vrot.slane %v9292, 4
      %v9295 = vor.u32 %v9291, %v9294
      %v9296 = vsel %vm1395, %v9286, %v9295
      %v9298 = vshrl.u32 %v9177, 16
      %v9300 = vrot.slane %v9298, 3
      %v9301 = vshll.u32 %v9177, 16
      %v9303 = vrot.slane %v9301, 4
      %v9304 = vor.u32 %v9300, %v9303
      %v9305 = vsel %vm1395, %v9295, %v9304
      %v9307 = vshrl.u32 %v9178, 16
      %v9309 = vrot.slane %v9307, 3
      %v9310 = vshll.u32 %v9178, 16
      %v9312 = vrot.slane %v9310, 4
      %v9313 = vor.u32 %v9309, %v9312
      %v9314 = vsel %vm1395, %v9304, %v9313
      %v9316 = vshrl.u32 %v9179, 16
      %v9318 = vrot.slane %v9316, 3
      %v9319 = vshll.u32 %v9179, 16
      %v9321 = vrot.slane %v9319, 4
      %v9322 = vor.u32 %v9318, %v9321
      %v9323 = vsel %vm1395, %v9313, %v9322
      %v9325 = vshrl.u32 %v9180, 16
      %v9327 = vrot.slane %v9325, 3
      %v9328 = vshll.u32 %v9180, 16
      %v9330 = vrot.slane %v9328, 4
      %v9331 = vor.u32 %v9327, %v9330
      %v9332 = vsel %vm1395, %v9322, %v9331
      %v9335 = vunpack.c.l.b16 %v9096
      %v9336 = vunpack.c.l.b16 %v9097
      %v9337 = vpack.c.b16 %v9336, %v9335
      %v9340 = vsel %vm1554, %v9197, 0
      %v9343 = vsel %vm1554, %v9206, 0
      %v9346 = vsel %vm1554, %v9215, 0
      %v9349 = vsel %vm1554, %v9224, 0
      %v9352 = vsel %vm1554, %v9233, 0
      %v9355 = vsel %vm1554, %v9242, 0
      %v9358 = vsel %vm1554, %v9251, 0
      %v9361 = vsel %vm1554, %v9260, 0
      %v9364 = vsel %vm1554, %v9269, 0
      %v9367 = vsel %vm1554, %v9278, 0
      %v9370 = vsel %vm1554, %v9287, 0
      %v9373 = vsel %vm1554, %v9296, 0
      %v9376 = vsel %vm1554, %v9305, 0
      %v9379 = vsel %vm1554, %v9314, 0
      %v9382 = vsel %vm1554, %v9323, 0
      %v9385 = vsel %vm1554, %v9332, 0
      %9387 = vmatprep.subr.bf16.mxu0 0
      %9388 = vmatpush1.bf16.msra.mxu0 0
      %9389 = vmatprep.subr.bf16.mxu0 0
      %9390 = vmatpush1.bf16.msra.mxu0 0
      %9391 = vmatprep.subr.bf16.mxu0 0
      %9392 = vmatpush1.bf16.msra.mxu0 0
      %9393 = vmatprep.subr.bf16.mxu0 0
      %9394 = vmatpush1.bf16.msra.mxu0 0
      %9395 = vmatprep.subr.bf16.mxu0 0
      %9396 = vmatpush1.bf16.msra.mxu0 0
      %9397 = vmatprep.subr.bf16.mxu0 0
      %9398 = vmatpush1.bf16.msra.mxu0 0
      %9399 = vmatprep.subr.bf16.mxu0 0
      %9400 = vmatpush1.bf16.msra.mxu0 0
      %9401 = vmatprep.subr.bf16.mxu0 0
      %9402 = vmatpush1.bf16.msra.mxu0 %v9337
      %9403 = vmatprep.subr.bf16.mxu0 0
      %9404 = vmatpush2.bf16.msra.mxu0 0
      %9405 = vmatprep.subr.bf16.mxu0 0
      %9406 = vmatpush2.bf16.msra.mxu0 0
      %9407 = vmatprep.subr.bf16.mxu0 0
      %9408 = vmatpush2.bf16.msra.mxu0 0
      %9409 = vmatprep.subr.bf16.mxu0 0
      %9410 = vmatpush2.bf16.msra.mxu0 0
      %9411 = vmatprep.subr.bf16.mxu0 0
      %9412 = vmatpush2.bf16.msra.mxu0 0
      %9413 = vmatprep.subr.bf16.mxu0 0
      %9414 = vmatpush2.bf16.msra.mxu0 0
      %9415 = vmatprep.subr.bf16.mxu0 0
      %9416 = vmatpush2.bf16.msra.mxu0 0
      %9417 = vmatprep.subr.bf16.mxu0 0
      %9418 = vmatpush2.bf16.msra.mxu0 0
      %9419 = vmatprep.mubr.bf16.mxu0 0
      %9420 = vmatmul.mubr.bf16.gmra.mxu0 %v9340
      %v9421 = vpop.f32.mrf.mxu0
      %v9422 = vadd.f32 0.0, %v9421
      %v9423 = vpop.f32.mrf.mxu0
      %v9424 = vpop.f32.mrf.mxu0
      %v9425 = vadd.f32 0.0, %v9424
      %v9426 = vpop.f32.mrf.mxu0
      %9427 = vmatprep.mubr.bf16.mxu0 0
      %9428 = vmatmul.mubr.bf16.gmra.mxu0 %v9343
      %v9429 = vpop.f32.mrf.mxu0
      %v9430 = vadd.f32 0.0, %v9429
      %v9431 = vpop.f32.mrf.mxu0
      %v9432 = vpop.f32.mrf.mxu0
      %v9433 = vadd.f32 0.0, %v9432
      %v9434 = vpop.f32.mrf.mxu0
      %9435 = vmatprep.mubr.bf16.mxu0 0
      %9436 = vmatmul.mubr.bf16.gmra.mxu0 %v9346
      %v9437 = vpop.f32.mrf.mxu0
      %v9438 = vadd.f32 0.0, %v9437
      %v9439 = vpop.f32.mrf.mxu0
      %v9440 = vpop.f32.mrf.mxu0
      %v9441 = vadd.f32 0.0, %v9440
      %v9442 = vpop.f32.mrf.mxu0
      %9443 = vmatprep.mubr.bf16.mxu0 0
      %9444 = vmatmul.mubr.bf16.gmra.mxu0 %v9349
      %v9445 = vpop.f32.mrf.mxu0
      %v9446 = vadd.f32 0.0, %v9445
      %v9447 = vpop.f32.mrf.mxu0
      %v9448 = vpop.f32.mrf.mxu0
      %v9449 = vadd.f32 0.0, %v9448
      %v9450 = vpop.f32.mrf.mxu0
      %9451 = vmatprep.mubr.bf16.mxu0 0
      %9452 = vmatmul.mubr.bf16.gmra.mxu0 %v9352
      %v9453 = vpop.f32.mrf.mxu0
      %v9454 = vadd.f32 0.0, %v9453
      %v9455 = vpop.f32.mrf.mxu0
      %v9456 = vpop.f32.mrf.mxu0
      %v9457 = vadd.f32 0.0, %v9456
      %v9458 = vpop.f32.mrf.mxu0
      %9459 = vmatprep.mubr.bf16.mxu0 0
      %9460 = vmatmul.mubr.bf16.gmra.mxu0 %v9355
      %v9461 = vpop.f32.mrf.mxu0
      %v9462 = vadd.f32 0.0, %v9461
      %v9463 = vpop.f32.mrf.mxu0
      %v9464 = vpop.f32.mrf.mxu0
      %v9465 = vadd.f32 0.0, %v9464
      %v9466 = vpop.f32.mrf.mxu0
      %9467 = vmatprep.mubr.bf16.mxu0 0
      %9468 = vmatmul.mubr.bf16.gmra.mxu0 %v9358
      %v9469 = vpop.f32.mrf.mxu0
      %v9470 = vadd.f32 0.0, %v9469
      %v9471 = vpop.f32.mrf.mxu0
      %v9472 = vpop.f32.mrf.mxu0
      %v9473 = vadd.f32 0.0, %v9472
      %v9474 = vpop.f32.mrf.mxu0
      %9475 = vmatprep.mubr.bf16.mxu0 0
      %9476 = vmatmul.mubr.bf16.gmra.mxu0 %v9361
      %v9477 = vpop.f32.mrf.mxu0
      %v9478 = vadd.f32 0.0, %v9477
      %v9479 = vpop.f32.mrf.mxu0
      %v9480 = vpop.f32.mrf.mxu0
      %v9481 = vadd.f32 0.0, %v9480
      %v9482 = vpop.f32.mrf.mxu0
      %9483 = vmatprep.mubr.bf16.mxu0 0
      %9484 = vmatmul.mubr.bf16.gmra.mxu0 %v9364
      %v9485 = vpop.f32.mrf.mxu0
      %v9486 = vadd.f32 0.0, %v9485
      %v9487 = vpop.f32.mrf.mxu0
      %v9488 = vpop.f32.mrf.mxu0
      %v9489 = vadd.f32 0.0, %v9488
      %v9490 = vpop.f32.mrf.mxu0
      %9491 = vmatprep.mubr.bf16.mxu0 0
      %9492 = vmatmul.mubr.bf16.gmra.mxu0 %v9367
      %v9493 = vpop.f32.mrf.mxu0
      %v9494 = vadd.f32 0.0, %v9493
      %v9495 = vpop.f32.mrf.mxu0
      %v9496 = vpop.f32.mrf.mxu0
      %v9497 = vadd.f32 0.0, %v9496
      %v9498 = vpop.f32.mrf.mxu0
      %9499 = vmatprep.mubr.bf16.mxu0 0
      %9500 = vmatmul.mubr.bf16.gmra.mxu0 %v9370
      %v9501 = vpop.f32.mrf.mxu0
      %v9502 = vadd.f32 0.0, %v9501
      %v9503 = vpop.f32.mrf.mxu0
      %v9504 = vpop.f32.mrf.mxu0
      %v9505 = vadd.f32 0.0, %v9504
      %v9506 = vpop.f32.mrf.mxu0
      %9507 = vmatprep.mubr.bf16.mxu0 0
      %9508 = vmatmul.mubr.bf16.gmra.mxu0 %v9373
      %v9509 = vpop.f32.mrf.mxu0
      %v9510 = vadd.f32 0.0, %v9509
      %v9511 = vpop.f32.mrf.mxu0
      %v9512 = vpop.f32.mrf.mxu0
      %v9513 = vadd.f32 0.0, %v9512
      %v9514 = vpop.f32.mrf.mxu0
      %9515 = vmatprep.mubr.bf16.mxu0 0
      %9516 = vmatmul.mubr.bf16.gmra.mxu0 %v9376
      %v9517 = vpop.f32.mrf.mxu0
      %v9518 = vadd.f32 0.0, %v9517
      %v9519 = vpop.f32.mrf.mxu0
      %v9520 = vpop.f32.mrf.mxu0
      %v9521 = vadd.f32 0.0, %v9520
      %v9522 = vpop.f32.mrf.mxu0
      %9523 = vmatprep.mubr.bf16.mxu0 0
      %9524 = vmatmul.mubr.bf16.gmra.mxu0 %v9379
      %v9525 = vpop.f32.mrf.mxu0
      %v9526 = vadd.f32 0.0, %v9525
      %v9527 = vpop.f32.mrf.mxu0
      %v9528 = vpop.f32.mrf.mxu0
      %v9529 = vadd.f32 0.0, %v9528
      %v9530 = vpop.f32.mrf.mxu0
      %9531 = vmatprep.mubr.bf16.mxu0 0
      %9532 = vmatmul.mubr.bf16.gmra.mxu0 %v9382
      %v9533 = vpop.f32.mrf.mxu0
      %v9534 = vadd.f32 0.0, %v9533
      %v9535 = vpop.f32.mrf.mxu0
      %v9536 = vpop.f32.mrf.mxu0
      %v9537 = vadd.f32 0.0, %v9536
      %v9538 = vpop.f32.mrf.mxu0
      %9539 = vmatprep.mubr.bf16.mxu0 0
      %9540 = vmatmul.mubr.bf16.gmra.mxu0 %v9385
      %v9541 = vpop.f32.mrf.mxu0
      %v9542 = vadd.f32 0.0, %v9541
      %v9543 = vpop.f32.mrf.mxu0
      %v9544 = vpop.f32.mrf.mxu0
      %v9545 = vadd.f32 0.0, %v9544
      %v9546 = vpop.f32.mrf.mxu0
      %9547 = vdwg.mxu0
      %v9548 = vadd.f32 %v8997, %v9422
      %v9549 = vadd.f32 %v8998, %v9425
      %v9550 = vadd.f32 %v8999, %v9430
      %v9551 = vadd.f32 %v9000, %v9433
      %v9552 = vadd.f32 %v9001, %v9438
      %v9553 = vadd.f32 %v9002, %v9441
      %v9554 = vadd.f32 %v9003, %v9446
      %v9555 = vadd.f32 %v9004, %v9449
      %v9556 = vadd.f32 %v9005, %v9454
      %v9557 = vadd.f32 %v9006, %v9457
      %v9558 = vadd.f32 %v9007, %v9462
      %v9559 = vadd.f32 %v9008, %v9465
      %v9560 = vadd.f32 %v9009, %v9470
      %v9561 = vadd.f32 %v9010, %v9473
      %v9562 = vadd.f32 %v9011, %v9478
      %v9563 = vadd.f32 %v9012, %v9481
      %v9564 = vadd.f32 %v9013, %v9486
      %v9565 = vadd.f32 %v9014, %v9489
      %v9566 = vadd.f32 %v9015, %v9494
      %v9567 = vadd.f32 %v9016, %v9497
      %v9568 = vadd.f32 %v9017, %v9502
      %v9569 = vadd.f32 %v9018, %v9505
      %v9570 = vadd.f32 %v9019, %v9510
      %v9571 = vadd.f32 %v9020, %v9513
      %v9572 = vadd.f32 %v9021, %v9518
      %v9573 = vadd.f32 %v9022, %v9521
      %v9574 = vadd.f32 %v9023, %v9526
      %v9575 = vadd.f32 %v9024, %v9529
      %v9576 = vadd.f32 %v9025, %v9534
      %v9577 = vadd.f32 %v9026, %v9537
      %v9578 = vadd.f32 %v9027, %v9542
      %v9579 = vadd.f32 %v9028, %v9545
      %s9580 = scalar_lea.vmem %s2, 112
      %v9581 = vld [vmem:[%s9580] sm:$0xf]
      %v9582 = vld [vmem:[%s9580 + $0x4] sm:$0xf]
      %v9615 = vunpack.c.l.b16 %v9030
      %v9616 = vunpack.c.l.b16 %v9031
      %v9617 = vunpack.c.l.b16 %v9032
      %v9618 = vunpack.c.l.b16 %v9033
      %v9619 = vunpack.c.l.b16 %v9034
      %v9620 = vunpack.c.l.b16 %v9035
      %v9621 = vunpack.c.l.b16 %v9036
      %v9622 = vunpack.c.l.b16 %v9037
      %v9623 = vunpack.c.l.b16 %v9038
      %v9624 = vunpack.c.l.b16 %v9039
      %v9625 = vunpack.c.l.b16 %v9040
      %v9626 = vunpack.c.l.b16 %v9041
      %v9627 = vunpack.c.l.b16 %v9042
      %v9628 = vunpack.c.l.b16 %v9043
      %v9629 = vunpack.c.l.b16 %v9044
      %v9630 = vunpack.c.l.b16 %v9045
      %v9631 = vunpack.c.l.b16 %v9046
      %v9632 = vunpack.c.l.b16 %v9047
      %v9633 = vunpack.c.l.b16 %v9048
      %v9634 = vunpack.c.l.b16 %v9049
      %v9635 = vunpack.c.l.b16 %v9050
      %v9636 = vunpack.c.l.b16 %v9051
      %v9637 = vunpack.c.l.b16 %v9052
      %v9638 = vunpack.c.l.b16 %v9053
      %v9639 = vunpack.c.l.b16 %v9054
      %v9640 = vunpack.c.l.b16 %v9055
      %v9641 = vunpack.c.l.b16 %v9056
      %v9642 = vunpack.c.l.b16 %v9057
      %v9643 = vunpack.c.l.b16 %v9058
      %v9644 = vunpack.c.l.b16 %v9059
      %v9645 = vunpack.c.l.b16 %v9060
      %v9646 = vunpack.c.l.b16 %v9061
      %v9647 = vpack.c.b16 %v9616, %v9615
      %v9648 = vpack.c.b16 %v9618, %v9617
      %v9649 = vpack.c.b16 %v9620, %v9619
      %v9650 = vpack.c.b16 %v9622, %v9621
      %v9651 = vpack.c.b16 %v9624, %v9623
      %v9652 = vpack.c.b16 %v9626, %v9625
      %v9653 = vpack.c.b16 %v9628, %v9627
      %v9654 = vpack.c.b16 %v9630, %v9629
      %v9655 = vpack.c.b16 %v9632, %v9631
      %v9656 = vpack.c.b16 %v9634, %v9633
      %v9657 = vpack.c.b16 %v9636, %v9635
      %v9658 = vpack.c.b16 %v9638, %v9637
      %v9659 = vpack.c.b16 %v9640, %v9639
      %v9660 = vpack.c.b16 %v9642, %v9641
      %v9661 = vpack.c.b16 %v9644, %v9643
      %v9662 = vpack.c.b16 %v9646, %v9645
      %v9665 = vunpack.c.l.b16 %v9581
      %v9666 = vunpack.c.l.b16 %v9582
      %v9667 = vpack.c.b16 %v9666, %v9665
      %v9670 = vsel %vm1554, %v9647, 0
      %v9673 = vsel %vm1554, %v9648, 0
      %v9676 = vsel %vm1554, %v9649, 0
      %v9679 = vsel %vm1554, %v9650, 0
      %v9682 = vsel %vm1554, %v9651, 0
      %v9685 = vsel %vm1554, %v9652, 0
      %v9688 = vsel %vm1554, %v9653, 0
      %v9691 = vsel %vm1554, %v9654, 0
      %v9694 = vsel %vm1554, %v9655, 0
      %v9697 = vsel %vm1554, %v9656, 0
      %v9700 = vsel %vm1554, %v9657, 0
      %v9703 = vsel %vm1554, %v9658, 0
      %v9706 = vsel %vm1554, %v9659, 0
      %v9709 = vsel %vm1554, %v9660, 0
      %v9712 = vsel %vm1554, %v9661, 0
      %v9715 = vsel %vm1554, %v9662, 0
      %9717 = vmatprep.subr.bf16.mxu0 0
      %9718 = vmatpush1.bf16.msra.mxu0 0
      %9719 = vmatprep.subr.bf16.mxu0 0
      %9720 = vmatpush1.bf16.msra.mxu0 0
      %9721 = vmatprep.subr.bf16.mxu0 0
      %9722 = vmatpush1.bf16.msra.mxu0 0
      %9723 = vmatprep.subr.bf16.mxu0 0
      %9724 = vmatpush1.bf16.msra.mxu0 0
      %9725 = vmatprep.subr.bf16.mxu0 0
      %9726 = vmatpush1.bf16.msra.mxu0 0
      %9727 = vmatprep.subr.bf16.mxu0 0
      %9728 = vmatpush1.bf16.msra.mxu0 0
      %9729 = vmatprep.subr.bf16.mxu0 0
      %9730 = vmatpush1.bf16.msra.mxu0 0
      %9731 = vmatprep.subr.bf16.mxu0 0
      %9732 = vmatpush1.bf16.msra.mxu0 %v9667
      %9733 = vmatprep.subr.bf16.mxu0 0
      %9734 = vmatpush2.bf16.msra.mxu0 0
      %9735 = vmatprep.subr.bf16.mxu0 0
      %9736 = vmatpush2.bf16.msra.mxu0 0
      %9737 = vmatprep.subr.bf16.mxu0 0
      %9738 = vmatpush2.bf16.msra.mxu0 0
      %9739 = vmatprep.subr.bf16.mxu0 0
      %9740 = vmatpush2.bf16.msra.mxu0 0
      %9741 = vmatprep.subr.bf16.mxu0 0
      %9742 = vmatpush2.bf16.msra.mxu0 0
      %9743 = vmatprep.subr.bf16.mxu0 0
      %9744 = vmatpush2.bf16.msra.mxu0 0
      %9745 = vmatprep.subr.bf16.mxu0 0
      %9746 = vmatpush2.bf16.msra.mxu0 0
      %9747 = vmatprep.subr.bf16.mxu0 0
      %9748 = vmatpush2.bf16.msra.mxu0 0
      %9749 = vmatprep.mubr.bf16.mxu0 0
      %9750 = vmatmul.mubr.bf16.gmra.mxu0 %v9670
      %v9751 = vpop.f32.mrf.mxu0
      %v9752 = vadd.f32 0.0, %v9751
      %v9753 = vpop.f32.mrf.mxu0
      %v9754 = vpop.f32.mrf.mxu0
      %v9755 = vadd.f32 0.0, %v9754
      %v9756 = vpop.f32.mrf.mxu0
      %9757 = vmatprep.mubr.bf16.mxu0 0
      %9758 = vmatmul.mubr.bf16.gmra.mxu0 %v9673
      %v9759 = vpop.f32.mrf.mxu0
      %v9760 = vadd.f32 0.0, %v9759
      %v9761 = vpop.f32.mrf.mxu0
      %v9762 = vpop.f32.mrf.mxu0
      %v9763 = vadd.f32 0.0, %v9762
      %v9764 = vpop.f32.mrf.mxu0
      %9765 = vmatprep.mubr.bf16.mxu0 0
      %9766 = vmatmul.mubr.bf16.gmra.mxu0 %v9676
      %v9767 = vpop.f32.mrf.mxu0
      %v9768 = vadd.f32 0.0, %v9767
      %v9769 = vpop.f32.mrf.mxu0
      %v9770 = vpop.f32.mrf.mxu0
      %v9771 = vadd.f32 0.0, %v9770
      %v9772 = vpop.f32.mrf.mxu0
      %9773 = vmatprep.mubr.bf16.mxu0 0
      %9774 = vmatmul.mubr.bf16.gmra.mxu0 %v9679
      %v9775 = vpop.f32.mrf.mxu0
      %v9776 = vadd.f32 0.0, %v9775
      %v9777 = vpop.f32.mrf.mxu0
      %v9778 = vpop.f32.mrf.mxu0
      %v9779 = vadd.f32 0.0, %v9778
      %v9780 = vpop.f32.mrf.mxu0
      %9781 = vmatprep.mubr.bf16.mxu0 0
      %9782 = vmatmul.mubr.bf16.gmra.mxu0 %v9682
      %v9783 = vpop.f32.mrf.mxu0
      %v9784 = vadd.f32 0.0, %v9783
      %v9785 = vpop.f32.mrf.mxu0
      %v9786 = vpop.f32.mrf.mxu0
      %v9787 = vadd.f32 0.0, %v9786
      %v9788 = vpop.f32.mrf.mxu0
      %9789 = vmatprep.mubr.bf16.mxu0 0
      %9790 = vmatmul.mubr.bf16.gmra.mxu0 %v9685
      %v9791 = vpop.f32.mrf.mxu0
      %v9792 = vadd.f32 0.0, %v9791
      %v9793 = vpop.f32.mrf.mxu0
      %v9794 = vpop.f32.mrf.mxu0
      %v9795 = vadd.f32 0.0, %v9794
      %v9796 = vpop.f32.mrf.mxu0
      %9797 = vmatprep.mubr.bf16.mxu0 0
      %9798 = vmatmul.mubr.bf16.gmra.mxu0 %v9688
      %v9799 = vpop.f32.mrf.mxu0
      %v9800 = vadd.f32 0.0, %v9799
      %v9801 = vpop.f32.mrf.mxu0
      %v9802 = vpop.f32.mrf.mxu0
      %v9803 = vadd.f32 0.0, %v9802
      %v9804 = vpop.f32.mrf.mxu0
      %9805 = vmatprep.mubr.bf16.mxu0 0
      %9806 = vmatmul.mubr.bf16.gmra.mxu0 %v9691
      %v9807 = vpop.f32.mrf.mxu0
      %v9808 = vadd.f32 0.0, %v9807
      %v9809 = vpop.f32.mrf.mxu0
      %v9810 = vpop.f32.mrf.mxu0
      %v9811 = vadd.f32 0.0, %v9810
      %v9812 = vpop.f32.mrf.mxu0
      %9813 = vmatprep.mubr.bf16.mxu0 0
      %9814 = vmatmul.mubr.bf16.gmra.mxu0 %v9694
      %v9815 = vpop.f32.mrf.mxu0
      %v9816 = vadd.f32 0.0, %v9815
      %v9817 = vpop.f32.mrf.mxu0
      %v9818 = vpop.f32.mrf.mxu0
      %v9819 = vadd.f32 0.0, %v9818
      %v9820 = vpop.f32.mrf.mxu0
      %9821 = vmatprep.mubr.bf16.mxu0 0
      %9822 = vmatmul.mubr.bf16.gmra.mxu0 %v9697
      %v9823 = vpop.f32.mrf.mxu0
      %v9824 = vadd.f32 0.0, %v9823
      %v9825 = vpop.f32.mrf.mxu0
      %v9826 = vpop.f32.mrf.mxu0
      %v9827 = vadd.f32 0.0, %v9826
      %v9828 = vpop.f32.mrf.mxu0
      %9829 = vmatprep.mubr.bf16.mxu0 0
      %9830 = vmatmul.mubr.bf16.gmra.mxu0 %v9700
      %v9831 = vpop.f32.mrf.mxu0
      %v9832 = vadd.f32 0.0, %v9831
      %v9833 = vpop.f32.mrf.mxu0
      %v9834 = vpop.f32.mrf.mxu0
      %v9835 = vadd.f32 0.0, %v9834
      %v9836 = vpop.f32.mrf.mxu0
      %9837 = vmatprep.mubr.bf16.mxu0 0
      %9838 = vmatmul.mubr.bf16.gmra.mxu0 %v9703
      %v9839 = vpop.f32.mrf.mxu0
      %v9840 = vadd.f32 0.0, %v9839
      %v9841 = vpop.f32.mrf.mxu0
      %v9842 = vpop.f32.mrf.mxu0
      %v9843 = vadd.f32 0.0, %v9842
      %v9844 = vpop.f32.mrf.mxu0
      %9845 = vmatprep.mubr.bf16.mxu0 0
      %9846 = vmatmul.mubr.bf16.gmra.mxu0 %v9706
      %v9847 = vpop.f32.mrf.mxu0
      %v9848 = vadd.f32 0.0, %v9847
      %v9849 = vpop.f32.mrf.mxu0
      %v9850 = vpop.f32.mrf.mxu0
      %v9851 = vadd.f32 0.0, %v9850
      %v9852 = vpop.f32.mrf.mxu0
      %9853 = vmatprep.mubr.bf16.mxu0 0
      %9854 = vmatmul.mubr.bf16.gmra.mxu0 %v9709
      %v9855 = vpop.f32.mrf.mxu0
      %v9856 = vadd.f32 0.0, %v9855
      %v9857 = vpop.f32.mrf.mxu0
      %v9858 = vpop.f32.mrf.mxu0
      %v9859 = vadd.f32 0.0, %v9858
      %v9860 = vpop.f32.mrf.mxu0
      %9861 = vmatprep.mubr.bf16.mxu0 0
      %9862 = vmatmul.mubr.bf16.gmra.mxu0 %v9712
      %v9863 = vpop.f32.mrf.mxu0
      %v9864 = vadd.f32 0.0, %v9863
      %v9865 = vpop.f32.mrf.mxu0
      %v9866 = vpop.f32.mrf.mxu0
      %v9867 = vadd.f32 0.0, %v9866
      %v9868 = vpop.f32.mrf.mxu0
      %9869 = vmatprep.mubr.bf16.mxu0 0
      %9870 = vmatmul.mubr.bf16.gmra.mxu0 %v9715
      %v9871 = vpop.f32.mrf.mxu0
      %v9872 = vadd.f32 0.0, %v9871
      %v9873 = vpop.f32.mrf.mxu0
      %v9874 = vpop.f32.mrf.mxu0
      %v9875 = vadd.f32 0.0, %v9874
      %v9876 = vpop.f32.mrf.mxu0
      %9877 = vdwg.mxu0
      %v9878 = vadd.f32 %v9548, %v9752
      %v9879 = vadd.f32 %v9549, %v9755
      %v9880 = vadd.f32 %v9550, %v9760
      %v9881 = vadd.f32 %v9551, %v9763
      %v9882 = vadd.f32 %v9552, %v9768
      %v9883 = vadd.f32 %v9553, %v9771
      %v9884 = vadd.f32 %v9554, %v9776
      %v9885 = vadd.f32 %v9555, %v9779
      %v9886 = vadd.f32 %v9556, %v9784
      %v9887 = vadd.f32 %v9557, %v9787
      %v9888 = vadd.f32 %v9558, %v9792
      %v9889 = vadd.f32 %v9559, %v9795
      %v9890 = vadd.f32 %v9560, %v9800
      %v9891 = vadd.f32 %v9561, %v9803
      %v9892 = vadd.f32 %v9562, %v9808
      %v9893 = vadd.f32 %v9563, %v9811
      %v9894 = vadd.f32 %v9564, %v9816
      %v9895 = vadd.f32 %v9565, %v9819
      %v9896 = vadd.f32 %v9566, %v9824
      %v9897 = vadd.f32 %v9567, %v9827
      %v9898 = vadd.f32 %v9568, %v9832
      %v9899 = vadd.f32 %v9569, %v9835
      %v9900 = vadd.f32 %v9570, %v9840
      %v9901 = vadd.f32 %v9571, %v9843
      %v9902 = vadd.f32 %v9572, %v9848
      %v9903 = vadd.f32 %v9573, %v9851
      %v9904 = vadd.f32 %v9574, %v9856
      %v9905 = vadd.f32 %v9575, %v9859
      %v9906 = vadd.f32 %v9576, %v9864
      %v9907 = vadd.f32 %v9577, %v9867
      %v9908 = vadd.f32 %v9578, %v9872
      %v9909 = vadd.f32 %v9579, %v9875
      %v9910 = vld [vmem:[#allocation2 + $0x18] sm:$0xf]
      %v9911 = vld [vmem:[#allocation2 + $0x1c] sm:$0xf]
      %v9912 = vld [vmem:[#allocation2 + $0x20] sm:$0xf]
      %v9913 = vld [vmem:[#allocation2 + $0x24] sm:$0xf]
      %v9914 = vld [vmem:[#allocation2 + $0x28] sm:$0xf]
      %v9915 = vld [vmem:[#allocation2 + $0x2c] sm:$0xf]
      %v9916 = vld [vmem:[#allocation2 + $0x30] sm:$0xf]
      %v9917 = vld [vmem:[#allocation2 + $0x34] sm:$0xf]
      %v9918 = vld [vmem:[#allocation2 + $0x38] sm:$0xf]
      %v9919 = vld [vmem:[#allocation2 + $0x3c] sm:$0xf]
      %v9920 = vld [vmem:[#allocation2 + $0x40] sm:$0xf]
      %v9921 = vld [vmem:[#allocation2 + $0x44] sm:$0xf]
      %v9922 = vld [vmem:[#allocation2 + $0x48] sm:$0xf]
      %v9923 = vld [vmem:[#allocation2 + $0x4c] sm:$0xf]
      %v9924 = vld [vmem:[#allocation2 + $0x50] sm:$0xf]
      %v9925 = vld [vmem:[#allocation2 + $0x54] sm:$0xf]
      %v9926 = vld [vmem:[#allocation2 + $0x58] sm:$0xf]
      %v9927 = vld [vmem:[#allocation2 + $0x5c] sm:$0xf]
      %v9928 = vld [vmem:[#allocation2 + $0x60] sm:$0xf]
      %v9929 = vld [vmem:[#allocation2 + $0x64] sm:$0xf]
      %v9930 = vld [vmem:[#allocation2 + $0x68] sm:$0xf]
      %v9931 = vld [vmem:[#allocation2 + $0x6c] sm:$0xf]
      %v9932 = vld [vmem:[#allocation2 + $0x70] sm:$0xf]
      %v9933 = vld [vmem:[#allocation2 + $0x74] sm:$0xf]
      %v9934 = vld [vmem:[#allocation2 + $0x78] sm:$0xf]
      %v9935 = vld [vmem:[#allocation2 + $0x7c] sm:$0xf]
      %v9936 = vld [vmem:[#allocation2 + $0x80] sm:$0xf]
      %v9937 = vld [vmem:[#allocation2 + $0x84] sm:$0xf]
      %v9938 = vld [vmem:[#allocation2 + $0x88] sm:$0xf]
      %v9939 = vld [vmem:[#allocation2 + $0x8c] sm:$0xf]
      %v9940 = vld [vmem:[#allocation2 + $0x90] sm:$0xf]
      %v9941 = vld [vmem:[#allocation2 + $0x94] sm:$0xf]
      %v9942 = vld [vmem:[#allocation2 + $0x98] sm:$0x1]
      %v9943 = vsel %vm2795, %v9910, 0
      %v9944 = vsel %vm2796, %v9911, 0
      %v9945 = vsel %vm2797, %v9912, 0
      %v9946 = vsel %vm2798, %v9913, 0
      %v9947 = vsel %vm2799, %v9914, 0
      %v9948 = vsel %vm2800, %v9915, 0
      %v9949 = vsel %vm2801, %v9916, 0
      %v9950 = vsel %vm2802, %v9917, 0
      %v9951 = vsel %vm2803, %v9918, 0
      %v9952 = vsel %vm2804, %v9919, 0
      %v9953 = vsel %vm2805, %v9920, 0
      %v9954 = vsel %vm2806, %v9921, 0
      %v9955 = vsel %vm2807, %v9922, 0
      %v9956 = vsel %vm2808, %v9923, 0
      %v9957 = vsel %vm2809, %v9924, 0
      %v9958 = vsel %vm2810, %v9925, 0
      %v9959 = vsel %vm2811, %v9926, 0
      %v9960 = vsel %vm2812, %v9927, 0
      %v9961 = vsel %vm2813, %v9928, 0
      %v9962 = vsel %vm2814, %v9929, 0
      %v9963 = vsel %vm2815, %v9930, 0
      %v9964 = vsel %vm2816, %v9931, 0
      %v9965 = vsel %vm2817, %v9932, 0
      %v9966 = vsel %vm2818, %v9933, 0
      %v9967 = vsel %vm2819, %v9934, 0
      %v9968 = vsel %vm2820, %v9935, 0
      %v9969 = vsel %vm2821, %v9936, 0
      %v9970 = vsel %vm2822, %v9937, 0
      %v9971 = vsel %vm2823, %v9938, 0
      %v9972 = vsel %vm2824, %v9939, 0
      %v9973 = vsel %vm2825, %v9940, 0
      %v9974 = vsel %vm2826, %v9941, 0
      %v9975 = vsel %vm2827, %v9942, 0
      %s9976 = scalar_lea.vmem %s2, 120
      %v9977 = vld [vmem:[%s9976] sm:$0xf]
      %v9978 = vld [vmem:[%s9976 + $0x4] sm:$0xf]
      %v10012 = vunpack.c.l.b16 %v9943
      %v10013 = vunpack.c.l.b16 %v9944
      %v10014 = vunpack.c.l.b16 %v9945
      %v10015 = vunpack.c.l.b16 %v9946
      %v10016 = vunpack.c.l.b16 %v9947
      %v10017 = vunpack.c.l.b16 %v9948
      %v10018 = vunpack.c.l.b16 %v9949
      %v10019 = vunpack.c.l.b16 %v9950
      %v10020 = vunpack.c.l.b16 %v9951
      %v10021 = vunpack.c.l.b16 %v9952
      %v10022 = vunpack.c.l.b16 %v9953
      %v10023 = vunpack.c.l.b16 %v9954
      %v10024 = vunpack.c.l.b16 %v9955
      %v10025 = vunpack.c.l.b16 %v9956
      %v10026 = vunpack.c.l.b16 %v9957
      %v10027 = vunpack.c.l.b16 %v9958
      %v10028 = vunpack.c.l.b16 %v9959
      %v10029 = vunpack.c.l.b16 %v9960
      %v10030 = vunpack.c.l.b16 %v9961
      %v10031 = vunpack.c.l.b16 %v9962
      %v10032 = vunpack.c.l.b16 %v9963
      %v10033 = vunpack.c.l.b16 %v9964
      %v10034 = vunpack.c.l.b16 %v9965
      %v10035 = vunpack.c.l.b16 %v9966
      %v10036 = vunpack.c.l.b16 %v9967
      %v10037 = vunpack.c.l.b16 %v9968
      %v10038 = vunpack.c.l.b16 %v9969
      %v10039 = vunpack.c.l.b16 %v9970
      %v10040 = vunpack.c.l.b16 %v9971
      %v10041 = vunpack.c.l.b16 %v9972
      %v10042 = vunpack.c.l.b16 %v9973
      %v10043 = vunpack.c.l.b16 %v9974
      %v10044 = vunpack.c.l.b16 %v9975
      %v10045 = vpack.c.b16 %v10013, %v10012
      %v10046 = vpack.c.b16 %v10015, %v10014
      %v10047 = vpack.c.b16 %v10017, %v10016
      %v10048 = vpack.c.b16 %v10019, %v10018
      %v10049 = vpack.c.b16 %v10021, %v10020
      %v10050 = vpack.c.b16 %v10023, %v10022
      %v10051 = vpack.c.b16 %v10025, %v10024
      %v10052 = vpack.c.b16 %v10027, %v10026
      %v10053 = vpack.c.b16 %v10029, %v10028
      %v10054 = vpack.c.b16 %v10031, %v10030
      %v10055 = vpack.c.b16 %v10033, %v10032
      %v10056 = vpack.c.b16 %v10035, %v10034
      %v10057 = vpack.c.b16 %v10037, %v10036
      %v10058 = vpack.c.b16 %v10039, %v10038
      %v10059 = vpack.c.b16 %v10041, %v10040
      %v10060 = vpack.c.b16 %v10043, %v10042
      %v10061 = vpack.c.b16 %v10044, %v10044
      %v10063 = vshrl.u32 %v10045, 16
      %v10065 = vshll.u32 %v10045, 16
      %v10067 = vrot.slane %v10065, 1
      %v10068 = vor.u32 %v10063, %v10067
      %v10070 = vshll.u32 %v10046, 16
      %v10072 = vrot.slane %v10070, 1
      %v10073 = vsel %vm2947, %v10068, %v10072
      %v10074 = vshrl.u32 %v10046, 16
      %v10076 = vor.u32 %v10074, %v10072
      %v10078 = vshll.u32 %v10047, 16
      %v10080 = vrot.slane %v10078, 1
      %v10081 = vsel %vm2947, %v10076, %v10080
      %v10082 = vshrl.u32 %v10047, 16
      %v10084 = vor.u32 %v10082, %v10080
      %v10086 = vshll.u32 %v10048, 16
      %v10088 = vrot.slane %v10086, 1
      %v10089 = vsel %vm2947, %v10084, %v10088
      %v10090 = vshrl.u32 %v10048, 16
      %v10092 = vor.u32 %v10090, %v10088
      %v10094 = vshll.u32 %v10049, 16
      %v10096 = vrot.slane %v10094, 1
      %v10097 = vsel %vm2947, %v10092, %v10096
      %v10098 = vshrl.u32 %v10049, 16
      %v10100 = vor.u32 %v10098, %v10096
      %v10102 = vshll.u32 %v10050, 16
      %v10104 = vrot.slane %v10102, 1
      %v10105 = vsel %vm2947, %v10100, %v10104
      %v10106 = vshrl.u32 %v10050, 16
      %v10108 = vor.u32 %v10106, %v10104
      %v10110 = vshll.u32 %v10051, 16
      %v10112 = vrot.slane %v10110, 1
      %v10113 = vsel %vm2947, %v10108, %v10112
      %v10114 = vshrl.u32 %v10051, 16
      %v10116 = vor.u32 %v10114, %v10112
      %v10118 = vshll.u32 %v10052, 16
      %v10120 = vrot.slane %v10118, 1
      %v10121 = vsel %vm2947, %v10116, %v10120
      %v10122 = vshrl.u32 %v10052, 16
      %v10124 = vor.u32 %v10122, %v10120
      %v10126 = vshll.u32 %v10053, 16
      %v10128 = vrot.slane %v10126, 1
      %v10129 = vsel %vm2947, %v10124, %v10128
      %v10130 = vshrl.u32 %v10053, 16
      %v10132 = vor.u32 %v10130, %v10128
      %v10134 = vshll.u32 %v10054, 16
      %v10136 = vrot.slane %v10134, 1
      %v10137 = vsel %vm2947, %v10132, %v10136
      %v10138 = vshrl.u32 %v10054, 16
      %v10140 = vor.u32 %v10138, %v10136
      %v10142 = vshll.u32 %v10055, 16
      %v10144 = vrot.slane %v10142, 1
      %v10145 = vsel %vm2947, %v10140, %v10144
      %v10146 = vshrl.u32 %v10055, 16
      %v10148 = vor.u32 %v10146, %v10144
      %v10150 = vshll.u32 %v10056, 16
      %v10152 = vrot.slane %v10150, 1
      %v10153 = vsel %vm2947, %v10148, %v10152
      %v10154 = vshrl.u32 %v10056, 16
      %v10156 = vor.u32 %v10154, %v10152
      %v10158 = vshll.u32 %v10057, 16
      %v10160 = vrot.slane %v10158, 1
      %v10161 = vsel %vm2947, %v10156, %v10160
      %v10162 = vshrl.u32 %v10057, 16
      %v10164 = vor.u32 %v10162, %v10160
      %v10166 = vshll.u32 %v10058, 16
      %v10168 = vrot.slane %v10166, 1
      %v10169 = vsel %vm2947, %v10164, %v10168
      %v10170 = vshrl.u32 %v10058, 16
      %v10172 = vor.u32 %v10170, %v10168
      %v10174 = vshll.u32 %v10059, 16
      %v10176 = vrot.slane %v10174, 1
      %v10177 = vsel %vm2947, %v10172, %v10176
      %v10178 = vshrl.u32 %v10059, 16
      %v10180 = vor.u32 %v10178, %v10176
      %v10182 = vshll.u32 %v10060, 16
      %v10184 = vrot.slane %v10182, 1
      %v10185 = vsel %vm2947, %v10180, %v10184
      %v10186 = vshrl.u32 %v10060, 16
      %v10188 = vor.u32 %v10186, %v10184
      %v10190 = vshll.u32 %v10061, 16
      %v10192 = vrot.slane %v10190, 1
      %v10193 = vsel %vm2947, %v10188, %v10192
      %v10196 = vunpack.c.l.b16 %v9977
      %v10197 = vunpack.c.l.b16 %v9978
      %v10198 = vpack.c.b16 %v10197, %v10196
      %v10201 = vsel %vm1554, %v10073, 0
      %v10204 = vsel %vm1554, %v10081, 0
      %v10207 = vsel %vm1554, %v10089, 0
      %v10210 = vsel %vm1554, %v10097, 0
      %v10213 = vsel %vm1554, %v10105, 0
      %v10216 = vsel %vm1554, %v10113, 0
      %v10219 = vsel %vm1554, %v10121, 0
      %v10222 = vsel %vm1554, %v10129, 0
      %v10225 = vsel %vm1554, %v10137, 0
      %v10228 = vsel %vm1554, %v10145, 0
      %v10231 = vsel %vm1554, %v10153, 0
      %v10234 = vsel %vm1554, %v10161, 0
      %v10237 = vsel %vm1554, %v10169, 0
      %v10240 = vsel %vm1554, %v10177, 0
      %v10243 = vsel %vm1554, %v10185, 0
      %v10246 = vsel %vm1554, %v10193, 0
      %10248 = vmatprep.subr.bf16.mxu0 0
      %10249 = vmatpush1.bf16.msra.mxu0 0
      %10250 = vmatprep.subr.bf16.mxu0 0
      %10251 = vmatpush1.bf16.msra.mxu0 0
      %10252 = vmatprep.subr.bf16.mxu0 0
      %10253 = vmatpush1.bf16.msra.mxu0 0
      %10254 = vmatprep.subr.bf16.mxu0 0
      %10255 = vmatpush1.bf16.msra.mxu0 0
      %10256 = vmatprep.subr.bf16.mxu0 0
      %10257 = vmatpush1.bf16.msra.mxu0 0
      %10258 = vmatprep.subr.bf16.mxu0 0
      %10259 = vmatpush1.bf16.msra.mxu0 0
      %10260 = vmatprep.subr.bf16.mxu0 0
      %10261 = vmatpush1.bf16.msra.mxu0 0
      %10262 = vmatprep.subr.bf16.mxu0 0
      %10263 = vmatpush1.bf16.msra.mxu0 %v10198
      %10264 = vmatprep.subr.bf16.mxu0 0
      %10265 = vmatpush2.bf16.msra.mxu0 0
      %10266 = vmatprep.subr.bf16.mxu0 0
      %10267 = vmatpush2.bf16.msra.mxu0 0
      %10268 = vmatprep.subr.bf16.mxu0 0
      %10269 = vmatpush2.bf16.msra.mxu0 0
      %10270 = vmatprep.subr.bf16.mxu0 0
      %10271 = vmatpush2.bf16.msra.mxu0 0
      %10272 = vmatprep.subr.bf16.mxu0 0
      %10273 = vmatpush2.bf16.msra.mxu0 0
      %10274 = vmatprep.subr.bf16.mxu0 0
      %10275 = vmatpush2.bf16.msra.mxu0 0
      %10276 = vmatprep.subr.bf16.mxu0 0
      %10277 = vmatpush2.bf16.msra.mxu0 0
      %10278 = vmatprep.subr.bf16.mxu0 0
      %10279 = vmatpush2.bf16.msra.mxu0 0
      %10280 = vmatprep.mubr.bf16.mxu0 0
      %10281 = vmatmul.mubr.bf16.gmra.mxu0 %v10201
      %v10282 = vpop.f32.mrf.mxu0
      %v10283 = vadd.f32 0.0, %v10282
      %v10284 = vpop.f32.mrf.mxu0
      %v10285 = vpop.f32.mrf.mxu0
      %v10286 = vadd.f32 0.0, %v10285
      %v10287 = vpop.f32.mrf.mxu0
      %10288 = vmatprep.mubr.bf16.mxu0 0
      %10289 = vmatmul.mubr.bf16.gmra.mxu0 %v10204
      %v10290 = vpop.f32.mrf.mxu0
      %v10291 = vadd.f32 0.0, %v10290
      %v10292 = vpop.f32.mrf.mxu0
      %v10293 = vpop.f32.mrf.mxu0
      %v10294 = vadd.f32 0.0, %v10293
      %v10295 = vpop.f32.mrf.mxu0
      %10296 = vmatprep.mubr.bf16.mxu0 0
      %10297 = vmatmul.mubr.bf16.gmra.mxu0 %v10207
      %v10298 = vpop.f32.mrf.mxu0
      %v10299 = vadd.f32 0.0, %v10298
      %v10300 = vpop.f32.mrf.mxu0
      %v10301 = vpop.f32.mrf.mxu0
      %v10302 = vadd.f32 0.0, %v10301
      %v10303 = vpop.f32.mrf.mxu0
      %10304 = vmatprep.mubr.bf16.mxu0 0
      %10305 = vmatmul.mubr.bf16.gmra.mxu0 %v10210
      %v10306 = vpop.f32.mrf.mxu0
      %v10307 = vadd.f32 0.0, %v10306
      %v10308 = vpop.f32.mrf.mxu0
      %v10309 = vpop.f32.mrf.mxu0
      %v10310 = vadd.f32 0.0, %v10309
      %v10311 = vpop.f32.mrf.mxu0
      %10312 = vmatprep.mubr.bf16.mxu0 0
      %10313 = vmatmul.mubr.bf16.gmra.mxu0 %v10213
      %v10314 = vpop.f32.mrf.mxu0
      %v10315 = vadd.f32 0.0, %v10314
      %v10316 = vpop.f32.mrf.mxu0
      %v10317 = vpop.f32.mrf.mxu0
      %v10318 = vadd.f32 0.0, %v10317
      %v10319 = vpop.f32.mrf.mxu0
      %10320 = vmatprep.mubr.bf16.mxu0 0
      %10321 = vmatmul.mubr.bf16.gmra.mxu0 %v10216
      %v10322 = vpop.f32.mrf.mxu0
      %v10323 = vadd.f32 0.0, %v10322
      %v10324 = vpop.f32.mrf.mxu0
      %v10325 = vpop.f32.mrf.mxu0
      %v10326 = vadd.f32 0.0, %v10325
      %v10327 = vpop.f32.mrf.mxu0
      %10328 = vmatprep.mubr.bf16.mxu0 0
      %10329 = vmatmul.mubr.bf16.gmra.mxu0 %v10219
      %v10330 = vpop.f32.mrf.mxu0
      %v10331 = vadd.f32 0.0, %v10330
      %v10332 = vpop.f32.mrf.mxu0
      %v10333 = vpop.f32.mrf.mxu0
      %v10334 = vadd.f32 0.0, %v10333
      %v10335 = vpop.f32.mrf.mxu0
      %10336 = vmatprep.mubr.bf16.mxu0 0
      %10337 = vmatmul.mubr.bf16.gmra.mxu0 %v10222
      %v10338 = vpop.f32.mrf.mxu0
      %v10339 = vadd.f32 0.0, %v10338
      %v10340 = vpop.f32.mrf.mxu0
      %v10341 = vpop.f32.mrf.mxu0
      %v10342 = vadd.f32 0.0, %v10341
      %v10343 = vpop.f32.mrf.mxu0
      %10344 = vmatprep.mubr.bf16.mxu0 0
      %10345 = vmatmul.mubr.bf16.gmra.mxu0 %v10225
      %v10346 = vpop.f32.mrf.mxu0
      %v10347 = vadd.f32 0.0, %v10346
      %v10348 = vpop.f32.mrf.mxu0
      %v10349 = vpop.f32.mrf.mxu0
      %v10350 = vadd.f32 0.0, %v10349
      %v10351 = vpop.f32.mrf.mxu0
      %10352 = vmatprep.mubr.bf16.mxu0 0
      %10353 = vmatmul.mubr.bf16.gmra.mxu0 %v10228
      %v10354 = vpop.f32.mrf.mxu0
      %v10355 = vadd.f32 0.0, %v10354
      %v10356 = vpop.f32.mrf.mxu0
      %v10357 = vpop.f32.mrf.mxu0
      %v10358 = vadd.f32 0.0, %v10357
      %v10359 = vpop.f32.mrf.mxu0
      %10360 = vmatprep.mubr.bf16.mxu0 0
      %10361 = vmatmul.mubr.bf16.gmra.mxu0 %v10231
      %v10362 = vpop.f32.mrf.mxu0
      %v10363 = vadd.f32 0.0, %v10362
      %v10364 = vpop.f32.mrf.mxu0
      %v10365 = vpop.f32.mrf.mxu0
      %v10366 = vadd.f32 0.0, %v10365
      %v10367 = vpop.f32.mrf.mxu0
      %10368 = vmatprep.mubr.bf16.mxu0 0
      %10369 = vmatmul.mubr.bf16.gmra.mxu0 %v10234
      %v10370 = vpop.f32.mrf.mxu0
      %v10371 = vadd.f32 0.0, %v10370
      %v10372 = vpop.f32.mrf.mxu0
      %v10373 = vpop.f32.mrf.mxu0
      %v10374 = vadd.f32 0.0, %v10373
      %v10375 = vpop.f32.mrf.mxu0
      %10376 = vmatprep.mubr.bf16.mxu0 0
      %10377 = vmatmul.mubr.bf16.gmra.mxu0 %v10237
      %v10378 = vpop.f32.mrf.mxu0
      %v10379 = vadd.f32 0.0, %v10378
      %v10380 = vpop.f32.mrf.mxu0
      %v10381 = vpop.f32.mrf.mxu0
      %v10382 = vadd.f32 0.0, %v10381
      %v10383 = vpop.f32.mrf.mxu0
      %10384 = vmatprep.mubr.bf16.mxu0 0
      %10385 = vmatmul.mubr.bf16.gmra.mxu0 %v10240
      %v10386 = vpop.f32.mrf.mxu0
      %v10387 = vadd.f32 0.0, %v10386
      %v10388 = vpop.f32.mrf.mxu0
      %v10389 = vpop.f32.mrf.mxu0
      %v10390 = vadd.f32 0.0, %v10389
      %v10391 = vpop.f32.mrf.mxu0
      %10392 = vmatprep.mubr.bf16.mxu0 0
      %10393 = vmatmul.mubr.bf16.gmra.mxu0 %v10243
      %v10394 = vpop.f32.mrf.mxu0
      %v10395 = vadd.f32 0.0, %v10394
      %v10396 = vpop.f32.mrf.mxu0
      %v10397 = vpop.f32.mrf.mxu0
      %v10398 = vadd.f32 0.0, %v10397
      %v10399 = vpop.f32.mrf.mxu0
      %10400 = vmatprep.mubr.bf16.mxu0 0
      %10401 = vmatmul.mubr.bf16.gmra.mxu0 %v10246
      %v10402 = vpop.f32.mrf.mxu0
      %v10403 = vadd.f32 0.0, %v10402
      %v10404 = vpop.f32.mrf.mxu0
      %v10405 = vpop.f32.mrf.mxu0
      %v10406 = vadd.f32 0.0, %v10405
      %v10407 = vpop.f32.mrf.mxu0
      %10408 = vdwg.mxu0
      %v10409 = vadd.f32 %v9878, %v10283
      %v10410 = vadd.f32 %v9879, %v10286
      %v10411 = vadd.f32 %v9880, %v10291
      %v10412 = vadd.f32 %v9881, %v10294
      %v10413 = vadd.f32 %v9882, %v10299
      %v10414 = vadd.f32 %v9883, %v10302
      %v10415 = vadd.f32 %v9884, %v10307
      %v10416 = vadd.f32 %v9885, %v10310
      %v10417 = vadd.f32 %v9886, %v10315
      %v10418 = vadd.f32 %v9887, %v10318
      %v10419 = vadd.f32 %v9888, %v10323
      %v10420 = vadd.f32 %v9889, %v10326
      %v10421 = vadd.f32 %v9890, %v10331
      %v10422 = vadd.f32 %v9891, %v10334
      %v10423 = vadd.f32 %v9892, %v10339
      %v10424 = vadd.f32 %v9893, %v10342
      %v10425 = vadd.f32 %v9894, %v10347
      %v10426 = vadd.f32 %v9895, %v10350
      %v10427 = vadd.f32 %v9896, %v10355
      %v10428 = vadd.f32 %v9897, %v10358
      %v10429 = vadd.f32 %v9898, %v10363
      %v10430 = vadd.f32 %v9899, %v10366
      %v10431 = vadd.f32 %v9900, %v10371
      %v10432 = vadd.f32 %v9901, %v10374
      %v10433 = vadd.f32 %v9902, %v10379
      %v10434 = vadd.f32 %v9903, %v10382
      %v10435 = vadd.f32 %v9904, %v10387
      %v10436 = vadd.f32 %v9905, %v10390
      %v10437 = vadd.f32 %v9906, %v10395
      %v10438 = vadd.f32 %v9907, %v10398
      %v10439 = vadd.f32 %v9908, %v10403
      %v10440 = vadd.f32 %v9909, %v10406
      %s10441 = scalar_lea.vmem %s3, 1
      %v10442 = vld [vmem:[%s10441] sm:$0x1]
      %v10444 = vlaneseq
      %v10445 = vshrl.u32 %v10444, 7
      %v10446 = vsub.s32 0, %v10445
      %v10447 = vrot.slane %v10442, %v10446
      %v10449 = vadd.f32 %v10409, %v10447
      %v10450 = vadd.f32 %v10410, %v10447
      %v10451 = vadd.f32 %v10411, %v10447
      %v10452 = vadd.f32 %v10412, %v10447
      %v10453 = vadd.f32 %v10413, %v10447
      %v10454 = vadd.f32 %v10414, %v10447
      %v10455 = vadd.f32 %v10415, %v10447
      %v10456 = vadd.f32 %v10416, %v10447
      %v10457 = vadd.f32 %v10417, %v10447
      %v10458 = vadd.f32 %v10418, %v10447
      %v10459 = vadd.f32 %v10419, %v10447
      %v10460 = vadd.f32 %v10420, %v10447
      %v10461 = vadd.f32 %v10421, %v10447
      %v10462 = vadd.f32 %v10422, %v10447
      %v10463 = vadd.f32 %v10423, %v10447
      %v10464 = vadd.f32 %v10424, %v10447
      %v10465 = vadd.f32 %v10425, %v10447
      %v10466 = vadd.f32 %v10426, %v10447
      %v10467 = vadd.f32 %v10427, %v10447
      %v10468 = vadd.f32 %v10428, %v10447
      %v10469 = vadd.f32 %v10429, %v10447
      %v10470 = vadd.f32 %v10430, %v10447
      %v10471 = vadd.f32 %v10431, %v10447
      %v10472 = vadd.f32 %v10432, %v10447
      %v10473 = vadd.f32 %v10433, %v10447
      %v10474 = vadd.f32 %v10434, %v10447
      %v10475 = vadd.f32 %v10435, %v10447
      %v10476 = vadd.f32 %v10436, %v10447
      %v10477 = vadd.f32 %v10437, %v10447
      %v10478 = vadd.f32 %v10438, %v10447
      %v10479 = vadd.f32 %v10439, %v10447
      %v10480 = vadd.f32 %v10440, %v10447
      %v10481 = vmax.f32 %v10449, 0.0
      %v10482 = vmax.f32 %v10450, 0.0
      %v10483 = vmax.f32 %v10451, 0.0
      %v10484 = vmax.f32 %v10452, 0.0
      %v10485 = vmax.f32 %v10453, 0.0
      %v10486 = vmax.f32 %v10454, 0.0
      %v10487 = vmax.f32 %v10455, 0.0
      %v10488 = vmax.f32 %v10456, 0.0
      %v10489 = vmax.f32 %v10457, 0.0
      %v10490 = vmax.f32 %v10458, 0.0
      %v10491 = vmax.f32 %v10459, 0.0
      %v10492 = vmax.f32 %v10460, 0.0
      %v10493 = vmax.f32 %v10461, 0.0
      %v10494 = vmax.f32 %v10462, 0.0
      %v10495 = vmax.f32 %v10463, 0.0
      %v10496 = vmax.f32 %v10464, 0.0
      %v10497 = vmax.f32 %v10465, 0.0
      %v10498 = vmax.f32 %v10466, 0.0
      %v10499 = vmax.f32 %v10467, 0.0
      %v10500 = vmax.f32 %v10468, 0.0
      %v10501 = vmax.f32 %v10469, 0.0
      %v10502 = vmax.f32 %v10470, 0.0
      %v10503 = vmax.f32 %v10471, 0.0
      %v10504 = vmax.f32 %v10472, 0.0
      %v10505 = vmax.f32 %v10473, 0.0
      %v10506 = vmax.f32 %v10474, 0.0
      %v10507 = vmax.f32 %v10475, 0.0
      %v10508 = vmax.f32 %v10476, 0.0
      %v10509 = vmax.f32 %v10477, 0.0
      %v10510 = vmax.f32 %v10478, 0.0
      %v10511 = vmax.f32 %v10479, 0.0
      %v10512 = vmax.f32 %v10480, 0.0
      %v10513 = vpack.c.bf16 %v10482, %v10481
      %v10514 = vpack.c.bf16 %v10484, %v10483
      %v10515 = vpack.c.bf16 %v10486, %v10485
      %v10516 = vpack.c.bf16 %v10488, %v10487
      %v10517 = vpack.c.bf16 %v10490, %v10489
      %v10518 = vpack.c.bf16 %v10492, %v10491
      %v10519 = vpack.c.bf16 %v10494, %v10493
      %v10520 = vpack.c.bf16 %v10496, %v10495
      %v10521 = vpack.c.bf16 %v10498, %v10497
      %v10522 = vpack.c.bf16 %v10500, %v10499
      %v10523 = vpack.c.bf16 %v10502, %v10501
      %v10524 = vpack.c.bf16 %v10504, %v10503
      %v10525 = vpack.c.bf16 %v10506, %v10505
      %v10526 = vpack.c.bf16 %v10508, %v10507
      %v10527 = vpack.c.bf16 %v10510, %v10509
      %v10528 = vpack.c.bf16 %v10512, %v10511
      %s10529 = scalar_lea.vmem %s4, 64
      %v10530 = vld [vmem:[%s10529] sm:$0xf]
      %v10531 = vld [vmem:[%s10529 + $0x4] sm:$0xf]
      %v10532 = vld [vmem:[%s10529 + $0x8] sm:$0xf]
      %v10533 = vld [vmem:[%s10529 + $0xc] sm:$0xf]
      %v10534 = vld [vmem:[%s10529 + $0x10] sm:$0xf]
      %v10535 = vld [vmem:[%s10529 + $0x14] sm:$0xf]
      %v10536 = vld [vmem:[%s10529 + $0x18] sm:$0xf]
      %v10537 = vld [vmem:[%s10529 + $0x1c] sm:$0xf]
      %v10538 = vld [vmem:[%s10529 + $0x20] sm:$0xf]
      %v10539 = vld [vmem:[%s10529 + $0x24] sm:$0xf]
      %v10540 = vld [vmem:[%s10529 + $0x28] sm:$0xf]
      %v10541 = vld [vmem:[%s10529 + $0x2c] sm:$0xf]
      %v10542 = vld [vmem:[%s10529 + $0x30] sm:$0xf]
      %v10543 = vld [vmem:[%s10529 + $0x34] sm:$0xf]
      %v10544 = vld [vmem:[%s10529 + $0x38] sm:$0xf]
      %v10545 = vld [vmem:[%s10529 + $0x3c] sm:$0xf]
      %v10562 = vunpack.c.l.b16 %v10530
      %v10563 = vunpack.c.l.b16 %v10531
      %v10564 = vunpack.c.l.b16 %v10532
      %v10565 = vunpack.c.l.b16 %v10533
      %v10566 = vunpack.c.l.b16 %v10534
      %v10567 = vunpack.c.l.b16 %v10535
      %v10568 = vunpack.c.l.b16 %v10536
      %v10569 = vunpack.c.l.b16 %v10537
      %v10570 = vunpack.c.l.b16 %v10538
      %v10571 = vunpack.c.l.b16 %v10539
      %v10572 = vunpack.c.l.b16 %v10540
      %v10573 = vunpack.c.l.b16 %v10541
      %v10574 = vunpack.c.l.b16 %v10542
      %v10575 = vunpack.c.l.b16 %v10543
      %v10576 = vunpack.c.l.b16 %v10544
      %v10577 = vunpack.c.l.b16 %v10545
      %v10578 = vpack.c.b16 %v10563, %v10562
      %v10579 = vpack.c.b16 %v10565, %v10564
      %v10580 = vpack.c.b16 %v10567, %v10566
      %v10581 = vpack.c.b16 %v10569, %v10568
      %v10582 = vpack.c.b16 %v10571, %v10570
      %v10583 = vpack.c.b16 %v10573, %v10572
      %v10584 = vpack.c.b16 %v10575, %v10574
      %v10585 = vpack.c.b16 %v10577, %v10576
      %10594 = vmatprep.subr.bf16.mxu0 0
      %10595 = vmatpush1.bf16.msra.mxu0 %v10585
      %10596 = vmatprep.subr.bf16.mxu0 0
      %10597 = vmatpush1.bf16.msra.mxu0 %v10584
      %10598 = vmatprep.subr.bf16.mxu0 0
      %10599 = vmatpush1.bf16.msra.mxu0 %v10583
      %10600 = vmatprep.subr.bf16.mxu0 0
      %10601 = vmatpush1.bf16.msra.mxu0 %v10582
      %10602 = vmatprep.subr.bf16.mxu0 0
      %10603 = vmatpush1.bf16.msra.mxu0 %v10581
      %10604 = vmatprep.subr.bf16.mxu0 0
      %10605 = vmatpush1.bf16.msra.mxu0 %v10580
      %10606 = vmatprep.subr.bf16.mxu0 0
      %10607 = vmatpush1.bf16.msra.mxu0 %v10579
      %10608 = vmatprep.subr.bf16.mxu0 0
      %10609 = vmatpush1.bf16.msra.mxu0 %v10578
      %10610 = vmatprep.subr.bf16.mxu0 0
      %10611 = vmatpush2.bf16.msra.mxu0 0
      %10612 = vmatprep.subr.bf16.mxu0 0
      %10613 = vmatpush2.bf16.msra.mxu0 0
      %10614 = vmatprep.subr.bf16.mxu0 0
      %10615 = vmatpush2.bf16.msra.mxu0 0
      %10616 = vmatprep.subr.bf16.mxu0 0
      %10617 = vmatpush2.bf16.msra.mxu0 0
      %10618 = vmatprep.subr.bf16.mxu0 0
      %10619 = vmatpush2.bf16.msra.mxu0 0
      %10620 = vmatprep.subr.bf16.mxu0 0
      %10621 = vmatpush2.bf16.msra.mxu0 0
      %10622 = vmatprep.subr.bf16.mxu0 0
      %10623 = vmatpush2.bf16.msra.mxu0 0
      %10624 = vmatprep.subr.bf16.mxu0 0
      %10625 = vmatpush2.bf16.msra.mxu0 0
      %10626 = vmatprep.mubr.bf16.mxu0 0
      %10627 = vmatmul.mubr.bf16.gmra.mxu0 %v10513
      %v10628 = vpop.f32.mrf.mxu0
      %v10629 = vadd.f32 0.0, %v10628
      %v10630 = vpop.f32.mrf.mxu0
      %v10631 = vpop.f32.mrf.mxu0
      %v10632 = vadd.f32 0.0, %v10631
      %v10633 = vpop.f32.mrf.mxu0
      %10634 = vmatprep.mubr.bf16.mxu0 0
      %10635 = vmatmul.mubr.bf16.gmra.mxu0 %v10514
      %v10636 = vpop.f32.mrf.mxu0
      %v10637 = vadd.f32 0.0, %v10636
      %v10638 = vpop.f32.mrf.mxu0
      %v10639 = vpop.f32.mrf.mxu0
      %v10640 = vadd.f32 0.0, %v10639
      %v10641 = vpop.f32.mrf.mxu0
      %10642 = vmatprep.mubr.bf16.mxu0 0
      %10643 = vmatmul.mubr.bf16.gmra.mxu0 %v10515
      %v10644 = vpop.f32.mrf.mxu0
      %v10645 = vadd.f32 0.0, %v10644
      %v10646 = vpop.f32.mrf.mxu0
      %v10647 = vpop.f32.mrf.mxu0
      %v10648 = vadd.f32 0.0, %v10647
      %v10649 = vpop.f32.mrf.mxu0
      %10650 = vmatprep.mubr.bf16.mxu0 0
      %10651 = vmatmul.mubr.bf16.gmra.mxu0 %v10516
      %v10652 = vpop.f32.mrf.mxu0
      %v10653 = vadd.f32 0.0, %v10652
      %v10654 = vpop.f32.mrf.mxu0
      %v10655 = vpop.f32.mrf.mxu0
      %v10656 = vadd.f32 0.0, %v10655
      %v10657 = vpop.f32.mrf.mxu0
      %10658 = vmatprep.mubr.bf16.mxu0 0
      %10659 = vmatmul.mubr.bf16.gmra.mxu0 %v10517
      %v10660 = vpop.f32.mrf.mxu0
      %v10661 = vadd.f32 0.0, %v10660
      %v10662 = vpop.f32.mrf.mxu0
      %v10663 = vpop.f32.mrf.mxu0
      %v10664 = vadd.f32 0.0, %v10663
      %v10665 = vpop.f32.mrf.mxu0
      %10666 = vmatprep.mubr.bf16.mxu0 0
      %10667 = vmatmul.mubr.bf16.gmra.mxu0 %v10518
      %v10668 = vpop.f32.mrf.mxu0
      %v10669 = vadd.f32 0.0, %v10668
      %v10670 = vpop.f32.mrf.mxu0
      %v10671 = vpop.f32.mrf.mxu0
      %v10672 = vadd.f32 0.0, %v10671
      %v10673 = vpop.f32.mrf.mxu0
      %10674 = vmatprep.mubr.bf16.mxu0 0
      %10675 = vmatmul.mubr.bf16.gmra.mxu0 %v10519
      %v10676 = vpop.f32.mrf.mxu0
      %v10677 = vadd.f32 0.0, %v10676
      %v10678 = vpop.f32.mrf.mxu0
      %v10679 = vpop.f32.mrf.mxu0
      %v10680 = vadd.f32 0.0, %v10679
      %v10681 = vpop.f32.mrf.mxu0
      %10682 = vmatprep.mubr.bf16.mxu0 0
      %10683 = vmatmul.mubr.bf16.gmra.mxu0 %v10520
      %v10684 = vpop.f32.mrf.mxu0
      %v10685 = vadd.f32 0.0, %v10684
      %v10686 = vpop.f32.mrf.mxu0
      %v10687 = vpop.f32.mrf.mxu0
      %v10688 = vadd.f32 0.0, %v10687
      %v10689 = vpop.f32.mrf.mxu0
      %10690 = vmatprep.mubr.bf16.mxu0 0
      %10691 = vmatmul.mubr.bf16.gmra.mxu0 %v10521
      %v10692 = vpop.f32.mrf.mxu0
      %v10693 = vadd.f32 0.0, %v10692
      %v10694 = vpop.f32.mrf.mxu0
      %v10695 = vpop.f32.mrf.mxu0
      %v10696 = vadd.f32 0.0, %v10695
      %v10697 = vpop.f32.mrf.mxu0
      %10698 = vmatprep.mubr.bf16.mxu0 0
      %10699 = vmatmul.mubr.bf16.gmra.mxu0 %v10522
      %v10700 = vpop.f32.mrf.mxu0
      %v10701 = vadd.f32 0.0, %v10700
      %v10702 = vpop.f32.mrf.mxu0
      %v10703 = vpop.f32.mrf.mxu0
      %v10704 = vadd.f32 0.0, %v10703
      %v10705 = vpop.f32.mrf.mxu0
      %10706 = vmatprep.mubr.bf16.mxu0 0
      %10707 = vmatmul.mubr.bf16.gmra.mxu0 %v10523
      %v10708 = vpop.f32.mrf.mxu0
      %v10709 = vadd.f32 0.0, %v10708
      %v10710 = vpop.f32.mrf.mxu0
      %v10711 = vpop.f32.mrf.mxu0
      %v10712 = vadd.f32 0.0, %v10711
      %v10713 = vpop.f32.mrf.mxu0
      %10714 = vmatprep.mubr.bf16.mxu0 0
      %10715 = vmatmul.mubr.bf16.gmra.mxu0 %v10524
      %v10716 = vpop.f32.mrf.mxu0
      %v10717 = vadd.f32 0.0, %v10716
      %v10718 = vpop.f32.mrf.mxu0
      %v10719 = vpop.f32.mrf.mxu0
      %v10720 = vadd.f32 0.0, %v10719
      %v10721 = vpop.f32.mrf.mxu0
      %10722 = vmatprep.mubr.bf16.mxu0 0
      %10723 = vmatmul.mubr.bf16.gmra.mxu0 %v10525
      %v10724 = vpop.f32.mrf.mxu0
      %v10725 = vadd.f32 0.0, %v10724
      %v10726 = vpop.f32.mrf.mxu0
      %v10727 = vpop.f32.mrf.mxu0
      %v10728 = vadd.f32 0.0, %v10727
      %v10729 = vpop.f32.mrf.mxu0
      %10730 = vmatprep.mubr.bf16.mxu0 0
      %10731 = vmatmul.mubr.bf16.gmra.mxu0 %v10526
      %v10732 = vpop.f32.mrf.mxu0
      %v10733 = vadd.f32 0.0, %v10732
      %v10734 = vpop.f32.mrf.mxu0
      %v10735 = vpop.f32.mrf.mxu0
      %v10736 = vadd.f32 0.0, %v10735
      %v10737 = vpop.f32.mrf.mxu0
      %10738 = vmatprep.mubr.bf16.mxu0 0
      %10739 = vmatmul.mubr.bf16.gmra.mxu0 %v10527
      %v10740 = vpop.f32.mrf.mxu0
      %v10741 = vadd.f32 0.0, %v10740
      %v10742 = vpop.f32.mrf.mxu0
      %v10743 = vpop.f32.mrf.mxu0
      %v10744 = vadd.f32 0.0, %v10743
      %v10745 = vpop.f32.mrf.mxu0
      %10746 = vmatprep.mubr.bf16.mxu0 0
      %10747 = vmatmul.mubr.bf16.gmra.mxu0 %v10528
      %v10748 = vpop.f32.mrf.mxu0
      %v10749 = vadd.f32 0.0, %v10748
      %v10750 = vpop.f32.mrf.mxu0
      %v10751 = vpop.f32.mrf.mxu0
      %v10752 = vadd.f32 0.0, %v10751
      %v10753 = vpop.f32.mrf.mxu0
      %10754 = vdwg.mxu0
      %v10755 = vadd.f32 %v6133, %v10629
      %v10756 = vadd.f32 %v6134, %v10632
      %v10757 = vadd.f32 %v6135, %v10637
      %v10758 = vadd.f32 %v6136, %v10640
      %v10759 = vadd.f32 %v6137, %v10645
      %v10760 = vadd.f32 %v6138, %v10648
      %v10761 = vadd.f32 %v6139, %v10653
      %v10762 = vadd.f32 %v6140, %v10656
      %v10763 = vadd.f32 %v6141, %v10661
      %v10764 = vadd.f32 %v6142, %v10664
      %v10765 = vadd.f32 %v6143, %v10669
      %v10766 = vadd.f32 %v6144, %v10672
      %v10767 = vadd.f32 %v6145, %v10677
      %v10768 = vadd.f32 %v6146, %v10680
      %v10769 = vadd.f32 %v6147, %v10685
      %v10770 = vadd.f32 %v6148, %v10688
      %v10771 = vadd.f32 %v6149, %v10693
      %v10772 = vadd.f32 %v6150, %v10696
      %v10773 = vadd.f32 %v6151, %v10701
      %v10774 = vadd.f32 %v6152, %v10704
      %v10775 = vadd.f32 %v6153, %v10709
      %v10776 = vadd.f32 %v6154, %v10712
      %v10777 = vadd.f32 %v6155, %v10717
      %v10778 = vadd.f32 %v6156, %v10720
      %v10779 = vadd.f32 %v6157, %v10725
      %v10780 = vadd.f32 %v6158, %v10728
      %v10781 = vadd.f32 %v6159, %v10733
      %v10782 = vadd.f32 %v6160, %v10736
      %v10783 = vadd.f32 %v6161, %v10741
      %v10784 = vadd.f32 %v6162, %v10744
      %v10785 = vadd.f32 %v6163, %v10749
      %v10786 = vadd.f32 %v6164, %v10752
      %v10787 = vpack.c.bf16 %v10756, %v10755
      %v10788 = vpack.c.bf16 %v10758, %v10757
      %v10789 = vpack.c.bf16 %v10760, %v10759
      %v10790 = vpack.c.bf16 %v10762, %v10761
      %v10791 = vpack.c.bf16 %v10764, %v10763
      %v10792 = vpack.c.bf16 %v10766, %v10765
      %v10793 = vpack.c.bf16 %v10768, %v10767
      %v10794 = vpack.c.bf16 %v10770, %v10769
      %v10795 = vpack.c.bf16 %v10772, %v10771
      %v10796 = vpack.c.bf16 %v10774, %v10773
      %v10797 = vpack.c.bf16 %v10776, %v10775
      %v10798 = vpack.c.bf16 %v10778, %v10777
      %v10799 = vpack.c.bf16 %v10780, %v10779
      %v10800 = vpack.c.bf16 %v10782, %v10781
      %v10801 = vpack.c.bf16 %v10784, %v10783
      %v10802 = vpack.c.bf16 %v10786, %v10785
      %v10819 = vunpack.c.l.b16 %v10787
      %v10820 = vunpack.c.h.b16 %v10787
      %v10821 = vunpack.c.l.b16 %v10788
      %v10822 = vunpack.c.h.b16 %v10788
      %v10823 = vunpack.c.l.b16 %v10789
      %v10824 = vunpack.c.h.b16 %v10789
      %v10825 = vunpack.c.l.b16 %v10790
      %v10826 = vunpack.c.h.b16 %v10790
      %v10827 = vunpack.c.l.b16 %v10791
      %v10828 = vunpack.c.h.b16 %v10791
      %v10829 = vunpack.c.l.b16 %v10792
      %v10830 = vunpack.c.h.b16 %v10792
      %v10831 = vunpack.c.l.b16 %v10793
      %v10832 = vunpack.c.h.b16 %v10793
      %v10833 = vunpack.c.l.b16 %v10794
      %v10834 = vunpack.c.h.b16 %v10794
      %v10835 = vunpack.c.l.b16 %v10795
      %v10836 = vunpack.c.h.b16 %v10795
      %v10837 = vunpack.c.l.b16 %v10796
      %v10838 = vunpack.c.h.b16 %v10796
      %v10839 = vunpack.c.l.b16 %v10797
      %v10840 = vunpack.c.h.b16 %v10797
      %v10841 = vunpack.c.l.b16 %v10798
      %v10842 = vunpack.c.h.b16 %v10798
      %v10843 = vunpack.c.l.b16 %v10799
      %v10844 = vunpack.c.h.b16 %v10799
      %v10845 = vunpack.c.l.b16 %v10800
      %v10846 = vunpack.c.h.b16 %v10800
      %v10847 = vunpack.c.l.b16 %v10801
      %v10848 = vunpack.c.h.b16 %v10801
      %v10849 = vunpack.c.l.b16 %v10802
      %v10850 = vunpack.c.h.b16 %v10802
      %v10851 = vpack.c.b16 %v10819, %v10819
      %v10852 = vpack.c.b16 %v10820, %v10820
      %v10853 = vpack.c.b16 %v10821, %v10821
      %v10854 = vpack.c.b16 %v10822, %v10822
      %v10855 = vpack.c.b16 %v10823, %v10823
      %v10856 = vpack.c.b16 %v10824, %v10824
      %v10857 = vpack.c.b16 %v10825, %v10825
      %v10858 = vpack.c.b16 %v10826, %v10826
      %v10859 = vpack.c.b16 %v10827, %v10827
      %v10860 = vpack.c.b16 %v10828, %v10828
      %v10861 = vpack.c.b16 %v10829, %v10829
      %v10862 = vpack.c.b16 %v10830, %v10830
      %v10863 = vpack.c.b16 %v10831, %v10831
      %v10864 = vpack.c.b16 %v10832, %v10832
      %v10865 = vpack.c.b16 %v10833, %v10833
      %v10866 = vpack.c.b16 %v10834, %v10834
      %v10867 = vpack.c.b16 %v10835, %v10835
      %v10868 = vpack.c.b16 %v10836, %v10836
      %v10869 = vpack.c.b16 %v10837, %v10837
      %v10870 = vpack.c.b16 %v10838, %v10838
      %v10871 = vpack.c.b16 %v10839, %v10839
      %v10872 = vpack.c.b16 %v10840, %v10840
      %v10873 = vpack.c.b16 %v10841, %v10841
      %v10874 = vpack.c.b16 %v10842, %v10842
      %v10875 = vpack.c.b16 %v10843, %v10843
      %v10876 = vpack.c.b16 %v10844, %v10844
      %v10877 = vpack.c.b16 %v10845, %v10845
      %v10878 = vpack.c.b16 %v10846, %v10846
      %v10879 = vpack.c.b16 %v10847, %v10847
      %v10880 = vpack.c.b16 %v10848, %v10848
      %v10881 = vpack.c.b16 %v10849, %v10849
      %v10882 = vpack.c.b16 %v10850, %v10850
      %vm10915 = vcmask 519168
      %10916 = vst.msk [vmem:[%s226] sm:$0xf] %vm10915, %v10851
      %10917 = vst.msk [vmem:[%s226 + $0x4] sm:$0xf] %vm10915, %v10852
      %10918 = vst.msk [vmem:[%s226 + $0x8] sm:$0xf] %vm10915, %v10853
      %10919 = vst.msk [vmem:[%s226 + $0xc] sm:$0xf] %vm10915, %v10854
      %10920 = vst.msk [vmem:[%s226 + $0x10] sm:$0xf] %vm10915, %v10855
      %10921 = vst.msk [vmem:[%s226 + $0x14] sm:$0xf] %vm10915, %v10856
      %10922 = vst.msk [vmem:[%s226 + $0x18] sm:$0xf] %vm10915, %v10857
      %10923 = vst.msk [vmem:[%s226 + $0x1c] sm:$0xf] %vm10915, %v10858
      %10924 = vst.msk [vmem:[%s226 + $0x20] sm:$0xf] %vm10915, %v10859
      %10925 = vst.msk [vmem:[%s226 + $0x24] sm:$0xf] %vm10915, %v10860
      %10926 = vst.msk [vmem:[%s226 + $0x28] sm:$0xf] %vm10915, %v10861
      %10927 = vst.msk [vmem:[%s226 + $0x2c] sm:$0xf] %vm10915, %v10862
      %10928 = vst.msk [vmem:[%s226 + $0x30] sm:$0xf] %vm10915, %v10863
      %10929 = vst.msk [vmem:[%s226 + $0x34] sm:$0xf] %vm10915, %v10864
      %10930 = vst.msk [vmem:[%s226 + $0x38] sm:$0xf] %vm10915, %v10865
      %10931 = vst.msk [vmem:[%s226 + $0x3c] sm:$0xf] %vm10915, %v10866
      %10932 = vst.msk [vmem:[%s226 + $0x40] sm:$0xf] %vm10915, %v10867
      %10933 = vst.msk [vmem:[%s226 + $0x44] sm:$0xf] %vm10915, %v10868
      %10934 = vst.msk [vmem:[%s226 + $0x48] sm:$0xf] %vm10915, %v10869
      %10935 = vst.msk [vmem:[%s226 + $0x4c] sm:$0xf] %vm10915, %v10870
      %10936 = vst.msk [vmem:[%s226 + $0x50] sm:$0xf] %vm10915, %v10871
      %10937 = vst.msk [vmem:[%s226 + $0x54] sm:$0xf] %vm10915, %v10872
      %10938 = vst.msk [vmem:[%s226 + $0x58] sm:$0xf] %vm10915, %v10873
      %10939 = vst.msk [vmem:[%s226 + $0x5c] sm:$0xf] %vm10915, %v10874
      %10940 = vst.msk [vmem:[%s226 + $0x60] sm:$0xf] %vm10915, %v10875
      %10941 = vst.msk [vmem:[%s226 + $0x64] sm:$0xf] %vm10915, %v10876
      %10942 = vst.msk [vmem:[%s226 + $0x68] sm:$0xf] %vm10915, %v10877
      %10943 = vst.msk [vmem:[%s226 + $0x6c] sm:$0xf] %vm10915, %v10878
      %10944 = vst.msk [vmem:[%s226 + $0x70] sm:$0xf] %vm10915, %v10879
      %10945 = vst.msk [vmem:[%s226 + $0x74] sm:$0xf] %vm10915, %v10880
      %10946 = vst.msk [vmem:[%s226 + $0x78] sm:$0xf] %vm10915, %v10881
      %10947 = vst.msk [vmem:[%s226 + $0x7c] sm:$0xf] %vm10915, %v10882
      %s10948 = smul.u32 32, %s16
      %p10949 = scmp.lt.s32.totalorder %s10948, 63
      %s10950 = scalar_select %p10949, %s10948, 63
      %s10951 = smul.addr %s10950, 4
      %s10952 = scalar_lea.vmem %s5, %s10951
      // Predicated region
      $region41: #{tpu_custom_call.1} parent=39 // pred_check
        %p10953 = pneg %p144
      $region42: #{tpu_custom_call.1} parent=39 // pred_check_branch
        %10955 = sbr.rel (%p10953) target = $region44
      $region43: #{tpu_custom_call.1} parent=39 // pred_region
        %s10956 = smul.u32 32, %s16
      $region44: #{tpu_custom_call.1} parent=39 // pred_fallthru
        _
    $region40: #{tpu_custom_call.1} parent=5 // pred_fallthru
      _
    %p10957 = scmp.le.s32.totalorder 2, %s11
    // Predicated region
    $region45: #{tpu_custom_call.1} parent=5 // pred_check
      %p10958 = pneg %p10957
    $region46: #{tpu_custom_call.1} parent=5 // pred_check_branch
      %10960 = sbr.rel (%p10958) target = $region48
    $region47: #{tpu_custom_call.1} parent=5 // pred_region
      %s10961 = ssub.s32 %s11, 2
      // Predicated region
      $region49: #{tpu_custom_call.1} parent=47 // pred_check
        %p10962 = pneg %p150
      $region50: #{tpu_custom_call.1} parent=47 // pred_check_branch
        %10964 = sbr.rel (%p10962) target = $region52
      $region51: #{tpu_custom_call.1} parent=47 // pred_region
        %s10965 = smul.u32 32, %s17
        %p10966 = scmp.lt.s32.totalorder %s10965, 63
        %s10967 = scalar_select %p10966, %s10965, 63
        %s10968 = smul.addr %s10967, 4
        %s10969 = scalar_lea.vmem %s5, %s10968
      $region52: #{tpu_custom_call.1} parent=47 // pred_fallthru
        _
    $region48: #{tpu_custom_call.1} parent=5 // pred_fallthru
      _
  $region6: #{tpu_custom_call.1} parent=0 // loop_footer
    %s15 = sadd.s32 1, %s11
  $region7: #{tpu_custom_call.1} parent=0 // loop_footer_branch
    %10 = sbr.rel target = $region3
  $region8: #{tpu_custom_call.1} parent=0 // loop_exit
    _

</llo_original>
